<compile_context>
chip_gen: v6e
topology: v6e:2x2x1
jax: 0.10.0
libtpu: 0.0.40
codegen_flags: <defaults>
</compile_context>

<pallas_src>
import functools

import jax
import jax.numpy as jnp
from jax import lax
from jax.experimental import pallas as pl
from jax.experimental.pallas import tpu as pltpu


# ----------------------------------------------------------------------------
# Fused Pallas kernel: whole ResNetLayer for a block of Nb batch elements
# ----------------------------------------------------------------------------
def _resnet_layer_kernel(*args, stride, n_phase, Nb, H, W, Ho, Wo):
    """Arg layout (inputs..., out, scratch...):
       stride == 1 : (x, w1a, w2a, w1b, w2b, bn, out, xpad, pbuf)
       stride >= 2 : (phase_0..phase_{n_phase-1}, wds, w1a, w2a, w1b, w2b, bn,
                      out, pbuf)
       w* have shape (9, Cin, Cout); bn is (8, Cout) packed
       [s1a, b1a, s_outa, b_outa, s1b, b1b, s_outb, b_outb]."""
    if stride == 1:
        (x_ref, w1a_ref, w2a_ref, w1b_ref, w2b_ref, bn_ref,
         out_ref, xpad_ref, pbuf_ref) = args
        phase_refs = None
        wds_ref = None
    else:
        phase_refs = args[:n_phase]
        (wds_ref, w1a_ref, w2a_ref, w1b_ref, w2b_ref, bn_ref,
         out_ref, pbuf_ref) = args[n_phase:]
        xpad_ref = None

    f32 = jnp.float32
    M = Nb * Ho * Wo
    Cout = out_ref.shape[-1]

    # --- halo setup -----------------------------------------------------------
    # Only the 1-px halo is zeroed (cheap); the interior is fully rewritten by
    # every stage.  Done every step so it is correct even when the parallel
    # batch grid is split across TensorCores (each core has its own scratch).
    def zero_halo(buf, hi, wi):
        c = buf.shape[-1]
        buf[:, 0:1, :, :] = jnp.zeros((Nb, 1, wi + 2, c), buf.dtype)
        buf[:, hi + 1:hi + 2, :, :] = jnp.zeros((Nb, 1, wi + 2, c), buf.dtype)
        buf[:, :, 0:1, :] = jnp.zeros((Nb, hi + 2, 1, c), buf.dtype)
        buf[:, :, wi + 1:wi + 2, :] = jnp.zeros((Nb, hi + 2, 1, c), buf.dtype)

    zero_halo(pbuf_ref, Ho, Wo)
    if stride == 1:
        # In-kernel padding of the raw input block (bf16 VMEM->VMEM copy) —
        # cheaper than a wrapper-side padded copy through HBM.
        zero_halo(xpad_ref, H, W)
        xpad_ref[:, 1:H + 1, 1:W + 1, :] = x_ref[...]

    # --- helpers --------------------------------------------------------------
    def conv3x3(get_tap, w_ref):
        # 9 per-tap MXU matmuls accumulated in f32 (no im2col concat temp).
        acc = None
        for kh in range(3):
            for kw in range(3):
                t = get_tap(kh, kw).reshape(M, -1)
                d = jnp.dot(t, w_ref[kh * 3 + kw], preferred_element_type=f32)
                acc = d if acc is None else acc + d
        return acc

    if stride == 1:
        def tap_x(kh, kw):
            return xpad_ref[:, pl.ds(kh, Ho), pl.ds(kw, Wo), :]
    else:
        def tap_x(kh, kw):
            # Strided conv1a taps become unit-stride slices of the polyphase
            # components (already VMEM-resident via BlockSpec, no staging copy).
            ph = (kh % stride) * stride + (kw % stride)
            return phase_refs[ph][:, pl.ds(kh // stride, Ho),
                                  pl.ds(kw // stride, Wo), :]

    def tap_p(kh, kw):
        return pbuf_ref[:, pl.ds(kh, Ho), pl.ds(kw, Wo), :]

    def bn_relu(v, i):
        s = bn_ref[2 * i:2 * i + 1, :]
        b = bn_ref[2 * i + 1:2 * i + 2, :]
        return jnp.maximum(v * s + b, 0.0)

    def stash(v):
        # Interior write of the padded intermediate buffer (compute dtype).
        pbuf_ref[:, 1:Ho + 1, 1:Wo + 1, :] = (
            v.reshape(Nb, Ho, Wo, Cout).astype(pbuf_ref.dtype))

    # --- conv1a -> bn1a -> relu ----------------------------------------------
    stash(bn_relu(conv3x3(tap_x, w1a_ref), 0))

    # --- conv2a + residual (identity, or fused 1x1 downsample conv) -----------
    if stride == 1:
        res = x_ref[...].astype(f32).reshape(M, -1)
    else:
        # x[::s, ::s] is exactly the (ph=1, pw=1) polyphase component.
        res2d = phase_refs[stride + 1][:, 0:Ho, 0:Wo, :].reshape(M, -1)
        res = jnp.dot(res2d, wds_ref[...], preferred_element_type=f32)
    inter = conv3x3(tap_p, w2a_ref) + res

    # --- outbna -> relu ; conv1b -> bn1b -> relu -------------------------------
    stash(bn_relu(inter, 1))
    stash(bn_relu(conv3x3(tap_p, w1b_ref), 2))

    # --- conv2b + residual ; outbnb -> relu ------------------------------------
    d = conv3x3(tap_p, w2b_ref) + inter
    out_ref[...] = bn_relu(d, 3).reshape(Nb, Ho, Wo, Cout).astype(out_ref.dtype)


# ----------------------------------------------------------------------------
# Wrapper
# ----------------------------------------------------------------------------
def _pick_batch_fold(N):
    # Fold several batch elements per grid step (amortize per-step overhead),
    # but keep >= 2 grid steps when N >= 2 so v7x's two TensorCores stay busy.
    target = min(8, max(1, N // 2))
    for nb in range(target, 0, -1):
        if N % nb == 0:
            return nb
    return 1


def resnet_layer_forward(x, p, stride, compute_dtype=jnp.bfloat16):
    """x: (N, H, W, Cin) NHWC -> (N, Ho, Wo, Cout) NHWC float32."""
    N, H, W, Cin = x.shape
    Cout = p["w1a"].shape[-1]
    if stride == 1 and Cin != Cout:
        raise ValueError("stride==1 identity residual needs inplanes == outplanes")
    Ho = (H - 1) // stride + 1
    Wo = (W - 1) // stride + 1
    cd = compute_dtype
    s = stride
    Nb = _pick_batch_fold(N)
    grid = (N // Nb,)

    # Weights as (9, Cin, Cout): each tap slice feeds its own MXU matmul.
    w1a = p["w1a"].reshape(9, Cin, Cout).astype(cd)
    w2a = p["w2a"].reshape(9, Cout, Cout).astype(cd)
    w1b = p["w1b"].reshape(9, Cout, Cout).astype(cd)
    w2b = p["w2b"].reshape(9, Cout, Cout).astype(cd)
    # Folded BN scale/bias packed into a single (8, Cout) f32 array.
    bn = jnp.concatenate([p["s1a"], p["b1a"], p["s_outa"], p["b_outa"],
                          p["s1b"], p["b1b"], p["s_outb"], p["b_outb"]],
                         axis=0).astype(jnp.float32)

    def img_spec(h, w, c):
        return pl.BlockSpec((Nb, h, w, c), lambda n: (n, 0, 0, 0))

    def rep_spec(shape):
        nd = len(shape)
        return pl.BlockSpec(shape, lambda n: (0,) * nd)

    w_specs = [rep_spec((9, Cin, Cout)), rep_spec((9, Cout, Cout)),
               rep_spec((9, Cout, Cout)), rep_spec((9, Cout, Cout)),
               rep_spec((8, Cout))]

    if stride == 1:
        # Raw x goes straight into the kernel (padding + residual handled
        # in-kernel) — no wrapper-side padded copy through HBM.
        inputs = (x.astype(cd),)
        in_specs = [img_spec(H, W, Cin)] + w_specs
        scratch = [pltpu.VMEM((Nb, H + 2, W + 2, Cin), cd),
                   pltpu.VMEM((Nb, Ho + 2, Wo + 2, Cout), cd)]
        n_phase = 0
    else:
        # Pad once and polyphase-split so the strided conv1a becomes unit-stride
        # slices in the kernel; the (1,1) phase doubles as the residual samples.
        xp = jnp.pad(x, ((0, 0), (1, 1), (1, 1), (0, 0)))
        need_h = Ho + 2 // s
        need_w = Wo + 2 // s
        Hp = max(-(-(H + 2) // s), need_h) * s
        Wp = max(-(-(W + 2) // s), need_w) * s
        xp = jnp.pad(xp, ((0, 0), (0, Hp - (H + 2)), (0, Wp - (W + 2)), (0, 0)))
        phases = [xp[:, ph::s, pw::s, :].astype(cd)
                  for ph in range(s) for pw in range(s)]
        n_phase = len(phases)
        Ph, Pw = phases[0].shape[1], phases[0].shape[2]
        wds = p["wds"].reshape(Cin, Cout).astype(cd)
        inputs = (*phases, wds)
        in_specs = ([img_spec(Ph, Pw, Cin) for _ in range(n_phase)]
                    + [rep_spec((Cin, Cout))] + w_specs)
        scratch = [pltpu.VMEM((Nb, Ho + 2, Wo + 2, Cout), cd)]

    kernel = functools.partial(_resnet_layer_kernel, stride=stride,
                               n_phase=n_phase, Nb=Nb, H=H, W=W, Ho=Ho, Wo=Wo)

    out = pl.pallas_call(
        kernel,
        out_shape=jax.ShapeDtypeStruct((N, Ho, Wo, Cout), jnp.float32),
        grid=grid,
        in_specs=in_specs,
        out_specs=pl.BlockSpec((Nb, Ho, Wo, Cout), lambda n: (n, 0, 0, 0)),
        scratch_shapes=scratch,
        compiler_params=pltpu.CompilerParams(
            dimension_semantics=("parallel",),
            vmem_limit_bytes=48 * 1024 * 1024),
    )(*inputs, w1a, w2a, w1b, w2b, bn)
    return out


# ----------------------------------------------------------------------------
# Pure-JAX reference (lax.conv) for verification
# ----------------------------------------------------------------------------
def _conv_ref(x, w, stride, pad):
    return lax.conv_general_dilated(
        x, w, (stride, stride), ((pad, pad), (pad, pad)),
        dimension_numbers=("NHWC", "HWIO", "NHWC"),
        precision=lax.Precision.HIGHEST)


def _bn_ref(x, scale, bias):
    return x * scale.reshape(1, 1, 1, -1) + bias.reshape(1, 1, 1, -1)


def resnet_layer_ref(x, p, stride):
    y = jax.nn.relu(_bn_ref(_conv_ref(x, p["w1a"], stride, 1), p["s1a"], p["b1a"]))
    y = _conv_ref(y, p["w2a"], 1, 1)
    res = x if stride == 1 else _conv_ref(x, p["wds"], stride, 0)
    b = y + res
    inter = b
    b = jax.nn.relu(_bn_ref(b, p["s_outa"], p["b_outa"]))
    b = jax.nn.relu(_bn_ref(_conv_ref(b, p["w1b"], 1, 1), p["s1b"], p["b1b"]))
    b = _conv_ref(b, p["w2b"], 1, 1)
    b = b + inter
    return jax.nn.relu(_bn_ref(b, p["s_outb"], p["b_outb"]))


# ----------------------------------------------------------------------------
# Deterministic parameter construction (synthetic, shapes from __init__)
# ----------------------------------------------------------------------------
def _make_bn(key, c, eps=1e-3):
    k1, k2, k3, k4 = jax.random.split(key, 4)
    gamma = jax.random.uniform(k1, (c,), jnp.float32, 0.5, 1.5)
    beta = 0.1 * jax.random.normal(k2, (c,), jnp.float32)
    mean = 0.1 * jax.random.normal(k3, (c,), jnp.float32)
    var = jax.random.uniform(k4, (c,), jnp.float32, 0.5, 1.5)
    scale = gamma / jnp.sqrt(var + eps)
    bias = beta - mean * scale
    return scale.reshape(1, c), bias.reshape(1, c)


def make_params(key, cin, cout):
    ks = jax.random.split(key, 9)
    p = {}
    p["w1a"] = 0.1 * jax.random.normal(ks[0], (3, 3, cin, cout), jnp.float32)
    p["w2a"] = 0.1 * jax.random.normal(ks[1], (3, 3, cout, cout), jnp.float32)
    p["wds"] = 0.1 * jax.random.normal(ks[2], (1, 1, cin, cout), jnp.float32)
    p["w1b"] = 0.1 * jax.random.normal(ks[3], (3, 3, cout, cout), jnp.float32)
    p["w2b"] = 0.1 * jax.random.normal(ks[4], (3, 3, cout, cout), jnp.float32)
    p["s1a"], p["b1a"] = _make_bn(ks[5], cout)
    p["s_outa"], p["b_outa"] = _make_bn(ks[6], cout)
    p["s1b"], p["b1b"] = _make_bn(ks[7], cout)
    p["s_outb"], p["b_outb"] = _make_bn(ks[8], cout)
    return p


# ----------------------------------------------------------------------------
if __name__ == "__main__":
    root = jax.random.PRNGKey(0)

    # (stride, inplanes, outplanes): stride=2 exercises the fused 1x1 downsample
    # branch (polyphase path), stride=1 the identity-residual / in-kernel-pad
    # path.  batch=4 exercises batch folding (Nb=2) with 2 parallel grid steps.
    configs = [(2, 4, 8), (1, 8, 8)]
    for i, (stride, cin, cout) in enumerate(configs):
        kx, kp = jax.random.split(jax.random.fold_in(root, i))
        # PyTorch-style NCHW input, transposed to NHWC for the TPU kernel.
        x_nchw = jax.random.normal(kx, (4, cin, 16, 16), jnp.float32)
        x = jnp.transpose(x_nchw, (0, 2, 3, 1))  # NCHW -> NHWC
        params = make_params(kp, cin, cout)

        ref = jax.block_until_ready(resnet_layer_ref(x, params, stride))

        # f32 path (correctness), bf16 path (optimized: half the HBM/VMEM bytes,
        # bf16 MXU inputs with f32 accumulation).
        for dtype, tol in ((jnp.float32, 2e-2), (jnp.bfloat16, 6e-2)):
            out = resnet_layer_forward(x, params, stride, compute_dtype=dtype)
            out = jax.block_until_ready(out)
            assert out.shape == ref.shape, (out.shape, ref.shape)
            err = float(jnp.max(jnp.abs(out - ref)))
            assert jnp.allclose(out, ref, rtol=tol, atol=tol), (str(dtype), err)

    print("KERNEL_OK")
</pallas_src>

<mosaic_0001>
module attributes {stable_mosaic.version = 11 : i64} {
  func.func @_resnet_layer_kernel(%arg0: i32, %arg1: memref<2x9x9x4xf32, #tpu.memory_space<vmem>>, %arg2: memref<2x9x9x4xf32, #tpu.memory_space<vmem>>, %arg3: memref<2x9x9x4xf32, #tpu.memory_space<vmem>>, %arg4: memref<2x9x9x4xf32, #tpu.memory_space<vmem>>, %arg5: memref<4x8xf32, #tpu.memory_space<vmem>>, %arg6: memref<9x4x8xf32, #tpu.memory_space<vmem>>, %arg7: memref<9x8x8xf32, #tpu.memory_space<vmem>>, %arg8: memref<9x8x8xf32, #tpu.memory_space<vmem>>, %arg9: memref<9x8x8xf32, #tpu.memory_space<vmem>>, %arg10: memref<8x8xf32, #tpu.memory_space<vmem>>, %arg11: memref<2x8x8x8xf32, #tpu.memory_space<vmem>>, %arg12: memref<2x10x10x8xf32, #tpu.memory_space<vmem>>) attributes {dimension_semantics = [#tpu.dimension_semantics<parallel>], iteration_bounds = array<i64: 2>, scalar_prefetch = 0 : i64, scratch_operands = 1 : i64, tpu.core_type = #tpu.core_type<tc>, window_params = [{transform_indices = @transform_0, window_bounds = array<i64: 2, 9, 9, 4>}, {transform_indices = @transform_1, window_bounds = array<i64: 2, 9, 9, 4>}, {transform_indices = @transform_2, window_bounds = array<i64: 2, 9, 9, 4>}, {transform_indices = @transform_3, window_bounds = array<i64: 2, 9, 9, 4>}, {pipeline_mode = #tpu.pipeline_mode<synchronous>, transform_indices = @transform_4, window_bounds = array<i64: 4, 8>}, {pipeline_mode = #tpu.pipeline_mode<synchronous>, transform_indices = @transform_5, window_bounds = array<i64: 9, 4, 8>}, {pipeline_mode = #tpu.pipeline_mode<synchronous>, transform_indices = @transform_6, window_bounds = array<i64: 9, 8, 8>}, {pipeline_mode = #tpu.pipeline_mode<synchronous>, transform_indices = @transform_7, window_bounds = array<i64: 9, 8, 8>}, {pipeline_mode = #tpu.pipeline_mode<synchronous>, transform_indices = @transform_8, window_bounds = array<i64: 9, 8, 8>}, {pipeline_mode = #tpu.pipeline_mode<synchronous>, transform_indices = @transform_9, window_bounds = array<i64: 8, 8>}, {transform_indices = @transform_10, window_bounds = array<i64: 2, 8, 8, 8>}]} {
    %cst = arith.constant 0.000000e+00 : f32
    %0 = vector.broadcast %cst : f32 to vector<2x1x10x8xf32>
    %c0 = arith.constant 0 : index
    %c0_0 = arith.constant 0 : index
    %c0_1 = arith.constant 0 : index
    %c0_2 = arith.constant 0 : index
    %1 = vector.load %arg12[%c0, %c0_0, %c0_1, %c0_2] : memref<2x10x10x8xf32, #tpu.memory_space<vmem>>, vector<2x1x10x8xf32>
    tpu.vector_store %arg12[%c0, %c0_0, %c0_1, %c0_2], %0 {strides = array<i32>} : memref<2x10x10x8xf32, #tpu.memory_space<vmem>>, vector<2x1x10x8xf32>,
    %cst_3 = arith.constant 0.000000e+00 : f32
    %2 = vector.broadcast %cst_3 : f32 to vector<2x1x10x8xf32>
    %c0_4 = arith.constant 0 : index
    %c9 = arith.constant 9 : index
    %c0_5 = arith.constant 0 : index
    %c0_6 = arith.constant 0 : index
    %3 = vector.load %arg12[%c0_4, %c9, %c0_5, %c0_6] : memref<2x10x10x8xf32, #tpu.memory_space<vmem>>, vector<2x1x10x8xf32>
    tpu.vector_store %arg12[%c0_4, %c9, %c0_5, %c0_6], %2 {strides = array<i32>} : memref<2x10x10x8xf32, #tpu.memory_space<vmem>>, vector<2x1x10x8xf32>,
    %cst_7 = arith.constant 0.000000e+00 : f32
    %4 = vector.broadcast %cst_7 : f32 to vector<2x10x1x8xf32>
    %c0_8 = arith.constant 0 : index
    %c0_9 = arith.constant 0 : index
    %c0_10 = arith.constant 0 : index
    %c0_11 = arith.constant 0 : index
    %5 = vector.load %arg12[%c0_8, %c0_9, %c0_10, %c0_11] : memref<2x10x10x8xf32, #tpu.memory_space<vmem>>, vector<2x10x1x8xf32>
    tpu.vector_store %arg12[%c0_8, %c0_9, %c0_10, %c0_11], %4 {strides = array<i32>} : memref<2x10x10x8xf32, #tpu.memory_space<vmem>>, vector<2x10x1x8xf32>,
    %cst_12 = arith.constant 0.000000e+00 : f32
    %6 = vector.broadcast %cst_12 : f32 to vector<2x10x1x8xf32>
    %c0_13 = arith.constant 0 : index
    %c0_14 = arith.constant 0 : index
    %c9_15 = arith.constant 9 : index
    %c0_16 = arith.constant 0 : index
    %7 = vector.load %arg12[%c0_13, %c0_14, %c9_15, %c0_16] : memref<2x10x10x8xf32, #tpu.memory_space<vmem>>, vector<2x10x1x8xf32>
    tpu.vector_store %arg12[%c0_13, %c0_14, %c9_15, %c0_16], %6 {strides = array<i32>} : memref<2x10x10x8xf32, #tpu.memory_space<vmem>>, vector<2x10x1x8xf32>,
    %c0_17 = arith.constant 0 : index
    %c0_18 = arith.constant 0 : index
    %c0_19 = arith.constant 0 : index
    %c0_20 = arith.constant 0 : index
    %8 = vector.load %arg1[%c0_17, %c0_18, %c0_19, %c0_20] : memref<2x9x9x4xf32, #tpu.memory_space<vmem>>, vector<2x8x8x4xf32>
    %9 = vector.shape_cast %8 : vector<2x8x8x4xf32> to vector<128x4xf32>
    %c0_21 = arith.constant 0 : index
    %c0_22 = arith.constant 0 : index
    %c0_23 = arith.constant 0 : index
    %10 = vector.load %arg6[%c0_21, %c0_22, %c0_23] : memref<9x4x8xf32, #tpu.memory_space<vmem>>, vector<1x4x8xf32>
    %11 = vector.shape_cast %10 : vector<1x4x8xf32> to vector<4x8xf32>
    %cst_24 = arith.constant dense<0.000000e+00> : vector<128x8xf32>
    %12 = tpu.matmul %9, %11, %cst_24 {dimension_numbers = #tpu.dot_dimension_numbers<[1], [0], [0], [1], [0, 0, 1, 1], [], []>} : vector<128x4xf32>, vector<4x8xf32>, vector<128x8xf32> -> vector<128x8xf32>
    %c0_25 = arith.constant 0 : index
    %c0_26 = arith.constant 0 : index
    %c0_27 = arith.constant 0 : index
    %c0_28 = arith.constant 0 : index
    %13 = vector.load %arg2[%c0_25, %c0_26, %c0_27, %c0_28] : memref<2x9x9x4xf32, #tpu.memory_space<vmem>>, vector<2x8x8x4xf32>
    %14 = vector.shape_cast %13 : vector<2x8x8x4xf32> to vector<128x4xf32>
    %c1 = arith.constant 1 : index
    %c0_29 = arith.constant 0 : index
    %c0_30 = arith.constant 0 : index
    %15 = vector.load %arg6[%c1, %c0_29, %c0_30] : memref<9x4x8xf32, #tpu.memory_space<vmem>>, vector<1x4x8xf32>
    %16 = vector.shape_cast %15 : vector<1x4x8xf32> to vector<4x8xf32>
    %cst_31 = arith.constant dense<0.000000e+00> : vector<128x8xf32>
    %17 = tpu.matmul %14, %16, %cst_31 {dimension_numbers = #tpu.dot_dimension_numbers<[1], [0], [0], [1], [0, 0, 1, 1], [], []>} : vector<128x4xf32>, vector<4x8xf32>, vector<128x8xf32> -> vector<128x8xf32>
    %18 = arith.addf %12, %17 : vector<128x8xf32>
    %c0_32 = arith.constant 0 : index
    %c0_33 = arith.constant 0 : index
    %c1_34 = arith.constant 1 : index
    %c0_35 = arith.constant 0 : index
    %19 = vector.load %arg1[%c0_32, %c0_33, %c1_34, %c0_35] : memref<2x9x9x4xf32, #tpu.memory_space<vmem>>, vector<2x8x8x4xf32>
    %20 = vector.shape_cast %19 : vector<2x8x8x4xf32> to vector<128x4xf32>
    %c2 = arith.constant 2 : index
    %c0_36 = arith.constant 0 : index
    %c0_37 = arith.constant 0 : index
    %21 = vector.load %arg6[%c2, %c0_36, %c0_37] : memref<9x4x8xf32, #tpu.memory_space<vmem>>, vector<1x4x8xf32>
    %22 = vector.shape_cast %21 : vector<1x4x8xf32> to vector<4x8xf32>
    %cst_38 = arith.constant dense<0.000000e+00> : vector<128x8xf32>
    %23 = tpu.matmul %20, %22, %cst_38 {dimension_numbers = #tpu.dot_dimension_numbers<[1], [0], [0], [1], [0, 0, 1, 1], [], []>} : vector<128x4xf32>, vector<4x8xf32>, vector<128x8xf32> -> vector<128x8xf32>
    %24 = arith.addf %18, %23 : vector<128x8xf32>
    %c0_39 = arith.constant 0 : index
    %c0_40 = arith.constant 0 : index
    %c0_41 = arith.constant 0 : index
    %c0_42 = arith.constant 0 : index
    %25 = vector.load %arg3[%c0_39, %c0_40, %c0_41, %c0_42] : memref<2x9x9x4xf32, #tpu.memory_space<vmem>>, vector<2x8x8x4xf32>
    %26 = vector.shape_cast %25 : vector<2x8x8x4xf32> to vector<128x4xf32>
    %c3 = arith.constant 3 : index
    %c0_43 = arith.constant 0 : index
    %c0_44 = arith.constant 0 : index
    %27 = vector.load %arg6[%c3, %c0_43, %c0_44] : memref<9x4x8xf32, #tpu.memory_space<vmem>>, vector<1x4x8xf32>
    %28 = vector.shape_cast %27 : vector<1x4x8xf32> to vector<4x8xf32>
    %cst_45 = arith.constant dense<0.000000e+00> : vector<128x8xf32>
    %29 = tpu.matmul %26, %28, %cst_45 {dimension_numbers = #tpu.dot_dimension_numbers<[1], [0], [0], [1], [0, 0, 1, 1], [], []>} : vector<128x4xf32>, vector<4x8xf32>, vector<128x8xf32> -> vector<128x8xf32>
    %30 = arith.addf %24, %29 : vector<128x8xf32>
    %c0_46 = arith.constant 0 : index
    %c0_47 = arith.constant 0 : index
    %c0_48 = arith.constant 0 : index
    %c0_49 = arith.constant 0 : index
    %31 = vector.load %arg4[%c0_46, %c0_47, %c0_48, %c0_49] : memref<2x9x9x4xf32, #tpu.memory_space<vmem>>, vector<2x8x8x4xf32>
    %32 = vector.shape_cast %31 : vector<2x8x8x4xf32> to vector<128x4xf32>
    %c4 = arith.constant 4 : index
    %c0_50 = arith.constant 0 : index
    %c0_51 = arith.constant 0 : index
    %33 = vector.load %arg6[%c4, %c0_50, %c0_51] : memref<9x4x8xf32, #tpu.memory_space<vmem>>, vector<1x4x8xf32>
    %34 = vector.shape_cast %33 : vector<1x4x8xf32> to vector<4x8xf32>
    %cst_52 = arith.constant dense<0.000000e+00> : vector<128x8xf32>
    %35 = tpu.matmul %32, %34, %cst_52 {dimension_numbers = #tpu.dot_dimension_numbers<[1], [0], [0], [1], [0, 0, 1, 1], [], []>} : vector<128x4xf32>, vector<4x8xf32>, vector<128x8xf32> -> vector<128x8xf32>
    %36 = arith.addf %30, %35 : vector<128x8xf32>
    %c0_53 = arith.constant 0 : index
    %c0_54 = arith.constant 0 : index
    %c1_55 = arith.constant 1 : index
    %c0_56 = arith.constant 0 : index
    %37 = vector.load %arg3[%c0_53, %c0_54, %c1_55, %c0_56] : memref<2x9x9x4xf32, #tpu.memory_space<vmem>>, vector<2x8x8x4xf32>
    %38 = vector.shape_cast %37 : vector<2x8x8x4xf32> to vector<128x4xf32>
    %c5 = arith.constant 5 : index
    %c0_57 = arith.constant 0 : index
    %c0_58 = arith.constant 0 : index
    %39 = vector.load %arg6[%c5, %c0_57, %c0_58] : memref<9x4x8xf32, #tpu.memory_space<vmem>>, vector<1x4x8xf32>
    %40 = vector.shape_cast %39 : vector<1x4x8xf32> to vector<4x8xf32>
    %cst_59 = arith.constant dense<0.000000e+00> : vector<128x8xf32>
    %41 = tpu.matmul %38, %40, %cst_59 {dimension_numbers = #tpu.dot_dimension_numbers<[1], [0], [0], [1], [0, 0, 1, 1], [], []>} : vector<128x4xf32>, vector<4x8xf32>, vector<128x8xf32> -> vector<128x8xf32>
    %42 = arith.addf %36, %41 : vector<128x8xf32>
    %c0_60 = arith.constant 0 : index
    %c1_61 = arith.constant 1 : index
    %c0_62 = arith.constant 0 : index
    %c0_63 = arith.constant 0 : index
    %43 = vector.load %arg1[%c0_60, %c1_61, %c0_62, %c0_63] : memref<2x9x9x4xf32, #tpu.memory_space<vmem>>, vector<2x8x8x4xf32>
    %44 = vector.shape_cast %43 : vector<2x8x8x4xf32> to vector<128x4xf32>
    %c6 = arith.constant 6 : index
    %c0_64 = arith.constant 0 : index
    %c0_65 = arith.constant 0 : index
    %45 = vector.load %arg6[%c6, %c0_64, %c0_65] : memref<9x4x8xf32, #tpu.memory_space<vmem>>, vector<1x4x8xf32>
    %46 = vector.shape_cast %45 : vector<1x4x8xf32> to vector<4x8xf32>
    %cst_66 = arith.constant dense<0.000000e+00> : vector<128x8xf32>
    %47 = tpu.matmul %44, %46, %cst_66 {dimension_numbers = #tpu.dot_dimension_numbers<[1], [0], [0], [1], [0, 0, 1, 1], [], []>} : vector<128x4xf32>, vector<4x8xf32>, vector<128x8xf32> -> vector<128x8xf32>
    %48 = arith.addf %42, %47 : vector<128x8xf32>
    %c0_67 = arith.constant 0 : index
    %c1_68 = arith.constant 1 : index
    %c0_69 = arith.constant 0 : index
    %c0_70 = arith.constant 0 : index
    %49 = vector.load %arg2[%c0_67, %c1_68, %c0_69, %c0_70] : memref<2x9x9x4xf32, #tpu.memory_space<vmem>>, vector<2x8x8x4xf32>
    %50 = vector.shape_cast %49 : vector<2x8x8x4xf32> to vector<128x4xf32>
    %c7 = arith.constant 7 : index
    %c0_71 = arith.constant 0 : index
    %c0_72 = arith.constant 0 : index
    %51 = vector.load %arg6[%c7, %c0_71, %c0_72] : memref<9x4x8xf32, #tpu.memory_space<vmem>>, vector<1x4x8xf32>
    %52 = vector.shape_cast %51 : vector<1x4x8xf32> to vector<4x8xf32>
    %cst_73 = arith.constant dense<0.000000e+00> : vector<128x8xf32>
    %53 = tpu.matmul %50, %52, %cst_73 {dimension_numbers = #tpu.dot_dimension_numbers<[1], [0], [0], [1], [0, 0, 1, 1], [], []>} : vector<128x4xf32>, vector<4x8xf32>, vector<128x8xf32> -> vector<128x8xf32>
    %54 = arith.addf %48, %53 : vector<128x8xf32>
    %c0_74 = arith.constant 0 : index
    %c1_75 = arith.constant 1 : index
    %c1_76 = arith.constant 1 : index
    %c0_77 = arith.constant 0 : index
    %55 = vector.load %arg1[%c0_74, %c1_75, %c1_76, %c0_77] : memref<2x9x9x4xf32, #tpu.memory_space<vmem>>, vector<2x8x8x4xf32>
    %56 = vector.shape_cast %55 : vector<2x8x8x4xf32> to vector<128x4xf32>
    %c8 = arith.constant 8 : index
    %c0_78 = arith.constant 0 : index
    %c0_79 = arith.constant 0 : index
    %57 = vector.load %arg6[%c8, %c0_78, %c0_79] : memref<9x4x8xf32, #tpu.memory_space<vmem>>, vector<1x4x8xf32>
    %58 = vector.shape_cast %57 : vector<1x4x8xf32> to vector<4x8xf32>
    %cst_80 = arith.constant dense<0.000000e+00> : vector<128x8xf32>
    %59 = tpu.matmul %56, %58, %cst_80 {dimension_numbers = #tpu.dot_dimension_numbers<[1], [0], [0], [1], [0, 0, 1, 1], [], []>} : vector<128x4xf32>, vector<4x8xf32>, vector<128x8xf32> -> vector<128x8xf32>
    %60 = arith.addf %54, %59 : vector<128x8xf32>
    %c0_81 = arith.constant 0 : index
    %c0_82 = arith.constant 0 : index
    %61 = vector.load %arg10[%c0_81, %c0_82] : memref<8x8xf32, #tpu.memory_space<vmem>>, vector<1x8xf32>
    %c1_83 = arith.constant 1 : index
    %c0_84 = arith.constant 0 : index
    %62 = vector.load %arg10[%c1_83, %c0_84] : memref<8x8xf32, #tpu.memory_space<vmem>>, vector<1x8xf32>
    %63 = vector.broadcast %61 : vector<1x8xf32> to vector<128x8xf32>
    %64 = arith.mulf %60, %63 : vector<128x8xf32>
    %65 = vector.broadcast %62 : vector<1x8xf32> to vector<128x8xf32>
    %66 = arith.addf %64, %65 : vector<128x8xf32>
    %cst_85 = arith.constant 0.000000e+00 : f32
    %67 = vector.broadcast %cst_85 : f32 to vector<128x8xf32>
    %68 = arith.maximumf %66, %67 : vector<128x8xf32>
    %69 = vector.shape_cast %68 : vector<128x8xf32> to vector<2x8x8x8xf32>
    %c0_86 = arith.constant 0 : index
    %c1_87 = arith.constant 1 : index
    %c1_88 = arith.constant 1 : index
    %c0_89 = arith.constant 0 : index
    %70 = vector.load %arg12[%c0_86, %c1_87, %c1_88, %c0_89] : memref<2x10x10x8xf32, #tpu.memory_space<vmem>>, vector<2x8x8x8xf32>
    tpu.vector_store %arg12[%c0_86, %c1_87, %c1_88, %c0_89], %69 {strides = array<i32>} : memref<2x10x10x8xf32, #tpu.memory_space<vmem>>, vector<2x8x8x8xf32>,
    %c0_90 = arith.constant 0 : index
    %c0_91 = arith.constant 0 : index
    %c0_92 = arith.constant 0 : index
    %c0_93 = arith.constant 0 : index
    %71 = vector.load %arg4[%c0_90, %c0_91, %c0_92, %c0_93] : memref<2x9x9x4xf32, #tpu.memory_space<vmem>>, vector<2x8x8x4xf32>
    %72 = vector.shape_cast %71 : vector<2x8x8x4xf32> to vector<128x4xf32>
    %c0_94 = arith.constant 0 : index
    %c0_95 = arith.constant 0 : index
    %73 = vector.load %arg5[%c0_94, %c0_95] : memref<4x8xf32, #tpu.memory_space<vmem>>, vector<4x8xf32>
    %cst_96 = arith.constant dense<0.000000e+00> : vector<128x8xf32>
    %74 = tpu.matmul %72, %73, %cst_96 {dimension_numbers = #tpu.dot_dimension_numbers<[1], [0], [0], [1], [0, 0, 1, 1], [], []>} : vector<128x4xf32>, vector<4x8xf32>, vector<128x8xf32> -> vector<128x8xf32>
    %c0_97 = arith.constant 0 : index
    %c0_98 = arith.constant 0 : index
    %c0_99 = arith.constant 0 : index
    %c0_100 = arith.constant 0 : index
    %75 = vector.load %arg12[%c0_97, %c0_98, %c0_99, %c0_100] : memref<2x10x10x8xf32, #tpu.memory_space<vmem>>, vector<2x8x8x8xf32>
    %76 = vector.shape_cast %75 : vector<2x8x8x8xf32> to vector<128x8xf32>
    %c0_101 = arith.constant 0 : index
    %c0_102 = arith.constant 0 : index
    %c0_103 = arith.constant 0 : index
    %77 = vector.load %arg7[%c0_101, %c0_102, %c0_103] : memref<9x8x8xf32, #tpu.memory_space<vmem>>, vector<1x8x8xf32>
    %78 = vector.shape_cast %77 : vector<1x8x8xf32> to vector<8x8xf32>
    %cst_104 = arith.constant dense<0.000000e+00> : vector<128x8xf32>
    %79 = tpu.matmul %76, %78, %cst_104 {dimension_numbers = #tpu.dot_dimension_numbers<[1], [0], [0], [1], [0, 0, 1, 1], [], []>} : vector<128x8xf32>, vector<8x8xf32>, vector<128x8xf32> -> vector<128x8xf32>
    %c0_105 = arith.constant 0 : index
    %c0_106 = arith.constant 0 : index
    %c1_107 = arith.constant 1 : index
    %c0_108 = arith.constant 0 : index
    %80 = vector.load %arg12[%c0_105, %c0_106, %c1_107, %c0_108] : memref<2x10x10x8xf32, #tpu.memory_space<vmem>>, vector<2x8x8x8xf32>
    %81 = vector.shape_cast %80 : vector<2x8x8x8xf32> to vector<128x8xf32>
    %c1_109 = arith.constant 1 : index
    %c0_110 = arith.constant 0 : index
    %c0_111 = arith.constant 0 : index
    %82 = vector.load %arg7[%c1_109, %c0_110, %c0_111] : memref<9x8x8xf32, #tpu.memory_space<vmem>>, vector<1x8x8xf32>
    %83 = vector.shape_cast %82 : vector<1x8x8xf32> to vector<8x8xf32>
    %cst_112 = arith.constant dense<0.000000e+00> : vector<128x8xf32>
    %84 = tpu.matmul %81, %83, %cst_112 {dimension_numbers = #tpu.dot_dimension_numbers<[1], [0], [0], [1], [0, 0, 1, 1], [], []>} : vector<128x8xf32>, vector<8x8xf32>, vector<128x8xf32> -> vector<128x8xf32>
    %85 = arith.addf %79, %84 : vector<128x8xf32>
    %c0_113 = arith.constant 0 : index
    %c0_114 = arith.constant 0 : index
    %c2_115 = arith.constant 2 : index
    %c0_116 = arith.constant 0 : index
    %86 = vector.load %arg12[%c0_113, %c0_114, %c2_115, %c0_116] : memref<2x10x10x8xf32, #tpu.memory_space<vmem>>, vector<2x8x8x8xf32>
    %87 = vector.shape_cast %86 : vector<2x8x8x8xf32> to vector<128x8xf32>
    %c2_117 = arith.constant 2 : index
    %c0_118 = arith.constant 0 : index
    %c0_119 = arith.constant 0 : index
    %88 = vector.load %arg7[%c2_117, %c0_118, %c0_119] : memref<9x8x8xf32, #tpu.memory_space<vmem>>, vector<1x8x8xf32>
    %89 = vector.shape_cast %88 : vector<1x8x8xf32> to vector<8x8xf32>
    %cst_120 = arith.constant dense<0.000000e+00> : vector<128x8xf32>
    %90 = tpu.matmul %87, %89, %cst_120 {dimension_numbers = #tpu.dot_dimension_numbers<[1], [0], [0], [1], [0, 0, 1, 1], [], []>} : vector<128x8xf32>, vector<8x8xf32>, vector<128x8xf32> -> vector<128x8xf32>
    %91 = arith.addf %85, %90 : vector<128x8xf32>
    %c0_121 = arith.constant 0 : index
    %c1_122 = arith.constant 1 : index
    %c0_123 = arith.constant 0 : index
    %c0_124 = arith.constant 0 : index
    %92 = vector.load %arg12[%c0_121, %c1_122, %c0_123, %c0_124] : memref<2x10x10x8xf32, #tpu.memory_space<vmem>>, vector<2x8x8x8xf32>
    %93 = vector.shape_cast %92 : vector<2x8x8x8xf32> to vector<128x8xf32>
    %c3_125 = arith.constant 3 : index
    %c0_126 = arith.constant 0 : index
    %c0_127 = arith.constant 0 : index
    %94 = vector.load %arg7[%c3_125, %c0_126, %c0_127] : memref<9x8x8xf32, #tpu.memory_space<vmem>>, vector<1x8x8xf32>
    %95 = vector.shape_cast %94 : vector<1x8x8xf32> to vector<8x8xf32>
    %cst_128 = arith.constant dense<0.000000e+00> : vector<128x8xf32>
    %96 = tpu.matmul %93, %95, %cst_128 {dimension_numbers = #tpu.dot_dimension_numbers<[1], [0], [0], [1], [0, 0, 1, 1], [], []>} : vector<128x8xf32>, vector<8x8xf32>, vector<128x8xf32> -> vector<128x8xf32>
    %97 = arith.addf %91, %96 : vector<128x8xf32>
    %c0_129 = arith.constant 0 : index
    %c1_130 = arith.constant 1 : index
    %c1_131 = arith.constant 1 : index
    %c0_132 = arith.constant 0 : index
    %98 = vector.load %arg12[%c0_129, %c1_130, %c1_131, %c0_132] : memref<2x10x10x8xf32, #tpu.memory_space<vmem>>, vector<2x8x8x8xf32>
    %99 = vector.shape_cast %98 : vector<2x8x8x8xf32> to vector<128x8xf32>
    %c4_133 = arith.constant 4 : index
    %c0_134 = arith.constant 0 : index
    %c0_135 = arith.constant 0 : index
    %100 = vector.load %arg7[%c4_133, %c0_134, %c0_135] : memref<9x8x8xf32, #tpu.memory_space<vmem>>, vector<1x8x8xf32>
    %101 = vector.shape_cast %100 : vector<1x8x8xf32> to vector<8x8xf32>
    %cst_136 = arith.constant dense<0.000000e+00> : vector<128x8xf32>
    %102 = tpu.matmul %99, %101, %cst_136 {dimension_numbers = #tpu.dot_dimension_numbers<[1], [0], [0], [1], [0, 0, 1, 1], [], []>} : vector<128x8xf32>, vector<8x8xf32>, vector<128x8xf32> -> vector<128x8xf32>
    %103 = arith.addf %97, %102 : vector<128x8xf32>
    %c0_137 = arith.constant 0 : index
    %c1_138 = arith.constant 1 : index
    %c2_139 = arith.constant 2 : index
    %c0_140 = arith.constant 0 : index
    %104 = vector.load %arg12[%c0_137, %c1_138, %c2_139, %c0_140] : memref<2x10x10x8xf32, #tpu.memory_space<vmem>>, vector<2x8x8x8xf32>
    %105 = vector.shape_cast %104 : vector<2x8x8x8xf32> to vector<128x8xf32>
    %c5_141 = arith.constant 5 : index
    %c0_142 = arith.constant 0 : index
    %c0_143 = arith.constant 0 : index
    %106 = vector.load %arg7[%c5_141, %c0_142, %c0_143] : memref<9x8x8xf32, #tpu.memory_space<vmem>>, vector<1x8x8xf32>
    %107 = vector.shape_cast %106 : vector<1x8x8xf32> to vector<8x8xf32>
    %cst_144 = arith.constant dense<0.000000e+00> : vector<128x8xf32>
    %108 = tpu.matmul %105, %107, %cst_144 {dimension_numbers = #tpu.dot_dimension_numbers<[1], [0], [0], [1], [0, 0, 1, 1], [], []>} : vector<128x8xf32>, vector<8x8xf32>, vector<128x8xf32> -> vector<128x8xf32>
    %109 = arith.addf %103, %108 : vector<128x8xf32>
    %c0_145 = arith.constant 0 : index
    %c2_146 = arith.constant 2 : index
    %c0_147 = arith.constant 0 : index
    %c0_148 = arith.constant 0 : index
    %110 = vector.load %arg12[%c0_145, %c2_146, %c0_147, %c0_148] : memref<2x10x10x8xf32, #tpu.memory_space<vmem>>, vector<2x8x8x8xf32>
    %111 = vector.shape_cast %110 : vector<2x8x8x8xf32> to vector<128x8xf32>
    %c6_149 = arith.constant 6 : index
    %c0_150 = arith.constant 0 : index
    %c0_151 = arith.constant 0 : index
    %112 = vector.load %arg7[%c6_149, %c0_150, %c0_151] : memref<9x8x8xf32, #tpu.memory_space<vmem>>, vector<1x8x8xf32>
    %113 = vector.shape_cast %112 : vector<1x8x8xf32> to vector<8x8xf32>
    %cst_152 = arith.constant dense<0.000000e+00> : vector<128x8xf32>
    %114 = tpu.matmul %111, %113, %cst_152 {dimension_numbers = #tpu.dot_dimension_numbers<[1], [0], [0], [1], [0, 0, 1, 1], [], []>} : vector<128x8xf32>, vector<8x8xf32>, vector<128x8xf32> -> vector<128x8xf32>
    %115 = arith.addf %109, %114 : vector<128x8xf32>
    %c0_153 = arith.constant 0 : index
    %c2_154 = arith.constant 2 : index
    %c1_155 = arith.constant 1 : index
    %c0_156 = arith.constant 0 : index
    %116 = vector.load %arg12[%c0_153, %c2_154, %c1_155, %c0_156] : memref<2x10x10x8xf32, #tpu.memory_space<vmem>>, vector<2x8x8x8xf32>
    %117 = vector.shape_cast %116 : vector<2x8x8x8xf32> to vector<128x8xf32>
    %c7_157 = arith.constant 7 : index
    %c0_158 = arith.constant 0 : index
    %c0_159 = arith.constant 0 : index
    %118 = vector.load %arg7[%c7_157, %c0_158, %c0_159] : memref<9x8x8xf32, #tpu.memory_space<vmem>>, vector<1x8x8xf32>
    %119 = vector.shape_cast %118 : vector<1x8x8xf32> to vector<8x8xf32>
    %cst_160 = arith.constant dense<0.000000e+00> : vector<128x8xf32>
    %120 = tpu.matmul %117, %119, %cst_160 {dimension_numbers = #tpu.dot_dimension_numbers<[1], [0], [0], [1], [0, 0, 1, 1], [], []>} : vector<128x8xf32>, vector<8x8xf32>, vector<128x8xf32> -> vector<128x8xf32>
    %121 = arith.addf %115, %120 : vector<128x8xf32>
    %c0_161 = arith.constant 0 : index
    %c2_162 = arith.constant 2 : index
    %c2_163 = arith.constant 2 : index
    %c0_164 = arith.constant 0 : index
    %122 = vector.load %arg12[%c0_161, %c2_162, %c2_163, %c0_164] : memref<2x10x10x8xf32, #tpu.memory_space<vmem>>, vector<2x8x8x8xf32>
    %123 = vector.shape_cast %122 : vector<2x8x8x8xf32> to vector<128x8xf32>
    %c8_165 = arith.constant 8 : index
    %c0_166 = arith.constant 0 : index
    %c0_167 = arith.constant 0 : index
    %124 = vector.load %arg7[%c8_165, %c0_166, %c0_167] : memref<9x8x8xf32, #tpu.memory_space<vmem>>, vector<1x8x8xf32>
    %125 = vector.shape_cast %124 : vector<1x8x8xf32> to vector<8x8xf32>
    %cst_168 = arith.constant dense<0.000000e+00> : vector<128x8xf32>
    %126 = tpu.matmul %123, %125, %cst_168 {dimension_numbers = #tpu.dot_dimension_numbers<[1], [0], [0], [1], [0, 0, 1, 1], [], []>} : vector<128x8xf32>, vector<8x8xf32>, vector<128x8xf32> -> vector<128x8xf32>
    %127 = arith.addf %121, %126 : vector<128x8xf32>
    %128 = arith.addf %127, %74 : vector<128x8xf32>
    %c2_169 = arith.constant 2 : index
    %c0_170 = arith.constant 0 : index
    %129 = vector.load %arg10[%c2_169, %c0_170] : memref<8x8xf32, #tpu.memory_space<vmem>>, vector<1x8xf32>
    %c3_171 = arith.constant 3 : index
    %c0_172 = arith.constant 0 : index
    %130 = vector.load %arg10[%c3_171, %c0_172] : memref<8x8xf32, #tpu.memory_space<vmem>>, vector<1x8xf32>
    %131 = vector.broadcast %129 : vector<1x8xf32> to vector<128x8xf32>
    %132 = arith.mulf %128, %131 : vector<128x8xf32>
    %133 = vector.broadcast %130 : vector<1x8xf32> to vector<128x8xf32>
    %134 = arith.addf %132, %133 : vector<128x8xf32>
    %cst_173 = arith.constant 0.000000e+00 : f32
    %135 = vector.broadcast %cst_173 : f32 to vector<128x8xf32>
    %136 = arith.maximumf %134, %135 : vector<128x8xf32>
    %137 = vector.shape_cast %136 : vector<128x8xf32> to vector<2x8x8x8xf32>
    %c0_174 = arith.constant 0 : index
    %c1_175 = arith.constant 1 : index
    %c1_176 = arith.constant 1 : index
    %c0_177 = arith.constant 0 : index
    %138 = vector.load %arg12[%c0_174, %c1_175, %c1_176, %c0_177] : memref<2x10x10x8xf32, #tpu.memory_space<vmem>>, vector<2x8x8x8xf32>
    tpu.vector_store %arg12[%c0_174, %c1_175, %c1_176, %c0_177], %137 {strides = array<i32>} : memref<2x10x10x8xf32, #tpu.memory_space<vmem>>, vector<2x8x8x8xf32>,
    %c0_178 = arith.constant 0 : index
    %c0_179 = arith.constant 0 : index
    %c0_180 = arith.constant 0 : index
    %c0_181 = arith.constant 0 : index
    %139 = vector.load %arg12[%c0_178, %c0_179, %c0_180, %c0_181] : memref<2x10x10x8xf32, #tpu.memory_space<vmem>>, vector<2x8x8x8xf32>
    %140 = vector.shape_cast %139 : vector<2x8x8x8xf32> to vector<128x8xf32>
    %c0_182 = arith.constant 0 : index
    %c0_183 = arith.constant 0 : index
    %c0_184 = arith.constant 0 : index
    %141 = vector.load %arg8[%c0_182, %c0_183, %c0_184] : memref<9x8x8xf32, #tpu.memory_space<vmem>>, vector<1x8x8xf32>
    %142 = vector.shape_cast %141 : vector<1x8x8xf32> to vector<8x8xf32>
    %cst_185 = arith.constant dense<0.000000e+00> : vector<128x8xf32>
    %143 = tpu.matmul %140, %142, %cst_185 {dimension_numbers = #tpu.dot_dimension_numbers<[1], [0], [0], [1], [0, 0, 1, 1], [], []>} : vector<128x8xf32>, vector<8x8xf32>, vector<128x8xf32> -> vector<128x8xf32>
    %c0_186 = arith.constant 0 : index
    %c0_187 = arith.constant 0 : index
    %c1_188 = arith.constant 1 : index
    %c0_189 = arith.constant 0 : index
    %144 = vector.load %arg12[%c0_186, %c0_187, %c1_188, %c0_189] : memref<2x10x10x8xf32, #tpu.memory_space<vmem>>, vector<2x8x8x8xf32>
    %145 = vector.shape_cast %144 : vector<2x8x8x8xf32> to vector<128x8xf32>
    %c1_190 = arith.constant 1 : index
    %c0_191 = arith.constant 0 : index
    %c0_192 = arith.constant 0 : index
    %146 = vector.load %arg8[%c1_190, %c0_191, %c0_192] : memref<9x8x8xf32, #tpu.memory_space<vmem>>, vector<1x8x8xf32>
    %147 = vector.shape_cast %146 : vector<1x8x8xf32> to vector<8x8xf32>
    %cst_193 = arith.constant dense<0.000000e+00> : vector<128x8xf32>
    %148 = tpu.matmul %145, %147, %cst_193 {dimension_numbers = #tpu.dot_dimension_numbers<[1], [0], [0], [1], [0, 0, 1, 1], [], []>} : vector<128x8xf32>, vector<8x8xf32>, vector<128x8xf32> -> vector<128x8xf32>
    %149 = arith.addf %143, %148 : vector<128x8xf32>
    %c0_194 = arith.constant 0 : index
    %c0_195 = arith.constant 0 : index
    %c2_196 = arith.constant 2 : index
    %c0_197 = arith.constant 0 : index
    %150 = vector.load %arg12[%c0_194, %c0_195, %c2_196, %c0_197] : memref<2x10x10x8xf32, #tpu.memory_space<vmem>>, vector<2x8x8x8xf32>
    %151 = vector.shape_cast %150 : vector<2x8x8x8xf32> to vector<128x8xf32>
    %c2_198 = arith.constant 2 : index
    %c0_199 = arith.constant 0 : index
    %c0_200 = arith.constant 0 : index
    %152 = vector.load %arg8[%c2_198, %c0_199, %c0_200] : memref<9x8x8xf32, #tpu.memory_space<vmem>>, vector<1x8x8xf32>
    %153 = vector.shape_cast %152 : vector<1x8x8xf32> to vector<8x8xf32>
    %cst_201 = arith.constant dense<0.000000e+00> : vector<128x8xf32>
    %154 = tpu.matmul %151, %153, %cst_201 {dimension_numbers = #tpu.dot_dimension_numbers<[1], [0], [0], [1], [0, 0, 1, 1], [], []>} : vector<128x8xf32>, vector<8x8xf32>, vector<128x8xf32> -> vector<128x8xf32>
    %155 = arith.addf %149, %154 : vector<128x8xf32>
    %c0_202 = arith.constant 0 : index
    %c1_203 = arith.constant 1 : index
    %c0_204 = arith.constant 0 : index
    %c0_205 = arith.constant 0 : index
    %156 = vector.load %arg12[%c0_202, %c1_203, %c0_204, %c0_205] : memref<2x10x10x8xf32, #tpu.memory_space<vmem>>, vector<2x8x8x8xf32>
    %157 = vector.shape_cast %156 : vector<2x8x8x8xf32> to vector<128x8xf32>
    %c3_206 = arith.constant 3 : index
    %c0_207 = arith.constant 0 : index
    %c0_208 = arith.constant 0 : index
    %158 = vector.load %arg8[%c3_206, %c0_207, %c0_208] : memref<9x8x8xf32, #tpu.memory_space<vmem>>, vector<1x8x8xf32>
    %159 = vector.shape_cast %158 : vector<1x8x8xf32> to vector<8x8xf32>
    %cst_209 = arith.constant dense<0.000000e+00> : vector<128x8xf32>
    %160 = tpu.matmul %157, %159, %cst_209 {dimension_numbers = #tpu.dot_dimension_numbers<[1], [0], [0], [1], [0, 0, 1, 1], [], []>} : vector<128x8xf32>, vector<8x8xf32>, vector<128x8xf32> -> vector<128x8xf32>
    %161 = arith.addf %155, %160 : vector<128x8xf32>
    %c0_210 = arith.constant 0 : index
    %c1_211 = arith.constant 1 : index
    %c1_212 = arith.constant 1 : index
    %c0_213 = arith.constant 0 : index
    %162 = vector.load %arg12[%c0_210, %c1_211, %c1_212, %c0_213] : memref<2x10x10x8xf32, #tpu.memory_space<vmem>>, vector<2x8x8x8xf32>
    %163 = vector.shape_cast %162 : vector<2x8x8x8xf32> to vector<128x8xf32>
    %c4_214 = arith.constant 4 : index
    %c0_215 = arith.constant 0 : index
    %c0_216 = arith.constant 0 : index
    %164 = vector.load %arg8[%c4_214, %c0_215, %c0_216] : memref<9x8x8xf32, #tpu.memory_space<vmem>>, vector<1x8x8xf32>
    %165 = vector.shape_cast %164 : vector<1x8x8xf32> to vector<8x8xf32>
    %cst_217 = arith.constant dense<0.000000e+00> : vector<128x8xf32>
    %166 = tpu.matmul %163, %165, %cst_217 {dimension_numbers = #tpu.dot_dimension_numbers<[1], [0], [0], [1], [0, 0, 1, 1], [], []>} : vector<128x8xf32>, vector<8x8xf32>, vector<128x8xf32> -> vector<128x8xf32>
    %167 = arith.addf %161, %166 : vector<128x8xf32>
    %c0_218 = arith.constant 0 : index
    %c1_219 = arith.constant 1 : index
    %c2_220 = arith.constant 2 : index
    %c0_221 = arith.constant 0 : index
    %168 = vector.load %arg12[%c0_218, %c1_219, %c2_220, %c0_221] : memref<2x10x10x8xf32, #tpu.memory_space<vmem>>, vector<2x8x8x8xf32>
    %169 = vector.shape_cast %168 : vector<2x8x8x8xf32> to vector<128x8xf32>
    %c5_222 = arith.constant 5 : index
    %c0_223 = arith.constant 0 : index
    %c0_224 = arith.constant 0 : index
    %170 = vector.load %arg8[%c5_222, %c0_223, %c0_224] : memref<9x8x8xf32, #tpu.memory_space<vmem>>, vector<1x8x8xf32>
    %171 = vector.shape_cast %170 : vector<1x8x8xf32> to vector<8x8xf32>
    %cst_225 = arith.constant dense<0.000000e+00> : vector<128x8xf32>
    %172 = tpu.matmul %169, %171, %cst_225 {dimension_numbers = #tpu.dot_dimension_numbers<[1], [0], [0], [1], [0, 0, 1, 1], [], []>} : vector<128x8xf32>, vector<8x8xf32>, vector<128x8xf32> -> vector<128x8xf32>
    %173 = arith.addf %167, %172 : vector<128x8xf32>
    %c0_226 = arith.constant 0 : index
    %c2_227 = arith.constant 2 : index
    %c0_228 = arith.constant 0 : index
    %c0_229 = arith.constant 0 : index
    %174 = vector.load %arg12[%c0_226, %c2_227, %c0_228, %c0_229] : memref<2x10x10x8xf32, #tpu.memory_space<vmem>>, vector<2x8x8x8xf32>
    %175 = vector.shape_cast %174 : vector<2x8x8x8xf32> to vector<128x8xf32>
    %c6_230 = arith.constant 6 : index
    %c0_231 = arith.constant 0 : index
    %c0_232 = arith.constant 0 : index
    %176 = vector.load %arg8[%c6_230, %c0_231, %c0_232] : memref<9x8x8xf32, #tpu.memory_space<vmem>>, vector<1x8x8xf32>
    %177 = vector.shape_cast %176 : vector<1x8x8xf32> to vector<8x8xf32>
    %cst_233 = arith.constant dense<0.000000e+00> : vector<128x8xf32>
    %178 = tpu.matmul %175, %177, %cst_233 {dimension_numbers = #tpu.dot_dimension_numbers<[1], [0], [0], [1], [0, 0, 1, 1], [], []>} : vector<128x8xf32>, vector<8x8xf32>, vector<128x8xf32> -> vector<128x8xf32>
    %179 = arith.addf %173, %178 : vector<128x8xf32>
    %c0_234 = arith.constant 0 : index
    %c2_235 = arith.constant 2 : index
    %c1_236 = arith.constant 1 : index
    %c0_237 = arith.constant 0 : index
    %180 = vector.load %arg12[%c0_234, %c2_235, %c1_236, %c0_237] : memref<2x10x10x8xf32, #tpu.memory_space<vmem>>, vector<2x8x8x8xf32>
    %181 = vector.shape_cast %180 : vector<2x8x8x8xf32> to vector<128x8xf32>
    %c7_238 = arith.constant 7 : index
    %c0_239 = arith.constant 0 : index
    %c0_240 = arith.constant 0 : index
    %182 = vector.load %arg8[%c7_238, %c0_239, %c0_240] : memref<9x8x8xf32, #tpu.memory_space<vmem>>, vector<1x8x8xf32>
    %183 = vector.shape_cast %182 : vector<1x8x8xf32> to vector<8x8xf32>
    %cst_241 = arith.constant dense<0.000000e+00> : vector<128x8xf32>
    %184 = tpu.matmul %181, %183, %cst_241 {dimension_numbers = #tpu.dot_dimension_numbers<[1], [0], [0], [1], [0, 0, 1, 1], [], []>} : vector<128x8xf32>, vector<8x8xf32>, vector<128x8xf32> -> vector<128x8xf32>
    %185 = arith.addf %179, %184 : vector<128x8xf32>
    %c0_242 = arith.constant 0 : index
    %c2_243 = arith.constant 2 : index
    %c2_244 = arith.constant 2 : index
    %c0_245 = arith.constant 0 : index
    %186 = vector.load %arg12[%c0_242, %c2_243, %c2_244, %c0_245] : memref<2x10x10x8xf32, #tpu.memory_space<vmem>>, vector<2x8x8x8xf32>
    %187 = vector.shape_cast %186 : vector<2x8x8x8xf32> to vector<128x8xf32>
    %c8_246 = arith.constant 8 : index
    %c0_247 = arith.constant 0 : index
    %c0_248 = arith.constant 0 : index
    %188 = vector.load %arg8[%c8_246, %c0_247, %c0_248] : memref<9x8x8xf32, #tpu.memory_space<vmem>>, vector<1x8x8xf32>
    %189 = vector.shape_cast %188 : vector<1x8x8xf32> to vector<8x8xf32>
    %cst_249 = arith.constant dense<0.000000e+00> : vector<128x8xf32>
    %190 = tpu.matmul %187, %189, %cst_249 {dimension_numbers = #tpu.dot_dimension_numbers<[1], [0], [0], [1], [0, 0, 1, 1], [], []>} : vector<128x8xf32>, vector<8x8xf32>, vector<128x8xf32> -> vector<128x8xf32>
    %191 = arith.addf %185, %190 : vector<128x8xf32>
    %c4_250 = arith.constant 4 : index
    %c0_251 = arith.constant 0 : index
    %192 = vector.load %arg10[%c4_250, %c0_251] : memref<8x8xf32, #tpu.memory_space<vmem>>, vector<1x8xf32>
    %c5_252 = arith.constant 5 : index
    %c0_253 = arith.constant 0 : index
    %193 = vector.load %arg10[%c5_252, %c0_253] : memref<8x8xf32, #tpu.memory_space<vmem>>, vector<1x8xf32>
    %194 = vector.broadcast %192 : vector<1x8xf32> to vector<128x8xf32>
    %195 = arith.mulf %191, %194 : vector<128x8xf32>
    %196 = vector.broadcast %193 : vector<1x8xf32> to vector<128x8xf32>
    %197 = arith.addf %195, %196 : vector<128x8xf32>
    %cst_254 = arith.constant 0.000000e+00 : f32
    %198 = vector.broadcast %cst_254 : f32 to vector<128x8xf32>
    %199 = arith.maximumf %197, %198 : vector<128x8xf32>
    %200 = vector.shape_cast %199 : vector<128x8xf32> to vector<2x8x8x8xf32>
    %c0_255 = arith.constant 0 : index
    %c1_256 = arith.constant 1 : index
    %c1_257 = arith.constant 1 : index
    %c0_258 = arith.constant 0 : index
    %201 = vector.load %arg12[%c0_255, %c1_256, %c1_257, %c0_258] : memref<2x10x10x8xf32, #tpu.memory_space<vmem>>, vector<2x8x8x8xf32>
    tpu.vector_store %arg12[%c0_255, %c1_256, %c1_257, %c0_258], %200 {strides = array<i32>} : memref<2x10x10x8xf32, #tpu.memory_space<vmem>>, vector<2x8x8x8xf32>,
    %c0_259 = arith.constant 0 : index
    %c0_260 = arith.constant 0 : index
    %c0_261 = arith.constant 0 : index
    %c0_262 = arith.constant 0 : index
    %202 = vector.load %arg12[%c0_259, %c0_260, %c0_261, %c0_262] : memref<2x10x10x8xf32, #tpu.memory_space<vmem>>, vector<2x8x8x8xf32>
    %203 = vector.shape_cast %202 : vector<2x8x8x8xf32> to vector<128x8xf32>
    %c0_263 = arith.constant 0 : index
    %c0_264 = arith.constant 0 : index
    %c0_265 = arith.constant 0 : index
    %204 = vector.load %arg9[%c0_263, %c0_264, %c0_265] : memref<9x8x8xf32, #tpu.memory_space<vmem>>, vector<1x8x8xf32>
    %205 = vector.shape_cast %204 : vector<1x8x8xf32> to vector<8x8xf32>
    %cst_266 = arith.constant dense<0.000000e+00> : vector<128x8xf32>
    %206 = tpu.matmul %203, %205, %cst_266 {dimension_numbers = #tpu.dot_dimension_numbers<[1], [0], [0], [1], [0, 0, 1, 1], [], []>} : vector<128x8xf32>, vector<8x8xf32>, vector<128x8xf32> -> vector<128x8xf32>
    %c0_267 = arith.constant 0 : index
    %c0_268 = arith.constant 0 : index
    %c1_269 = arith.constant 1 : index
    %c0_270 = arith.constant 0 : index
    %207 = vector.load %arg12[%c0_267, %c0_268, %c1_269, %c0_270] : memref<2x10x10x8xf32, #tpu.memory_space<vmem>>, vector<2x8x8x8xf32>
    %208 = vector.shape_cast %207 : vector<2x8x8x8xf32> to vector<128x8xf32>
    %c1_271 = arith.constant 1 : index
    %c0_272 = arith.constant 0 : index
    %c0_273 = arith.constant 0 : index
    %209 = vector.load %arg9[%c1_271, %c0_272, %c0_273] : memref<9x8x8xf32, #tpu.memory_space<vmem>>, vector<1x8x8xf32>
    %210 = vector.shape_cast %209 : vector<1x8x8xf32> to vector<8x8xf32>
    %cst_274 = arith.constant dense<0.000000e+00> : vector<128x8xf32>
    %211 = tpu.matmul %208, %210, %cst_274 {dimension_numbers = #tpu.dot_dimension_numbers<[1], [0], [0], [1], [0, 0, 1, 1], [], []>} : vector<128x8xf32>, vector<8x8xf32>, vector<128x8xf32> -> vector<128x8xf32>
    %212 = arith.addf %206, %211 : vector<128x8xf32>
    %c0_275 = arith.constant 0 : index
    %c0_276 = arith.constant 0 : index
    %c2_277 = arith.constant 2 : index
    %c0_278 = arith.constant 0 : index
    %213 = vector.load %arg12[%c0_275, %c0_276, %c2_277, %c0_278] : memref<2x10x10x8xf32, #tpu.memory_space<vmem>>, vector<2x8x8x8xf32>
    %214 = vector.shape_cast %213 : vector<2x8x8x8xf32> to vector<128x8xf32>
    %c2_279 = arith.constant 2 : index
    %c0_280 = arith.constant 0 : index
    %c0_281 = arith.constant 0 : index
    %215 = vector.load %arg9[%c2_279, %c0_280, %c0_281] : memref<9x8x8xf32, #tpu.memory_space<vmem>>, vector<1x8x8xf32>
    %216 = vector.shape_cast %215 : vector<1x8x8xf32> to vector<8x8xf32>
    %cst_282 = arith.constant dense<0.000000e+00> : vector<128x8xf32>
    %217 = tpu.matmul %214, %216, %cst_282 {dimension_numbers = #tpu.dot_dimension_numbers<[1], [0], [0], [1], [0, 0, 1, 1], [], []>} : vector<128x8xf32>, vector<8x8xf32>, vector<128x8xf32> -> vector<128x8xf32>
    %218 = arith.addf %212, %217 : vector<128x8xf32>
    %c0_283 = arith.constant 0 : index
    %c1_284 = arith.constant 1 : index
    %c0_285 = arith.constant 0 : index
    %c0_286 = arith.constant 0 : index
    %219 = vector.load %arg12[%c0_283, %c1_284, %c0_285, %c0_286] : memref<2x10x10x8xf32, #tpu.memory_space<vmem>>, vector<2x8x8x8xf32>
    %220 = vector.shape_cast %219 : vector<2x8x8x8xf32> to vector<128x8xf32>
    %c3_287 = arith.constant 3 : index
    %c0_288 = arith.constant 0 : index
    %c0_289 = arith.constant 0 : index
    %221 = vector.load %arg9[%c3_287, %c0_288, %c0_289] : memref<9x8x8xf32, #tpu.memory_space<vmem>>, vector<1x8x8xf32>
    %222 = vector.shape_cast %221 : vector<1x8x8xf32> to vector<8x8xf32>
    %cst_290 = arith.constant dense<0.000000e+00> : vector<128x8xf32>
    %223 = tpu.matmul %220, %222, %cst_290 {dimension_numbers = #tpu.dot_dimension_numbers<[1], [0], [0], [1], [0, 0, 1, 1], [], []>} : vector<128x8xf32>, vector<8x8xf32>, vector<128x8xf32> -> vector<128x8xf32>
    %224 = arith.addf %218, %223 : vector<128x8xf32>
    %c0_291 = arith.constant 0 : index
    %c1_292 = arith.constant 1 : index
    %c1_293 = arith.constant 1 : index
    %c0_294 = arith.constant 0 : index
    %225 = vector.load %arg12[%c0_291, %c1_292, %c1_293, %c0_294] : memref<2x10x10x8xf32, #tpu.memory_space<vmem>>, vector<2x8x8x8xf32>
    %226 = vector.shape_cast %225 : vector<2x8x8x8xf32> to vector<128x8xf32>
    %c4_295 = arith.constant 4 : index
    %c0_296 = arith.constant 0 : index
    %c0_297 = arith.constant 0 : index
    %227 = vector.load %arg9[%c4_295, %c0_296, %c0_297] : memref<9x8x8xf32, #tpu.memory_space<vmem>>, vector<1x8x8xf32>
    %228 = vector.shape_cast %227 : vector<1x8x8xf32> to vector<8x8xf32>
    %cst_298 = arith.constant dense<0.000000e+00> : vector<128x8xf32>
    %229 = tpu.matmul %226, %228, %cst_298 {dimension_numbers = #tpu.dot_dimension_numbers<[1], [0], [0], [1], [0, 0, 1, 1], [], []>} : vector<128x8xf32>, vector<8x8xf32>, vector<128x8xf32> -> vector<128x8xf32>
    %230 = arith.addf %224, %229 : vector<128x8xf32>
    %c0_299 = arith.constant 0 : index
    %c1_300 = arith.constant 1 : index
    %c2_301 = arith.constant 2 : index
    %c0_302 = arith.constant 0 : index
    %231 = vector.load %arg12[%c0_299, %c1_300, %c2_301, %c0_302] : memref<2x10x10x8xf32, #tpu.memory_space<vmem>>, vector<2x8x8x8xf32>
    %232 = vector.shape_cast %231 : vector<2x8x8x8xf32> to vector<128x8xf32>
    %c5_303 = arith.constant 5 : index
    %c0_304 = arith.constant 0 : index
    %c0_305 = arith.constant 0 : index
    %233 = vector.load %arg9[%c5_303, %c0_304, %c0_305] : memref<9x8x8xf32, #tpu.memory_space<vmem>>, vector<1x8x8xf32>
    %234 = vector.shape_cast %233 : vector<1x8x8xf32> to vector<8x8xf32>
    %cst_306 = arith.constant dense<0.000000e+00> : vector<128x8xf32>
    %235 = tpu.matmul %232, %234, %cst_306 {dimension_numbers = #tpu.dot_dimension_numbers<[1], [0], [0], [1], [0, 0, 1, 1], [], []>} : vector<128x8xf32>, vector<8x8xf32>, vector<128x8xf32> -> vector<128x8xf32>
    %236 = arith.addf %230, %235 : vector<128x8xf32>
    %c0_307 = arith.constant 0 : index
    %c2_308 = arith.constant 2 : index
    %c0_309 = arith.constant 0 : index
    %c0_310 = arith.constant 0 : index
    %237 = vector.load %arg12[%c0_307, %c2_308, %c0_309, %c0_310] : memref<2x10x10x8xf32, #tpu.memory_space<vmem>>, vector<2x8x8x8xf32>
    %238 = vector.shape_cast %237 : vector<2x8x8x8xf32> to vector<128x8xf32>
    %c6_311 = arith.constant 6 : index
    %c0_312 = arith.constant 0 : index
    %c0_313 = arith.constant 0 : index
    %239 = vector.load %arg9[%c6_311, %c0_312, %c0_313] : memref<9x8x8xf32, #tpu.memory_space<vmem>>, vector<1x8x8xf32>
    %240 = vector.shape_cast %239 : vector<1x8x8xf32> to vector<8x8xf32>
    %cst_314 = arith.constant dense<0.000000e+00> : vector<128x8xf32>
    %241 = tpu.matmul %238, %240, %cst_314 {dimension_numbers = #tpu.dot_dimension_numbers<[1], [0], [0], [1], [0, 0, 1, 1], [], []>} : vector<128x8xf32>, vector<8x8xf32>, vector<128x8xf32> -> vector<128x8xf32>
    %242 = arith.addf %236, %241 : vector<128x8xf32>
    %c0_315 = arith.constant 0 : index
    %c2_316 = arith.constant 2 : index
    %c1_317 = arith.constant 1 : index
    %c0_318 = arith.constant 0 : index
    %243 = vector.load %arg12[%c0_315, %c2_316, %c1_317, %c0_318] : memref<2x10x10x8xf32, #tpu.memory_space<vmem>>, vector<2x8x8x8xf32>
    %244 = vector.shape_cast %243 : vector<2x8x8x8xf32> to vector<128x8xf32>
    %c7_319 = arith.constant 7 : index
    %c0_320 = arith.constant 0 : index
    %c0_321 = arith.constant 0 : index
    %245 = vector.load %arg9[%c7_319, %c0_320, %c0_321] : memref<9x8x8xf32, #tpu.memory_space<vmem>>, vector<1x8x8xf32>
    %246 = vector.shape_cast %245 : vector<1x8x8xf32> to vector<8x8xf32>
    %cst_322 = arith.constant dense<0.000000e+00> : vector<128x8xf32>
    %247 = tpu.matmul %244, %246, %cst_322 {dimension_numbers = #tpu.dot_dimension_numbers<[1], [0], [0], [1], [0, 0, 1, 1], [], []>} : vector<128x8xf32>, vector<8x8xf32>, vector<128x8xf32> -> vector<128x8xf32>
    %248 = arith.addf %242, %247 : vector<128x8xf32>
    %c0_323 = arith.constant 0 : index
    %c2_324 = arith.constant 2 : index
    %c2_325 = arith.constant 2 : index
    %c0_326 = arith.constant 0 : index
    %249 = vector.load %arg12[%c0_323, %c2_324, %c2_325, %c0_326] : memref<2x10x10x8xf32, #tpu.memory_space<vmem>>, vector<2x8x8x8xf32>
    %250 = vector.shape_cast %249 : vector<2x8x8x8xf32> to vector<128x8xf32>
    %c8_327 = arith.constant 8 : index
    %c0_328 = arith.constant 0 : index
    %c0_329 = arith.constant 0 : index
    %251 = vector.load %arg9[%c8_327, %c0_328, %c0_329] : memref<9x8x8xf32, #tpu.memory_space<vmem>>, vector<1x8x8xf32>
    %252 = vector.shape_cast %251 : vector<1x8x8xf32> to vector<8x8xf32>
    %cst_330 = arith.constant dense<0.000000e+00> : vector<128x8xf32>
    %253 = tpu.matmul %250, %252, %cst_330 {dimension_numbers = #tpu.dot_dimension_numbers<[1], [0], [0], [1], [0, 0, 1, 1], [], []>} : vector<128x8xf32>, vector<8x8xf32>, vector<128x8xf32> -> vector<128x8xf32>
    %254 = arith.addf %248, %253 : vector<128x8xf32>
    %255 = arith.addf %254, %128 : vector<128x8xf32>
    %c6_331 = arith.constant 6 : index
    %c0_332 = arith.constant 0 : index
    %256 = vector.load %arg10[%c6_331, %c0_332] : memref<8x8xf32, #tpu.memory_space<vmem>>, vector<1x8xf32>
    %c7_333 = arith.constant 7 : index
    %c0_334 = arith.constant 0 : index
    %257 = vector.load %arg10[%c7_333, %c0_334] : memref<8x8xf32, #tpu.memory_space<vmem>>, vector<1x8xf32>
    %258 = vector.broadcast %256 : vector<1x8xf32> to vector<128x8xf32>
    %259 = arith.mulf %255, %258 : vector<128x8xf32>
    %260 = vector.broadcast %257 : vector<1x8xf32> to vector<128x8xf32>
    %261 = arith.addf %259, %260 : vector<128x8xf32>
    %cst_335 = arith.constant 0.000000e+00 : f32
    %262 = vector.broadcast %cst_335 : f32 to vector<128x8xf32>
    %263 = arith.maximumf %261, %262 : vector<128x8xf32>
    %264 = vector.shape_cast %263 : vector<128x8xf32> to vector<2x8x8x8xf32>
    %c0_336 = arith.constant 0 : index
    %c0_337 = arith.constant 0 : index
    %c0_338 = arith.constant 0 : index
    %c0_339 = arith.constant 0 : index
    %265 = vector.load %arg11[%c0_336, %c0_337, %c0_338, %c0_339] : memref<2x8x8x8xf32, #tpu.memory_space<vmem>>, vector<2x8x8x8xf32>
    tpu.vector_store %arg11[%c0_336, %c0_337, %c0_338, %c0_339], %264 {strides = array<i32>} : memref<2x8x8x8xf32, #tpu.memory_space<vmem>>, vector<2x8x8x8xf32>,
    return
  }
  func.func @transform_0(%arg0: i32) -> (i32, i32, i32, i32) {
    %c0_i32 = arith.constant 0 : i32
    %c0_i32_0 = arith.constant 0 : i32
    %c0_i32_1 = arith.constant 0 : i32
    %c0_i32_2 = arith.constant 0 : i32
    return %arg0, %c0_i32, %c0_i32_0, %c0_i32_1 : i32, i32, i32, i32
  }
  func.func @transform_1(%arg0: i32) -> (i32, i32, i32, i32) {
    %c0_i32 = arith.constant 0 : i32
    %c0_i32_0 = arith.constant 0 : i32
    %c0_i32_1 = arith.constant 0 : i32
    %c0_i32_2 = arith.constant 0 : i32
    return %arg0, %c0_i32, %c0_i32_0, %c0_i32_1 : i32, i32, i32, i32
  }
  func.func @transform_2(%arg0: i32) -> (i32, i32, i32, i32) {
    %c0_i32 = arith.constant 0 : i32
    %c0_i32_0 = arith.constant 0 : i32
    %c0_i32_1 = arith.constant 0 : i32
    %c0_i32_2 = arith.constant 0 : i32
    return %arg0, %c0_i32, %c0_i32_0, %c0_i32_1 : i32, i32, i32, i32
  }
  func.func @transform_3(%arg0: i32) -> (i32, i32, i32, i32) {
    %c0_i32 = arith.constant 0 : i32
    %c0_i32_0 = arith.constant 0 : i32
    %c0_i32_1 = arith.constant 0 : i32
    %c0_i32_2 = arith.constant 0 : i32
    return %arg0, %c0_i32, %c0_i32_0, %c0_i32_1 : i32, i32, i32, i32
  }
  func.func @transform_4(%arg0: i32) -> (i32, i32) {
    %c0_i32 = arith.constant 0 : i32
    %c0_i32_0 = arith.constant 0 : i32
    %c0_i32_1 = arith.constant 0 : i32
    return %c0_i32, %c0_i32_0 : i32, i32
  }
  func.func @transform_5(%arg0: i32) -> (i32, i32, i32) {
    %c0_i32 = arith.constant 0 : i32
    %c0_i32_0 = arith.constant 0 : i32
    %c0_i32_1 = arith.constant 0 : i32
    %c0_i32_2 = arith.constant 0 : i32
    return %c0_i32, %c0_i32_0, %c0_i32_1 : i32, i32, i32
  }
  func.func @transform_6(%arg0: i32) -> (i32, i32, i32) {
    %c0_i32 = arith.constant 0 : i32
    %c0_i32_0 = arith.constant 0 : i32
    %c0_i32_1 = arith.constant 0 : i32
    %c0_i32_2 = arith.constant 0 : i32
    return %c0_i32, %c0_i32_0, %c0_i32_1 : i32, i32, i32
  }
  func.func @transform_7(%arg0: i32) -> (i32, i32, i32) {
    %c0_i32 = arith.constant 0 : i32
    %c0_i32_0 = arith.constant 0 : i32
    %c0_i32_1 = arith.constant 0 : i32
    %c0_i32_2 = arith.constant 0 : i32
    return %c0_i32, %c0_i32_0, %c0_i32_1 : i32, i32, i32
  }
  func.func @transform_8(%arg0: i32) -> (i32, i32, i32) {
    %c0_i32 = arith.constant 0 : i32
    %c0_i32_0 = arith.constant 0 : i32
    %c0_i32_1 = arith.constant 0 : i32
    %c0_i32_2 = arith.constant 0 : i32
    return %c0_i32, %c0_i32_0, %c0_i32_1 : i32, i32, i32
  }
  func.func @transform_9(%arg0: i32) -> (i32, i32) {
    %c0_i32 = arith.constant 0 : i32
    %c0_i32_0 = arith.constant 0 : i32
    %c0_i32_1 = arith.constant 0 : i32
    return %c0_i32, %c0_i32_0 : i32, i32
  }
  func.func @transform_10(%arg0: i32) -> (i32, i32, i32, i32) {
    %c0_i32 = arith.constant 0 : i32
    %c0_i32_0 = arith.constant 0 : i32
    %c0_i32_1 = arith.constant 0 : i32
    %c0_i32_2 = arith.constant 0 : i32
    return %arg0, %c0_i32, %c0_i32_0, %c0_i32_1 : i32, i32, i32, i32
  }
}

</mosaic_0001>

<llo_original>
// kernel: tpu_custom_call.1
$region0: #{tpu_custom_call.1}
  #allocation0 [shape = 'u32[]', space=smem, size = 0x4, offset = 0x4, fixed_abs, tag = 'smem constant byte address 0x4 - core index']
  #allocation1 [shape = 'u32[144,128]{1,0:T(1,128)}', space=vmem, size = 0x12000, scoped, tag = 'internal scratch']
  #allocation2 [shape = 'f32[2,10,10,8]{3,2,1,0:T(8,128)}', space=vmem, size = 0x28000, scoped, tag = 'scratch operand']
  %s0 = inlined_call_operand.vmem [shape: f32[4,9,9,4], index: 0, kind: input, shape index: {}]
  %s1 = inlined_call_operand.vmem [shape: f32[4,9,9,4], index: 1, kind: input, shape index: {}]
  %s2 = inlined_call_operand.vmem [shape: f32[4,9,9,4], index: 2, kind: input, shape index: {}]
  %s3 = inlined_call_operand.vmem [shape: f32[4,9,9,4], index: 3, kind: input, shape index: {}]
  %s4 = inlined_call_operand.vmem [shape: f32[4,8], index: 4, kind: input, shape index: {}]
  %s5 = inlined_call_operand.vmem [shape: f32[9,4,8], index: 5, kind: input, shape index: {}]
  %s6 = inlined_call_operand.vmem [shape: f32[9,8,8], index: 6, kind: input, shape index: {}]
  %s7 = inlined_call_operand.vmem [shape: f32[9,8,8], index: 7, kind: input, shape index: {}]
  %s8 = inlined_call_operand.vmem [shape: f32[9,8,8], index: 8, kind: input, shape index: {}]
  %s9 = inlined_call_operand.vmem [shape: f32[8,8], index: 9, kind: input, shape index: {}]
  %s10 = inlined_call_operand.hbm [shape: f32[4,8,8,8], index: 10, kind: output, shape index: {}]
  %s11 = sld [smem:[#allocation0]]
  $region73: #{tpu_custom_call.1} parent=0
    _
  %s13 = ssub.s32 1, %s11
  %s14 = scalar_select 0, %s13, %s11
  $region1: #{tpu_custom_call.1} parent=0
    #allocation3 [shape = 'u8[131072]{0}', space=vmem, size = 0x20000, scoped, tag = 'output window, operand 0']
    #allocation4 [shape = 's32[2]{0}', space=sflag, size = 0x8, scoped, tag = 'scoped memory for tpu_custom_call.1']
    %15 = vsyncpa [#allocation4], 0
    %s16 = scalar_lea.sflag [#allocation4], 1
    %17 = vsyncpa %s16, 0
    loop: start=0, step=1, limit=4
    $region2: #{tpu_custom_call.1} parent=1 // loop_pre_header
      _
    $region3: #{tpu_custom_call.1} parent=1 // loop_header
      %s19 = sphi 0, %s23
      %p20 = scmp.ge.s32.totalorder %s19, 4
      %s29 = sphi 0, %s31
      %s32 = sphi 0, %s29
      %s33 = sphi 0, %s32
      %s49 = sphi 0, %s33
      %s55 = sphi 0, %s57
      %s58 = sphi 0, %s55
      %s59 = sphi 0, %s58
      %s75 = sphi 0, %s59
      %s81 = sphi 0, %s83
      %s84 = sphi 0, %s81
      %s85 = sphi 0, %s84
      %s101 = sphi 0, %s85
      %s107 = sphi 0, %s109
      %s110 = sphi 0, %s107
      %s111 = sphi 0, %s110
      %s127 = sphi 0, %s111
      %s131 = sphi 0, %s131
      %s133 = sphi 0, %s131
      %s134 = sphi 0, %s133
      %s148 = sphi 0, %s134
      %s152 = sphi 0, %s152
      %s154 = sphi 0, %s152
      %s155 = sphi 0, %s154
      %s169 = sphi 0, %s155
      %s173 = sphi 0, %s173
      %s175 = sphi 0, %s173
      %s176 = sphi 0, %s175
      %s190 = sphi 0, %s176
      %s194 = sphi 0, %s194
      %s196 = sphi 0, %s194
      %s197 = sphi 0, %s196
      %s211 = sphi 0, %s197
      %s215 = sphi 0, %s215
      %s217 = sphi 0, %s215
      %s218 = sphi 0, %s217
      %s232 = sphi 0, %s218
      %s236 = sphi 0, %s236
      %s238 = sphi 0, %s236
      %s239 = sphi 0, %s238
      %s253 = sphi 0, %s239
      %s259 = sphi 0, %s261
      %s262 = sphi 0, %s259
      %s263 = sphi 0, %s262
      %s279 = sphi 0, %s263
    $region4: #{tpu_custom_call.1} parent=1 // loop_header_branch
      %22 = sbr.rel (%p20) target = $region8
    $region5: #{tpu_custom_call.1} parent=1 // loop_body
      %s24 = ssub.s32 %s19, 1
      %s25 = ssub.s32 %s19, 2
      %s26 = sadd.s32 %s19, 1
      %s27 = ssub.s32 %s19, %s26
      %p28 = scmp.eq.s32.totalorder %s27, 0
      %s30 = sadd.s32 %s29, 1
      %s31 = scalar_select %p28, %s29, %s30
      %p34 = pneg %p28
      %p35 = scmp.eq.s32.totalorder %s19, 1
      %p36 = por %p34, %p35
      %p37 = scmp.ne.s32.totalorder %s29, %s32
      %p38 = scmp.eq.s32.totalorder %s19, 0
      %p39 = por %p37, %p38
      %p40 = scmp.ne.s32.totalorder %s29, %s32
      %p41 = scmp.eq.s32.totalorder %s24, 1
      %p42 = por %p40, %p41
      %p43 = scmp.ne.s32.totalorder %s32, %s33
      %p44 = scmp.eq.s32.totalorder %s24, 0
      %p45 = por %p43, %p44
      %p46 = scmp.ne.s32.totalorder %s32, %s33
      %p47 = scmp.eq.s32.totalorder %s25, 1
      %p48 = por %p46, %p47
      %p50 = scmp.ne.s32.totalorder %s33, %s49
      %p51 = scmp.eq.s32.totalorder %s25, 0
      %p52 = por %p50, %p51
      %s53 = ssub.s32 %s19, %s26
      %p54 = scmp.eq.s32.totalorder %s53, 0
      %s56 = sadd.s32 %s55, 1
      %s57 = scalar_select %p54, %s55, %s56
      %p60 = pneg %p54
      %p61 = scmp.eq.s32.totalorder %s19, 1
      %p62 = por %p60, %p61
      %p63 = scmp.ne.s32.totalorder %s55, %s58
      %p64 = scmp.eq.s32.totalorder %s19, 0
      %p65 = por %p63, %p64
      %p66 = scmp.ne.s32.totalorder %s55, %s58
      %p67 = scmp.eq.s32.totalorder %s24, 1
      %p68 = por %p66, %p67
      %p69 = scmp.ne.s32.totalorder %s58, %s59
      %p70 = scmp.eq.s32.totalorder %s24, 0
      %p71 = por %p69, %p70
      %p72 = scmp.ne.s32.totalorder %s58, %s59
      %p73 = scmp.eq.s32.totalorder %s25, 1
      %p74 = por %p72, %p73
      %p76 = scmp.ne.s32.totalorder %s59, %s75
      %p77 = scmp.eq.s32.totalorder %s25, 0
      %p78 = por %p76, %p77
      %s79 = ssub.s32 %s19, %s26
      %p80 = scmp.eq.s32.totalorder %s79, 0
      %s82 = sadd.s32 %s81, 1
      %s83 = scalar_select %p80, %s81, %s82
      %p86 = pneg %p80
      %p87 = scmp.eq.s32.totalorder %s19, 1
      %p88 = por %p86, %p87
      %p89 = scmp.ne.s32.totalorder %s81, %s84
      %p90 = scmp.eq.s32.totalorder %s19, 0
      %p91 = por %p89, %p90
      %p92 = scmp.ne.s32.totalorder %s81, %s84
      %p93 = scmp.eq.s32.totalorder %s24, 1
      %p94 = por %p92, %p93
      %p95 = scmp.ne.s32.totalorder %s84, %s85
      %p96 = scmp.eq.s32.totalorder %s24, 0
      %p97 = por %p95, %p96
      %p98 = scmp.ne.s32.totalorder %s84, %s85
      %p99 = scmp.eq.s32.totalorder %s25, 1
      %p100 = por %p98, %p99
      %p102 = scmp.ne.s32.totalorder %s85, %s101
      %p103 = scmp.eq.s32.totalorder %s25, 0
      %p104 = por %p102, %p103
      %s105 = ssub.s32 %s19, %s26
      %p106 = scmp.eq.s32.totalorder %s105, 0
      %s108 = sadd.s32 %s107, 1
      %s109 = scalar_select %p106, %s107, %s108
      %p112 = pneg %p106
      %p113 = scmp.eq.s32.totalorder %s19, 1
      %p114 = por %p112, %p113
      %p115 = scmp.ne.s32.totalorder %s107, %s110
      %p116 = scmp.eq.s32.totalorder %s19, 0
      %p117 = por %p115, %p116
      %p118 = scmp.ne.s32.totalorder %s107, %s110
      %p119 = scmp.eq.s32.totalorder %s24, 1
      %p120 = por %p118, %p119
      %p121 = scmp.ne.s32.totalorder %s110, %s111
      %p122 = scmp.eq.s32.totalorder %s24, 0
      %p123 = por %p121, %p122
      %p124 = scmp.ne.s32.totalorder %s110, %s111
      %p125 = scmp.eq.s32.totalorder %s25, 1
      %p126 = por %p124, %p125
      %p128 = scmp.ne.s32.totalorder %s111, %s127
      %p129 = scmp.eq.s32.totalorder %s25, 0
      %p130 = por %p128, %p129
      %s132 = sadd.s32 %s131, 1
      %p135 = scmp.eq.s32.totalorder %s19, 1
      %p136 = scmp.ne.s32.totalorder %s131, %s133
      %p137 = scmp.eq.s32.totalorder %s19, 0
      %p138 = por %p136, %p137
      %p139 = scmp.ne.s32.totalorder %s131, %s133
      %p140 = scmp.eq.s32.totalorder %s24, 1
      %p141 = por %p139, %p140
      %p142 = scmp.ne.s32.totalorder %s133, %s134
      %p143 = scmp.eq.s32.totalorder %s24, 0
      %p144 = por %p142, %p143
      %p145 = scmp.ne.s32.totalorder %s133, %s134
      %p146 = scmp.eq.s32.totalorder %s25, 1
      %p147 = por %p145, %p146
      %p149 = scmp.ne.s32.totalorder %s134, %s148
      %p150 = scmp.eq.s32.totalorder %s25, 0
      %p151 = por %p149, %p150
      %s153 = sadd.s32 %s152, 1
      %p156 = scmp.eq.s32.totalorder %s19, 1
      %p157 = scmp.ne.s32.totalorder %s152, %s154
      %p158 = scmp.eq.s32.totalorder %s19, 0
      %p159 = por %p157, %p158
      %p160 = scmp.ne.s32.totalorder %s152, %s154
      %p161 = scmp.eq.s32.totalorder %s24, 1
      %p162 = por %p160, %p161
      %p163 = scmp.ne.s32.totalorder %s154, %s155
      %p164 = scmp.eq.s32.totalorder %s24, 0
      %p165 = por %p163, %p164
      %p166 = scmp.ne.s32.totalorder %s154, %s155
      %p167 = scmp.eq.s32.totalorder %s25, 1
      %p168 = por %p166, %p167
      %p170 = scmp.ne.s32.totalorder %s155, %s169
      %p171 = scmp.eq.s32.totalorder %s25, 0
      %p172 = por %p170, %p171
      %s174 = sadd.s32 %s173, 1
      %p177 = scmp.eq.s32.totalorder %s19, 1
      %p178 = scmp.ne.s32.totalorder %s173, %s175
      %p179 = scmp.eq.s32.totalorder %s19, 0
      %p180 = por %p178, %p179
      %p181 = scmp.ne.s32.totalorder %s173, %s175
      %p182 = scmp.eq.s32.totalorder %s24, 1
      %p183 = por %p181, %p182
      %p184 = scmp.ne.s32.totalorder %s175, %s176
      %p185 = scmp.eq.s32.totalorder %s24, 0
      %p186 = por %p184, %p185
      %p187 = scmp.ne.s32.totalorder %s175, %s176
      %p188 = scmp.eq.s32.totalorder %s25, 1
      %p189 = por %p187, %p188
      %p191 = scmp.ne.s32.totalorder %s176, %s190
      %p192 = scmp.eq.s32.totalorder %s25, 0
      %p193 = por %p191, %p192
      %s195 = sadd.s32 %s194, 1
      %p198 = scmp.eq.s32.totalorder %s19, 1
      %p199 = scmp.ne.s32.totalorder %s194, %s196
      %p200 = scmp.eq.s32.totalorder %s19, 0
      %p201 = por %p199, %p200
      %p202 = scmp.ne.s32.totalorder %s194, %s196
      %p203 = scmp.eq.s32.totalorder %s24, 1
      %p204 = por %p202, %p203
      %p205 = scmp.ne.s32.totalorder %s196, %s197
      %p206 = scmp.eq.s32.totalorder %s24, 0
      %p207 = por %p205, %p206
      %p208 = scmp.ne.s32.totalorder %s196, %s197
      %p209 = scmp.eq.s32.totalorder %s25, 1
      %p210 = por %p208, %p209
      %p212 = scmp.ne.s32.totalorder %s197, %s211
      %p213 = scmp.eq.s32.totalorder %s25, 0
      %p214 = por %p212, %p213
      %s216 = sadd.s32 %s215, 1
      %p219 = scmp.eq.s32.totalorder %s19, 1
      %p220 = scmp.ne.s32.totalorder %s215, %s217
      %p221 = scmp.eq.s32.totalorder %s19, 0
      %p222 = por %p220, %p221
      %p223 = scmp.ne.s32.totalorder %s215, %s217
      %p224 = scmp.eq.s32.totalorder %s24, 1
      %p225 = por %p223, %p224
      %p226 = scmp.ne.s32.totalorder %s217, %s218
      %p227 = scmp.eq.s32.totalorder %s24, 0
      %p228 = por %p226, %p227
      %p229 = scmp.ne.s32.totalorder %s217, %s218
      %p230 = scmp.eq.s32.totalorder %s25, 1
      %p231 = por %p229, %p230
      %p233 = scmp.ne.s32.totalorder %s218, %s232
      %p234 = scmp.eq.s32.totalorder %s25, 0
      %p235 = por %p233, %p234
      %s237 = sadd.s32 %s236, 1
      %p240 = scmp.eq.s32.totalorder %s19, 1
      %p241 = scmp.ne.s32.totalorder %s236, %s238
      %p242 = scmp.eq.s32.totalorder %s19, 0
      %p243 = por %p241, %p242
      %p244 = scmp.ne.s32.totalorder %s236, %s238
      %p245 = scmp.eq.s32.totalorder %s24, 1
      %p246 = por %p244, %p245
      %p247 = scmp.ne.s32.totalorder %s238, %s239
      %p248 = scmp.eq.s32.totalorder %s24, 0
      %p249 = por %p247, %p248
      %p250 = scmp.ne.s32.totalorder %s238, %s239
      %p251 = scmp.eq.s32.totalorder %s25, 1
      %p252 = por %p250, %p251
      %p254 = scmp.ne.s32.totalorder %s239, %s253
      %p255 = scmp.eq.s32.totalorder %s25, 0
      %p256 = por %p254, %p255
      %s257 = ssub.s32 %s19, %s26
      %p258 = scmp.eq.s32.totalorder %s257, 0
      %s260 = sadd.s32 %s259, 1
      %s261 = scalar_select %p258, %s259, %s260
      %p264 = pneg %p258
      %p265 = scmp.eq.s32.totalorder %s19, 1
      %p266 = por %p264, %p265
      %p267 = scmp.ne.s32.totalorder %s259, %s262
      %p268 = scmp.eq.s32.totalorder %s19, 0
      %p269 = por %p267, %p268
      %p270 = scmp.ne.s32.totalorder %s259, %s262
      %p271 = scmp.eq.s32.totalorder %s24, 1
      %p272 = por %p270, %p271
      %p273 = scmp.ne.s32.totalorder %s262, %s263
      %p274 = scmp.eq.s32.totalorder %s24, 0
      %p275 = por %p273, %p274
      %p276 = scmp.ne.s32.totalorder %s262, %s263
      %p277 = scmp.eq.s32.totalorder %s25, 1
      %p278 = por %p276, %p277
      %p280 = scmp.ne.s32.totalorder %s263, %s279
      %p281 = scmp.eq.s32.totalorder %s25, 0
      %p282 = por %p280, %p281
      %p283 = scmp.le.s32.totalorder 1, %s19
      %p284 = scmp.lt.s32.totalorder %s19, 3
      %p285 = pnand %p283, %p284
      %p286 = pneg %p285
      // Predicated region
      $region9: #{tpu_custom_call.1} parent=5 // pred_check
        _
      $region10: #{tpu_custom_call.1} parent=5 // pred_check_branch
        %288 = sbr.rel (%p285) target = $region12
      $region11: #{tpu_custom_call.1} parent=5 // pred_region
        %s289 = ssub.s32 %s19, 1
        // Predicated region
        $region13: #{tpu_custom_call.1} parent=11 // pred_check
          %p290 = pneg %p144
        $region14: #{tpu_custom_call.1} parent=11 // pred_check_branch
          %292 = sbr.rel (%p290) target = $region16
        $region15: #{tpu_custom_call.1} parent=11 // pred_region
          _
        $region16: #{tpu_custom_call.1} parent=11 // pred_fallthru
          _
        // Predicated region
        $region17: #{tpu_custom_call.1} parent=11 // pred_check
          %p293 = pneg %p165
        $region18: #{tpu_custom_call.1} parent=11 // pred_check_branch
          %295 = sbr.rel (%p293) target = $region20
        $region19: #{tpu_custom_call.1} parent=11 // pred_region
          _
        $region20: #{tpu_custom_call.1} parent=11 // pred_fallthru
          _
        // Predicated region
        $region21: #{tpu_custom_call.1} parent=11 // pred_check
          %p296 = pneg %p186
        $region22: #{tpu_custom_call.1} parent=11 // pred_check_branch
          %298 = sbr.rel (%p296) target = $region24
        $region23: #{tpu_custom_call.1} parent=11 // pred_region
          _
        $region24: #{tpu_custom_call.1} parent=11 // pred_fallthru
          _
        // Predicated region
        $region25: #{tpu_custom_call.1} parent=11 // pred_check
          %p299 = pneg %p207
        $region26: #{tpu_custom_call.1} parent=11 // pred_check_branch
          %301 = sbr.rel (%p299) target = $region28
        $region27: #{tpu_custom_call.1} parent=11 // pred_region
          _
        $region28: #{tpu_custom_call.1} parent=11 // pred_fallthru
          _
        // Predicated region
        $region29: #{tpu_custom_call.1} parent=11 // pred_check
          %p302 = pneg %p228
        $region30: #{tpu_custom_call.1} parent=11 // pred_check_branch
          %304 = sbr.rel (%p302) target = $region32
        $region31: #{tpu_custom_call.1} parent=11 // pred_region
          _
        $region32: #{tpu_custom_call.1} parent=11 // pred_fallthru
          _
        // Predicated region
        $region33: #{tpu_custom_call.1} parent=11 // pred_check
          %p305 = pneg %p249
        $region34: #{tpu_custom_call.1} parent=11 // pred_check_branch
          %307 = sbr.rel (%p305) target = $region36
        $region35: #{tpu_custom_call.1} parent=11 // pred_region
          _
        $region36: #{tpu_custom_call.1} parent=11 // pred_fallthru
          _
      $region12: #{tpu_custom_call.1} parent=5 // pred_fallthru
        _
      %p308 = scmp.lt.s32.totalorder %s19, 2
      // Predicated region
      $region37: #{tpu_custom_call.1} parent=5 // pred_check
        %p309 = pneg %p308
      $region38: #{tpu_custom_call.1} parent=5 // pred_check_branch
        %311 = sbr.rel (%p309) target = $region40
      $region39: #{tpu_custom_call.1} parent=5 // pred_region
        // Predicated region
        $region41: #{tpu_custom_call.1} parent=39 // pred_check
          %p312 = pneg %p39
        $region42: #{tpu_custom_call.1} parent=39 // pred_check_branch
          %314 = sbr.rel (%p312) target = $region44
        $region43: #{tpu_custom_call.1} parent=39 // pred_region
          %s315 = smul.u32 2, %s19
          %p316 = scmp.lt.s32.totalorder %s315, 3
          %s317 = scalar_select %p316, %s315, 3
          %s318 = smul.addr %s317, 18
          %s319 = smul.addr %s318, 8
          %s320 = scalar_lea.vmem %s0, %s319
          %s321 = smul.u32 2, %s19
        $region44: #{tpu_custom_call.1} parent=39 // pred_fallthru
          _
        // Predicated region
        $region45: #{tpu_custom_call.1} parent=39 // pred_check
          %p322 = pneg %p65
        $region46: #{tpu_custom_call.1} parent=39 // pred_check_branch
          %324 = sbr.rel (%p322) target = $region48
        $region47: #{tpu_custom_call.1} parent=39 // pred_region
          %s325 = smul.u32 2, %s19
          %p326 = scmp.lt.s32.totalorder %s325, 3
          %s327 = scalar_select %p326, %s325, 3
          %s328 = smul.addr %s327, 18
          %s329 = smul.addr %s328, 8
          %s330 = scalar_lea.vmem %s1, %s329
          %s331 = smul.u32 2, %s19
        $region48: #{tpu_custom_call.1} parent=39 // pred_fallthru
          _
        // Predicated region
        $region49: #{tpu_custom_call.1} parent=39 // pred_check
          %p332 = pneg %p91
        $region50: #{tpu_custom_call.1} parent=39 // pred_check_branch
          %334 = sbr.rel (%p332) target = $region52
        $region51: #{tpu_custom_call.1} parent=39 // pred_region
          %s335 = smul.u32 2, %s19
          %p336 = scmp.lt.s32.totalorder %s335, 3
          %s337 = scalar_select %p336, %s335, 3
          %s338 = smul.addr %s337, 18
          %s339 = smul.addr %s338, 8
          %s340 = scalar_lea.vmem %s2, %s339
          %s341 = smul.u32 2, %s19
        $region52: #{tpu_custom_call.1} parent=39 // pred_fallthru
          _
        // Predicated region
        $region53: #{tpu_custom_call.1} parent=39 // pred_check
          %p342 = pneg %p117
        $region54: #{tpu_custom_call.1} parent=39 // pred_check_branch
          %344 = sbr.rel (%p342) target = $region56
        $region55: #{tpu_custom_call.1} parent=39 // pred_region
          %s345 = smul.u32 2, %s19
          %p346 = scmp.lt.s32.totalorder %s345, 3
          %s347 = scalar_select %p346, %s345, 3
          %s348 = smul.addr %s347, 18
          %s349 = smul.addr %s348, 8
          %s350 = scalar_lea.vmem %s3, %s349
          %s351 = smul.u32 2, %s19
        $region56: #{tpu_custom_call.1} parent=39 // pred_fallthru
          _
      $region40: #{tpu_custom_call.1} parent=5 // pred_fallthru
        _
      %p352 = scmp.le.s32.totalorder 1, %s19
      %p353 = scmp.lt.s32.totalorder %s19, 3
      %p354 = pnand %p352, %p353
      %p355 = pneg %p354
      // Predicated region
      $region57: #{tpu_custom_call.1} parent=5 // pred_check
        _
      $region58: #{tpu_custom_call.1} parent=5 // pred_check_branch
        %357 = sbr.rel (%p354) target = $region60
      $region59: #{tpu_custom_call.1} parent=5 // pred_region
        %s358 = ssub.s32 %s19, 1
        %s359 = smul.u32 2, %s24
        %p360 = scmp.lt.s32.totalorder %s359, 3
        %s361 = scalar_select %p360, %s359, 3
        %s362 = smul.addr %s361, 18
        %s363 = smul.addr %s362, 8
        %s364 = scalar_lea.vmem %s0, %s363
        %p365 = pneg %p45
        %p366 = pneg %p42
        %s367 = smul.u32 2, %s24
        %p368 = scmp.lt.s32.totalorder %s367, 3
        %s369 = scalar_select %p368, %s367, 3
        %s370 = smul.addr %s369, 18
        %s371 = smul.addr %s370, 8
        %s372 = scalar_lea.vmem %s1, %s371
        %p373 = pneg %p71
        %p374 = pneg %p68
        %s375 = smul.u32 2, %s24
        %p376 = scmp.lt.s32.totalorder %s375, 3
        %s377 = scalar_select %p376, %s375, 3
        %s378 = smul.addr %s377, 18
        %s379 = smul.addr %s378, 8
        %s380 = scalar_lea.vmem %s2, %s379
        %p381 = pneg %p97
        %p382 = pneg %p94
        %s383 = smul.u32 2, %s24
        %p384 = scmp.lt.s32.totalorder %s383, 3
        %s385 = scalar_select %p384, %s383, 3
        %s386 = smul.addr %s385, 18
        %s387 = smul.addr %s386, 8
        %s388 = scalar_lea.vmem %s3, %s387
        %p389 = pneg %p123
        %p390 = pneg %p120
        %p391 = pneg %p144
        %p392 = pneg %p141
        %p393 = pneg %p165
        %p394 = pneg %p162
        %p395 = pneg %p186
        %p396 = pneg %p183
        %p397 = pneg %p207
        %p398 = pneg %p204
        %p399 = pneg %p228
        %p400 = pneg %p225
        %p401 = pneg %p249
        %p402 = pneg %p246
        %p403 = pneg %p275
        %p404 = pneg %p272
        %s405 = sand.u32 %s262, 1
        %s406 = scalar_lea.sflag [#allocation4], %s405
        %s407 = sand.u32 %s262, 1
        %s408 = smul.addr %s407, 128
        %s409 = scalar_lea.vmem [#allocation3], %s408
        %s410 = smul.u32 2, %s24
        %p411 = scmp.lt.s32.totalorder %s410, 3
        %s412 = scalar_select %p411, %s410, 3
        %s413 = smul.addr %s412, 18
        %s414 = smul.addr %s413, 8
        %s415 = scalar_lea.vmem %s0, %s414
        %s416 = smul.u32 2, %s24
        %s417 = smul.u32 2, %s24
        %p418 = scmp.lt.s32.totalorder %s417, 3
        %s419 = scalar_select %p418, %s417, 3
        %s420 = smul.addr %s419, 18
        %s421 = smul.addr %s420, 8
        %s422 = scalar_lea.vmem %s1, %s421
        %s423 = smul.u32 2, %s24
        %s424 = smul.u32 2, %s24
        %p425 = scmp.lt.s32.totalorder %s424, 3
        %s426 = scalar_select %p425, %s424, 3
        %s427 = smul.addr %s426, 18
        %s428 = smul.addr %s427, 8
        %s429 = scalar_lea.vmem %s2, %s428
        %s430 = smul.u32 2, %s24
        %s431 = smul.u32 2, %s24
        %p432 = scmp.lt.s32.totalorder %s431, 3
        %s433 = scalar_select %p432, %s431, 3
        %s434 = smul.addr %s433, 18
        %s435 = smul.addr %s434, 8
        %s436 = scalar_lea.vmem %s3, %s435
        %s437 = smul.u32 2, %s24
        %s438 = smul.u32 2, %s24
        %vm439 = vcmask 64512
        %440 = vst.msk [vmem:[#allocation2] sm:$0xff] %vm439, 0.0
        %vm441 = vcmask 58368
        %442 = vst.msk [vmem:[#allocation2 + $0x8] sm:$0x3] %vm441, 0.0
        %443 = vst.msk [vmem:[#allocation2 + $0xa0] sm:$0xff] %vm439, 0.0
        %444 = vst.msk [vmem:[#allocation2 + $0xa8] sm:$0x3] %vm441, 0.0
        %s445 = scalar_lea.vmem [#allocation2], 144
        %446 = vst.msk [vmem:[%s445] sm:$0xff] %vm439, 0.0
        %447 = vst.msk [vmem:[%s445 + $0x8] sm:$0x3] %vm441, 0.0
        %448 = vst.msk [vmem:[%s445 + $0xa0] sm:$0xff] %vm439, 0.0
        %449 = vst.msk [vmem:[%s445 + $0xa8] sm:$0x3] %vm441, 0.0
        %vm450 = vcmask 57344
        %451 = vst.msk [vmem:[#allocation2] sm:$0x1] %vm450, 0.0
        %452 = vst.msk [vmem:[#allocation2 + $0x10] sm:$0x1] %vm450, 0.0
        %453 = vst.msk [vmem:[#allocation2 + $0x20] sm:$0x1] %vm450, 0.0
        %454 = vst.msk [vmem:[#allocation2 + $0x30] sm:$0x1] %vm450, 0.0
        %455 = vst.msk [vmem:[#allocation2 + $0x40] sm:$0x1] %vm450, 0.0
        %456 = vst.msk [vmem:[#allocation2 + $0x50] sm:$0x1] %vm450, 0.0
        %457 = vst.msk [vmem:[#allocation2 + $0x60] sm:$0x1] %vm450, 0.0
        %458 = vst.msk [vmem:[#allocation2 + $0x70] sm:$0x1] %vm450, 0.0
        %459 = vst.msk [vmem:[#allocation2 + $0x80] sm:$0x1] %vm450, 0.0
        %460 = vst.msk [vmem:[#allocation2 + $0x90] sm:$0x1] %vm450, 0.0
        %461 = vst.msk [vmem:[#allocation2 + $0xa0] sm:$0x1] %vm450, 0.0
        %462 = vst.msk [vmem:[#allocation2 + $0xb0] sm:$0x1] %vm450, 0.0
        %463 = vst.msk [vmem:[#allocation2 + $0xc0] sm:$0x1] %vm450, 0.0
        %464 = vst.msk [vmem:[#allocation2 + $0xd0] sm:$0x1] %vm450, 0.0
        %465 = vst.msk [vmem:[#allocation2 + $0xe0] sm:$0x1] %vm450, 0.0
        %466 = vst.msk [vmem:[#allocation2 + $0xf0] sm:$0x1] %vm450, 0.0
        %467 = vst.msk [vmem:[#allocation2 + $0x100] sm:$0x1] %vm450, 0.0
        %468 = vst.msk [vmem:[#allocation2 + $0x110] sm:$0x1] %vm450, 0.0
        %469 = vst.msk [vmem:[#allocation2 + $0x120] sm:$0x1] %vm450, 0.0
        %470 = vst.msk [vmem:[#allocation2 + $0x130] sm:$0x1] %vm450, 0.0
        %471 = vst.msk [vmem:[#allocation2 + $0x9] sm:$0x1] %vm450, 0.0
        %472 = vst.msk [vmem:[#allocation2 + $0x19] sm:$0x1] %vm450, 0.0
        %473 = vst.msk [vmem:[#allocation2 + $0x29] sm:$0x1] %vm450, 0.0
        %474 = vst.msk [vmem:[#allocation2 + $0x39] sm:$0x1] %vm450, 0.0
        %475 = vst.msk [vmem:[#allocation2 + $0x49] sm:$0x1] %vm450, 0.0
        %476 = vst.msk [vmem:[#allocation2 + $0x59] sm:$0x1] %vm450, 0.0
        %477 = vst.msk [vmem:[#allocation2 + $0x69] sm:$0x1] %vm450, 0.0
        %478 = vst.msk [vmem:[#allocation2 + $0x79] sm:$0x1] %vm450, 0.0
        %479 = vst.msk [vmem:[#allocation2 + $0x89] sm:$0x1] %vm450, 0.0
        %480 = vst.msk [vmem:[#allocation2 + $0x99] sm:$0x1] %vm450, 0.0
        %481 = vst.msk [vmem:[#allocation2 + $0xa9] sm:$0x1] %vm450, 0.0
        %482 = vst.msk [vmem:[#allocation2 + $0xb9] sm:$0x1] %vm450, 0.0
        %483 = vst.msk [vmem:[#allocation2 + $0xc9] sm:$0x1] %vm450, 0.0
        %484 = vst.msk [vmem:[#allocation2 + $0xd9] sm:$0x1] %vm450, 0.0
        %485 = vst.msk [vmem:[#allocation2 + $0xe9] sm:$0x1] %vm450, 0.0
        %486 = vst.msk [vmem:[#allocation2 + $0xf9] sm:$0x1] %vm450, 0.0
        %487 = vst.msk [vmem:[#allocation2 + $0x109] sm:$0x1] %vm450, 0.0
        %488 = vst.msk [vmem:[#allocation2 + $0x119] sm:$0x1] %vm450, 0.0
        %489 = vst.msk [vmem:[#allocation2 + $0x129] sm:$0x1] %vm450, 0.0
        %490 = vst.msk [vmem:[#allocation2 + $0x139] sm:$0x1] %vm450, 0.0
        %v491 = vld [vmem:[%s415] sm:$0xff]
        %v492 = vld [vmem:[%s415 + $0x10] sm:$0xff]
        %v493 = vld [vmem:[%s415 + $0x20] sm:$0xff]
        %v494 = vld [vmem:[%s415 + $0x30] sm:$0xff]
        %v495 = vld [vmem:[%s415 + $0x40] sm:$0xff]
        %v496 = vld [vmem:[%s415 + $0x50] sm:$0xff]
        %v497 = vld [vmem:[%s415 + $0x60] sm:$0xff]
        %v498 = vld [vmem:[%s415 + $0x70] sm:$0xff]
        %v499 = vld [vmem:[%s415 + $0x90] sm:$0xff]
        %v500 = vld [vmem:[%s415 + $0xa0] sm:$0xff]
        %v501 = vld [vmem:[%s415 + $0xb0] sm:$0xff]
        %v502 = vld [vmem:[%s415 + $0xc0] sm:$0xff]
        %v503 = vld [vmem:[%s415 + $0xd0] sm:$0xff]
        %v504 = vld [vmem:[%s415 + $0xe0] sm:$0xff]
        %v505 = vld [vmem:[%s415 + $0xf0] sm:$0xff]
        %v506 = vld [vmem:[%s415 + $0x100] sm:$0xff]
        %v507 = vld [vmem:[%s5] sm:$0xf]
        %v508 = vld [vmem:[%s422] sm:$0xff]
        %v509 = vld [vmem:[%s422 + $0x10] sm:$0xff]
        %v510 = vld [vmem:[%s422 + $0x20] sm:$0xff]
        %v511 = vld [vmem:[%s422 + $0x30] sm:$0xff]
        %v512 = vld [vmem:[%s422 + $0x40] sm:$0xff]
        %v513 = vld [vmem:[%s422 + $0x50] sm:$0xff]
        %v514 = vld [vmem:[%s422 + $0x60] sm:$0xff]
        %v515 = vld [vmem:[%s422 + $0x70] sm:$0xff]
        %v516 = vld [vmem:[%s422 + $0x90] sm:$0xff]
        %v517 = vld [vmem:[%s422 + $0xa0] sm:$0xff]
        %v518 = vld [vmem:[%s422 + $0xb0] sm:$0xff]
        %v519 = vld [vmem:[%s422 + $0xc0] sm:$0xff]
        %v520 = vld [vmem:[%s422 + $0xd0] sm:$0xff]
        %v521 = vld [vmem:[%s422 + $0xe0] sm:$0xff]
        %v522 = vld [vmem:[%s422 + $0xf0] sm:$0xff]
        %v523 = vld [vmem:[%s422 + $0x100] sm:$0xff]
        %s524 = scalar_lea.vmem %s5, 4
        %v525 = vld [vmem:[%s524] sm:$0xf]
        %vm526 = vcmask 31744
        %v528 = vsel %vm526, %v508, 0
        %v531 = vsel %vm526, %v509, 0
        %v534 = vsel %vm526, %v510, 0
        %v537 = vsel %vm526, %v511, 0
        %v540 = vsel %vm526, %v512, 0
        %v543 = vsel %vm526, %v513, 0
        %v546 = vsel %vm526, %v514, 0
        %v549 = vsel %vm526, %v515, 0
        %v552 = vsel %vm526, %v516, 0
        %v555 = vsel %vm526, %v517, 0
        %v558 = vsel %vm526, %v518, 0
        %v561 = vsel %vm526, %v519, 0
        %v564 = vsel %vm526, %v520, 0
        %v567 = vsel %vm526, %v521, 0
        %v570 = vsel %vm526, %v522, 0
        %v573 = vsel %vm526, %v523, 0
        %vm575 = vcmask 1043456
        %v577 = vsel %vm575, %v525, 0
        %579 = vmatprep.subr.mxu0 0.0
        %580 = vmatpush1.msra.mxu0 0.0
        %581 = vmatprep.subr.mxu0 0.0
        %582 = vmatpush1.msra.mxu0 0.0
        %583 = vmatprep.subr.mxu0 0.0
        %584 = vmatpush1.msra.mxu0 0.0
        %585 = vmatprep.subr.mxu0 0.0
        %586 = vmatpush1.msra.mxu0 0.0
        %587 = vmatprep.subr.mxu0 0.0
        %588 = vmatpush1.msra.mxu0 0.0
        %589 = vmatprep.subr.mxu0 0.0
        %590 = vmatpush1.msra.mxu0 0.0
        %591 = vmatprep.subr.mxu0 0.0
        %592 = vmatpush1.msra.mxu0 0.0
        %593 = vmatprep.subr.mxu0 0.0
        %594 = vmatpush1.msra.mxu0 0.0
        %595 = vmatprep.subr.mxu0 0.0
        %596 = vmatpush1.msra.mxu0 0.0
        %597 = vmatprep.subr.mxu0 0.0
        %598 = vmatpush1.msra.mxu0 0.0
        %599 = vmatprep.subr.mxu0 0.0
        %600 = vmatpush1.msra.mxu0 0.0
        %601 = vmatprep.subr.mxu0 0.0
        %602 = vmatpush1.msra.mxu0 0.0
        %603 = vmatprep.subr.mxu0 0.0
        %604 = vmatpush1.msra.mxu0 0.0
        %605 = vmatprep.subr.mxu0 0.0
        %606 = vmatpush1.msra.mxu0 0.0
        %607 = vmatprep.subr.mxu0 0.0
        %608 = vmatpush1.msra.mxu0 0.0
        %609 = vmatprep.subr.mxu0 0.0
        %610 = vmatpush1.msra.mxu0 %v577
        %611 = vmatprep.subr.mxu0 0.0
        %612 = vmatpush2.msra.mxu0 0.0
        %613 = vmatprep.subr.mxu0 0.0
        %614 = vmatpush2.msra.mxu0 0.0
        %615 = vmatprep.subr.mxu0 0.0
        %616 = vmatpush2.msra.mxu0 0.0
        %617 = vmatprep.subr.mxu0 0.0
        %618 = vmatpush2.msra.mxu0 0.0
        %619 = vmatprep.subr.mxu0 0.0
        %620 = vmatpush2.msra.mxu0 0.0
        %621 = vmatprep.subr.mxu0 0.0
        %622 = vmatpush2.msra.mxu0 0.0
        %623 = vmatprep.subr.mxu0 0.0
        %624 = vmatpush2.msra.mxu0 0.0
        %625 = vmatprep.subr.mxu0 0.0
        %626 = vmatpush2.msra.mxu0 0.0
        %627 = vmatprep.subr.mxu0 0.0
        %628 = vmatpush2.msra.mxu0 0.0
        %629 = vmatprep.subr.mxu0 0.0
        %630 = vmatpush2.msra.mxu0 0.0
        %631 = vmatprep.subr.mxu0 0.0
        %632 = vmatpush2.msra.mxu0 0.0
        %633 = vmatprep.subr.mxu0 0.0
        %634 = vmatpush2.msra.mxu0 0.0
        %635 = vmatprep.subr.mxu0 0.0
        %636 = vmatpush2.msra.mxu0 0.0
        %637 = vmatprep.subr.mxu0 0.0
        %638 = vmatpush2.msra.mxu0 0.0
        %639 = vmatprep.subr.mxu0 0.0
        %640 = vmatpush2.msra.mxu0 0.0
        %641 = vmatprep.subr.mxu0 0.0
        %642 = vmatpush2.msra.mxu0 0.0
        %643 = vmatprep.mubr.f32.mxu0 0.0
        %644 = vmatmul.mubr.f32.gmra.mxu0 %v528
        %v645 = vpop.f32.mrf.mxu0
        %v646 = vadd.f32 0.0, %v645
        %v647 = vpop.f32.mrf.mxu0
        %648 = vmatprep.mubr.f32.mxu0 0.0
        %649 = vmatmul.mubr.f32.gmra.mxu0 %v531
        %v650 = vpop.f32.mrf.mxu0
        %v651 = vadd.f32 0.0, %v650
        %v652 = vpop.f32.mrf.mxu0
        %653 = vmatprep.mubr.f32.mxu0 0.0
        %654 = vmatmul.mubr.f32.gmra.mxu0 %v534
        %v655 = vpop.f32.mrf.mxu0
        %v656 = vadd.f32 0.0, %v655
        %v657 = vpop.f32.mrf.mxu0
        %658 = vmatprep.mubr.f32.mxu0 0.0
        %659 = vmatmul.mubr.f32.gmra.mxu0 %v537
        %v660 = vpop.f32.mrf.mxu0
        %v661 = vadd.f32 0.0, %v660
        %v662 = vpop.f32.mrf.mxu0
        %663 = vmatprep.mubr.f32.mxu0 0.0
        %664 = vmatmul.mubr.f32.gmra.mxu0 %v540
        %v665 = vpop.f32.mrf.mxu0
        %v666 = vadd.f32 0.0, %v665
        %v667 = vpop.f32.mrf.mxu0
        %668 = vmatprep.mubr.f32.mxu0 0.0
        %669 = vmatmul.mubr.f32.gmra.mxu0 %v543
        %v670 = vpop.f32.mrf.mxu0
        %v671 = vadd.f32 0.0, %v670
        %v672 = vpop.f32.mrf.mxu0
        %673 = vmatprep.mubr.f32.mxu0 0.0
        %674 = vmatmul.mubr.f32.gmra.mxu0 %v546
        %v675 = vpop.f32.mrf.mxu0
        %v676 = vadd.f32 0.0, %v675
        %v677 = vpop.f32.mrf.mxu0
        %678 = vmatprep.mubr.f32.mxu0 0.0
        %679 = vmatmul.mubr.f32.gmra.mxu0 %v549
        %v680 = vpop.f32.mrf.mxu0
        %v681 = vadd.f32 0.0, %v680
        %v682 = vpop.f32.mrf.mxu0
        %683 = vmatprep.mubr.f32.mxu0 0.0
        %684 = vmatmul.mubr.f32.gmra.mxu0 %v552
        %v685 = vpop.f32.mrf.mxu0
        %v686 = vadd.f32 0.0, %v685
        %v687 = vpop.f32.mrf.mxu0
        %688 = vmatprep.mubr.f32.mxu0 0.0
        %689 = vmatmul.mubr.f32.gmra.mxu0 %v555
        %v690 = vpop.f32.mrf.mxu0
        %v691 = vadd.f32 0.0, %v690
        %v692 = vpop.f32.mrf.mxu0
        %693 = vmatprep.mubr.f32.mxu0 0.0
        %694 = vmatmul.mubr.f32.gmra.mxu0 %v558
        %v695 = vpop.f32.mrf.mxu0
        %v696 = vadd.f32 0.0, %v695
        %v697 = vpop.f32.mrf.mxu0
        %698 = vmatprep.mubr.f32.mxu0 0.0
        %699 = vmatmul.mubr.f32.gmra.mxu0 %v561
        %v700 = vpop.f32.mrf.mxu0
        %v701 = vadd.f32 0.0, %v700
        %v702 = vpop.f32.mrf.mxu0
        %703 = vmatprep.mubr.f32.mxu0 0.0
        %704 = vmatmul.mubr.f32.gmra.mxu0 %v564
        %v705 = vpop.f32.mrf.mxu0
        %v706 = vadd.f32 0.0, %v705
        %v707 = vpop.f32.mrf.mxu0
        %708 = vmatprep.mubr.f32.mxu0 0.0
        %709 = vmatmul.mubr.f32.gmra.mxu0 %v567
        %v710 = vpop.f32.mrf.mxu0
        %v711 = vadd.f32 0.0, %v710
        %v712 = vpop.f32.mrf.mxu0
        %713 = vmatprep.mubr.f32.mxu0 0.0
        %714 = vmatmul.mubr.f32.gmra.mxu0 %v570
        %v715 = vpop.f32.mrf.mxu0
        %v716 = vadd.f32 0.0, %v715
        %v717 = vpop.f32.mrf.mxu0
        %718 = vmatprep.mubr.f32.mxu0 0.0
        %719 = vmatmul.mubr.f32.gmra.mxu0 %v573
        %v720 = vpop.f32.mrf.mxu0
        %v721 = vadd.f32 0.0, %v720
        %v722 = vpop.f32.mrf.mxu0
        %723 = vdwg.mxu0
        %v725 = vsel %vm526, %v491, 0
        %v728 = vsel %vm526, %v492, 0
        %v731 = vsel %vm526, %v493, 0
        %v734 = vsel %vm526, %v494, 0
        %v737 = vsel %vm526, %v495, 0
        %v740 = vsel %vm526, %v496, 0
        %v743 = vsel %vm526, %v497, 0
        %v746 = vsel %vm526, %v498, 0
        %v749 = vsel %vm526, %v499, 0
        %v752 = vsel %vm526, %v500, 0
        %v755 = vsel %vm526, %v501, 0
        %v758 = vsel %vm526, %v502, 0
        %v761 = vsel %vm526, %v503, 0
        %v764 = vsel %vm526, %v504, 0
        %v767 = vsel %vm526, %v505, 0
        %v770 = vsel %vm526, %v506, 0
        %v773 = vsel %vm575, %v507, 0
        %775 = vmatprep.subr.mxu0 0.0
        %776 = vmatpush1.msra.mxu0 0.0
        %777 = vmatprep.subr.mxu0 0.0
        %778 = vmatpush1.msra.mxu0 0.0
        %779 = vmatprep.subr.mxu0 0.0
        %780 = vmatpush1.msra.mxu0 0.0
        %781 = vmatprep.subr.mxu0 0.0
        %782 = vmatpush1.msra.mxu0 0.0
        %783 = vmatprep.subr.mxu0 0.0
        %784 = vmatpush1.msra.mxu0 0.0
        %785 = vmatprep.subr.mxu0 0.0
        %786 = vmatpush1.msra.mxu0 0.0
        %787 = vmatprep.subr.mxu0 0.0
        %788 = vmatpush1.msra.mxu0 0.0
        %789 = vmatprep.subr.mxu0 0.0
        %790 = vmatpush1.msra.mxu0 0.0
        %791 = vmatprep.subr.mxu0 0.0
        %792 = vmatpush1.msra.mxu0 0.0
        %793 = vmatprep.subr.mxu0 0.0
        %794 = vmatpush1.msra.mxu0 0.0
        %795 = vmatprep.subr.mxu0 0.0
        %796 = vmatpush1.msra.mxu0 0.0
        %797 = vmatprep.subr.mxu0 0.0
        %798 = vmatpush1.msra.mxu0 0.0
        %799 = vmatprep.subr.mxu0 0.0
        %800 = vmatpush1.msra.mxu0 0.0
        %801 = vmatprep.subr.mxu0 0.0
        %802 = vmatpush1.msra.mxu0 0.0
        %803 = vmatprep.subr.mxu0 0.0
        %804 = vmatpush1.msra.mxu0 0.0
        %805 = vmatprep.subr.mxu0 0.0
        %806 = vmatpush1.msra.mxu0 %v773
        %807 = vmatprep.subr.mxu0 0.0
        %808 = vmatpush2.msra.mxu0 0.0
        %809 = vmatprep.subr.mxu0 0.0
        %810 = vmatpush2.msra.mxu0 0.0
        %811 = vmatprep.subr.mxu0 0.0
        %812 = vmatpush2.msra.mxu0 0.0
        %813 = vmatprep.subr.mxu0 0.0
        %814 = vmatpush2.msra.mxu0 0.0
        %815 = vmatprep.subr.mxu0 0.0
        %816 = vmatpush2.msra.mxu0 0.0
        %817 = vmatprep.subr.mxu0 0.0
        %818 = vmatpush2.msra.mxu0 0.0
        %819 = vmatprep.subr.mxu0 0.0
        %820 = vmatpush2.msra.mxu0 0.0
        %821 = vmatprep.subr.mxu0 0.0
        %822 = vmatpush2.msra.mxu0 0.0
        %823 = vmatprep.subr.mxu0 0.0
        %824 = vmatpush2.msra.mxu0 0.0
        %825 = vmatprep.subr.mxu0 0.0
        %826 = vmatpush2.msra.mxu0 0.0
        %827 = vmatprep.subr.mxu0 0.0
        %828 = vmatpush2.msra.mxu0 0.0
        %829 = vmatprep.subr.mxu0 0.0
        %830 = vmatpush2.msra.mxu0 0.0
        %831 = vmatprep.subr.mxu0 0.0
        %832 = vmatpush2.msra.mxu0 0.0
        %833 = vmatprep.subr.mxu0 0.0
        %834 = vmatpush2.msra.mxu0 0.0
        %835 = vmatprep.subr.mxu0 0.0
        %836 = vmatpush2.msra.mxu0 0.0
        %837 = vmatprep.subr.mxu0 0.0
        %838 = vmatpush2.msra.mxu0 0.0
        %839 = vmatprep.mubr.f32.mxu0 0.0
        %840 = vmatmul.mubr.f32.gmra.mxu0 %v725
        %v841 = vpop.f32.mrf.mxu0
        %v842 = vadd.f32 %v646, %v841
        %v843 = vpop.f32.mrf.mxu0
        %844 = vmatprep.mubr.f32.mxu0 0.0
        %845 = vmatmul.mubr.f32.gmra.mxu0 %v728
        %v846 = vpop.f32.mrf.mxu0
        %v847 = vadd.f32 %v651, %v846
        %v848 = vpop.f32.mrf.mxu0
        %849 = vmatprep.mubr.f32.mxu0 0.0
        %850 = vmatmul.mubr.f32.gmra.mxu0 %v731
        %v851 = vpop.f32.mrf.mxu0
        %v852 = vadd.f32 %v656, %v851
        %v853 = vpop.f32.mrf.mxu0
        %854 = vmatprep.mubr.f32.mxu0 0.0
        %855 = vmatmul.mubr.f32.gmra.mxu0 %v734
        %v856 = vpop.f32.mrf.mxu0
        %v857 = vadd.f32 %v661, %v856
        %v858 = vpop.f32.mrf.mxu0
        %859 = vmatprep.mubr.f32.mxu0 0.0
        %860 = vmatmul.mubr.f32.gmra.mxu0 %v737
        %v861 = vpop.f32.mrf.mxu0
        %v862 = vadd.f32 %v666, %v861
        %v863 = vpop.f32.mrf.mxu0
        %864 = vmatprep.mubr.f32.mxu0 0.0
        %865 = vmatmul.mubr.f32.gmra.mxu0 %v740
        %v866 = vpop.f32.mrf.mxu0
        %v867 = vadd.f32 %v671, %v866
        %v868 = vpop.f32.mrf.mxu0
        %869 = vmatprep.mubr.f32.mxu0 0.0
        %870 = vmatmul.mubr.f32.gmra.mxu0 %v743
        %v871 = vpop.f32.mrf.mxu0
        %v872 = vadd.f32 %v676, %v871
        %v873 = vpop.f32.mrf.mxu0
        %874 = vmatprep.mubr.f32.mxu0 0.0
        %875 = vmatmul.mubr.f32.gmra.mxu0 %v746
        %v876 = vpop.f32.mrf.mxu0
        %v877 = vadd.f32 %v681, %v876
        %v878 = vpop.f32.mrf.mxu0
        %879 = vmatprep.mubr.f32.mxu0 0.0
        %880 = vmatmul.mubr.f32.gmra.mxu0 %v749
        %v881 = vpop.f32.mrf.mxu0
        %v882 = vadd.f32 %v686, %v881
        %v883 = vpop.f32.mrf.mxu0
        %884 = vmatprep.mubr.f32.mxu0 0.0
        %885 = vmatmul.mubr.f32.gmra.mxu0 %v752
        %v886 = vpop.f32.mrf.mxu0
        %v887 = vadd.f32 %v691, %v886
        %v888 = vpop.f32.mrf.mxu0
        %889 = vmatprep.mubr.f32.mxu0 0.0
        %890 = vmatmul.mubr.f32.gmra.mxu0 %v755
        %v891 = vpop.f32.mrf.mxu0
        %v892 = vadd.f32 %v696, %v891
        %v893 = vpop.f32.mrf.mxu0
        %894 = vmatprep.mubr.f32.mxu0 0.0
        %895 = vmatmul.mubr.f32.gmra.mxu0 %v758
        %v896 = vpop.f32.mrf.mxu0
        %v897 = vadd.f32 %v701, %v896
        %v898 = vpop.f32.mrf.mxu0
        %899 = vmatprep.mubr.f32.mxu0 0.0
        %900 = vmatmul.mubr.f32.gmra.mxu0 %v761
        %v901 = vpop.f32.mrf.mxu0
        %v902 = vadd.f32 %v706, %v901
        %v903 = vpop.f32.mrf.mxu0
        %904 = vmatprep.mubr.f32.mxu0 0.0
        %905 = vmatmul.mubr.f32.gmra.mxu0 %v764
        %v906 = vpop.f32.mrf.mxu0
        %v907 = vadd.f32 %v711, %v906
        %v908 = vpop.f32.mrf.mxu0
        %909 = vmatprep.mubr.f32.mxu0 0.0
        %910 = vmatmul.mubr.f32.gmra.mxu0 %v767
        %v911 = vpop.f32.mrf.mxu0
        %v912 = vadd.f32 %v716, %v911
        %v913 = vpop.f32.mrf.mxu0
        %914 = vmatprep.mubr.f32.mxu0 0.0
        %915 = vmatmul.mubr.f32.gmra.mxu0 %v770
        %v916 = vpop.f32.mrf.mxu0
        %v917 = vadd.f32 %v721, %v916
        %v918 = vpop.f32.mrf.mxu0
        %919 = vdwg.mxu0
        %v920 = vld [vmem:[%s415 + $0x1] sm:$0xff]
        %v921 = vld [vmem:[%s415 + $0x11] sm:$0xff]
        %v922 = vld [vmem:[%s415 + $0x21] sm:$0xff]
        %v923 = vld [vmem:[%s415 + $0x31] sm:$0xff]
        %v924 = vld [vmem:[%s415 + $0x41] sm:$0xff]
        %v925 = vld [vmem:[%s415 + $0x51] sm:$0xff]
        %v926 = vld [vmem:[%s415 + $0x61] sm:$0xff]
        %v927 = vld [vmem:[%s415 + $0x71] sm:$0xff]
        %v928 = vld [vmem:[%s415 + $0x91] sm:$0xff]
        %v929 = vld [vmem:[%s415 + $0xa1] sm:$0xff]
        %v930 = vld [vmem:[%s415 + $0xb1] sm:$0xff]
        %v931 = vld [vmem:[%s415 + $0xc1] sm:$0xff]
        %v932 = vld [vmem:[%s415 + $0xd1] sm:$0xff]
        %v933 = vld [vmem:[%s415 + $0xe1] sm:$0xff]
        %v934 = vld [vmem:[%s415 + $0xf1] sm:$0xff]
        %v935 = vld [vmem:[%s415 + $0x101] sm:$0xff]
        %s936 = scalar_lea.vmem %s5, 8
        %v937 = vld [vmem:[%s936] sm:$0xf]
        %v939 = vsel %vm526, %v920, 0
        %v942 = vsel %vm526, %v921, 0
        %v945 = vsel %vm526, %v922, 0
        %v948 = vsel %vm526, %v923, 0
        %v951 = vsel %vm526, %v924, 0
        %v954 = vsel %vm526, %v925, 0
        %v957 = vsel %vm526, %v926, 0
        %v960 = vsel %vm526, %v927, 0
        %v963 = vsel %vm526, %v928, 0
        %v966 = vsel %vm526, %v929, 0
        %v969 = vsel %vm526, %v930, 0
        %v972 = vsel %vm526, %v931, 0
        %v975 = vsel %vm526, %v932, 0
        %v978 = vsel %vm526, %v933, 0
        %v981 = vsel %vm526, %v934, 0
        %v984 = vsel %vm526, %v935, 0
        %v987 = vsel %vm575, %v937, 0
        %989 = vmatprep.subr.mxu0 0.0
        %990 = vmatpush1.msra.mxu0 0.0
        %991 = vmatprep.subr.mxu0 0.0
        %992 = vmatpush1.msra.mxu0 0.0
        %993 = vmatprep.subr.mxu0 0.0
        %994 = vmatpush1.msra.mxu0 0.0
        %995 = vmatprep.subr.mxu0 0.0
        %996 = vmatpush1.msra.mxu0 0.0
        %997 = vmatprep.subr.mxu0 0.0
        %998 = vmatpush1.msra.mxu0 0.0
        %999 = vmatprep.subr.mxu0 0.0
        %1000 = vmatpush1.msra.mxu0 0.0
        %1001 = vmatprep.subr.mxu0 0.0
        %1002 = vmatpush1.msra.mxu0 0.0
        %1003 = vmatprep.subr.mxu0 0.0
        %1004 = vmatpush1.msra.mxu0 0.0
        %1005 = vmatprep.subr.mxu0 0.0
        %1006 = vmatpush1.msra.mxu0 0.0
        %1007 = vmatprep.subr.mxu0 0.0
        %1008 = vmatpush1.msra.mxu0 0.0
        %1009 = vmatprep.subr.mxu0 0.0
        %1010 = vmatpush1.msra.mxu0 0.0
        %1011 = vmatprep.subr.mxu0 0.0
        %1012 = vmatpush1.msra.mxu0 0.0
        %1013 = vmatprep.subr.mxu0 0.0
        %1014 = vmatpush1.msra.mxu0 0.0
        %1015 = vmatprep.subr.mxu0 0.0
        %1016 = vmatpush1.msra.mxu0 0.0
        %1017 = vmatprep.subr.mxu0 0.0
        %1018 = vmatpush1.msra.mxu0 0.0
        %1019 = vmatprep.subr.mxu0 0.0
        %1020 = vmatpush1.msra.mxu0 %v987
        %1021 = vmatprep.subr.mxu0 0.0
        %1022 = vmatpush2.msra.mxu0 0.0
        %1023 = vmatprep.subr.mxu0 0.0
        %1024 = vmatpush2.msra.mxu0 0.0
        %1025 = vmatprep.subr.mxu0 0.0
        %1026 = vmatpush2.msra.mxu0 0.0
        %1027 = vmatprep.subr.mxu0 0.0
        %1028 = vmatpush2.msra.mxu0 0.0
        %1029 = vmatprep.subr.mxu0 0.0
        %1030 = vmatpush2.msra.mxu0 0.0
        %1031 = vmatprep.subr.mxu0 0.0
        %1032 = vmatpush2.msra.mxu0 0.0
        %1033 = vmatprep.subr.mxu0 0.0
        %1034 = vmatpush2.msra.mxu0 0.0
        %1035 = vmatprep.subr.mxu0 0.0
        %1036 = vmatpush2.msra.mxu0 0.0
        %1037 = vmatprep.subr.mxu0 0.0
        %1038 = vmatpush2.msra.mxu0 0.0
        %1039 = vmatprep.subr.mxu0 0.0
        %1040 = vmatpush2.msra.mxu0 0.0
        %1041 = vmatprep.subr.mxu0 0.0
        %1042 = vmatpush2.msra.mxu0 0.0
        %1043 = vmatprep.subr.mxu0 0.0
        %1044 = vmatpush2.msra.mxu0 0.0
        %1045 = vmatprep.subr.mxu0 0.0
        %1046 = vmatpush2.msra.mxu0 0.0
        %1047 = vmatprep.subr.mxu0 0.0
        %1048 = vmatpush2.msra.mxu0 0.0
        %1049 = vmatprep.subr.mxu0 0.0
        %1050 = vmatpush2.msra.mxu0 0.0
        %1051 = vmatprep.subr.mxu0 0.0
        %1052 = vmatpush2.msra.mxu0 0.0
        %1053 = vmatprep.mubr.f32.mxu0 0.0
        %1054 = vmatmul.mubr.f32.gmra.mxu0 %v939
        %v1055 = vpop.f32.mrf.mxu0
        %v1056 = vadd.f32 0.0, %v1055
        %v1057 = vpop.f32.mrf.mxu0
        %1058 = vmatprep.mubr.f32.mxu0 0.0
        %1059 = vmatmul.mubr.f32.gmra.mxu0 %v942
        %v1060 = vpop.f32.mrf.mxu0
        %v1061 = vadd.f32 0.0, %v1060
        %v1062 = vpop.f32.mrf.mxu0
        %1063 = vmatprep.mubr.f32.mxu0 0.0
        %1064 = vmatmul.mubr.f32.gmra.mxu0 %v945
        %v1065 = vpop.f32.mrf.mxu0
        %v1066 = vadd.f32 0.0, %v1065
        %v1067 = vpop.f32.mrf.mxu0
        %1068 = vmatprep.mubr.f32.mxu0 0.0
        %1069 = vmatmul.mubr.f32.gmra.mxu0 %v948
        %v1070 = vpop.f32.mrf.mxu0
        %v1071 = vadd.f32 0.0, %v1070
        %v1072 = vpop.f32.mrf.mxu0
        %1073 = vmatprep.mubr.f32.mxu0 0.0
        %1074 = vmatmul.mubr.f32.gmra.mxu0 %v951
        %v1075 = vpop.f32.mrf.mxu0
        %v1076 = vadd.f32 0.0, %v1075
        %v1077 = vpop.f32.mrf.mxu0
        %1078 = vmatprep.mubr.f32.mxu0 0.0
        %1079 = vmatmul.mubr.f32.gmra.mxu0 %v954
        %v1080 = vpop.f32.mrf.mxu0
        %v1081 = vadd.f32 0.0, %v1080
        %v1082 = vpop.f32.mrf.mxu0
        %1083 = vmatprep.mubr.f32.mxu0 0.0
        %1084 = vmatmul.mubr.f32.gmra.mxu0 %v957
        %v1085 = vpop.f32.mrf.mxu0
        %v1086 = vadd.f32 0.0, %v1085
        %v1087 = vpop.f32.mrf.mxu0
        %1088 = vmatprep.mubr.f32.mxu0 0.0
        %1089 = vmatmul.mubr.f32.gmra.mxu0 %v960
        %v1090 = vpop.f32.mrf.mxu0
        %v1091 = vadd.f32 0.0, %v1090
        %v1092 = vpop.f32.mrf.mxu0
        %1093 = vmatprep.mubr.f32.mxu0 0.0
        %1094 = vmatmul.mubr.f32.gmra.mxu0 %v963
        %v1095 = vpop.f32.mrf.mxu0
        %v1096 = vadd.f32 0.0, %v1095
        %v1097 = vpop.f32.mrf.mxu0
        %1098 = vmatprep.mubr.f32.mxu0 0.0
        %1099 = vmatmul.mubr.f32.gmra.mxu0 %v966
        %v1100 = vpop.f32.mrf.mxu0
        %v1101 = vadd.f32 0.0, %v1100
        %v1102 = vpop.f32.mrf.mxu0
        %1103 = vmatprep.mubr.f32.mxu0 0.0
        %1104 = vmatmul.mubr.f32.gmra.mxu0 %v969
        %v1105 = vpop.f32.mrf.mxu0
        %v1106 = vadd.f32 0.0, %v1105
        %v1107 = vpop.f32.mrf.mxu0
        %1108 = vmatprep.mubr.f32.mxu0 0.0
        %1109 = vmatmul.mubr.f32.gmra.mxu0 %v972
        %v1110 = vpop.f32.mrf.mxu0
        %v1111 = vadd.f32 0.0, %v1110
        %v1112 = vpop.f32.mrf.mxu0
        %1113 = vmatprep.mubr.f32.mxu0 0.0
        %1114 = vmatmul.mubr.f32.gmra.mxu0 %v975
        %v1115 = vpop.f32.mrf.mxu0
        %v1116 = vadd.f32 0.0, %v1115
        %v1117 = vpop.f32.mrf.mxu0
        %1118 = vmatprep.mubr.f32.mxu0 0.0
        %1119 = vmatmul.mubr.f32.gmra.mxu0 %v978
        %v1120 = vpop.f32.mrf.mxu0
        %v1121 = vadd.f32 0.0, %v1120
        %v1122 = vpop.f32.mrf.mxu0
        %1123 = vmatprep.mubr.f32.mxu0 0.0
        %1124 = vmatmul.mubr.f32.gmra.mxu0 %v981
        %v1125 = vpop.f32.mrf.mxu0
        %v1126 = vadd.f32 0.0, %v1125
        %v1127 = vpop.f32.mrf.mxu0
        %1128 = vmatprep.mubr.f32.mxu0 0.0
        %1129 = vmatmul.mubr.f32.gmra.mxu0 %v984
        %v1130 = vpop.f32.mrf.mxu0
        %v1131 = vadd.f32 0.0, %v1130
        %v1132 = vpop.f32.mrf.mxu0
        %1133 = vdwg.mxu0
        %v1134 = vadd.f32 %v842, %v1056
        %v1135 = vadd.f32 %v847, %v1061
        %v1136 = vadd.f32 %v852, %v1066
        %v1137 = vadd.f32 %v857, %v1071
        %v1138 = vadd.f32 %v862, %v1076
        %v1139 = vadd.f32 %v867, %v1081
        %v1140 = vadd.f32 %v872, %v1086
        %v1141 = vadd.f32 %v877, %v1091
        %v1142 = vadd.f32 %v882, %v1096
        %v1143 = vadd.f32 %v887, %v1101
        %v1144 = vadd.f32 %v892, %v1106
        %v1145 = vadd.f32 %v897, %v1111
        %v1146 = vadd.f32 %v902, %v1116
        %v1147 = vadd.f32 %v907, %v1121
        %v1148 = vadd.f32 %v912, %v1126
        %v1149 = vadd.f32 %v917, %v1131
        %v1150 = vld [vmem:[%s429] sm:$0xff]
        %v1151 = vld [vmem:[%s429 + $0x10] sm:$0xff]
        %v1152 = vld [vmem:[%s429 + $0x20] sm:$0xff]
        %v1153 = vld [vmem:[%s429 + $0x30] sm:$0xff]
        %v1154 = vld [vmem:[%s429 + $0x40] sm:$0xff]
        %v1155 = vld [vmem:[%s429 + $0x50] sm:$0xff]
        %v1156 = vld [vmem:[%s429 + $0x60] sm:$0xff]
        %v1157 = vld [vmem:[%s429 + $0x70] sm:$0xff]
        %v1158 = vld [vmem:[%s429 + $0x90] sm:$0xff]
        %v1159 = vld [vmem:[%s429 + $0xa0] sm:$0xff]
        %v1160 = vld [vmem:[%s429 + $0xb0] sm:$0xff]
        %v1161 = vld [vmem:[%s429 + $0xc0] sm:$0xff]
        %v1162 = vld [vmem:[%s429 + $0xd0] sm:$0xff]
        %v1163 = vld [vmem:[%s429 + $0xe0] sm:$0xff]
        %v1164 = vld [vmem:[%s429 + $0xf0] sm:$0xff]
        %v1165 = vld [vmem:[%s429 + $0x100] sm:$0xff]
        %s1166 = scalar_lea.vmem %s5, 12
        %v1167 = vld [vmem:[%s1166] sm:$0xf]
        %v1169 = vsel %vm526, %v1150, 0
        %v1172 = vsel %vm526, %v1151, 0
        %v1175 = vsel %vm526, %v1152, 0
        %v1178 = vsel %vm526, %v1153, 0
        %v1181 = vsel %vm526, %v1154, 0
        %v1184 = vsel %vm526, %v1155, 0
        %v1187 = vsel %vm526, %v1156, 0
        %v1190 = vsel %vm526, %v1157, 0
        %v1193 = vsel %vm526, %v1158, 0
        %v1196 = vsel %vm526, %v1159, 0
        %v1199 = vsel %vm526, %v1160, 0
        %v1202 = vsel %vm526, %v1161, 0
        %v1205 = vsel %vm526, %v1162, 0
        %v1208 = vsel %vm526, %v1163, 0
        %v1211 = vsel %vm526, %v1164, 0
        %v1214 = vsel %vm526, %v1165, 0
        %v1217 = vsel %vm575, %v1167, 0
        %1219 = vmatprep.subr.mxu0 0.0
        %1220 = vmatpush1.msra.mxu0 0.0
        %1221 = vmatprep.subr.mxu0 0.0
        %1222 = vmatpush1.msra.mxu0 0.0
        %1223 = vmatprep.subr.mxu0 0.0
        %1224 = vmatpush1.msra.mxu0 0.0
        %1225 = vmatprep.subr.mxu0 0.0
        %1226 = vmatpush1.msra.mxu0 0.0
        %1227 = vmatprep.subr.mxu0 0.0
        %1228 = vmatpush1.msra.mxu0 0.0
        %1229 = vmatprep.subr.mxu0 0.0
        %1230 = vmatpush1.msra.mxu0 0.0
        %1231 = vmatprep.subr.mxu0 0.0
        %1232 = vmatpush1.msra.mxu0 0.0
        %1233 = vmatprep.subr.mxu0 0.0
        %1234 = vmatpush1.msra.mxu0 0.0
        %1235 = vmatprep.subr.mxu0 0.0
        %1236 = vmatpush1.msra.mxu0 0.0
        %1237 = vmatprep.subr.mxu0 0.0
        %1238 = vmatpush1.msra.mxu0 0.0
        %1239 = vmatprep.subr.mxu0 0.0
        %1240 = vmatpush1.msra.mxu0 0.0
        %1241 = vmatprep.subr.mxu0 0.0
        %1242 = vmatpush1.msra.mxu0 0.0
        %1243 = vmatprep.subr.mxu0 0.0
        %1244 = vmatpush1.msra.mxu0 0.0
        %1245 = vmatprep.subr.mxu0 0.0
        %1246 = vmatpush1.msra.mxu0 0.0
        %1247 = vmatprep.subr.mxu0 0.0
        %1248 = vmatpush1.msra.mxu0 0.0
        %1249 = vmatprep.subr.mxu0 0.0
        %1250 = vmatpush1.msra.mxu0 %v1217
        %1251 = vmatprep.subr.mxu0 0.0
        %1252 = vmatpush2.msra.mxu0 0.0
        %1253 = vmatprep.subr.mxu0 0.0
        %1254 = vmatpush2.msra.mxu0 0.0
        %1255 = vmatprep.subr.mxu0 0.0
        %1256 = vmatpush2.msra.mxu0 0.0
        %1257 = vmatprep.subr.mxu0 0.0
        %1258 = vmatpush2.msra.mxu0 0.0
        %1259 = vmatprep.subr.mxu0 0.0
        %1260 = vmatpush2.msra.mxu0 0.0
        %1261 = vmatprep.subr.mxu0 0.0
        %1262 = vmatpush2.msra.mxu0 0.0
        %1263 = vmatprep.subr.mxu0 0.0
        %1264 = vmatpush2.msra.mxu0 0.0
        %1265 = vmatprep.subr.mxu0 0.0
        %1266 = vmatpush2.msra.mxu0 0.0
        %1267 = vmatprep.subr.mxu0 0.0
        %1268 = vmatpush2.msra.mxu0 0.0
        %1269 = vmatprep.subr.mxu0 0.0
        %1270 = vmatpush2.msra.mxu0 0.0
        %1271 = vmatprep.subr.mxu0 0.0
        %1272 = vmatpush2.msra.mxu0 0.0
        %1273 = vmatprep.subr.mxu0 0.0
        %1274 = vmatpush2.msra.mxu0 0.0
        %1275 = vmatprep.subr.mxu0 0.0
        %1276 = vmatpush2.msra.mxu0 0.0
        %1277 = vmatprep.subr.mxu0 0.0
        %1278 = vmatpush2.msra.mxu0 0.0
        %1279 = vmatprep.subr.mxu0 0.0
        %1280 = vmatpush2.msra.mxu0 0.0
        %1281 = vmatprep.subr.mxu0 0.0
        %1282 = vmatpush2.msra.mxu0 0.0
        %1283 = vmatprep.mubr.f32.mxu0 0.0
        %1284 = vmatmul.mubr.f32.gmra.mxu0 %v1169
        %v1285 = vpop.f32.mrf.mxu0
        %v1286 = vadd.f32 0.0, %v1285
        %v1287 = vpop.f32.mrf.mxu0
        %1288 = vmatprep.mubr.f32.mxu0 0.0
        %1289 = vmatmul.mubr.f32.gmra.mxu0 %v1172
        %v1290 = vpop.f32.mrf.mxu0
        %v1291 = vadd.f32 0.0, %v1290
        %v1292 = vpop.f32.mrf.mxu0
        %1293 = vmatprep.mubr.f32.mxu0 0.0
        %1294 = vmatmul.mubr.f32.gmra.mxu0 %v1175
        %v1295 = vpop.f32.mrf.mxu0
        %v1296 = vadd.f32 0.0, %v1295
        %v1297 = vpop.f32.mrf.mxu0
        %1298 = vmatprep.mubr.f32.mxu0 0.0
        %1299 = vmatmul.mubr.f32.gmra.mxu0 %v1178
        %v1300 = vpop.f32.mrf.mxu0
        %v1301 = vadd.f32 0.0, %v1300
        %v1302 = vpop.f32.mrf.mxu0
        %1303 = vmatprep.mubr.f32.mxu0 0.0
        %1304 = vmatmul.mubr.f32.gmra.mxu0 %v1181
        %v1305 = vpop.f32.mrf.mxu0
        %v1306 = vadd.f32 0.0, %v1305
        %v1307 = vpop.f32.mrf.mxu0
        %1308 = vmatprep.mubr.f32.mxu0 0.0
        %1309 = vmatmul.mubr.f32.gmra.mxu0 %v1184
        %v1310 = vpop.f32.mrf.mxu0
        %v1311 = vadd.f32 0.0, %v1310
        %v1312 = vpop.f32.mrf.mxu0
        %1313 = vmatprep.mubr.f32.mxu0 0.0
        %1314 = vmatmul.mubr.f32.gmra.mxu0 %v1187
        %v1315 = vpop.f32.mrf.mxu0
        %v1316 = vadd.f32 0.0, %v1315
        %v1317 = vpop.f32.mrf.mxu0
        %1318 = vmatprep.mubr.f32.mxu0 0.0
        %1319 = vmatmul.mubr.f32.gmra.mxu0 %v1190
        %v1320 = vpop.f32.mrf.mxu0
        %v1321 = vadd.f32 0.0, %v1320
        %v1322 = vpop.f32.mrf.mxu0
        %1323 = vmatprep.mubr.f32.mxu0 0.0
        %1324 = vmatmul.mubr.f32.gmra.mxu0 %v1193
        %v1325 = vpop.f32.mrf.mxu0
        %v1326 = vadd.f32 0.0, %v1325
        %v1327 = vpop.f32.mrf.mxu0
        %1328 = vmatprep.mubr.f32.mxu0 0.0
        %1329 = vmatmul.mubr.f32.gmra.mxu0 %v1196
        %v1330 = vpop.f32.mrf.mxu0
        %v1331 = vadd.f32 0.0, %v1330
        %v1332 = vpop.f32.mrf.mxu0
        %1333 = vmatprep.mubr.f32.mxu0 0.0
        %1334 = vmatmul.mubr.f32.gmra.mxu0 %v1199
        %v1335 = vpop.f32.mrf.mxu0
        %v1336 = vadd.f32 0.0, %v1335
        %v1337 = vpop.f32.mrf.mxu0
        %1338 = vmatprep.mubr.f32.mxu0 0.0
        %1339 = vmatmul.mubr.f32.gmra.mxu0 %v1202
        %v1340 = vpop.f32.mrf.mxu0
        %v1341 = vadd.f32 0.0, %v1340
        %v1342 = vpop.f32.mrf.mxu0
        %1343 = vmatprep.mubr.f32.mxu0 0.0
        %1344 = vmatmul.mubr.f32.gmra.mxu0 %v1205
        %v1345 = vpop.f32.mrf.mxu0
        %v1346 = vadd.f32 0.0, %v1345
        %v1347 = vpop.f32.mrf.mxu0
        %1348 = vmatprep.mubr.f32.mxu0 0.0
        %1349 = vmatmul.mubr.f32.gmra.mxu0 %v1208
        %v1350 = vpop.f32.mrf.mxu0
        %v1351 = vadd.f32 0.0, %v1350
        %v1352 = vpop.f32.mrf.mxu0
        %1353 = vmatprep.mubr.f32.mxu0 0.0
        %1354 = vmatmul.mubr.f32.gmra.mxu0 %v1211
        %v1355 = vpop.f32.mrf.mxu0
        %v1356 = vadd.f32 0.0, %v1355
        %v1357 = vpop.f32.mrf.mxu0
        %1358 = vmatprep.mubr.f32.mxu0 0.0
        %1359 = vmatmul.mubr.f32.gmra.mxu0 %v1214
        %v1360 = vpop.f32.mrf.mxu0
        %v1361 = vadd.f32 0.0, %v1360
        %v1362 = vpop.f32.mrf.mxu0
        %1363 = vdwg.mxu0
        %v1364 = vadd.f32 %v1134, %v1286
        %v1365 = vadd.f32 %v1135, %v1291
        %v1366 = vadd.f32 %v1136, %v1296
        %v1367 = vadd.f32 %v1137, %v1301
        %v1368 = vadd.f32 %v1138, %v1306
        %v1369 = vadd.f32 %v1139, %v1311
        %v1370 = vadd.f32 %v1140, %v1316
        %v1371 = vadd.f32 %v1141, %v1321
        %v1372 = vadd.f32 %v1142, %v1326
        %v1373 = vadd.f32 %v1143, %v1331
        %v1374 = vadd.f32 %v1144, %v1336
        %v1375 = vadd.f32 %v1145, %v1341
        %v1376 = vadd.f32 %v1146, %v1346
        %v1377 = vadd.f32 %v1147, %v1351
        %v1378 = vadd.f32 %v1148, %v1356
        %v1379 = vadd.f32 %v1149, %v1361
        %v1380 = vld [vmem:[%s436] sm:$0xff]
        %v1381 = vld [vmem:[%s436 + $0x10] sm:$0xff]
        %v1382 = vld [vmem:[%s436 + $0x20] sm:$0xff]
        %v1383 = vld [vmem:[%s436 + $0x30] sm:$0xff]
        %v1384 = vld [vmem:[%s436 + $0x40] sm:$0xff]
        %v1385 = vld [vmem:[%s436 + $0x50] sm:$0xff]
        %v1386 = vld [vmem:[%s436 + $0x60] sm:$0xff]
        %v1387 = vld [vmem:[%s436 + $0x70] sm:$0xff]
        %v1388 = vld [vmem:[%s436 + $0x90] sm:$0xff]
        %v1389 = vld [vmem:[%s436 + $0xa0] sm:$0xff]
        %v1390 = vld [vmem:[%s436 + $0xb0] sm:$0xff]
        %v1391 = vld [vmem:[%s436 + $0xc0] sm:$0xff]
        %v1392 = vld [vmem:[%s436 + $0xd0] sm:$0xff]
        %v1393 = vld [vmem:[%s436 + $0xe0] sm:$0xff]
        %v1394 = vld [vmem:[%s436 + $0xf0] sm:$0xff]
        %v1395 = vld [vmem:[%s436 + $0x100] sm:$0xff]
        %s1396 = scalar_lea.vmem %s5, 16
        %v1397 = vld [vmem:[%s1396] sm:$0xf]
        %v1399 = vsel %vm526, %v1380, 0
        %v1402 = vsel %vm526, %v1381, 0
        %v1405 = vsel %vm526, %v1382, 0
        %v1408 = vsel %vm526, %v1383, 0
        %v1411 = vsel %vm526, %v1384, 0
        %v1414 = vsel %vm526, %v1385, 0
        %v1417 = vsel %vm526, %v1386, 0
        %v1420 = vsel %vm526, %v1387, 0
        %v1423 = vsel %vm526, %v1388, 0
        %v1426 = vsel %vm526, %v1389, 0
        %v1429 = vsel %vm526, %v1390, 0
        %v1432 = vsel %vm526, %v1391, 0
        %v1435 = vsel %vm526, %v1392, 0
        %v1438 = vsel %vm526, %v1393, 0
        %v1441 = vsel %vm526, %v1394, 0
        %v1444 = vsel %vm526, %v1395, 0
        %v1447 = vsel %vm575, %v1397, 0
        %1449 = vmatprep.subr.mxu0 0.0
        %1450 = vmatpush1.msra.mxu0 0.0
        %1451 = vmatprep.subr.mxu0 0.0
        %1452 = vmatpush1.msra.mxu0 0.0
        %1453 = vmatprep.subr.mxu0 0.0
        %1454 = vmatpush1.msra.mxu0 0.0
        %1455 = vmatprep.subr.mxu0 0.0
        %1456 = vmatpush1.msra.mxu0 0.0
        %1457 = vmatprep.subr.mxu0 0.0
        %1458 = vmatpush1.msra.mxu0 0.0
        %1459 = vmatprep.subr.mxu0 0.0
        %1460 = vmatpush1.msra.mxu0 0.0
        %1461 = vmatprep.subr.mxu0 0.0
        %1462 = vmatpush1.msra.mxu0 0.0
        %1463 = vmatprep.subr.mxu0 0.0
        %1464 = vmatpush1.msra.mxu0 0.0
        %1465 = vmatprep.subr.mxu0 0.0
        %1466 = vmatpush1.msra.mxu0 0.0
        %1467 = vmatprep.subr.mxu0 0.0
        %1468 = vmatpush1.msra.mxu0 0.0
        %1469 = vmatprep.subr.mxu0 0.0
        %1470 = vmatpush1.msra.mxu0 0.0
        %1471 = vmatprep.subr.mxu0 0.0
        %1472 = vmatpush1.msra.mxu0 0.0
        %1473 = vmatprep.subr.mxu0 0.0
        %1474 = vmatpush1.msra.mxu0 0.0
        %1475 = vmatprep.subr.mxu0 0.0
        %1476 = vmatpush1.msra.mxu0 0.0
        %1477 = vmatprep.subr.mxu0 0.0
        %1478 = vmatpush1.msra.mxu0 0.0
        %1479 = vmatprep.subr.mxu0 0.0
        %1480 = vmatpush1.msra.mxu0 %v1447
        %1481 = vmatprep.subr.mxu0 0.0
        %1482 = vmatpush2.msra.mxu0 0.0
        %1483 = vmatprep.subr.mxu0 0.0
        %1484 = vmatpush2.msra.mxu0 0.0
        %1485 = vmatprep.subr.mxu0 0.0
        %1486 = vmatpush2.msra.mxu0 0.0
        %1487 = vmatprep.subr.mxu0 0.0
        %1488 = vmatpush2.msra.mxu0 0.0
        %1489 = vmatprep.subr.mxu0 0.0
        %1490 = vmatpush2.msra.mxu0 0.0
        %1491 = vmatprep.subr.mxu0 0.0
        %1492 = vmatpush2.msra.mxu0 0.0
        %1493 = vmatprep.subr.mxu0 0.0
        %1494 = vmatpush2.msra.mxu0 0.0
        %1495 = vmatprep.subr.mxu0 0.0
        %1496 = vmatpush2.msra.mxu0 0.0
        %1497 = vmatprep.subr.mxu0 0.0
        %1498 = vmatpush2.msra.mxu0 0.0
        %1499 = vmatprep.subr.mxu0 0.0
        %1500 = vmatpush2.msra.mxu0 0.0
        %1501 = vmatprep.subr.mxu0 0.0
        %1502 = vmatpush2.msra.mxu0 0.0
        %1503 = vmatprep.subr.mxu0 0.0
        %1504 = vmatpush2.msra.mxu0 0.0
        %1505 = vmatprep.subr.mxu0 0.0
        %1506 = vmatpush2.msra.mxu0 0.0
        %1507 = vmatprep.subr.mxu0 0.0
        %1508 = vmatpush2.msra.mxu0 0.0
        %1509 = vmatprep.subr.mxu0 0.0
        %1510 = vmatpush2.msra.mxu0 0.0
        %1511 = vmatprep.subr.mxu0 0.0
        %1512 = vmatpush2.msra.mxu0 0.0
        %1513 = vmatprep.mubr.f32.mxu0 0.0
        %1514 = vmatmul.mubr.f32.gmra.mxu0 %v1399
        %v1515 = vpop.f32.mrf.mxu0
        %v1516 = vadd.f32 0.0, %v1515
        %v1517 = vpop.f32.mrf.mxu0
        %1518 = vmatprep.mubr.f32.mxu0 0.0
        %1519 = vmatmul.mubr.f32.gmra.mxu0 %v1402
        %v1520 = vpop.f32.mrf.mxu0
        %v1521 = vadd.f32 0.0, %v1520
        %v1522 = vpop.f32.mrf.mxu0
        %1523 = vmatprep.mubr.f32.mxu0 0.0
        %1524 = vmatmul.mubr.f32.gmra.mxu0 %v1405
        %v1525 = vpop.f32.mrf.mxu0
        %v1526 = vadd.f32 0.0, %v1525
        %v1527 = vpop.f32.mrf.mxu0
        %1528 = vmatprep.mubr.f32.mxu0 0.0
        %1529 = vmatmul.mubr.f32.gmra.mxu0 %v1408
        %v1530 = vpop.f32.mrf.mxu0
        %v1531 = vadd.f32 0.0, %v1530
        %v1532 = vpop.f32.mrf.mxu0
        %1533 = vmatprep.mubr.f32.mxu0 0.0
        %1534 = vmatmul.mubr.f32.gmra.mxu0 %v1411
        %v1535 = vpop.f32.mrf.mxu0
        %v1536 = vadd.f32 0.0, %v1535
        %v1537 = vpop.f32.mrf.mxu0
        %1538 = vmatprep.mubr.f32.mxu0 0.0
        %1539 = vmatmul.mubr.f32.gmra.mxu0 %v1414
        %v1540 = vpop.f32.mrf.mxu0
        %v1541 = vadd.f32 0.0, %v1540
        %v1542 = vpop.f32.mrf.mxu0
        %1543 = vmatprep.mubr.f32.mxu0 0.0
        %1544 = vmatmul.mubr.f32.gmra.mxu0 %v1417
        %v1545 = vpop.f32.mrf.mxu0
        %v1546 = vadd.f32 0.0, %v1545
        %v1547 = vpop.f32.mrf.mxu0
        %1548 = vmatprep.mubr.f32.mxu0 0.0
        %1549 = vmatmul.mubr.f32.gmra.mxu0 %v1420
        %v1550 = vpop.f32.mrf.mxu0
        %v1551 = vadd.f32 0.0, %v1550
        %v1552 = vpop.f32.mrf.mxu0
        %1553 = vmatprep.mubr.f32.mxu0 0.0
        %1554 = vmatmul.mubr.f32.gmra.mxu0 %v1423
        %v1555 = vpop.f32.mrf.mxu0
        %v1556 = vadd.f32 0.0, %v1555
        %v1557 = vpop.f32.mrf.mxu0
        %1558 = vmatprep.mubr.f32.mxu0 0.0
        %1559 = vmatmul.mubr.f32.gmra.mxu0 %v1426
        %v1560 = vpop.f32.mrf.mxu0
        %v1561 = vadd.f32 0.0, %v1560
        %v1562 = vpop.f32.mrf.mxu0
        %1563 = vmatprep.mubr.f32.mxu0 0.0
        %1564 = vmatmul.mubr.f32.gmra.mxu0 %v1429
        %v1565 = vpop.f32.mrf.mxu0
        %v1566 = vadd.f32 0.0, %v1565
        %v1567 = vpop.f32.mrf.mxu0
        %1568 = vmatprep.mubr.f32.mxu0 0.0
        %1569 = vmatmul.mubr.f32.gmra.mxu0 %v1432
        %v1570 = vpop.f32.mrf.mxu0
        %v1571 = vadd.f32 0.0, %v1570
        %v1572 = vpop.f32.mrf.mxu0
        %1573 = vmatprep.mubr.f32.mxu0 0.0
        %1574 = vmatmul.mubr.f32.gmra.mxu0 %v1435
        %v1575 = vpop.f32.mrf.mxu0
        %v1576 = vadd.f32 0.0, %v1575
        %v1577 = vpop.f32.mrf.mxu0
        %1578 = vmatprep.mubr.f32.mxu0 0.0
        %1579 = vmatmul.mubr.f32.gmra.mxu0 %v1438
        %v1580 = vpop.f32.mrf.mxu0
        %v1581 = vadd.f32 0.0, %v1580
        %v1582 = vpop.f32.mrf.mxu0
        %1583 = vmatprep.mubr.f32.mxu0 0.0
        %1584 = vmatmul.mubr.f32.gmra.mxu0 %v1441
        %v1585 = vpop.f32.mrf.mxu0
        %v1586 = vadd.f32 0.0, %v1585
        %v1587 = vpop.f32.mrf.mxu0
        %1588 = vmatprep.mubr.f32.mxu0 0.0
        %1589 = vmatmul.mubr.f32.gmra.mxu0 %v1444
        %v1590 = vpop.f32.mrf.mxu0
        %v1591 = vadd.f32 0.0, %v1590
        %v1592 = vpop.f32.mrf.mxu0
        %1593 = vdwg.mxu0
        %v1594 = vadd.f32 %v1364, %v1516
        %v1595 = vadd.f32 %v1365, %v1521
        %v1596 = vadd.f32 %v1366, %v1526
        %v1597 = vadd.f32 %v1367, %v1531
        %v1598 = vadd.f32 %v1368, %v1536
        %v1599 = vadd.f32 %v1369, %v1541
        %v1600 = vadd.f32 %v1370, %v1546
        %v1601 = vadd.f32 %v1371, %v1551
        %v1602 = vadd.f32 %v1372, %v1556
        %v1603 = vadd.f32 %v1373, %v1561
        %v1604 = vadd.f32 %v1374, %v1566
        %v1605 = vadd.f32 %v1375, %v1571
        %v1606 = vadd.f32 %v1376, %v1576
        %v1607 = vadd.f32 %v1377, %v1581
        %v1608 = vadd.f32 %v1378, %v1586
        %v1609 = vadd.f32 %v1379, %v1591
        %v1610 = vld [vmem:[%s429 + $0x1] sm:$0xff]
        %v1611 = vld [vmem:[%s429 + $0x11] sm:$0xff]
        %v1612 = vld [vmem:[%s429 + $0x21] sm:$0xff]
        %v1613 = vld [vmem:[%s429 + $0x31] sm:$0xff]
        %v1614 = vld [vmem:[%s429 + $0x41] sm:$0xff]
        %v1615 = vld [vmem:[%s429 + $0x51] sm:$0xff]
        %v1616 = vld [vmem:[%s429 + $0x61] sm:$0xff]
        %v1617 = vld [vmem:[%s429 + $0x71] sm:$0xff]
        %v1618 = vld [vmem:[%s429 + $0x91] sm:$0xff]
        %v1619 = vld [vmem:[%s429 + $0xa1] sm:$0xff]
        %v1620 = vld [vmem:[%s429 + $0xb1] sm:$0xff]
        %v1621 = vld [vmem:[%s429 + $0xc1] sm:$0xff]
        %v1622 = vld [vmem:[%s429 + $0xd1] sm:$0xff]
        %v1623 = vld [vmem:[%s429 + $0xe1] sm:$0xff]
        %v1624 = vld [vmem:[%s429 + $0xf1] sm:$0xff]
        %v1625 = vld [vmem:[%s429 + $0x101] sm:$0xff]
        %s1626 = scalar_lea.vmem %s5, 20
        %v1627 = vld [vmem:[%s1626] sm:$0xf]
        %v1629 = vsel %vm526, %v1610, 0
        %v1632 = vsel %vm526, %v1611, 0
        %v1635 = vsel %vm526, %v1612, 0
        %v1638 = vsel %vm526, %v1613, 0
        %v1641 = vsel %vm526, %v1614, 0
        %v1644 = vsel %vm526, %v1615, 0
        %v1647 = vsel %vm526, %v1616, 0
        %v1650 = vsel %vm526, %v1617, 0
        %v1653 = vsel %vm526, %v1618, 0
        %v1656 = vsel %vm526, %v1619, 0
        %v1659 = vsel %vm526, %v1620, 0
        %v1662 = vsel %vm526, %v1621, 0
        %v1665 = vsel %vm526, %v1622, 0
        %v1668 = vsel %vm526, %v1623, 0
        %v1671 = vsel %vm526, %v1624, 0
        %v1674 = vsel %vm526, %v1625, 0
        %v1677 = vsel %vm575, %v1627, 0
        %1679 = vmatprep.subr.mxu0 0.0
        %1680 = vmatpush1.msra.mxu0 0.0
        %1681 = vmatprep.subr.mxu0 0.0
        %1682 = vmatpush1.msra.mxu0 0.0
        %1683 = vmatprep.subr.mxu0 0.0
        %1684 = vmatpush1.msra.mxu0 0.0
        %1685 = vmatprep.subr.mxu0 0.0
        %1686 = vmatpush1.msra.mxu0 0.0
        %1687 = vmatprep.subr.mxu0 0.0
        %1688 = vmatpush1.msra.mxu0 0.0
        %1689 = vmatprep.subr.mxu0 0.0
        %1690 = vmatpush1.msra.mxu0 0.0
        %1691 = vmatprep.subr.mxu0 0.0
        %1692 = vmatpush1.msra.mxu0 0.0
        %1693 = vmatprep.subr.mxu0 0.0
        %1694 = vmatpush1.msra.mxu0 0.0
        %1695 = vmatprep.subr.mxu0 0.0
        %1696 = vmatpush1.msra.mxu0 0.0
        %1697 = vmatprep.subr.mxu0 0.0
        %1698 = vmatpush1.msra.mxu0 0.0
        %1699 = vmatprep.subr.mxu0 0.0
        %1700 = vmatpush1.msra.mxu0 0.0
        %1701 = vmatprep.subr.mxu0 0.0
        %1702 = vmatpush1.msra.mxu0 0.0
        %1703 = vmatprep.subr.mxu0 0.0
        %1704 = vmatpush1.msra.mxu0 0.0
        %1705 = vmatprep.subr.mxu0 0.0
        %1706 = vmatpush1.msra.mxu0 0.0
        %1707 = vmatprep.subr.mxu0 0.0
        %1708 = vmatpush1.msra.mxu0 0.0
        %1709 = vmatprep.subr.mxu0 0.0
        %1710 = vmatpush1.msra.mxu0 %v1677
        %1711 = vmatprep.subr.mxu0 0.0
        %1712 = vmatpush2.msra.mxu0 0.0
        %1713 = vmatprep.subr.mxu0 0.0
        %1714 = vmatpush2.msra.mxu0 0.0
        %1715 = vmatprep.subr.mxu0 0.0
        %1716 = vmatpush2.msra.mxu0 0.0
        %1717 = vmatprep.subr.mxu0 0.0
        %1718 = vmatpush2.msra.mxu0 0.0
        %1719 = vmatprep.subr.mxu0 0.0
        %1720 = vmatpush2.msra.mxu0 0.0
        %1721 = vmatprep.subr.mxu0 0.0
        %1722 = vmatpush2.msra.mxu0 0.0
        %1723 = vmatprep.subr.mxu0 0.0
        %1724 = vmatpush2.msra.mxu0 0.0
        %1725 = vmatprep.subr.mxu0 0.0
        %1726 = vmatpush2.msra.mxu0 0.0
        %1727 = vmatprep.subr.mxu0 0.0
        %1728 = vmatpush2.msra.mxu0 0.0
        %1729 = vmatprep.subr.mxu0 0.0
        %1730 = vmatpush2.msra.mxu0 0.0
        %1731 = vmatprep.subr.mxu0 0.0
        %1732 = vmatpush2.msra.mxu0 0.0
        %1733 = vmatprep.subr.mxu0 0.0
        %1734 = vmatpush2.msra.mxu0 0.0
        %1735 = vmatprep.subr.mxu0 0.0
        %1736 = vmatpush2.msra.mxu0 0.0
        %1737 = vmatprep.subr.mxu0 0.0
        %1738 = vmatpush2.msra.mxu0 0.0
        %1739 = vmatprep.subr.mxu0 0.0
        %1740 = vmatpush2.msra.mxu0 0.0
        %1741 = vmatprep.subr.mxu0 0.0
        %1742 = vmatpush2.msra.mxu0 0.0
        %1743 = vmatprep.mubr.f32.mxu0 0.0
        %1744 = vmatmul.mubr.f32.gmra.mxu0 %v1629
        %v1745 = vpop.f32.mrf.mxu0
        %v1746 = vadd.f32 0.0, %v1745
        %v1747 = vpop.f32.mrf.mxu0
        %1748 = vmatprep.mubr.f32.mxu0 0.0
        %1749 = vmatmul.mubr.f32.gmra.mxu0 %v1632
        %v1750 = vpop.f32.mrf.mxu0
        %v1751 = vadd.f32 0.0, %v1750
        %v1752 = vpop.f32.mrf.mxu0
        %1753 = vmatprep.mubr.f32.mxu0 0.0
        %1754 = vmatmul.mubr.f32.gmra.mxu0 %v1635
        %v1755 = vpop.f32.mrf.mxu0
        %v1756 = vadd.f32 0.0, %v1755
        %v1757 = vpop.f32.mrf.mxu0
        %1758 = vmatprep.mubr.f32.mxu0 0.0
        %1759 = vmatmul.mubr.f32.gmra.mxu0 %v1638
        %v1760 = vpop.f32.mrf.mxu0
        %v1761 = vadd.f32 0.0, %v1760
        %v1762 = vpop.f32.mrf.mxu0
        %1763 = vmatprep.mubr.f32.mxu0 0.0
        %1764 = vmatmul.mubr.f32.gmra.mxu0 %v1641
        %v1765 = vpop.f32.mrf.mxu0
        %v1766 = vadd.f32 0.0, %v1765
        %v1767 = vpop.f32.mrf.mxu0
        %1768 = vmatprep.mubr.f32.mxu0 0.0
        %1769 = vmatmul.mubr.f32.gmra.mxu0 %v1644
        %v1770 = vpop.f32.mrf.mxu0
        %v1771 = vadd.f32 0.0, %v1770
        %v1772 = vpop.f32.mrf.mxu0
        %1773 = vmatprep.mubr.f32.mxu0 0.0
        %1774 = vmatmul.mubr.f32.gmra.mxu0 %v1647
        %v1775 = vpop.f32.mrf.mxu0
        %v1776 = vadd.f32 0.0, %v1775
        %v1777 = vpop.f32.mrf.mxu0
        %1778 = vmatprep.mubr.f32.mxu0 0.0
        %1779 = vmatmul.mubr.f32.gmra.mxu0 %v1650
        %v1780 = vpop.f32.mrf.mxu0
        %v1781 = vadd.f32 0.0, %v1780
        %v1782 = vpop.f32.mrf.mxu0
        %1783 = vmatprep.mubr.f32.mxu0 0.0
        %1784 = vmatmul.mubr.f32.gmra.mxu0 %v1653
        %v1785 = vpop.f32.mrf.mxu0
        %v1786 = vadd.f32 0.0, %v1785
        %v1787 = vpop.f32.mrf.mxu0
        %1788 = vmatprep.mubr.f32.mxu0 0.0
        %1789 = vmatmul.mubr.f32.gmra.mxu0 %v1656
        %v1790 = vpop.f32.mrf.mxu0
        %v1791 = vadd.f32 0.0, %v1790
        %v1792 = vpop.f32.mrf.mxu0
        %1793 = vmatprep.mubr.f32.mxu0 0.0
        %1794 = vmatmul.mubr.f32.gmra.mxu0 %v1659
        %v1795 = vpop.f32.mrf.mxu0
        %v1796 = vadd.f32 0.0, %v1795
        %v1797 = vpop.f32.mrf.mxu0
        %1798 = vmatprep.mubr.f32.mxu0 0.0
        %1799 = vmatmul.mubr.f32.gmra.mxu0 %v1662
        %v1800 = vpop.f32.mrf.mxu0
        %v1801 = vadd.f32 0.0, %v1800
        %v1802 = vpop.f32.mrf.mxu0
        %1803 = vmatprep.mubr.f32.mxu0 0.0
        %1804 = vmatmul.mubr.f32.gmra.mxu0 %v1665
        %v1805 = vpop.f32.mrf.mxu0
        %v1806 = vadd.f32 0.0, %v1805
        %v1807 = vpop.f32.mrf.mxu0
        %1808 = vmatprep.mubr.f32.mxu0 0.0
        %1809 = vmatmul.mubr.f32.gmra.mxu0 %v1668
        %v1810 = vpop.f32.mrf.mxu0
        %v1811 = vadd.f32 0.0, %v1810
        %v1812 = vpop.f32.mrf.mxu0
        %1813 = vmatprep.mubr.f32.mxu0 0.0
        %1814 = vmatmul.mubr.f32.gmra.mxu0 %v1671
        %v1815 = vpop.f32.mrf.mxu0
        %v1816 = vadd.f32 0.0, %v1815
        %v1817 = vpop.f32.mrf.mxu0
        %1818 = vmatprep.mubr.f32.mxu0 0.0
        %1819 = vmatmul.mubr.f32.gmra.mxu0 %v1674
        %v1820 = vpop.f32.mrf.mxu0
        %v1821 = vadd.f32 0.0, %v1820
        %v1822 = vpop.f32.mrf.mxu0
        %1823 = vdwg.mxu0
        %v1824 = vadd.f32 %v1594, %v1746
        %v1825 = vadd.f32 %v1595, %v1751
        %v1826 = vadd.f32 %v1596, %v1756
        %v1827 = vadd.f32 %v1597, %v1761
        %v1828 = vadd.f32 %v1598, %v1766
        %v1829 = vadd.f32 %v1599, %v1771
        %v1830 = vadd.f32 %v1600, %v1776
        %v1831 = vadd.f32 %v1601, %v1781
        %v1832 = vadd.f32 %v1602, %v1786
        %v1833 = vadd.f32 %v1603, %v1791
        %v1834 = vadd.f32 %v1604, %v1796
        %v1835 = vadd.f32 %v1605, %v1801
        %v1836 = vadd.f32 %v1606, %v1806
        %v1837 = vadd.f32 %v1607, %v1811
        %v1838 = vadd.f32 %v1608, %v1816
        %v1839 = vadd.f32 %v1609, %v1821
        %s1840 = scalar_lea.vmem %s415, 16
        %v1841 = vld [vmem:[%s1840] sm:$0xff]
        %v1842 = vld [vmem:[%s1840 + $0x10] sm:$0xff]
        %v1843 = vld [vmem:[%s1840 + $0x20] sm:$0xff]
        %v1844 = vld [vmem:[%s1840 + $0x30] sm:$0xff]
        %v1845 = vld [vmem:[%s1840 + $0x40] sm:$0xff]
        %v1846 = vld [vmem:[%s1840 + $0x50] sm:$0xff]
        %v1847 = vld [vmem:[%s1840 + $0x60] sm:$0xff]
        %v1848 = vld [vmem:[%s1840 + $0x70] sm:$0xff]
        %v1849 = vld [vmem:[%s1840 + $0x90] sm:$0xff]
        %v1850 = vld [vmem:[%s1840 + $0xa0] sm:$0xff]
        %v1851 = vld [vmem:[%s1840 + $0xb0] sm:$0xff]
        %v1852 = vld [vmem:[%s1840 + $0xc0] sm:$0xff]
        %v1853 = vld [vmem:[%s1840 + $0xd0] sm:$0xff]
        %v1854 = vld [vmem:[%s1840 + $0xe0] sm:$0xff]
        %v1855 = vld [vmem:[%s1840 + $0xf0] sm:$0xff]
        %v1856 = vld [vmem:[%s1840 + $0x100] sm:$0xff]
        %s1857 = scalar_lea.vmem %s5, 24
        %v1858 = vld [vmem:[%s1857] sm:$0xf]
        %v1860 = vsel %vm526, %v1841, 0
        %v1863 = vsel %vm526, %v1842, 0
        %v1866 = vsel %vm526, %v1843, 0
        %v1869 = vsel %vm526, %v1844, 0
        %v1872 = vsel %vm526, %v1845, 0
        %v1875 = vsel %vm526, %v1846, 0
        %v1878 = vsel %vm526, %v1847, 0
        %v1881 = vsel %vm526, %v1848, 0
        %v1884 = vsel %vm526, %v1849, 0
        %v1887 = vsel %vm526, %v1850, 0
        %v1890 = vsel %vm526, %v1851, 0
        %v1893 = vsel %vm526, %v1852, 0
        %v1896 = vsel %vm526, %v1853, 0
        %v1899 = vsel %vm526, %v1854, 0
        %v1902 = vsel %vm526, %v1855, 0
        %v1905 = vsel %vm526, %v1856, 0
        %v1908 = vsel %vm575, %v1858, 0
        %1910 = vmatprep.subr.mxu0 0.0
        %1911 = vmatpush1.msra.mxu0 0.0
        %1912 = vmatprep.subr.mxu0 0.0
        %1913 = vmatpush1.msra.mxu0 0.0
        %1914 = vmatprep.subr.mxu0 0.0
        %1915 = vmatpush1.msra.mxu0 0.0
        %1916 = vmatprep.subr.mxu0 0.0
        %1917 = vmatpush1.msra.mxu0 0.0
        %1918 = vmatprep.subr.mxu0 0.0
        %1919 = vmatpush1.msra.mxu0 0.0
        %1920 = vmatprep.subr.mxu0 0.0
        %1921 = vmatpush1.msra.mxu0 0.0
        %1922 = vmatprep.subr.mxu0 0.0
        %1923 = vmatpush1.msra.mxu0 0.0
        %1924 = vmatprep.subr.mxu0 0.0
        %1925 = vmatpush1.msra.mxu0 0.0
        %1926 = vmatprep.subr.mxu0 0.0
        %1927 = vmatpush1.msra.mxu0 0.0
        %1928 = vmatprep.subr.mxu0 0.0
        %1929 = vmatpush1.msra.mxu0 0.0
        %1930 = vmatprep.subr.mxu0 0.0
        %1931 = vmatpush1.msra.mxu0 0.0
        %1932 = vmatprep.subr.mxu0 0.0
        %1933 = vmatpush1.msra.mxu0 0.0
        %1934 = vmatprep.subr.mxu0 0.0
        %1935 = vmatpush1.msra.mxu0 0.0
        %1936 = vmatprep.subr.mxu0 0.0
        %1937 = vmatpush1.msra.mxu0 0.0
        %1938 = vmatprep.subr.mxu0 0.0
        %1939 = vmatpush1.msra.mxu0 0.0
        %1940 = vmatprep.subr.mxu0 0.0
        %1941 = vmatpush1.msra.mxu0 %v1908
        %1942 = vmatprep.subr.mxu0 0.0
        %1943 = vmatpush2.msra.mxu0 0.0
        %1944 = vmatprep.subr.mxu0 0.0
        %1945 = vmatpush2.msra.mxu0 0.0
        %1946 = vmatprep.subr.mxu0 0.0
        %1947 = vmatpush2.msra.mxu0 0.0
        %1948 = vmatprep.subr.mxu0 0.0
        %1949 = vmatpush2.msra.mxu0 0.0
        %1950 = vmatprep.subr.mxu0 0.0
        %1951 = vmatpush2.msra.mxu0 0.0
        %1952 = vmatprep.subr.mxu0 0.0
        %1953 = vmatpush2.msra.mxu0 0.0
        %1954 = vmatprep.subr.mxu0 0.0
        %1955 = vmatpush2.msra.mxu0 0.0
        %1956 = vmatprep.subr.mxu0 0.0
        %1957 = vmatpush2.msra.mxu0 0.0
        %1958 = vmatprep.subr.mxu0 0.0
        %1959 = vmatpush2.msra.mxu0 0.0
        %1960 = vmatprep.subr.mxu0 0.0
        %1961 = vmatpush2.msra.mxu0 0.0
        %1962 = vmatprep.subr.mxu0 0.0
        %1963 = vmatpush2.msra.mxu0 0.0
        %1964 = vmatprep.subr.mxu0 0.0
        %1965 = vmatpush2.msra.mxu0 0.0
        %1966 = vmatprep.subr.mxu0 0.0
        %1967 = vmatpush2.msra.mxu0 0.0
        %1968 = vmatprep.subr.mxu0 0.0
        %1969 = vmatpush2.msra.mxu0 0.0
        %1970 = vmatprep.subr.mxu0 0.0
        %1971 = vmatpush2.msra.mxu0 0.0
        %1972 = vmatprep.subr.mxu0 0.0
        %1973 = vmatpush2.msra.mxu0 0.0
        %1974 = vmatprep.mubr.f32.mxu0 0.0
        %1975 = vmatmul.mubr.f32.gmra.mxu0 %v1860
        %v1976 = vpop.f32.mrf.mxu0
        %v1977 = vadd.f32 0.0, %v1976
        %v1978 = vpop.f32.mrf.mxu0
        %1979 = vmatprep.mubr.f32.mxu0 0.0
        %1980 = vmatmul.mubr.f32.gmra.mxu0 %v1863
        %v1981 = vpop.f32.mrf.mxu0
        %v1982 = vadd.f32 0.0, %v1981
        %v1983 = vpop.f32.mrf.mxu0
        %1984 = vmatprep.mubr.f32.mxu0 0.0
        %1985 = vmatmul.mubr.f32.gmra.mxu0 %v1866
        %v1986 = vpop.f32.mrf.mxu0
        %v1987 = vadd.f32 0.0, %v1986
        %v1988 = vpop.f32.mrf.mxu0
        %1989 = vmatprep.mubr.f32.mxu0 0.0
        %1990 = vmatmul.mubr.f32.gmra.mxu0 %v1869
        %v1991 = vpop.f32.mrf.mxu0
        %v1992 = vadd.f32 0.0, %v1991
        %v1993 = vpop.f32.mrf.mxu0
        %1994 = vmatprep.mubr.f32.mxu0 0.0
        %1995 = vmatmul.mubr.f32.gmra.mxu0 %v1872
        %v1996 = vpop.f32.mrf.mxu0
        %v1997 = vadd.f32 0.0, %v1996
        %v1998 = vpop.f32.mrf.mxu0
        %1999 = vmatprep.mubr.f32.mxu0 0.0
        %2000 = vmatmul.mubr.f32.gmra.mxu0 %v1875
        %v2001 = vpop.f32.mrf.mxu0
        %v2002 = vadd.f32 0.0, %v2001
        %v2003 = vpop.f32.mrf.mxu0
        %2004 = vmatprep.mubr.f32.mxu0 0.0
        %2005 = vmatmul.mubr.f32.gmra.mxu0 %v1878
        %v2006 = vpop.f32.mrf.mxu0
        %v2007 = vadd.f32 0.0, %v2006
        %v2008 = vpop.f32.mrf.mxu0
        %2009 = vmatprep.mubr.f32.mxu0 0.0
        %2010 = vmatmul.mubr.f32.gmra.mxu0 %v1881
        %v2011 = vpop.f32.mrf.mxu0
        %v2012 = vadd.f32 0.0, %v2011
        %v2013 = vpop.f32.mrf.mxu0
        %2014 = vmatprep.mubr.f32.mxu0 0.0
        %2015 = vmatmul.mubr.f32.gmra.mxu0 %v1884
        %v2016 = vpop.f32.mrf.mxu0
        %v2017 = vadd.f32 0.0, %v2016
        %v2018 = vpop.f32.mrf.mxu0
        %2019 = vmatprep.mubr.f32.mxu0 0.0
        %2020 = vmatmul.mubr.f32.gmra.mxu0 %v1887
        %v2021 = vpop.f32.mrf.mxu0
        %v2022 = vadd.f32 0.0, %v2021
        %v2023 = vpop.f32.mrf.mxu0
        %2024 = vmatprep.mubr.f32.mxu0 0.0
        %2025 = vmatmul.mubr.f32.gmra.mxu0 %v1890
        %v2026 = vpop.f32.mrf.mxu0
        %v2027 = vadd.f32 0.0, %v2026
        %v2028 = vpop.f32.mrf.mxu0
        %2029 = vmatprep.mubr.f32.mxu0 0.0
        %2030 = vmatmul.mubr.f32.gmra.mxu0 %v1893
        %v2031 = vpop.f32.mrf.mxu0
        %v2032 = vadd.f32 0.0, %v2031
        %v2033 = vpop.f32.mrf.mxu0
        %2034 = vmatprep.mubr.f32.mxu0 0.0
        %2035 = vmatmul.mubr.f32.gmra.mxu0 %v1896
        %v2036 = vpop.f32.mrf.mxu0
        %v2037 = vadd.f32 0.0, %v2036
        %v2038 = vpop.f32.mrf.mxu0
        %2039 = vmatprep.mubr.f32.mxu0 0.0
        %2040 = vmatmul.mubr.f32.gmra.mxu0 %v1899
        %v2041 = vpop.f32.mrf.mxu0
        %v2042 = vadd.f32 0.0, %v2041
        %v2043 = vpop.f32.mrf.mxu0
        %2044 = vmatprep.mubr.f32.mxu0 0.0
        %2045 = vmatmul.mubr.f32.gmra.mxu0 %v1902
        %v2046 = vpop.f32.mrf.mxu0
        %v2047 = vadd.f32 0.0, %v2046
        %v2048 = vpop.f32.mrf.mxu0
        %2049 = vmatprep.mubr.f32.mxu0 0.0
        %2050 = vmatmul.mubr.f32.gmra.mxu0 %v1905
        %v2051 = vpop.f32.mrf.mxu0
        %v2052 = vadd.f32 0.0, %v2051
        %v2053 = vpop.f32.mrf.mxu0
        %2054 = vdwg.mxu0
        %v2055 = vadd.f32 %v1824, %v1977
        %v2056 = vadd.f32 %v1825, %v1982
        %v2057 = vadd.f32 %v1826, %v1987
        %v2058 = vadd.f32 %v1827, %v1992
        %v2059 = vadd.f32 %v1828, %v1997
        %v2060 = vadd.f32 %v1829, %v2002
        %v2061 = vadd.f32 %v1830, %v2007
        %v2062 = vadd.f32 %v1831, %v2012
        %v2063 = vadd.f32 %v1832, %v2017
        %v2064 = vadd.f32 %v1833, %v2022
        %v2065 = vadd.f32 %v1834, %v2027
        %v2066 = vadd.f32 %v1835, %v2032
        %v2067 = vadd.f32 %v1836, %v2037
        %v2068 = vadd.f32 %v1837, %v2042
        %v2069 = vadd.f32 %v1838, %v2047
        %v2070 = vadd.f32 %v1839, %v2052
        %s2071 = scalar_lea.vmem %s422, 16
        %v2072 = vld [vmem:[%s2071] sm:$0xff]
        %v2073 = vld [vmem:[%s2071 + $0x10] sm:$0xff]
        %v2074 = vld [vmem:[%s2071 + $0x20] sm:$0xff]
        %v2075 = vld [vmem:[%s2071 + $0x30] sm:$0xff]
        %v2076 = vld [vmem:[%s2071 + $0x40] sm:$0xff]
        %v2077 = vld [vmem:[%s2071 + $0x50] sm:$0xff]
        %v2078 = vld [vmem:[%s2071 + $0x60] sm:$0xff]
        %v2079 = vld [vmem:[%s2071 + $0x70] sm:$0xff]
        %v2080 = vld [vmem:[%s2071 + $0x90] sm:$0xff]
        %v2081 = vld [vmem:[%s2071 + $0xa0] sm:$0xff]
        %v2082 = vld [vmem:[%s2071 + $0xb0] sm:$0xff]
        %v2083 = vld [vmem:[%s2071 + $0xc0] sm:$0xff]
        %v2084 = vld [vmem:[%s2071 + $0xd0] sm:$0xff]
        %v2085 = vld [vmem:[%s2071 + $0xe0] sm:$0xff]
        %v2086 = vld [vmem:[%s2071 + $0xf0] sm:$0xff]
        %v2087 = vld [vmem:[%s2071 + $0x100] sm:$0xff]
        %s2088 = scalar_lea.vmem %s5, 28
        %v2089 = vld [vmem:[%s2088] sm:$0xf]
        %v2091 = vsel %vm526, %v2072, 0
        %v2094 = vsel %vm526, %v2073, 0
        %v2097 = vsel %vm526, %v2074, 0
        %v2100 = vsel %vm526, %v2075, 0
        %v2103 = vsel %vm526, %v2076, 0
        %v2106 = vsel %vm526, %v2077, 0
        %v2109 = vsel %vm526, %v2078, 0
        %v2112 = vsel %vm526, %v2079, 0
        %v2115 = vsel %vm526, %v2080, 0
        %v2118 = vsel %vm526, %v2081, 0
        %v2121 = vsel %vm526, %v2082, 0
        %v2124 = vsel %vm526, %v2083, 0
        %v2127 = vsel %vm526, %v2084, 0
        %v2130 = vsel %vm526, %v2085, 0
        %v2133 = vsel %vm526, %v2086, 0
        %v2136 = vsel %vm526, %v2087, 0
        %v2139 = vsel %vm575, %v2089, 0
        %2141 = vmatprep.subr.mxu0 0.0
        %2142 = vmatpush1.msra.mxu0 0.0
        %2143 = vmatprep.subr.mxu0 0.0
        %2144 = vmatpush1.msra.mxu0 0.0
        %2145 = vmatprep.subr.mxu0 0.0
        %2146 = vmatpush1.msra.mxu0 0.0
        %2147 = vmatprep.subr.mxu0 0.0
        %2148 = vmatpush1.msra.mxu0 0.0
        %2149 = vmatprep.subr.mxu0 0.0
        %2150 = vmatpush1.msra.mxu0 0.0
        %2151 = vmatprep.subr.mxu0 0.0
        %2152 = vmatpush1.msra.mxu0 0.0
        %2153 = vmatprep.subr.mxu0 0.0
        %2154 = vmatpush1.msra.mxu0 0.0
        %2155 = vmatprep.subr.mxu0 0.0
        %2156 = vmatpush1.msra.mxu0 0.0
        %2157 = vmatprep.subr.mxu0 0.0
        %2158 = vmatpush1.msra.mxu0 0.0
        %2159 = vmatprep.subr.mxu0 0.0
        %2160 = vmatpush1.msra.mxu0 0.0
        %2161 = vmatprep.subr.mxu0 0.0
        %2162 = vmatpush1.msra.mxu0 0.0
        %2163 = vmatprep.subr.mxu0 0.0
        %2164 = vmatpush1.msra.mxu0 0.0
        %2165 = vmatprep.subr.mxu0 0.0
        %2166 = vmatpush1.msra.mxu0 0.0
        %2167 = vmatprep.subr.mxu0 0.0
        %2168 = vmatpush1.msra.mxu0 0.0
        %2169 = vmatprep.subr.mxu0 0.0
        %2170 = vmatpush1.msra.mxu0 0.0
        %2171 = vmatprep.subr.mxu0 0.0
        %2172 = vmatpush1.msra.mxu0 %v2139
        %2173 = vmatprep.subr.mxu0 0.0
        %2174 = vmatpush2.msra.mxu0 0.0
        %2175 = vmatprep.subr.mxu0 0.0
        %2176 = vmatpush2.msra.mxu0 0.0
        %2177 = vmatprep.subr.mxu0 0.0
        %2178 = vmatpush2.msra.mxu0 0.0
        %2179 = vmatprep.subr.mxu0 0.0
        %2180 = vmatpush2.msra.mxu0 0.0
        %2181 = vmatprep.subr.mxu0 0.0
        %2182 = vmatpush2.msra.mxu0 0.0
        %2183 = vmatprep.subr.mxu0 0.0
        %2184 = vmatpush2.msra.mxu0 0.0
        %2185 = vmatprep.subr.mxu0 0.0
        %2186 = vmatpush2.msra.mxu0 0.0
        %2187 = vmatprep.subr.mxu0 0.0
        %2188 = vmatpush2.msra.mxu0 0.0
        %2189 = vmatprep.subr.mxu0 0.0
        %2190 = vmatpush2.msra.mxu0 0.0
        %2191 = vmatprep.subr.mxu0 0.0
        %2192 = vmatpush2.msra.mxu0 0.0
        %2193 = vmatprep.subr.mxu0 0.0
        %2194 = vmatpush2.msra.mxu0 0.0
        %2195 = vmatprep.subr.mxu0 0.0
        %2196 = vmatpush2.msra.mxu0 0.0
        %2197 = vmatprep.subr.mxu0 0.0
        %2198 = vmatpush2.msra.mxu0 0.0
        %2199 = vmatprep.subr.mxu0 0.0
        %2200 = vmatpush2.msra.mxu0 0.0
        %2201 = vmatprep.subr.mxu0 0.0
        %2202 = vmatpush2.msra.mxu0 0.0
        %2203 = vmatprep.subr.mxu0 0.0
        %2204 = vmatpush2.msra.mxu0 0.0
        %2205 = vmatprep.mubr.f32.mxu0 0.0
        %2206 = vmatmul.mubr.f32.gmra.mxu0 %v2091
        %v2207 = vpop.f32.mrf.mxu0
        %v2208 = vadd.f32 0.0, %v2207
        %v2209 = vpop.f32.mrf.mxu0
        %2210 = vmatprep.mubr.f32.mxu0 0.0
        %2211 = vmatmul.mubr.f32.gmra.mxu0 %v2094
        %v2212 = vpop.f32.mrf.mxu0
        %v2213 = vadd.f32 0.0, %v2212
        %v2214 = vpop.f32.mrf.mxu0
        %2215 = vmatprep.mubr.f32.mxu0 0.0
        %2216 = vmatmul.mubr.f32.gmra.mxu0 %v2097
        %v2217 = vpop.f32.mrf.mxu0
        %v2218 = vadd.f32 0.0, %v2217
        %v2219 = vpop.f32.mrf.mxu0
        %2220 = vmatprep.mubr.f32.mxu0 0.0
        %2221 = vmatmul.mubr.f32.gmra.mxu0 %v2100
        %v2222 = vpop.f32.mrf.mxu0
        %v2223 = vadd.f32 0.0, %v2222
        %v2224 = vpop.f32.mrf.mxu0
        %2225 = vmatprep.mubr.f32.mxu0 0.0
        %2226 = vmatmul.mubr.f32.gmra.mxu0 %v2103
        %v2227 = vpop.f32.mrf.mxu0
        %v2228 = vadd.f32 0.0, %v2227
        %v2229 = vpop.f32.mrf.mxu0
        %2230 = vmatprep.mubr.f32.mxu0 0.0
        %2231 = vmatmul.mubr.f32.gmra.mxu0 %v2106
        %v2232 = vpop.f32.mrf.mxu0
        %v2233 = vadd.f32 0.0, %v2232
        %v2234 = vpop.f32.mrf.mxu0
        %2235 = vmatprep.mubr.f32.mxu0 0.0
        %2236 = vmatmul.mubr.f32.gmra.mxu0 %v2109
        %v2237 = vpop.f32.mrf.mxu0
        %v2238 = vadd.f32 0.0, %v2237
        %v2239 = vpop.f32.mrf.mxu0
        %2240 = vmatprep.mubr.f32.mxu0 0.0
        %2241 = vmatmul.mubr.f32.gmra.mxu0 %v2112
        %v2242 = vpop.f32.mrf.mxu0
        %v2243 = vadd.f32 0.0, %v2242
        %v2244 = vpop.f32.mrf.mxu0
        %2245 = vmatprep.mubr.f32.mxu0 0.0
        %2246 = vmatmul.mubr.f32.gmra.mxu0 %v2115
        %v2247 = vpop.f32.mrf.mxu0
        %v2248 = vadd.f32 0.0, %v2247
        %v2249 = vpop.f32.mrf.mxu0
        %2250 = vmatprep.mubr.f32.mxu0 0.0
        %2251 = vmatmul.mubr.f32.gmra.mxu0 %v2118
        %v2252 = vpop.f32.mrf.mxu0
        %v2253 = vadd.f32 0.0, %v2252
        %v2254 = vpop.f32.mrf.mxu0
        %2255 = vmatprep.mubr.f32.mxu0 0.0
        %2256 = vmatmul.mubr.f32.gmra.mxu0 %v2121
        %v2257 = vpop.f32.mrf.mxu0
        %v2258 = vadd.f32 0.0, %v2257
        %v2259 = vpop.f32.mrf.mxu0
        %2260 = vmatprep.mubr.f32.mxu0 0.0
        %2261 = vmatmul.mubr.f32.gmra.mxu0 %v2124
        %v2262 = vpop.f32.mrf.mxu0
        %v2263 = vadd.f32 0.0, %v2262
        %v2264 = vpop.f32.mrf.mxu0
        %2265 = vmatprep.mubr.f32.mxu0 0.0
        %2266 = vmatmul.mubr.f32.gmra.mxu0 %v2127
        %v2267 = vpop.f32.mrf.mxu0
        %v2268 = vadd.f32 0.0, %v2267
        %v2269 = vpop.f32.mrf.mxu0
        %2270 = vmatprep.mubr.f32.mxu0 0.0
        %2271 = vmatmul.mubr.f32.gmra.mxu0 %v2130
        %v2272 = vpop.f32.mrf.mxu0
        %v2273 = vadd.f32 0.0, %v2272
        %v2274 = vpop.f32.mrf.mxu0
        %2275 = vmatprep.mubr.f32.mxu0 0.0
        %2276 = vmatmul.mubr.f32.gmra.mxu0 %v2133
        %v2277 = vpop.f32.mrf.mxu0
        %v2278 = vadd.f32 0.0, %v2277
        %v2279 = vpop.f32.mrf.mxu0
        %2280 = vmatprep.mubr.f32.mxu0 0.0
        %2281 = vmatmul.mubr.f32.gmra.mxu0 %v2136
        %v2282 = vpop.f32.mrf.mxu0
        %v2283 = vadd.f32 0.0, %v2282
        %v2284 = vpop.f32.mrf.mxu0
        %2285 = vdwg.mxu0
        %v2286 = vadd.f32 %v2055, %v2208
        %v2287 = vadd.f32 %v2056, %v2213
        %v2288 = vadd.f32 %v2057, %v2218
        %v2289 = vadd.f32 %v2058, %v2223
        %v2290 = vadd.f32 %v2059, %v2228
        %v2291 = vadd.f32 %v2060, %v2233
        %v2292 = vadd.f32 %v2061, %v2238
        %v2293 = vadd.f32 %v2062, %v2243
        %v2294 = vadd.f32 %v2063, %v2248
        %v2295 = vadd.f32 %v2064, %v2253
        %v2296 = vadd.f32 %v2065, %v2258
        %v2297 = vadd.f32 %v2066, %v2263
        %v2298 = vadd.f32 %v2067, %v2268
        %v2299 = vadd.f32 %v2068, %v2273
        %v2300 = vadd.f32 %v2069, %v2278
        %v2301 = vadd.f32 %v2070, %v2283
        %v2302 = vld [vmem:[%s1840 + $0x1] sm:$0xff]
        %v2303 = vld [vmem:[%s1840 + $0x11] sm:$0xff]
        %v2304 = vld [vmem:[%s1840 + $0x21] sm:$0xff]
        %v2305 = vld [vmem:[%s1840 + $0x31] sm:$0xff]
        %v2306 = vld [vmem:[%s1840 + $0x41] sm:$0xff]
        %v2307 = vld [vmem:[%s1840 + $0x51] sm:$0xff]
        %v2308 = vld [vmem:[%s1840 + $0x61] sm:$0xff]
        %v2309 = vld [vmem:[%s1840 + $0x71] sm:$0xff]
        %v2310 = vld [vmem:[%s1840 + $0x91] sm:$0xff]
        %v2311 = vld [vmem:[%s1840 + $0xa1] sm:$0xff]
        %v2312 = vld [vmem:[%s1840 + $0xb1] sm:$0xff]
        %v2313 = vld [vmem:[%s1840 + $0xc1] sm:$0xff]
        %v2314 = vld [vmem:[%s1840 + $0xd1] sm:$0xff]
        %v2315 = vld [vmem:[%s1840 + $0xe1] sm:$0xff]
        %v2316 = vld [vmem:[%s1840 + $0xf1] sm:$0xff]
        %v2317 = vld [vmem:[%s1840 + $0x101] sm:$0xff]
        %s2318 = scalar_lea.vmem %s5, 32
        %v2319 = vld [vmem:[%s2318] sm:$0xf]
        %v2321 = vsel %vm526, %v2302, 0
        %v2324 = vsel %vm526, %v2303, 0
        %v2327 = vsel %vm526, %v2304, 0
        %v2330 = vsel %vm526, %v2305, 0
        %v2333 = vsel %vm526, %v2306, 0
        %v2336 = vsel %vm526, %v2307, 0
        %v2339 = vsel %vm526, %v2308, 0
        %v2342 = vsel %vm526, %v2309, 0
        %v2345 = vsel %vm526, %v2310, 0
        %v2348 = vsel %vm526, %v2311, 0
        %v2351 = vsel %vm526, %v2312, 0
        %v2354 = vsel %vm526, %v2313, 0
        %v2357 = vsel %vm526, %v2314, 0
        %v2360 = vsel %vm526, %v2315, 0
        %v2363 = vsel %vm526, %v2316, 0
        %v2366 = vsel %vm526, %v2317, 0
        %v2369 = vsel %vm575, %v2319, 0
        %2371 = vmatprep.subr.mxu0 0.0
        %2372 = vmatpush1.msra.mxu0 0.0
        %2373 = vmatprep.subr.mxu0 0.0
        %2374 = vmatpush1.msra.mxu0 0.0
        %2375 = vmatprep.subr.mxu0 0.0
        %2376 = vmatpush1.msra.mxu0 0.0
        %2377 = vmatprep.subr.mxu0 0.0
        %2378 = vmatpush1.msra.mxu0 0.0
        %2379 = vmatprep.subr.mxu0 0.0
        %2380 = vmatpush1.msra.mxu0 0.0
        %2381 = vmatprep.subr.mxu0 0.0
        %2382 = vmatpush1.msra.mxu0 0.0
        %2383 = vmatprep.subr.mxu0 0.0
        %2384 = vmatpush1.msra.mxu0 0.0
        %2385 = vmatprep.subr.mxu0 0.0
        %2386 = vmatpush1.msra.mxu0 0.0
        %2387 = vmatprep.subr.mxu0 0.0
        %2388 = vmatpush1.msra.mxu0 0.0
        %2389 = vmatprep.subr.mxu0 0.0
        %2390 = vmatpush1.msra.mxu0 0.0
        %2391 = vmatprep.subr.mxu0 0.0
        %2392 = vmatpush1.msra.mxu0 0.0
        %2393 = vmatprep.subr.mxu0 0.0
        %2394 = vmatpush1.msra.mxu0 0.0
        %2395 = vmatprep.subr.mxu0 0.0
        %2396 = vmatpush1.msra.mxu0 0.0
        %2397 = vmatprep.subr.mxu0 0.0
        %2398 = vmatpush1.msra.mxu0 0.0
        %2399 = vmatprep.subr.mxu0 0.0
        %2400 = vmatpush1.msra.mxu0 0.0
        %2401 = vmatprep.subr.mxu0 0.0
        %2402 = vmatpush1.msra.mxu0 %v2369
        %2403 = vmatprep.subr.mxu0 0.0
        %2404 = vmatpush2.msra.mxu0 0.0
        %2405 = vmatprep.subr.mxu0 0.0
        %2406 = vmatpush2.msra.mxu0 0.0
        %2407 = vmatprep.subr.mxu0 0.0
        %2408 = vmatpush2.msra.mxu0 0.0
        %2409 = vmatprep.subr.mxu0 0.0
        %2410 = vmatpush2.msra.mxu0 0.0
        %2411 = vmatprep.subr.mxu0 0.0
        %2412 = vmatpush2.msra.mxu0 0.0
        %2413 = vmatprep.subr.mxu0 0.0
        %2414 = vmatpush2.msra.mxu0 0.0
        %2415 = vmatprep.subr.mxu0 0.0
        %2416 = vmatpush2.msra.mxu0 0.0
        %2417 = vmatprep.subr.mxu0 0.0
        %2418 = vmatpush2.msra.mxu0 0.0
        %2419 = vmatprep.subr.mxu0 0.0
        %2420 = vmatpush2.msra.mxu0 0.0
        %2421 = vmatprep.subr.mxu0 0.0
        %2422 = vmatpush2.msra.mxu0 0.0
        %2423 = vmatprep.subr.mxu0 0.0
        %2424 = vmatpush2.msra.mxu0 0.0
        %2425 = vmatprep.subr.mxu0 0.0
        %2426 = vmatpush2.msra.mxu0 0.0
        %2427 = vmatprep.subr.mxu0 0.0
        %2428 = vmatpush2.msra.mxu0 0.0
        %2429 = vmatprep.subr.mxu0 0.0
        %2430 = vmatpush2.msra.mxu0 0.0
        %2431 = vmatprep.subr.mxu0 0.0
        %2432 = vmatpush2.msra.mxu0 0.0
        %2433 = vmatprep.subr.mxu0 0.0
        %2434 = vmatpush2.msra.mxu0 0.0
        %2435 = vmatprep.mubr.f32.mxu0 0.0
        %2436 = vmatmul.mubr.f32.gmra.mxu0 %v2321
        %v2437 = vpop.f32.mrf.mxu0
        %v2438 = vadd.f32 0.0, %v2437
        %v2439 = vpop.f32.mrf.mxu0
        %2440 = vmatprep.mubr.f32.mxu0 0.0
        %2441 = vmatmul.mubr.f32.gmra.mxu0 %v2324
        %v2442 = vpop.f32.mrf.mxu0
        %v2443 = vadd.f32 0.0, %v2442
        %v2444 = vpop.f32.mrf.mxu0
        %2445 = vmatprep.mubr.f32.mxu0 0.0
        %2446 = vmatmul.mubr.f32.gmra.mxu0 %v2327
        %v2447 = vpop.f32.mrf.mxu0
        %v2448 = vadd.f32 0.0, %v2447
        %v2449 = vpop.f32.mrf.mxu0
        %2450 = vmatprep.mubr.f32.mxu0 0.0
        %2451 = vmatmul.mubr.f32.gmra.mxu0 %v2330
        %v2452 = vpop.f32.mrf.mxu0
        %v2453 = vadd.f32 0.0, %v2452
        %v2454 = vpop.f32.mrf.mxu0
        %2455 = vmatprep.mubr.f32.mxu0 0.0
        %2456 = vmatmul.mubr.f32.gmra.mxu0 %v2333
        %v2457 = vpop.f32.mrf.mxu0
        %v2458 = vadd.f32 0.0, %v2457
        %v2459 = vpop.f32.mrf.mxu0
        %2460 = vmatprep.mubr.f32.mxu0 0.0
        %2461 = vmatmul.mubr.f32.gmra.mxu0 %v2336
        %v2462 = vpop.f32.mrf.mxu0
        %v2463 = vadd.f32 0.0, %v2462
        %v2464 = vpop.f32.mrf.mxu0
        %2465 = vmatprep.mubr.f32.mxu0 0.0
        %2466 = vmatmul.mubr.f32.gmra.mxu0 %v2339
        %v2467 = vpop.f32.mrf.mxu0
        %v2468 = vadd.f32 0.0, %v2467
        %v2469 = vpop.f32.mrf.mxu0
        %2470 = vmatprep.mubr.f32.mxu0 0.0
        %2471 = vmatmul.mubr.f32.gmra.mxu0 %v2342
        %v2472 = vpop.f32.mrf.mxu0
        %v2473 = vadd.f32 0.0, %v2472
        %v2474 = vpop.f32.mrf.mxu0
        %2475 = vmatprep.mubr.f32.mxu0 0.0
        %2476 = vmatmul.mubr.f32.gmra.mxu0 %v2345
        %v2477 = vpop.f32.mrf.mxu0
        %v2478 = vadd.f32 0.0, %v2477
        %v2479 = vpop.f32.mrf.mxu0
        %2480 = vmatprep.mubr.f32.mxu0 0.0
        %2481 = vmatmul.mubr.f32.gmra.mxu0 %v2348
        %v2482 = vpop.f32.mrf.mxu0
        %v2483 = vadd.f32 0.0, %v2482
        %v2484 = vpop.f32.mrf.mxu0
        %2485 = vmatprep.mubr.f32.mxu0 0.0
        %2486 = vmatmul.mubr.f32.gmra.mxu0 %v2351
        %v2487 = vpop.f32.mrf.mxu0
        %v2488 = vadd.f32 0.0, %v2487
        %v2489 = vpop.f32.mrf.mxu0
        %2490 = vmatprep.mubr.f32.mxu0 0.0
        %2491 = vmatmul.mubr.f32.gmra.mxu0 %v2354
        %v2492 = vpop.f32.mrf.mxu0
        %v2493 = vadd.f32 0.0, %v2492
        %v2494 = vpop.f32.mrf.mxu0
        %2495 = vmatprep.mubr.f32.mxu0 0.0
        %2496 = vmatmul.mubr.f32.gmra.mxu0 %v2357
        %v2497 = vpop.f32.mrf.mxu0
        %v2498 = vadd.f32 0.0, %v2497
        %v2499 = vpop.f32.mrf.mxu0
        %2500 = vmatprep.mubr.f32.mxu0 0.0
        %2501 = vmatmul.mubr.f32.gmra.mxu0 %v2360
        %v2502 = vpop.f32.mrf.mxu0
        %v2503 = vadd.f32 0.0, %v2502
        %v2504 = vpop.f32.mrf.mxu0
        %2505 = vmatprep.mubr.f32.mxu0 0.0
        %2506 = vmatmul.mubr.f32.gmra.mxu0 %v2363
        %v2507 = vpop.f32.mrf.mxu0
        %v2508 = vadd.f32 0.0, %v2507
        %v2509 = vpop.f32.mrf.mxu0
        %2510 = vmatprep.mubr.f32.mxu0 0.0
        %2511 = vmatmul.mubr.f32.gmra.mxu0 %v2366
        %v2512 = vpop.f32.mrf.mxu0
        %v2513 = vadd.f32 0.0, %v2512
        %v2514 = vpop.f32.mrf.mxu0
        %2515 = vdwg.mxu0
        %v2516 = vadd.f32 %v2286, %v2438
        %v2517 = vadd.f32 %v2287, %v2443
        %v2518 = vadd.f32 %v2288, %v2448
        %v2519 = vadd.f32 %v2289, %v2453
        %v2520 = vadd.f32 %v2290, %v2458
        %v2521 = vadd.f32 %v2291, %v2463
        %v2522 = vadd.f32 %v2292, %v2468
        %v2523 = vadd.f32 %v2293, %v2473
        %v2524 = vadd.f32 %v2294, %v2478
        %v2525 = vadd.f32 %v2295, %v2483
        %v2526 = vadd.f32 %v2296, %v2488
        %v2527 = vadd.f32 %v2297, %v2493
        %v2528 = vadd.f32 %v2298, %v2498
        %v2529 = vadd.f32 %v2299, %v2503
        %v2530 = vadd.f32 %v2300, %v2508
        %v2531 = vadd.f32 %v2301, %v2513
        %v2532 = vld [vmem:[%s9] sm:$0x1]
        %v2533 = vld [vmem:[%s9 + $0x1] sm:$0x1]
        %v2534 = vlaneseq
        %v2535 = vshrl.u32 %v2534, 7
        %v2536 = vsub.s32 0, %v2535
        %v2537 = vrot.slane %v2532, %v2536
        %v2538 = vmul.f32 %v2516, %v2537
        %v2539 = vmul.f32 %v2517, %v2537
        %v2540 = vmul.f32 %v2518, %v2537
        %v2541 = vmul.f32 %v2519, %v2537
        %v2542 = vmul.f32 %v2520, %v2537
        %v2543 = vmul.f32 %v2521, %v2537
        %v2544 = vmul.f32 %v2522, %v2537
        %v2545 = vmul.f32 %v2523, %v2537
        %v2546 = vmul.f32 %v2524, %v2537
        %v2547 = vmul.f32 %v2525, %v2537
        %v2548 = vmul.f32 %v2526, %v2537
        %v2549 = vmul.f32 %v2527, %v2537
        %v2550 = vmul.f32 %v2528, %v2537
        %v2551 = vmul.f32 %v2529, %v2537
        %v2552 = vmul.f32 %v2530, %v2537
        %v2553 = vmul.f32 %v2531, %v2537
        %v2554 = vlaneseq
        %v2555 = vshrl.u32 %v2554, 7
        %v2556 = vsub.s32 0, %v2555
        %v2557 = vrot.slane %v2533, %v2556
        %v2558 = vadd.f32 %v2538, %v2557
        %v2559 = vadd.f32 %v2539, %v2557
        %v2560 = vadd.f32 %v2540, %v2557
        %v2561 = vadd.f32 %v2541, %v2557
        %v2562 = vadd.f32 %v2542, %v2557
        %v2563 = vadd.f32 %v2543, %v2557
        %v2564 = vadd.f32 %v2544, %v2557
        %v2565 = vadd.f32 %v2545, %v2557
        %v2566 = vadd.f32 %v2546, %v2557
        %v2567 = vadd.f32 %v2547, %v2557
        %v2568 = vadd.f32 %v2548, %v2557
        %v2569 = vadd.f32 %v2549, %v2557
        %v2570 = vadd.f32 %v2550, %v2557
        %v2571 = vadd.f32 %v2551, %v2557
        %v2572 = vadd.f32 %v2552, %v2557
        %v2573 = vadd.f32 %v2553, %v2557
        %v2574 = vmax.f32 %v2558, 0.0
        %v2575 = vmax.f32 %v2559, 0.0
        %v2576 = vmax.f32 %v2560, 0.0
        %v2577 = vmax.f32 %v2561, 0.0
        %v2578 = vmax.f32 %v2562, 0.0
        %v2579 = vmax.f32 %v2563, 0.0
        %v2580 = vmax.f32 %v2564, 0.0
        %v2581 = vmax.f32 %v2565, 0.0
        %v2582 = vmax.f32 %v2566, 0.0
        %v2583 = vmax.f32 %v2567, 0.0
        %v2584 = vmax.f32 %v2568, 0.0
        %v2585 = vmax.f32 %v2569, 0.0
        %v2586 = vmax.f32 %v2570, 0.0
        %v2587 = vmax.f32 %v2571, 0.0
        %v2588 = vmax.f32 %v2572, 0.0
        %v2589 = vmax.f32 %v2573, 0.0
        %s2590 = scalar_lea.vmem [#allocation2], 16
        %2591 = vst.msk [vmem:[%s2590 + $0x1] sm:$0xff] %vm439, %v2574
        %2592 = vst.msk [vmem:[%s2590 + $0x11] sm:$0xff] %vm439, %v2575
        %2593 = vst.msk [vmem:[%s2590 + $0x21] sm:$0xff] %vm439, %v2576
        %2594 = vst.msk [vmem:[%s2590 + $0x31] sm:$0xff] %vm439, %v2577
        %2595 = vst.msk [vmem:[%s2590 + $0x41] sm:$0xff] %vm439, %v2578
        %2596 = vst.msk [vmem:[%s2590 + $0x51] sm:$0xff] %vm439, %v2579
        %2597 = vst.msk [vmem:[%s2590 + $0x61] sm:$0xff] %vm439, %v2580
        %2598 = vst.msk [vmem:[%s2590 + $0x71] sm:$0xff] %vm439, %v2581
        %2599 = vst.msk [vmem:[%s2590 + $0xa1] sm:$0xff] %vm439, %v2582
        %2600 = vst.msk [vmem:[%s2590 + $0xb1] sm:$0xff] %vm439, %v2583
        %2601 = vst.msk [vmem:[%s2590 + $0xc1] sm:$0xff] %vm439, %v2584
        %2602 = vst.msk [vmem:[%s2590 + $0xd1] sm:$0xff] %vm439, %v2585
        %2603 = vst.msk [vmem:[%s2590 + $0xe1] sm:$0xff] %vm439, %v2586
        %2604 = vst.msk [vmem:[%s2590 + $0xf1] sm:$0xff] %vm439, %v2587
        %2605 = vst.msk [vmem:[%s2590 + $0x101] sm:$0xff] %vm439, %v2588
        %2606 = vst.msk [vmem:[%s2590 + $0x111] sm:$0xff] %vm439, %v2589
        %v2607 = vld [vmem:[%s436] sm:$0xff]
        %v2608 = vld [vmem:[%s436 + $0x10] sm:$0xff]
        %v2609 = vld [vmem:[%s436 + $0x20] sm:$0xff]
        %v2610 = vld [vmem:[%s436 + $0x30] sm:$0xff]
        %v2611 = vld [vmem:[%s436 + $0x40] sm:$0xff]
        %v2612 = vld [vmem:[%s436 + $0x50] sm:$0xff]
        %v2613 = vld [vmem:[%s436 + $0x60] sm:$0xff]
        %v2614 = vld [vmem:[%s436 + $0x70] sm:$0xff]
        %v2615 = vld [vmem:[%s436 + $0x90] sm:$0xff]
        %v2616 = vld [vmem:[%s436 + $0xa0] sm:$0xff]
        %v2617 = vld [vmem:[%s436 + $0xb0] sm:$0xff]
        %v2618 = vld [vmem:[%s436 + $0xc0] sm:$0xff]
        %v2619 = vld [vmem:[%s436 + $0xd0] sm:$0xff]
        %v2620 = vld [vmem:[%s436 + $0xe0] sm:$0xff]
        %v2621 = vld [vmem:[%s436 + $0xf0] sm:$0xff]
        %v2622 = vld [vmem:[%s436 + $0x100] sm:$0xff]
        %v2623 = vld [vmem:[%s4] sm:$0xf]
        %v2625 = vsel %vm526, %v2607, 0
        %v2628 = vsel %vm526, %v2608, 0
        %v2631 = vsel %vm526, %v2609, 0
        %v2634 = vsel %vm526, %v2610, 0
        %v2637 = vsel %vm526, %v2611, 0
        %v2640 = vsel %vm526, %v2612, 0
        %v2643 = vsel %vm526, %v2613, 0
        %v2646 = vsel %vm526, %v2614, 0
        %v2649 = vsel %vm526, %v2615, 0
        %v2652 = vsel %vm526, %v2616, 0
        %v2655 = vsel %vm526, %v2617, 0
        %v2658 = vsel %vm526, %v2618, 0
        %v2661 = vsel %vm526, %v2619, 0
        %v2664 = vsel %vm526, %v2620, 0
        %v2667 = vsel %vm526, %v2621, 0
        %v2670 = vsel %vm526, %v2622, 0
        %v2673 = vsel %vm575, %v2623, 0
        %2675 = vmatprep.subr.mxu0 0.0
        %2676 = vmatpush1.msra.mxu0 0.0
        %2677 = vmatprep.subr.mxu0 0.0
        %2678 = vmatpush1.msra.mxu0 0.0
        %2679 = vmatprep.subr.mxu0 0.0
        %2680 = vmatpush1.msra.mxu0 0.0
        %2681 = vmatprep.subr.mxu0 0.0
        %2682 = vmatpush1.msra.mxu0 0.0
        %2683 = vmatprep.subr.mxu0 0.0
        %2684 = vmatpush1.msra.mxu0 0.0
        %2685 = vmatprep.subr.mxu0 0.0
        %2686 = vmatpush1.msra.mxu0 0.0
        %2687 = vmatprep.subr.mxu0 0.0
        %2688 = vmatpush1.msra.mxu0 0.0
        %2689 = vmatprep.subr.mxu0 0.0
        %2690 = vmatpush1.msra.mxu0 0.0
        %2691 = vmatprep.subr.mxu0 0.0
        %2692 = vmatpush1.msra.mxu0 0.0
        %2693 = vmatprep.subr.mxu0 0.0
        %2694 = vmatpush1.msra.mxu0 0.0
        %2695 = vmatprep.subr.mxu0 0.0
        %2696 = vmatpush1.msra.mxu0 0.0
        %2697 = vmatprep.subr.mxu0 0.0
        %2698 = vmatpush1.msra.mxu0 0.0
        %2699 = vmatprep.subr.mxu0 0.0
        %2700 = vmatpush1.msra.mxu0 0.0
        %2701 = vmatprep.subr.mxu0 0.0
        %2702 = vmatpush1.msra.mxu0 0.0
        %2703 = vmatprep.subr.mxu0 0.0
        %2704 = vmatpush1.msra.mxu0 0.0
        %2705 = vmatprep.subr.mxu0 0.0
        %2706 = vmatpush1.msra.mxu0 %v2673
        %2707 = vmatprep.subr.mxu0 0.0
        %2708 = vmatpush2.msra.mxu0 0.0
        %2709 = vmatprep.subr.mxu0 0.0
        %2710 = vmatpush2.msra.mxu0 0.0
        %2711 = vmatprep.subr.mxu0 0.0
        %2712 = vmatpush2.msra.mxu0 0.0
        %2713 = vmatprep.subr.mxu0 0.0
        %2714 = vmatpush2.msra.mxu0 0.0
        %2715 = vmatprep.subr.mxu0 0.0
        %2716 = vmatpush2.msra.mxu0 0.0
        %2717 = vmatprep.subr.mxu0 0.0
        %2718 = vmatpush2.msra.mxu0 0.0
        %2719 = vmatprep.subr.mxu0 0.0
        %2720 = vmatpush2.msra.mxu0 0.0
        %2721 = vmatprep.subr.mxu0 0.0
        %2722 = vmatpush2.msra.mxu0 0.0
        %2723 = vmatprep.subr.mxu0 0.0
        %2724 = vmatpush2.msra.mxu0 0.0
        %2725 = vmatprep.subr.mxu0 0.0
        %2726 = vmatpush2.msra.mxu0 0.0
        %2727 = vmatprep.subr.mxu0 0.0
        %2728 = vmatpush2.msra.mxu0 0.0
        %2729 = vmatprep.subr.mxu0 0.0
        %2730 = vmatpush2.msra.mxu0 0.0
        %2731 = vmatprep.subr.mxu0 0.0
        %2732 = vmatpush2.msra.mxu0 0.0
        %2733 = vmatprep.subr.mxu0 0.0
        %2734 = vmatpush2.msra.mxu0 0.0
        %2735 = vmatprep.subr.mxu0 0.0
        %2736 = vmatpush2.msra.mxu0 0.0
        %2737 = vmatprep.subr.mxu0 0.0
        %2738 = vmatpush2.msra.mxu0 0.0
        %2739 = vmatprep.mubr.f32.mxu0 0.0
        %2740 = vmatmul.mubr.f32.gmra.mxu0 %v2625
        %v2741 = vpop.f32.mrf.mxu0
        %v2742 = vadd.f32 0.0, %v2741
        %v2743 = vpop.f32.mrf.mxu0
        %2744 = vmatprep.mubr.f32.mxu0 0.0
        %2745 = vmatmul.mubr.f32.gmra.mxu0 %v2628
        %v2746 = vpop.f32.mrf.mxu0
        %v2747 = vadd.f32 0.0, %v2746
        %v2748 = vpop.f32.mrf.mxu0
        %2749 = vmatprep.mubr.f32.mxu0 0.0
        %2750 = vmatmul.mubr.f32.gmra.mxu0 %v2631
        %v2751 = vpop.f32.mrf.mxu0
        %v2752 = vadd.f32 0.0, %v2751
        %v2753 = vpop.f32.mrf.mxu0
        %2754 = vmatprep.mubr.f32.mxu0 0.0
        %2755 = vmatmul.mubr.f32.gmra.mxu0 %v2634
        %v2756 = vpop.f32.mrf.mxu0
        %v2757 = vadd.f32 0.0, %v2756
        %v2758 = vpop.f32.mrf.mxu0
        %2759 = vmatprep.mubr.f32.mxu0 0.0
        %2760 = vmatmul.mubr.f32.gmra.mxu0 %v2637
        %v2761 = vpop.f32.mrf.mxu0
        %v2762 = vadd.f32 0.0, %v2761
        %v2763 = vpop.f32.mrf.mxu0
        %2764 = vmatprep.mubr.f32.mxu0 0.0
        %2765 = vmatmul.mubr.f32.gmra.mxu0 %v2640
        %v2766 = vpop.f32.mrf.mxu0
        %v2767 = vadd.f32 0.0, %v2766
        %v2768 = vpop.f32.mrf.mxu0
        %2769 = vmatprep.mubr.f32.mxu0 0.0
        %2770 = vmatmul.mubr.f32.gmra.mxu0 %v2643
        %v2771 = vpop.f32.mrf.mxu0
        %v2772 = vadd.f32 0.0, %v2771
        %v2773 = vpop.f32.mrf.mxu0
        %2774 = vmatprep.mubr.f32.mxu0 0.0
        %2775 = vmatmul.mubr.f32.gmra.mxu0 %v2646
        %v2776 = vpop.f32.mrf.mxu0
        %v2777 = vadd.f32 0.0, %v2776
        %v2778 = vpop.f32.mrf.mxu0
        %2779 = vmatprep.mubr.f32.mxu0 0.0
        %2780 = vmatmul.mubr.f32.gmra.mxu0 %v2649
        %v2781 = vpop.f32.mrf.mxu0
        %v2782 = vadd.f32 0.0, %v2781
        %v2783 = vpop.f32.mrf.mxu0
        %2784 = vmatprep.mubr.f32.mxu0 0.0
        %2785 = vmatmul.mubr.f32.gmra.mxu0 %v2652
        %v2786 = vpop.f32.mrf.mxu0
        %v2787 = vadd.f32 0.0, %v2786
        %v2788 = vpop.f32.mrf.mxu0
        %2789 = vmatprep.mubr.f32.mxu0 0.0
        %2790 = vmatmul.mubr.f32.gmra.mxu0 %v2655
        %v2791 = vpop.f32.mrf.mxu0
        %v2792 = vadd.f32 0.0, %v2791
        %v2793 = vpop.f32.mrf.mxu0
        %2794 = vmatprep.mubr.f32.mxu0 0.0
        %2795 = vmatmul.mubr.f32.gmra.mxu0 %v2658
        %v2796 = vpop.f32.mrf.mxu0
        %v2797 = vadd.f32 0.0, %v2796
        %v2798 = vpop.f32.mrf.mxu0
        %2799 = vmatprep.mubr.f32.mxu0 0.0
        %2800 = vmatmul.mubr.f32.gmra.mxu0 %v2661
        %v2801 = vpop.f32.mrf.mxu0
        %v2802 = vadd.f32 0.0, %v2801
        %v2803 = vpop.f32.mrf.mxu0
        %2804 = vmatprep.mubr.f32.mxu0 0.0
        %2805 = vmatmul.mubr.f32.gmra.mxu0 %v2664
        %v2806 = vpop.f32.mrf.mxu0
        %v2807 = vadd.f32 0.0, %v2806
        %v2808 = vpop.f32.mrf.mxu0
        %2809 = vmatprep.mubr.f32.mxu0 0.0
        %2810 = vmatmul.mubr.f32.gmra.mxu0 %v2667
        %v2811 = vpop.f32.mrf.mxu0
        %v2812 = vadd.f32 0.0, %v2811
        %v2813 = vpop.f32.mrf.mxu0
        %2814 = vmatprep.mubr.f32.mxu0 0.0
        %2815 = vmatmul.mubr.f32.gmra.mxu0 %v2670
        %v2816 = vpop.f32.mrf.mxu0
        %v2817 = vadd.f32 0.0, %v2816
        %v2818 = vpop.f32.mrf.mxu0
        %2819 = vdwg.mxu0
        %v2820 = vld [vmem:[#allocation2] sm:$0xff]
        %v2821 = vld [vmem:[#allocation2 + $0x10] sm:$0xff]
        %v2822 = vld [vmem:[#allocation2 + $0x20] sm:$0xff]
        %v2823 = vld [vmem:[#allocation2 + $0x30] sm:$0xff]
        %v2824 = vld [vmem:[#allocation2 + $0x40] sm:$0xff]
        %v2825 = vld [vmem:[#allocation2 + $0x50] sm:$0xff]
        %v2826 = vld [vmem:[#allocation2 + $0x60] sm:$0xff]
        %v2827 = vld [vmem:[#allocation2 + $0x70] sm:$0xff]
        %v2828 = vld [vmem:[#allocation2 + $0xa0] sm:$0xff]
        %v2829 = vld [vmem:[#allocation2 + $0xb0] sm:$0xff]
        %v2830 = vld [vmem:[#allocation2 + $0xc0] sm:$0xff]
        %v2831 = vld [vmem:[#allocation2 + $0xd0] sm:$0xff]
        %v2832 = vld [vmem:[#allocation2 + $0xe0] sm:$0xff]
        %v2833 = vld [vmem:[#allocation2 + $0xf0] sm:$0xff]
        %v2834 = vld [vmem:[#allocation2 + $0x100] sm:$0xff]
        %v2835 = vld [vmem:[#allocation2 + $0x110] sm:$0xff]
        %v2836 = vld [vmem:[%s6] sm:$0xff]
        %v2837 = vld [vmem:[#allocation2 + $0x1] sm:$0xff]
        %v2838 = vld [vmem:[#allocation2 + $0x11] sm:$0xff]
        %v2839 = vld [vmem:[#allocation2 + $0x21] sm:$0xff]
        %v2840 = vld [vmem:[#allocation2 + $0x31] sm:$0xff]
        %v2841 = vld [vmem:[#allocation2 + $0x41] sm:$0xff]
        %v2842 = vld [vmem:[#allocation2 + $0x51] sm:$0xff]
        %v2843 = vld [vmem:[#allocation2 + $0x61] sm:$0xff]
        %v2844 = vld [vmem:[#allocation2 + $0x71] sm:$0xff]
        %v2845 = vld [vmem:[#allocation2 + $0xa1] sm:$0xff]
        %v2846 = vld [vmem:[#allocation2 + $0xb1] sm:$0xff]
        %v2847 = vld [vmem:[#allocation2 + $0xc1] sm:$0xff]
        %v2848 = vld [vmem:[#allocation2 + $0xd1] sm:$0xff]
        %v2849 = vld [vmem:[#allocation2 + $0xe1] sm:$0xff]
        %v2850 = vld [vmem:[#allocation2 + $0xf1] sm:$0xff]
        %v2851 = vld [vmem:[#allocation2 + $0x101] sm:$0xff]
        %v2852 = vld [vmem:[#allocation2 + $0x111] sm:$0xff]
        %s2853 = scalar_lea.vmem %s6, 8
        %v2854 = vld [vmem:[%s2853] sm:$0xff]
        %v2856 = vsel %vm439, %v2837, 0
        %v2859 = vsel %vm439, %v2838, 0
        %v2862 = vsel %vm439, %v2839, 0
        %v2865 = vsel %vm439, %v2840, 0
        %v2868 = vsel %vm439, %v2841, 0
        %v2871 = vsel %vm439, %v2842, 0
        %v2874 = vsel %vm439, %v2843, 0
        %v2877 = vsel %vm439, %v2844, 0
        %v2880 = vsel %vm439, %v2845, 0
        %v2883 = vsel %vm439, %v2846, 0
        %v2886 = vsel %vm439, %v2847, 0
        %v2889 = vsel %vm439, %v2848, 0
        %v2892 = vsel %vm439, %v2849, 0
        %v2895 = vsel %vm439, %v2850, 0
        %v2898 = vsel %vm439, %v2851, 0
        %v2901 = vsel %vm439, %v2852, 0
        %2903 = vmatprep.subr.mxu0 0.0
        %2904 = vmatpush1.msra.mxu0 0.0
        %2905 = vmatprep.subr.mxu0 0.0
        %2906 = vmatpush1.msra.mxu0 0.0
        %2907 = vmatprep.subr.mxu0 0.0
        %2908 = vmatpush1.msra.mxu0 0.0
        %2909 = vmatprep.subr.mxu0 0.0
        %2910 = vmatpush1.msra.mxu0 0.0
        %2911 = vmatprep.subr.mxu0 0.0
        %2912 = vmatpush1.msra.mxu0 0.0
        %2913 = vmatprep.subr.mxu0 0.0
        %2914 = vmatpush1.msra.mxu0 0.0
        %2915 = vmatprep.subr.mxu0 0.0
        %2916 = vmatpush1.msra.mxu0 0.0
        %2917 = vmatprep.subr.mxu0 0.0
        %2918 = vmatpush1.msra.mxu0 0.0
        %2919 = vmatprep.subr.mxu0 0.0
        %2920 = vmatpush1.msra.mxu0 0.0
        %2921 = vmatprep.subr.mxu0 0.0
        %2922 = vmatpush1.msra.mxu0 0.0
        %2923 = vmatprep.subr.mxu0 0.0
        %2924 = vmatpush1.msra.mxu0 0.0
        %2925 = vmatprep.subr.mxu0 0.0
        %2926 = vmatpush1.msra.mxu0 0.0
        %2927 = vmatprep.subr.mxu0 0.0
        %2928 = vmatpush1.msra.mxu0 0.0
        %2929 = vmatprep.subr.mxu0 0.0
        %2930 = vmatpush1.msra.mxu0 0.0
        %2931 = vmatprep.subr.mxu0 0.0
        %2932 = vmatpush1.msra.mxu0 0.0
        %2933 = vmatprep.subr.mxu0 0.0
        %2934 = vmatpush1.msra.mxu0 %v2854
        %2935 = vmatprep.subr.mxu0 0.0
        %2936 = vmatpush2.msra.mxu0 0.0
        %2937 = vmatprep.subr.mxu0 0.0
        %2938 = vmatpush2.msra.mxu0 0.0
        %2939 = vmatprep.subr.mxu0 0.0
        %2940 = vmatpush2.msra.mxu0 0.0
        %2941 = vmatprep.subr.mxu0 0.0
        %2942 = vmatpush2.msra.mxu0 0.0
        %2943 = vmatprep.subr.mxu0 0.0
        %2944 = vmatpush2.msra.mxu0 0.0
        %2945 = vmatprep.subr.mxu0 0.0
        %2946 = vmatpush2.msra.mxu0 0.0
        %2947 = vmatprep.subr.mxu0 0.0
        %2948 = vmatpush2.msra.mxu0 0.0
        %2949 = vmatprep.subr.mxu0 0.0
        %2950 = vmatpush2.msra.mxu0 0.0
        %2951 = vmatprep.subr.mxu0 0.0
        %2952 = vmatpush2.msra.mxu0 0.0
        %2953 = vmatprep.subr.mxu0 0.0
        %2954 = vmatpush2.msra.mxu0 0.0
        %2955 = vmatprep.subr.mxu0 0.0
        %2956 = vmatpush2.msra.mxu0 0.0
        %2957 = vmatprep.subr.mxu0 0.0
        %2958 = vmatpush2.msra.mxu0 0.0
        %2959 = vmatprep.subr.mxu0 0.0
        %2960 = vmatpush2.msra.mxu0 0.0
        %2961 = vmatprep.subr.mxu0 0.0
        %2962 = vmatpush2.msra.mxu0 0.0
        %2963 = vmatprep.subr.mxu0 0.0
        %2964 = vmatpush2.msra.mxu0 0.0
        %2965 = vmatprep.subr.mxu0 0.0
        %2966 = vmatpush2.msra.mxu0 0.0
        %2967 = vmatprep.mubr.f32.mxu0 0.0
        %2968 = vmatmul.mubr.f32.gmra.mxu0 %v2856
        %v2969 = vpop.f32.mrf.mxu0
        %v2970 = vadd.f32 0.0, %v2969
        %v2971 = vpop.f32.mrf.mxu0
        %2972 = vmatprep.mubr.f32.mxu0 0.0
        %2973 = vmatmul.mubr.f32.gmra.mxu0 %v2859
        %v2974 = vpop.f32.mrf.mxu0
        %v2975 = vadd.f32 0.0, %v2974
        %v2976 = vpop.f32.mrf.mxu0
        %2977 = vmatprep.mubr.f32.mxu0 0.0
        %2978 = vmatmul.mubr.f32.gmra.mxu0 %v2862
        %v2979 = vpop.f32.mrf.mxu0
        %v2980 = vadd.f32 0.0, %v2979
        %v2981 = vpop.f32.mrf.mxu0
        %2982 = vmatprep.mubr.f32.mxu0 0.0
        %2983 = vmatmul.mubr.f32.gmra.mxu0 %v2865
        %v2984 = vpop.f32.mrf.mxu0
        %v2985 = vadd.f32 0.0, %v2984
        %v2986 = vpop.f32.mrf.mxu0
        %2987 = vmatprep.mubr.f32.mxu0 0.0
        %2988 = vmatmul.mubr.f32.gmra.mxu0 %v2868
        %v2989 = vpop.f32.mrf.mxu0
        %v2990 = vadd.f32 0.0, %v2989
        %v2991 = vpop.f32.mrf.mxu0
        %2992 = vmatprep.mubr.f32.mxu0 0.0
        %2993 = vmatmul.mubr.f32.gmra.mxu0 %v2871
        %v2994 = vpop.f32.mrf.mxu0
        %v2995 = vadd.f32 0.0, %v2994
        %v2996 = vpop.f32.mrf.mxu0
        %2997 = vmatprep.mubr.f32.mxu0 0.0
        %2998 = vmatmul.mubr.f32.gmra.mxu0 %v2874
        %v2999 = vpop.f32.mrf.mxu0
        %v3000 = vadd.f32 0.0, %v2999
        %v3001 = vpop.f32.mrf.mxu0
        %3002 = vmatprep.mubr.f32.mxu0 0.0
        %3003 = vmatmul.mubr.f32.gmra.mxu0 %v2877
        %v3004 = vpop.f32.mrf.mxu0
        %v3005 = vadd.f32 0.0, %v3004
        %v3006 = vpop.f32.mrf.mxu0
        %3007 = vmatprep.mubr.f32.mxu0 0.0
        %3008 = vmatmul.mubr.f32.gmra.mxu0 %v2880
        %v3009 = vpop.f32.mrf.mxu0
        %v3010 = vadd.f32 0.0, %v3009
        %v3011 = vpop.f32.mrf.mxu0
        %3012 = vmatprep.mubr.f32.mxu0 0.0
        %3013 = vmatmul.mubr.f32.gmra.mxu0 %v2883
        %v3014 = vpop.f32.mrf.mxu0
        %v3015 = vadd.f32 0.0, %v3014
        %v3016 = vpop.f32.mrf.mxu0
        %3017 = vmatprep.mubr.f32.mxu0 0.0
        %3018 = vmatmul.mubr.f32.gmra.mxu0 %v2886
        %v3019 = vpop.f32.mrf.mxu0
        %v3020 = vadd.f32 0.0, %v3019
        %v3021 = vpop.f32.mrf.mxu0
        %3022 = vmatprep.mubr.f32.mxu0 0.0
        %3023 = vmatmul.mubr.f32.gmra.mxu0 %v2889
        %v3024 = vpop.f32.mrf.mxu0
        %v3025 = vadd.f32 0.0, %v3024
        %v3026 = vpop.f32.mrf.mxu0
        %3027 = vmatprep.mubr.f32.mxu0 0.0
        %3028 = vmatmul.mubr.f32.gmra.mxu0 %v2892
        %v3029 = vpop.f32.mrf.mxu0
        %v3030 = vadd.f32 0.0, %v3029
        %v3031 = vpop.f32.mrf.mxu0
        %3032 = vmatprep.mubr.f32.mxu0 0.0
        %3033 = vmatmul.mubr.f32.gmra.mxu0 %v2895
        %v3034 = vpop.f32.mrf.mxu0
        %v3035 = vadd.f32 0.0, %v3034
        %v3036 = vpop.f32.mrf.mxu0
        %3037 = vmatprep.mubr.f32.mxu0 0.0
        %3038 = vmatmul.mubr.f32.gmra.mxu0 %v2898
        %v3039 = vpop.f32.mrf.mxu0
        %v3040 = vadd.f32 0.0, %v3039
        %v3041 = vpop.f32.mrf.mxu0
        %3042 = vmatprep.mubr.f32.mxu0 0.0
        %3043 = vmatmul.mubr.f32.gmra.mxu0 %v2901
        %v3044 = vpop.f32.mrf.mxu0
        %v3045 = vadd.f32 0.0, %v3044
        %v3046 = vpop.f32.mrf.mxu0
        %3047 = vdwg.mxu0
        %v3049 = vsel %vm439, %v2820, 0
        %v3052 = vsel %vm439, %v2821, 0
        %v3055 = vsel %vm439, %v2822, 0
        %v3058 = vsel %vm439, %v2823, 0
        %v3061 = vsel %vm439, %v2824, 0
        %v3064 = vsel %vm439, %v2825, 0
        %v3067 = vsel %vm439, %v2826, 0
        %v3070 = vsel %vm439, %v2827, 0
        %v3073 = vsel %vm439, %v2828, 0
        %v3076 = vsel %vm439, %v2829, 0
        %v3079 = vsel %vm439, %v2830, 0
        %v3082 = vsel %vm439, %v2831, 0
        %v3085 = vsel %vm439, %v2832, 0
        %v3088 = vsel %vm439, %v2833, 0
        %v3091 = vsel %vm439, %v2834, 0
        %v3094 = vsel %vm439, %v2835, 0
        %3096 = vmatprep.subr.mxu0 0.0
        %3097 = vmatpush1.msra.mxu0 0.0
        %3098 = vmatprep.subr.mxu0 0.0
        %3099 = vmatpush1.msra.mxu0 0.0
        %3100 = vmatprep.subr.mxu0 0.0
        %3101 = vmatpush1.msra.mxu0 0.0
        %3102 = vmatprep.subr.mxu0 0.0
        %3103 = vmatpush1.msra.mxu0 0.0
        %3104 = vmatprep.subr.mxu0 0.0
        %3105 = vmatpush1.msra.mxu0 0.0
        %3106 = vmatprep.subr.mxu0 0.0
        %3107 = vmatpush1.msra.mxu0 0.0
        %3108 = vmatprep.subr.mxu0 0.0
        %3109 = vmatpush1.msra.mxu0 0.0
        %3110 = vmatprep.subr.mxu0 0.0
        %3111 = vmatpush1.msra.mxu0 0.0
        %3112 = vmatprep.subr.mxu0 0.0
        %3113 = vmatpush1.msra.mxu0 0.0
        %3114 = vmatprep.subr.mxu0 0.0
        %3115 = vmatpush1.msra.mxu0 0.0
        %3116 = vmatprep.subr.mxu0 0.0
        %3117 = vmatpush1.msra.mxu0 0.0
        %3118 = vmatprep.subr.mxu0 0.0
        %3119 = vmatpush1.msra.mxu0 0.0
        %3120 = vmatprep.subr.mxu0 0.0
        %3121 = vmatpush1.msra.mxu0 0.0
        %3122 = vmatprep.subr.mxu0 0.0
        %3123 = vmatpush1.msra.mxu0 0.0
        %3124 = vmatprep.subr.mxu0 0.0
        %3125 = vmatpush1.msra.mxu0 0.0
        %3126 = vmatprep.subr.mxu0 0.0
        %3127 = vmatpush1.msra.mxu0 %v2836
        %3128 = vmatprep.subr.mxu0 0.0
        %3129 = vmatpush2.msra.mxu0 0.0
        %3130 = vmatprep.subr.mxu0 0.0
        %3131 = vmatpush2.msra.mxu0 0.0
        %3132 = vmatprep.subr.mxu0 0.0
        %3133 = vmatpush2.msra.mxu0 0.0
        %3134 = vmatprep.subr.mxu0 0.0
        %3135 = vmatpush2.msra.mxu0 0.0
        %3136 = vmatprep.subr.mxu0 0.0
        %3137 = vmatpush2.msra.mxu0 0.0
        %3138 = vmatprep.subr.mxu0 0.0
        %3139 = vmatpush2.msra.mxu0 0.0
        %3140 = vmatprep.subr.mxu0 0.0
        %3141 = vmatpush2.msra.mxu0 0.0
        %3142 = vmatprep.subr.mxu0 0.0
        %3143 = vmatpush2.msra.mxu0 0.0
        %3144 = vmatprep.subr.mxu0 0.0
        %3145 = vmatpush2.msra.mxu0 0.0
        %3146 = vmatprep.subr.mxu0 0.0
        %3147 = vmatpush2.msra.mxu0 0.0
        %3148 = vmatprep.subr.mxu0 0.0
        %3149 = vmatpush2.msra.mxu0 0.0
        %3150 = vmatprep.subr.mxu0 0.0
        %3151 = vmatpush2.msra.mxu0 0.0
        %3152 = vmatprep.subr.mxu0 0.0
        %3153 = vmatpush2.msra.mxu0 0.0
        %3154 = vmatprep.subr.mxu0 0.0
        %3155 = vmatpush2.msra.mxu0 0.0
        %3156 = vmatprep.subr.mxu0 0.0
        %3157 = vmatpush2.msra.mxu0 0.0
        %3158 = vmatprep.subr.mxu0 0.0
        %3159 = vmatpush2.msra.mxu0 0.0
        %3160 = vmatprep.mubr.f32.mxu0 0.0
        %3161 = vmatmul.mubr.f32.gmra.mxu0 %v3049
        %v3162 = vpop.f32.mrf.mxu0
        %v3163 = vadd.f32 %v2970, %v3162
        %v3164 = vpop.f32.mrf.mxu0
        %3165 = vmatprep.mubr.f32.mxu0 0.0
        %3166 = vmatmul.mubr.f32.gmra.mxu0 %v3052
        %v3167 = vpop.f32.mrf.mxu0
        %v3168 = vadd.f32 %v2975, %v3167
        %v3169 = vpop.f32.mrf.mxu0
        %3170 = vmatprep.mubr.f32.mxu0 0.0
        %3171 = vmatmul.mubr.f32.gmra.mxu0 %v3055
        %v3172 = vpop.f32.mrf.mxu0
        %v3173 = vadd.f32 %v2980, %v3172
        %v3174 = vpop.f32.mrf.mxu0
        %3175 = vmatprep.mubr.f32.mxu0 0.0
        %3176 = vmatmul.mubr.f32.gmra.mxu0 %v3058
        %v3177 = vpop.f32.mrf.mxu0
        %v3178 = vadd.f32 %v2985, %v3177
        %v3179 = vpop.f32.mrf.mxu0
        %3180 = vmatprep.mubr.f32.mxu0 0.0
        %3181 = vmatmul.mubr.f32.gmra.mxu0 %v3061
        %v3182 = vpop.f32.mrf.mxu0
        %v3183 = vadd.f32 %v2990, %v3182
        %v3184 = vpop.f32.mrf.mxu0
        %3185 = vmatprep.mubr.f32.mxu0 0.0
        %3186 = vmatmul.mubr.f32.gmra.mxu0 %v3064
        %v3187 = vpop.f32.mrf.mxu0
        %v3188 = vadd.f32 %v2995, %v3187
        %v3189 = vpop.f32.mrf.mxu0
        %3190 = vmatprep.mubr.f32.mxu0 0.0
        %3191 = vmatmul.mubr.f32.gmra.mxu0 %v3067
        %v3192 = vpop.f32.mrf.mxu0
        %v3193 = vadd.f32 %v3000, %v3192
        %v3194 = vpop.f32.mrf.mxu0
        %3195 = vmatprep.mubr.f32.mxu0 0.0
        %3196 = vmatmul.mubr.f32.gmra.mxu0 %v3070
        %v3197 = vpop.f32.mrf.mxu0
        %v3198 = vadd.f32 %v3005, %v3197
        %v3199 = vpop.f32.mrf.mxu0
        %3200 = vmatprep.mubr.f32.mxu0 0.0
        %3201 = vmatmul.mubr.f32.gmra.mxu0 %v3073
        %v3202 = vpop.f32.mrf.mxu0
        %v3203 = vadd.f32 %v3010, %v3202
        %v3204 = vpop.f32.mrf.mxu0
        %3205 = vmatprep.mubr.f32.mxu0 0.0
        %3206 = vmatmul.mubr.f32.gmra.mxu0 %v3076
        %v3207 = vpop.f32.mrf.mxu0
        %v3208 = vadd.f32 %v3015, %v3207
        %v3209 = vpop.f32.mrf.mxu0
        %3210 = vmatprep.mubr.f32.mxu0 0.0
        %3211 = vmatmul.mubr.f32.gmra.mxu0 %v3079
        %v3212 = vpop.f32.mrf.mxu0
        %v3213 = vadd.f32 %v3020, %v3212
        %v3214 = vpop.f32.mrf.mxu0
        %3215 = vmatprep.mubr.f32.mxu0 0.0
        %3216 = vmatmul.mubr.f32.gmra.mxu0 %v3082
        %v3217 = vpop.f32.mrf.mxu0
        %v3218 = vadd.f32 %v3025, %v3217
        %v3219 = vpop.f32.mrf.mxu0
        %3220 = vmatprep.mubr.f32.mxu0 0.0
        %3221 = vmatmul.mubr.f32.gmra.mxu0 %v3085
        %v3222 = vpop.f32.mrf.mxu0
        %v3223 = vadd.f32 %v3030, %v3222
        %v3224 = vpop.f32.mrf.mxu0
        %3225 = vmatprep.mubr.f32.mxu0 0.0
        %3226 = vmatmul.mubr.f32.gmra.mxu0 %v3088
        %v3227 = vpop.f32.mrf.mxu0
        %v3228 = vadd.f32 %v3035, %v3227
        %v3229 = vpop.f32.mrf.mxu0
        %3230 = vmatprep.mubr.f32.mxu0 0.0
        %3231 = vmatmul.mubr.f32.gmra.mxu0 %v3091
        %v3232 = vpop.f32.mrf.mxu0
        %v3233 = vadd.f32 %v3040, %v3232
        %v3234 = vpop.f32.mrf.mxu0
        %3235 = vmatprep.mubr.f32.mxu0 0.0
        %3236 = vmatmul.mubr.f32.gmra.mxu0 %v3094
        %v3237 = vpop.f32.mrf.mxu0
        %v3238 = vadd.f32 %v3045, %v3237
        %v3239 = vpop.f32.mrf.mxu0
        %3240 = vdwg.mxu0
        %v3241 = vld [vmem:[#allocation2 + $0x2] sm:$0xff]
        %v3242 = vld [vmem:[#allocation2 + $0x12] sm:$0xff]
        %v3243 = vld [vmem:[#allocation2 + $0x22] sm:$0xff]
        %v3244 = vld [vmem:[#allocation2 + $0x32] sm:$0xff]
        %v3245 = vld [vmem:[#allocation2 + $0x42] sm:$0xff]
        %v3246 = vld [vmem:[#allocation2 + $0x52] sm:$0xff]
        %v3247 = vld [vmem:[#allocation2 + $0x62] sm:$0xff]
        %v3248 = vld [vmem:[#allocation2 + $0x72] sm:$0xff]
        %v3249 = vld [vmem:[#allocation2 + $0xa2] sm:$0xff]
        %v3250 = vld [vmem:[#allocation2 + $0xb2] sm:$0xff]
        %v3251 = vld [vmem:[#allocation2 + $0xc2] sm:$0xff]
        %v3252 = vld [vmem:[#allocation2 + $0xd2] sm:$0xff]
        %v3253 = vld [vmem:[#allocation2 + $0xe2] sm:$0xff]
        %v3254 = vld [vmem:[#allocation2 + $0xf2] sm:$0xff]
        %v3255 = vld [vmem:[#allocation2 + $0x102] sm:$0xff]
        %v3256 = vld [vmem:[#allocation2 + $0x112] sm:$0xff]
        %s3257 = scalar_lea.vmem %s6, 16
        %v3258 = vld [vmem:[%s3257] sm:$0xff]
        %v3260 = vsel %vm439, %v3241, 0
        %v3263 = vsel %vm439, %v3242, 0
        %v3266 = vsel %vm439, %v3243, 0
        %v3269 = vsel %vm439, %v3244, 0
        %v3272 = vsel %vm439, %v3245, 0
        %v3275 = vsel %vm439, %v3246, 0
        %v3278 = vsel %vm439, %v3247, 0
        %v3281 = vsel %vm439, %v3248, 0
        %v3284 = vsel %vm439, %v3249, 0
        %v3287 = vsel %vm439, %v3250, 0
        %v3290 = vsel %vm439, %v3251, 0
        %v3293 = vsel %vm439, %v3252, 0
        %v3296 = vsel %vm439, %v3253, 0
        %v3299 = vsel %vm439, %v3254, 0
        %v3302 = vsel %vm439, %v3255, 0
        %v3305 = vsel %vm439, %v3256, 0
        %3307 = vmatprep.subr.mxu0 0.0
        %3308 = vmatpush1.msra.mxu0 0.0
        %3309 = vmatprep.subr.mxu0 0.0
        %3310 = vmatpush1.msra.mxu0 0.0
        %3311 = vmatprep.subr.mxu0 0.0
        %3312 = vmatpush1.msra.mxu0 0.0
        %3313 = vmatprep.subr.mxu0 0.0
        %3314 = vmatpush1.msra.mxu0 0.0
        %3315 = vmatprep.subr.mxu0 0.0
        %3316 = vmatpush1.msra.mxu0 0.0
        %3317 = vmatprep.subr.mxu0 0.0
        %3318 = vmatpush1.msra.mxu0 0.0
        %3319 = vmatprep.subr.mxu0 0.0
        %3320 = vmatpush1.msra.mxu0 0.0
        %3321 = vmatprep.subr.mxu0 0.0
        %3322 = vmatpush1.msra.mxu0 0.0
        %3323 = vmatprep.subr.mxu0 0.0
        %3324 = vmatpush1.msra.mxu0 0.0
        %3325 = vmatprep.subr.mxu0 0.0
        %3326 = vmatpush1.msra.mxu0 0.0
        %3327 = vmatprep.subr.mxu0 0.0
        %3328 = vmatpush1.msra.mxu0 0.0
        %3329 = vmatprep.subr.mxu0 0.0
        %3330 = vmatpush1.msra.mxu0 0.0
        %3331 = vmatprep.subr.mxu0 0.0
        %3332 = vmatpush1.msra.mxu0 0.0
        %3333 = vmatprep.subr.mxu0 0.0
        %3334 = vmatpush1.msra.mxu0 0.0
        %3335 = vmatprep.subr.mxu0 0.0
        %3336 = vmatpush1.msra.mxu0 0.0
        %3337 = vmatprep.subr.mxu0 0.0
        %3338 = vmatpush1.msra.mxu0 %v3258
        %3339 = vmatprep.subr.mxu0 0.0
        %3340 = vmatpush2.msra.mxu0 0.0
        %3341 = vmatprep.subr.mxu0 0.0
        %3342 = vmatpush2.msra.mxu0 0.0
        %3343 = vmatprep.subr.mxu0 0.0
        %3344 = vmatpush2.msra.mxu0 0.0
        %3345 = vmatprep.subr.mxu0 0.0
        %3346 = vmatpush2.msra.mxu0 0.0
        %3347 = vmatprep.subr.mxu0 0.0
        %3348 = vmatpush2.msra.mxu0 0.0
        %3349 = vmatprep.subr.mxu0 0.0
        %3350 = vmatpush2.msra.mxu0 0.0
        %3351 = vmatprep.subr.mxu0 0.0
        %3352 = vmatpush2.msra.mxu0 0.0
        %3353 = vmatprep.subr.mxu0 0.0
        %3354 = vmatpush2.msra.mxu0 0.0
        %3355 = vmatprep.subr.mxu0 0.0
        %3356 = vmatpush2.msra.mxu0 0.0
        %3357 = vmatprep.subr.mxu0 0.0
        %3358 = vmatpush2.msra.mxu0 0.0
        %3359 = vmatprep.subr.mxu0 0.0
        %3360 = vmatpush2.msra.mxu0 0.0
        %3361 = vmatprep.subr.mxu0 0.0
        %3362 = vmatpush2.msra.mxu0 0.0
        %3363 = vmatprep.subr.mxu0 0.0
        %3364 = vmatpush2.msra.mxu0 0.0
        %3365 = vmatprep.subr.mxu0 0.0
        %3366 = vmatpush2.msra.mxu0 0.0
        %3367 = vmatprep.subr.mxu0 0.0
        %3368 = vmatpush2.msra.mxu0 0.0
        %3369 = vmatprep.subr.mxu0 0.0
        %3370 = vmatpush2.msra.mxu0 0.0
        %3371 = vmatprep.mubr.f32.mxu0 0.0
        %3372 = vmatmul.mubr.f32.gmra.mxu0 %v3260
        %v3373 = vpop.f32.mrf.mxu0
        %v3374 = vadd.f32 0.0, %v3373
        %v3375 = vpop.f32.mrf.mxu0
        %3376 = vmatprep.mubr.f32.mxu0 0.0
        %3377 = vmatmul.mubr.f32.gmra.mxu0 %v3263
        %v3378 = vpop.f32.mrf.mxu0
        %v3379 = vadd.f32 0.0, %v3378
        %v3380 = vpop.f32.mrf.mxu0
        %3381 = vmatprep.mubr.f32.mxu0 0.0
        %3382 = vmatmul.mubr.f32.gmra.mxu0 %v3266
        %v3383 = vpop.f32.mrf.mxu0
        %v3384 = vadd.f32 0.0, %v3383
        %v3385 = vpop.f32.mrf.mxu0
        %3386 = vmatprep.mubr.f32.mxu0 0.0
        %3387 = vmatmul.mubr.f32.gmra.mxu0 %v3269
        %v3388 = vpop.f32.mrf.mxu0
        %v3389 = vadd.f32 0.0, %v3388
        %v3390 = vpop.f32.mrf.mxu0
        %3391 = vmatprep.mubr.f32.mxu0 0.0
        %3392 = vmatmul.mubr.f32.gmra.mxu0 %v3272
        %v3393 = vpop.f32.mrf.mxu0
        %v3394 = vadd.f32 0.0, %v3393
        %v3395 = vpop.f32.mrf.mxu0
        %3396 = vmatprep.mubr.f32.mxu0 0.0
        %3397 = vmatmul.mubr.f32.gmra.mxu0 %v3275
        %v3398 = vpop.f32.mrf.mxu0
        %v3399 = vadd.f32 0.0, %v3398
        %v3400 = vpop.f32.mrf.mxu0
        %3401 = vmatprep.mubr.f32.mxu0 0.0
        %3402 = vmatmul.mubr.f32.gmra.mxu0 %v3278
        %v3403 = vpop.f32.mrf.mxu0
        %v3404 = vadd.f32 0.0, %v3403
        %v3405 = vpop.f32.mrf.mxu0
        %3406 = vmatprep.mubr.f32.mxu0 0.0
        %3407 = vmatmul.mubr.f32.gmra.mxu0 %v3281
        %v3408 = vpop.f32.mrf.mxu0
        %v3409 = vadd.f32 0.0, %v3408
        %v3410 = vpop.f32.mrf.mxu0
        %3411 = vmatprep.mubr.f32.mxu0 0.0
        %3412 = vmatmul.mubr.f32.gmra.mxu0 %v3284
        %v3413 = vpop.f32.mrf.mxu0
        %v3414 = vadd.f32 0.0, %v3413
        %v3415 = vpop.f32.mrf.mxu0
        %3416 = vmatprep.mubr.f32.mxu0 0.0
        %3417 = vmatmul.mubr.f32.gmra.mxu0 %v3287
        %v3418 = vpop.f32.mrf.mxu0
        %v3419 = vadd.f32 0.0, %v3418
        %v3420 = vpop.f32.mrf.mxu0
        %3421 = vmatprep.mubr.f32.mxu0 0.0
        %3422 = vmatmul.mubr.f32.gmra.mxu0 %v3290
        %v3423 = vpop.f32.mrf.mxu0
        %v3424 = vadd.f32 0.0, %v3423
        %v3425 = vpop.f32.mrf.mxu0
        %3426 = vmatprep.mubr.f32.mxu0 0.0
        %3427 = vmatmul.mubr.f32.gmra.mxu0 %v3293
        %v3428 = vpop.f32.mrf.mxu0
        %v3429 = vadd.f32 0.0, %v3428
        %v3430 = vpop.f32.mrf.mxu0
        %3431 = vmatprep.mubr.f32.mxu0 0.0
        %3432 = vmatmul.mubr.f32.gmra.mxu0 %v3296
        %v3433 = vpop.f32.mrf.mxu0
        %v3434 = vadd.f32 0.0, %v3433
        %v3435 = vpop.f32.mrf.mxu0
        %3436 = vmatprep.mubr.f32.mxu0 0.0
        %3437 = vmatmul.mubr.f32.gmra.mxu0 %v3299
        %v3438 = vpop.f32.mrf.mxu0
        %v3439 = vadd.f32 0.0, %v3438
        %v3440 = vpop.f32.mrf.mxu0
        %3441 = vmatprep.mubr.f32.mxu0 0.0
        %3442 = vmatmul.mubr.f32.gmra.mxu0 %v3302
        %v3443 = vpop.f32.mrf.mxu0
        %v3444 = vadd.f32 0.0, %v3443
        %v3445 = vpop.f32.mrf.mxu0
        %3446 = vmatprep.mubr.f32.mxu0 0.0
        %3447 = vmatmul.mubr.f32.gmra.mxu0 %v3305
        %v3448 = vpop.f32.mrf.mxu0
        %v3449 = vadd.f32 0.0, %v3448
        %v3450 = vpop.f32.mrf.mxu0
        %3451 = vdwg.mxu0
        %v3452 = vadd.f32 %v3163, %v3374
        %v3453 = vadd.f32 %v3168, %v3379
        %v3454 = vadd.f32 %v3173, %v3384
        %v3455 = vadd.f32 %v3178, %v3389
        %v3456 = vadd.f32 %v3183, %v3394
        %v3457 = vadd.f32 %v3188, %v3399
        %v3458 = vadd.f32 %v3193, %v3404
        %v3459 = vadd.f32 %v3198, %v3409
        %v3460 = vadd.f32 %v3203, %v3414
        %v3461 = vadd.f32 %v3208, %v3419
        %v3462 = vadd.f32 %v3213, %v3424
        %v3463 = vadd.f32 %v3218, %v3429
        %v3464 = vadd.f32 %v3223, %v3434
        %v3465 = vadd.f32 %v3228, %v3439
        %v3466 = vadd.f32 %v3233, %v3444
        %v3467 = vadd.f32 %v3238, %v3449
        %v3468 = vld [vmem:[%s2590] sm:$0xff]
        %v3469 = vld [vmem:[%s2590 + $0x10] sm:$0xff]
        %v3470 = vld [vmem:[%s2590 + $0x20] sm:$0xff]
        %v3471 = vld [vmem:[%s2590 + $0x30] sm:$0xff]
        %v3472 = vld [vmem:[%s2590 + $0x40] sm:$0xff]
        %v3473 = vld [vmem:[%s2590 + $0x50] sm:$0xff]
        %v3474 = vld [vmem:[%s2590 + $0x60] sm:$0xff]
        %v3475 = vld [vmem:[%s2590 + $0x70] sm:$0xff]
        %v3476 = vld [vmem:[%s2590 + $0xa0] sm:$0xff]
        %v3477 = vld [vmem:[%s2590 + $0xb0] sm:$0xff]
        %v3478 = vld [vmem:[%s2590 + $0xc0] sm:$0xff]
        %v3479 = vld [vmem:[%s2590 + $0xd0] sm:$0xff]
        %v3480 = vld [vmem:[%s2590 + $0xe0] sm:$0xff]
        %v3481 = vld [vmem:[%s2590 + $0xf0] sm:$0xff]
        %v3482 = vld [vmem:[%s2590 + $0x100] sm:$0xff]
        %v3483 = vld [vmem:[%s2590 + $0x110] sm:$0xff]
        %s3484 = scalar_lea.vmem %s6, 24
        %v3485 = vld [vmem:[%s3484] sm:$0xff]
        %v3487 = vsel %vm439, %v3468, 0
        %v3490 = vsel %vm439, %v3469, 0
        %v3493 = vsel %vm439, %v3470, 0
        %v3496 = vsel %vm439, %v3471, 0
        %v3499 = vsel %vm439, %v3472, 0
        %v3502 = vsel %vm439, %v3473, 0
        %v3505 = vsel %vm439, %v3474, 0
        %v3508 = vsel %vm439, %v3475, 0
        %v3511 = vsel %vm439, %v3476, 0
        %v3514 = vsel %vm439, %v3477, 0
        %v3517 = vsel %vm439, %v3478, 0
        %v3520 = vsel %vm439, %v3479, 0
        %v3523 = vsel %vm439, %v3480, 0
        %v3526 = vsel %vm439, %v3481, 0
        %v3529 = vsel %vm439, %v3482, 0
        %v3532 = vsel %vm439, %v3483, 0
        %3534 = vmatprep.subr.mxu0 0.0
        %3535 = vmatpush1.msra.mxu0 0.0
        %3536 = vmatprep.subr.mxu0 0.0
        %3537 = vmatpush1.msra.mxu0 0.0
        %3538 = vmatprep.subr.mxu0 0.0
        %3539 = vmatpush1.msra.mxu0 0.0
        %3540 = vmatprep.subr.mxu0 0.0
        %3541 = vmatpush1.msra.mxu0 0.0
        %3542 = vmatprep.subr.mxu0 0.0
        %3543 = vmatpush1.msra.mxu0 0.0
        %3544 = vmatprep.subr.mxu0 0.0
        %3545 = vmatpush1.msra.mxu0 0.0
        %3546 = vmatprep.subr.mxu0 0.0
        %3547 = vmatpush1.msra.mxu0 0.0
        %3548 = vmatprep.subr.mxu0 0.0
        %3549 = vmatpush1.msra.mxu0 0.0
        %3550 = vmatprep.subr.mxu0 0.0
        %3551 = vmatpush1.msra.mxu0 0.0
        %3552 = vmatprep.subr.mxu0 0.0
        %3553 = vmatpush1.msra.mxu0 0.0
        %3554 = vmatprep.subr.mxu0 0.0
        %3555 = vmatpush1.msra.mxu0 0.0
        %3556 = vmatprep.subr.mxu0 0.0
        %3557 = vmatpush1.msra.mxu0 0.0
        %3558 = vmatprep.subr.mxu0 0.0
        %3559 = vmatpush1.msra.mxu0 0.0
        %3560 = vmatprep.subr.mxu0 0.0
        %3561 = vmatpush1.msra.mxu0 0.0
        %3562 = vmatprep.subr.mxu0 0.0
        %3563 = vmatpush1.msra.mxu0 0.0
        %3564 = vmatprep.subr.mxu0 0.0
        %3565 = vmatpush1.msra.mxu0 %v3485
        %3566 = vmatprep.subr.mxu0 0.0
        %3567 = vmatpush2.msra.mxu0 0.0
        %3568 = vmatprep.subr.mxu0 0.0
        %3569 = vmatpush2.msra.mxu0 0.0
        %3570 = vmatprep.subr.mxu0 0.0
        %3571 = vmatpush2.msra.mxu0 0.0
        %3572 = vmatprep.subr.mxu0 0.0
        %3573 = vmatpush2.msra.mxu0 0.0
        %3574 = vmatprep.subr.mxu0 0.0
        %3575 = vmatpush2.msra.mxu0 0.0
        %3576 = vmatprep.subr.mxu0 0.0
        %3577 = vmatpush2.msra.mxu0 0.0
        %3578 = vmatprep.subr.mxu0 0.0
        %3579 = vmatpush2.msra.mxu0 0.0
        %3580 = vmatprep.subr.mxu0 0.0
        %3581 = vmatpush2.msra.mxu0 0.0
        %3582 = vmatprep.subr.mxu0 0.0
        %3583 = vmatpush2.msra.mxu0 0.0
        %3584 = vmatprep.subr.mxu0 0.0
        %3585 = vmatpush2.msra.mxu0 0.0
        %3586 = vmatprep.subr.mxu0 0.0
        %3587 = vmatpush2.msra.mxu0 0.0
        %3588 = vmatprep.subr.mxu0 0.0
        %3589 = vmatpush2.msra.mxu0 0.0
        %3590 = vmatprep.subr.mxu0 0.0
        %3591 = vmatpush2.msra.mxu0 0.0
        %3592 = vmatprep.subr.mxu0 0.0
        %3593 = vmatpush2.msra.mxu0 0.0
        %3594 = vmatprep.subr.mxu0 0.0
        %3595 = vmatpush2.msra.mxu0 0.0
        %3596 = vmatprep.subr.mxu0 0.0
        %3597 = vmatpush2.msra.mxu0 0.0
        %3598 = vmatprep.mubr.f32.mxu0 0.0
        %3599 = vmatmul.mubr.f32.gmra.mxu0 %v3487
        %v3600 = vpop.f32.mrf.mxu0
        %v3601 = vadd.f32 0.0, %v3600
        %v3602 = vpop.f32.mrf.mxu0
        %3603 = vmatprep.mubr.f32.mxu0 0.0
        %3604 = vmatmul.mubr.f32.gmra.mxu0 %v3490
        %v3605 = vpop.f32.mrf.mxu0
        %v3606 = vadd.f32 0.0, %v3605
        %v3607 = vpop.f32.mrf.mxu0
        %3608 = vmatprep.mubr.f32.mxu0 0.0
        %3609 = vmatmul.mubr.f32.gmra.mxu0 %v3493
        %v3610 = vpop.f32.mrf.mxu0
        %v3611 = vadd.f32 0.0, %v3610
        %v3612 = vpop.f32.mrf.mxu0
        %3613 = vmatprep.mubr.f32.mxu0 0.0
        %3614 = vmatmul.mubr.f32.gmra.mxu0 %v3496
        %v3615 = vpop.f32.mrf.mxu0
        %v3616 = vadd.f32 0.0, %v3615
        %v3617 = vpop.f32.mrf.mxu0
        %3618 = vmatprep.mubr.f32.mxu0 0.0
        %3619 = vmatmul.mubr.f32.gmra.mxu0 %v3499
        %v3620 = vpop.f32.mrf.mxu0
        %v3621 = vadd.f32 0.0, %v3620
        %v3622 = vpop.f32.mrf.mxu0
        %3623 = vmatprep.mubr.f32.mxu0 0.0
        %3624 = vmatmul.mubr.f32.gmra.mxu0 %v3502
        %v3625 = vpop.f32.mrf.mxu0
        %v3626 = vadd.f32 0.0, %v3625
        %v3627 = vpop.f32.mrf.mxu0
        %3628 = vmatprep.mubr.f32.mxu0 0.0
        %3629 = vmatmul.mubr.f32.gmra.mxu0 %v3505
        %v3630 = vpop.f32.mrf.mxu0
        %v3631 = vadd.f32 0.0, %v3630
        %v3632 = vpop.f32.mrf.mxu0
        %3633 = vmatprep.mubr.f32.mxu0 0.0
        %3634 = vmatmul.mubr.f32.gmra.mxu0 %v3508
        %v3635 = vpop.f32.mrf.mxu0
        %v3636 = vadd.f32 0.0, %v3635
        %v3637 = vpop.f32.mrf.mxu0
        %3638 = vmatprep.mubr.f32.mxu0 0.0
        %3639 = vmatmul.mubr.f32.gmra.mxu0 %v3511
        %v3640 = vpop.f32.mrf.mxu0
        %v3641 = vadd.f32 0.0, %v3640
        %v3642 = vpop.f32.mrf.mxu0
        %3643 = vmatprep.mubr.f32.mxu0 0.0
        %3644 = vmatmul.mubr.f32.gmra.mxu0 %v3514
        %v3645 = vpop.f32.mrf.mxu0
        %v3646 = vadd.f32 0.0, %v3645
        %v3647 = vpop.f32.mrf.mxu0
        %3648 = vmatprep.mubr.f32.mxu0 0.0
        %3649 = vmatmul.mubr.f32.gmra.mxu0 %v3517
        %v3650 = vpop.f32.mrf.mxu0
        %v3651 = vadd.f32 0.0, %v3650
        %v3652 = vpop.f32.mrf.mxu0
        %3653 = vmatprep.mubr.f32.mxu0 0.0
        %3654 = vmatmul.mubr.f32.gmra.mxu0 %v3520
        %v3655 = vpop.f32.mrf.mxu0
        %v3656 = vadd.f32 0.0, %v3655
        %v3657 = vpop.f32.mrf.mxu0
        %3658 = vmatprep.mubr.f32.mxu0 0.0
        %3659 = vmatmul.mubr.f32.gmra.mxu0 %v3523
        %v3660 = vpop.f32.mrf.mxu0
        %v3661 = vadd.f32 0.0, %v3660
        %v3662 = vpop.f32.mrf.mxu0
        %3663 = vmatprep.mubr.f32.mxu0 0.0
        %3664 = vmatmul.mubr.f32.gmra.mxu0 %v3526
        %v3665 = vpop.f32.mrf.mxu0
        %v3666 = vadd.f32 0.0, %v3665
        %v3667 = vpop.f32.mrf.mxu0
        %3668 = vmatprep.mubr.f32.mxu0 0.0
        %3669 = vmatmul.mubr.f32.gmra.mxu0 %v3529
        %v3670 = vpop.f32.mrf.mxu0
        %v3671 = vadd.f32 0.0, %v3670
        %v3672 = vpop.f32.mrf.mxu0
        %3673 = vmatprep.mubr.f32.mxu0 0.0
        %3674 = vmatmul.mubr.f32.gmra.mxu0 %v3532
        %v3675 = vpop.f32.mrf.mxu0
        %v3676 = vadd.f32 0.0, %v3675
        %v3677 = vpop.f32.mrf.mxu0
        %3678 = vdwg.mxu0
        %v3679 = vadd.f32 %v3452, %v3601
        %v3680 = vadd.f32 %v3453, %v3606
        %v3681 = vadd.f32 %v3454, %v3611
        %v3682 = vadd.f32 %v3455, %v3616
        %v3683 = vadd.f32 %v3456, %v3621
        %v3684 = vadd.f32 %v3457, %v3626
        %v3685 = vadd.f32 %v3458, %v3631
        %v3686 = vadd.f32 %v3459, %v3636
        %v3687 = vadd.f32 %v3460, %v3641
        %v3688 = vadd.f32 %v3461, %v3646
        %v3689 = vadd.f32 %v3462, %v3651
        %v3690 = vadd.f32 %v3463, %v3656
        %v3691 = vadd.f32 %v3464, %v3661
        %v3692 = vadd.f32 %v3465, %v3666
        %v3693 = vadd.f32 %v3466, %v3671
        %v3694 = vadd.f32 %v3467, %v3676
        %v3695 = vld [vmem:[%s2590 + $0x1] sm:$0xff]
        %v3696 = vld [vmem:[%s2590 + $0x11] sm:$0xff]
        %v3697 = vld [vmem:[%s2590 + $0x21] sm:$0xff]
        %v3698 = vld [vmem:[%s2590 + $0x31] sm:$0xff]
        %v3699 = vld [vmem:[%s2590 + $0x41] sm:$0xff]
        %v3700 = vld [vmem:[%s2590 + $0x51] sm:$0xff]
        %v3701 = vld [vmem:[%s2590 + $0x61] sm:$0xff]
        %v3702 = vld [vmem:[%s2590 + $0x71] sm:$0xff]
        %v3703 = vld [vmem:[%s2590 + $0xa1] sm:$0xff]
        %v3704 = vld [vmem:[%s2590 + $0xb1] sm:$0xff]
        %v3705 = vld [vmem:[%s2590 + $0xc1] sm:$0xff]
        %v3706 = vld [vmem:[%s2590 + $0xd1] sm:$0xff]
        %v3707 = vld [vmem:[%s2590 + $0xe1] sm:$0xff]
        %v3708 = vld [vmem:[%s2590 + $0xf1] sm:$0xff]
        %v3709 = vld [vmem:[%s2590 + $0x101] sm:$0xff]
        %v3710 = vld [vmem:[%s2590 + $0x111] sm:$0xff]
        %s3711 = scalar_lea.vmem %s6, 32
        %v3712 = vld [vmem:[%s3711] sm:$0xff]
        %v3714 = vsel %vm439, %v3695, 0
        %v3717 = vsel %vm439, %v3696, 0
        %v3720 = vsel %vm439, %v3697, 0
        %v3723 = vsel %vm439, %v3698, 0
        %v3726 = vsel %vm439, %v3699, 0
        %v3729 = vsel %vm439, %v3700, 0
        %v3732 = vsel %vm439, %v3701, 0
        %v3735 = vsel %vm439, %v3702, 0
        %v3738 = vsel %vm439, %v3703, 0
        %v3741 = vsel %vm439, %v3704, 0
        %v3744 = vsel %vm439, %v3705, 0
        %v3747 = vsel %vm439, %v3706, 0
        %v3750 = vsel %vm439, %v3707, 0
        %v3753 = vsel %vm439, %v3708, 0
        %v3756 = vsel %vm439, %v3709, 0
        %v3759 = vsel %vm439, %v3710, 0
        %3761 = vmatprep.subr.mxu0 0.0
        %3762 = vmatpush1.msra.mxu0 0.0
        %3763 = vmatprep.subr.mxu0 0.0
        %3764 = vmatpush1.msra.mxu0 0.0
        %3765 = vmatprep.subr.mxu0 0.0
        %3766 = vmatpush1.msra.mxu0 0.0
        %3767 = vmatprep.subr.mxu0 0.0
        %3768 = vmatpush1.msra.mxu0 0.0
        %3769 = vmatprep.subr.mxu0 0.0
        %3770 = vmatpush1.msra.mxu0 0.0
        %3771 = vmatprep.subr.mxu0 0.0
        %3772 = vmatpush1.msra.mxu0 0.0
        %3773 = vmatprep.subr.mxu0 0.0
        %3774 = vmatpush1.msra.mxu0 0.0
        %3775 = vmatprep.subr.mxu0 0.0
        %3776 = vmatpush1.msra.mxu0 0.0
        %3777 = vmatprep.subr.mxu0 0.0
        %3778 = vmatpush1.msra.mxu0 0.0
        %3779 = vmatprep.subr.mxu0 0.0
        %3780 = vmatpush1.msra.mxu0 0.0
        %3781 = vmatprep.subr.mxu0 0.0
        %3782 = vmatpush1.msra.mxu0 0.0
        %3783 = vmatprep.subr.mxu0 0.0
        %3784 = vmatpush1.msra.mxu0 0.0
        %3785 = vmatprep.subr.mxu0 0.0
        %3786 = vmatpush1.msra.mxu0 0.0
        %3787 = vmatprep.subr.mxu0 0.0
        %3788 = vmatpush1.msra.mxu0 0.0
        %3789 = vmatprep.subr.mxu0 0.0
        %3790 = vmatpush1.msra.mxu0 0.0
        %3791 = vmatprep.subr.mxu0 0.0
        %3792 = vmatpush1.msra.mxu0 %v3712
        %3793 = vmatprep.subr.mxu0 0.0
        %3794 = vmatpush2.msra.mxu0 0.0
        %3795 = vmatprep.subr.mxu0 0.0
        %3796 = vmatpush2.msra.mxu0 0.0
        %3797 = vmatprep.subr.mxu0 0.0
        %3798 = vmatpush2.msra.mxu0 0.0
        %3799 = vmatprep.subr.mxu0 0.0
        %3800 = vmatpush2.msra.mxu0 0.0
        %3801 = vmatprep.subr.mxu0 0.0
        %3802 = vmatpush2.msra.mxu0 0.0
        %3803 = vmatprep.subr.mxu0 0.0
        %3804 = vmatpush2.msra.mxu0 0.0
        %3805 = vmatprep.subr.mxu0 0.0
        %3806 = vmatpush2.msra.mxu0 0.0
        %3807 = vmatprep.subr.mxu0 0.0
        %3808 = vmatpush2.msra.mxu0 0.0
        %3809 = vmatprep.subr.mxu0 0.0
        %3810 = vmatpush2.msra.mxu0 0.0
        %3811 = vmatprep.subr.mxu0 0.0
        %3812 = vmatpush2.msra.mxu0 0.0
        %3813 = vmatprep.subr.mxu0 0.0
        %3814 = vmatpush2.msra.mxu0 0.0
        %3815 = vmatprep.subr.mxu0 0.0
        %3816 = vmatpush2.msra.mxu0 0.0
        %3817 = vmatprep.subr.mxu0 0.0
        %3818 = vmatpush2.msra.mxu0 0.0
        %3819 = vmatprep.subr.mxu0 0.0
        %3820 = vmatpush2.msra.mxu0 0.0
        %3821 = vmatprep.subr.mxu0 0.0
        %3822 = vmatpush2.msra.mxu0 0.0
        %3823 = vmatprep.subr.mxu0 0.0
        %3824 = vmatpush2.msra.mxu0 0.0
        %3825 = vmatprep.mubr.f32.mxu0 0.0
        %3826 = vmatmul.mubr.f32.gmra.mxu0 %v3714
        %v3827 = vpop.f32.mrf.mxu0
        %v3828 = vadd.f32 0.0, %v3827
        %v3829 = vpop.f32.mrf.mxu0
        %3830 = vmatprep.mubr.f32.mxu0 0.0
        %3831 = vmatmul.mubr.f32.gmra.mxu0 %v3717
        %v3832 = vpop.f32.mrf.mxu0
        %v3833 = vadd.f32 0.0, %v3832
        %v3834 = vpop.f32.mrf.mxu0
        %3835 = vmatprep.mubr.f32.mxu0 0.0
        %3836 = vmatmul.mubr.f32.gmra.mxu0 %v3720
        %v3837 = vpop.f32.mrf.mxu0
        %v3838 = vadd.f32 0.0, %v3837
        %v3839 = vpop.f32.mrf.mxu0
        %3840 = vmatprep.mubr.f32.mxu0 0.0
        %3841 = vmatmul.mubr.f32.gmra.mxu0 %v3723
        %v3842 = vpop.f32.mrf.mxu0
        %v3843 = vadd.f32 0.0, %v3842
        %v3844 = vpop.f32.mrf.mxu0
        %3845 = vmatprep.mubr.f32.mxu0 0.0
        %3846 = vmatmul.mubr.f32.gmra.mxu0 %v3726
        %v3847 = vpop.f32.mrf.mxu0
        %v3848 = vadd.f32 0.0, %v3847
        %v3849 = vpop.f32.mrf.mxu0
        %3850 = vmatprep.mubr.f32.mxu0 0.0
        %3851 = vmatmul.mubr.f32.gmra.mxu0 %v3729
        %v3852 = vpop.f32.mrf.mxu0
        %v3853 = vadd.f32 0.0, %v3852
        %v3854 = vpop.f32.mrf.mxu0
        %3855 = vmatprep.mubr.f32.mxu0 0.0
        %3856 = vmatmul.mubr.f32.gmra.mxu0 %v3732
        %v3857 = vpop.f32.mrf.mxu0
        %v3858 = vadd.f32 0.0, %v3857
        %v3859 = vpop.f32.mrf.mxu0
        %3860 = vmatprep.mubr.f32.mxu0 0.0
        %3861 = vmatmul.mubr.f32.gmra.mxu0 %v3735
        %v3862 = vpop.f32.mrf.mxu0
        %v3863 = vadd.f32 0.0, %v3862
        %v3864 = vpop.f32.mrf.mxu0
        %3865 = vmatprep.mubr.f32.mxu0 0.0
        %3866 = vmatmul.mubr.f32.gmra.mxu0 %v3738
        %v3867 = vpop.f32.mrf.mxu0
        %v3868 = vadd.f32 0.0, %v3867
        %v3869 = vpop.f32.mrf.mxu0
        %3870 = vmatprep.mubr.f32.mxu0 0.0
        %3871 = vmatmul.mubr.f32.gmra.mxu0 %v3741
        %v3872 = vpop.f32.mrf.mxu0
        %v3873 = vadd.f32 0.0, %v3872
        %v3874 = vpop.f32.mrf.mxu0
        %3875 = vmatprep.mubr.f32.mxu0 0.0
        %3876 = vmatmul.mubr.f32.gmra.mxu0 %v3744
        %v3877 = vpop.f32.mrf.mxu0
        %v3878 = vadd.f32 0.0, %v3877
        %v3879 = vpop.f32.mrf.mxu0
        %3880 = vmatprep.mubr.f32.mxu0 0.0
        %3881 = vmatmul.mubr.f32.gmra.mxu0 %v3747
        %v3882 = vpop.f32.mrf.mxu0
        %v3883 = vadd.f32 0.0, %v3882
        %v3884 = vpop.f32.mrf.mxu0
        %3885 = vmatprep.mubr.f32.mxu0 0.0
        %3886 = vmatmul.mubr.f32.gmra.mxu0 %v3750
        %v3887 = vpop.f32.mrf.mxu0
        %v3888 = vadd.f32 0.0, %v3887
        %v3889 = vpop.f32.mrf.mxu0
        %3890 = vmatprep.mubr.f32.mxu0 0.0
        %3891 = vmatmul.mubr.f32.gmra.mxu0 %v3753
        %v3892 = vpop.f32.mrf.mxu0
        %v3893 = vadd.f32 0.0, %v3892
        %v3894 = vpop.f32.mrf.mxu0
        %3895 = vmatprep.mubr.f32.mxu0 0.0
        %3896 = vmatmul.mubr.f32.gmra.mxu0 %v3756
        %v3897 = vpop.f32.mrf.mxu0
        %v3898 = vadd.f32 0.0, %v3897
        %v3899 = vpop.f32.mrf.mxu0
        %3900 = vmatprep.mubr.f32.mxu0 0.0
        %3901 = vmatmul.mubr.f32.gmra.mxu0 %v3759
        %v3902 = vpop.f32.mrf.mxu0
        %v3903 = vadd.f32 0.0, %v3902
        %v3904 = vpop.f32.mrf.mxu0
        %3905 = vdwg.mxu0
        %v3906 = vadd.f32 %v3679, %v3828
        %v3907 = vadd.f32 %v3680, %v3833
        %v3908 = vadd.f32 %v3681, %v3838
        %v3909 = vadd.f32 %v3682, %v3843
        %v3910 = vadd.f32 %v3683, %v3848
        %v3911 = vadd.f32 %v3684, %v3853
        %v3912 = vadd.f32 %v3685, %v3858
        %v3913 = vadd.f32 %v3686, %v3863
        %v3914 = vadd.f32 %v3687, %v3868
        %v3915 = vadd.f32 %v3688, %v3873
        %v3916 = vadd.f32 %v3689, %v3878
        %v3917 = vadd.f32 %v3690, %v3883
        %v3918 = vadd.f32 %v3691, %v3888
        %v3919 = vadd.f32 %v3692, %v3893
        %v3920 = vadd.f32 %v3693, %v3898
        %v3921 = vadd.f32 %v3694, %v3903
        %v3922 = vld [vmem:[%s2590 + $0x2] sm:$0xff]
        %v3923 = vld [vmem:[%s2590 + $0x12] sm:$0xff]
        %v3924 = vld [vmem:[%s2590 + $0x22] sm:$0xff]
        %v3925 = vld [vmem:[%s2590 + $0x32] sm:$0xff]
        %v3926 = vld [vmem:[%s2590 + $0x42] sm:$0xff]
        %v3927 = vld [vmem:[%s2590 + $0x52] sm:$0xff]
        %v3928 = vld [vmem:[%s2590 + $0x62] sm:$0xff]
        %v3929 = vld [vmem:[%s2590 + $0x72] sm:$0xff]
        %v3930 = vld [vmem:[%s2590 + $0xa2] sm:$0xff]
        %v3931 = vld [vmem:[%s2590 + $0xb2] sm:$0xff]
        %v3932 = vld [vmem:[%s2590 + $0xc2] sm:$0xff]
        %v3933 = vld [vmem:[%s2590 + $0xd2] sm:$0xff]
        %v3934 = vld [vmem:[%s2590 + $0xe2] sm:$0xff]
        %v3935 = vld [vmem:[%s2590 + $0xf2] sm:$0xff]
        %v3936 = vld [vmem:[%s2590 + $0x102] sm:$0xff]
        %v3937 = vld [vmem:[%s2590 + $0x112] sm:$0xff]
        %s3938 = scalar_lea.vmem %s6, 40
        %v3939 = vld [vmem:[%s3938] sm:$0xff]
        %v3941 = vsel %vm439, %v3922, 0
        %v3944 = vsel %vm439, %v3923, 0
        %v3947 = vsel %vm439, %v3924, 0
        %v3950 = vsel %vm439, %v3925, 0
        %v3953 = vsel %vm439, %v3926, 0
        %v3956 = vsel %vm439, %v3927, 0
        %v3959 = vsel %vm439, %v3928, 0
        %v3962 = vsel %vm439, %v3929, 0
        %v3965 = vsel %vm439, %v3930, 0
        %v3968 = vsel %vm439, %v3931, 0
        %v3971 = vsel %vm439, %v3932, 0
        %v3974 = vsel %vm439, %v3933, 0
        %v3977 = vsel %vm439, %v3934, 0
        %v3980 = vsel %vm439, %v3935, 0
        %v3983 = vsel %vm439, %v3936, 0
        %v3986 = vsel %vm439, %v3937, 0
        %3988 = vmatprep.subr.mxu0 0.0
        %3989 = vmatpush1.msra.mxu0 0.0
        %3990 = vmatprep.subr.mxu0 0.0
        %3991 = vmatpush1.msra.mxu0 0.0
        %3992 = vmatprep.subr.mxu0 0.0
        %3993 = vmatpush1.msra.mxu0 0.0
        %3994 = vmatprep.subr.mxu0 0.0
        %3995 = vmatpush1.msra.mxu0 0.0
        %3996 = vmatprep.subr.mxu0 0.0
        %3997 = vmatpush1.msra.mxu0 0.0
        %3998 = vmatprep.subr.mxu0 0.0
        %3999 = vmatpush1.msra.mxu0 0.0
        %4000 = vmatprep.subr.mxu0 0.0
        %4001 = vmatpush1.msra.mxu0 0.0
        %4002 = vmatprep.subr.mxu0 0.0
        %4003 = vmatpush1.msra.mxu0 0.0
        %4004 = vmatprep.subr.mxu0 0.0
        %4005 = vmatpush1.msra.mxu0 0.0
        %4006 = vmatprep.subr.mxu0 0.0
        %4007 = vmatpush1.msra.mxu0 0.0
        %4008 = vmatprep.subr.mxu0 0.0
        %4009 = vmatpush1.msra.mxu0 0.0
        %4010 = vmatprep.subr.mxu0 0.0
        %4011 = vmatpush1.msra.mxu0 0.0
        %4012 = vmatprep.subr.mxu0 0.0
        %4013 = vmatpush1.msra.mxu0 0.0
        %4014 = vmatprep.subr.mxu0 0.0
        %4015 = vmatpush1.msra.mxu0 0.0
        %4016 = vmatprep.subr.mxu0 0.0
        %4017 = vmatpush1.msra.mxu0 0.0
        %4018 = vmatprep.subr.mxu0 0.0
        %4019 = vmatpush1.msra.mxu0 %v3939
        %4020 = vmatprep.subr.mxu0 0.0
        %4021 = vmatpush2.msra.mxu0 0.0
        %4022 = vmatprep.subr.mxu0 0.0
        %4023 = vmatpush2.msra.mxu0 0.0
        %4024 = vmatprep.subr.mxu0 0.0
        %4025 = vmatpush2.msra.mxu0 0.0
        %4026 = vmatprep.subr.mxu0 0.0
        %4027 = vmatpush2.msra.mxu0 0.0
        %4028 = vmatprep.subr.mxu0 0.0
        %4029 = vmatpush2.msra.mxu0 0.0
        %4030 = vmatprep.subr.mxu0 0.0
        %4031 = vmatpush2.msra.mxu0 0.0
        %4032 = vmatprep.subr.mxu0 0.0
        %4033 = vmatpush2.msra.mxu0 0.0
        %4034 = vmatprep.subr.mxu0 0.0
        %4035 = vmatpush2.msra.mxu0 0.0
        %4036 = vmatprep.subr.mxu0 0.0
        %4037 = vmatpush2.msra.mxu0 0.0
        %4038 = vmatprep.subr.mxu0 0.0
        %4039 = vmatpush2.msra.mxu0 0.0
        %4040 = vmatprep.subr.mxu0 0.0
        %4041 = vmatpush2.msra.mxu0 0.0
        %4042 = vmatprep.subr.mxu0 0.0
        %4043 = vmatpush2.msra.mxu0 0.0
        %4044 = vmatprep.subr.mxu0 0.0
        %4045 = vmatpush2.msra.mxu0 0.0
        %4046 = vmatprep.subr.mxu0 0.0
        %4047 = vmatpush2.msra.mxu0 0.0
        %4048 = vmatprep.subr.mxu0 0.0
        %4049 = vmatpush2.msra.mxu0 0.0
        %4050 = vmatprep.subr.mxu0 0.0
        %4051 = vmatpush2.msra.mxu0 0.0
        %4052 = vmatprep.mubr.f32.mxu0 0.0
        %4053 = vmatmul.mubr.f32.gmra.mxu0 %v3941
        %v4054 = vpop.f32.mrf.mxu0
        %v4055 = vadd.f32 0.0, %v4054
        %v4056 = vpop.f32.mrf.mxu0
        %4057 = vmatprep.mubr.f32.mxu0 0.0
        %4058 = vmatmul.mubr.f32.gmra.mxu0 %v3944
        %v4059 = vpop.f32.mrf.mxu0
        %v4060 = vadd.f32 0.0, %v4059
        %v4061 = vpop.f32.mrf.mxu0
        %4062 = vmatprep.mubr.f32.mxu0 0.0
        %4063 = vmatmul.mubr.f32.gmra.mxu0 %v3947
        %v4064 = vpop.f32.mrf.mxu0
        %v4065 = vadd.f32 0.0, %v4064
        %v4066 = vpop.f32.mrf.mxu0
        %4067 = vmatprep.mubr.f32.mxu0 0.0
        %4068 = vmatmul.mubr.f32.gmra.mxu0 %v3950
        %v4069 = vpop.f32.mrf.mxu0
        %v4070 = vadd.f32 0.0, %v4069
        %v4071 = vpop.f32.mrf.mxu0
        %4072 = vmatprep.mubr.f32.mxu0 0.0
        %4073 = vmatmul.mubr.f32.gmra.mxu0 %v3953
        %v4074 = vpop.f32.mrf.mxu0
        %v4075 = vadd.f32 0.0, %v4074
        %v4076 = vpop.f32.mrf.mxu0
        %4077 = vmatprep.mubr.f32.mxu0 0.0
        %4078 = vmatmul.mubr.f32.gmra.mxu0 %v3956
        %v4079 = vpop.f32.mrf.mxu0
        %v4080 = vadd.f32 0.0, %v4079
        %v4081 = vpop.f32.mrf.mxu0
        %4082 = vmatprep.mubr.f32.mxu0 0.0
        %4083 = vmatmul.mubr.f32.gmra.mxu0 %v3959
        %v4084 = vpop.f32.mrf.mxu0
        %v4085 = vadd.f32 0.0, %v4084
        %v4086 = vpop.f32.mrf.mxu0
        %4087 = vmatprep.mubr.f32.mxu0 0.0
        %4088 = vmatmul.mubr.f32.gmra.mxu0 %v3962
        %v4089 = vpop.f32.mrf.mxu0
        %v4090 = vadd.f32 0.0, %v4089
        %v4091 = vpop.f32.mrf.mxu0
        %4092 = vmatprep.mubr.f32.mxu0 0.0
        %4093 = vmatmul.mubr.f32.gmra.mxu0 %v3965
        %v4094 = vpop.f32.mrf.mxu0
        %v4095 = vadd.f32 0.0, %v4094
        %v4096 = vpop.f32.mrf.mxu0
        %4097 = vmatprep.mubr.f32.mxu0 0.0
        %4098 = vmatmul.mubr.f32.gmra.mxu0 %v3968
        %v4099 = vpop.f32.mrf.mxu0
        %v4100 = vadd.f32 0.0, %v4099
        %v4101 = vpop.f32.mrf.mxu0
        %4102 = vmatprep.mubr.f32.mxu0 0.0
        %4103 = vmatmul.mubr.f32.gmra.mxu0 %v3971
        %v4104 = vpop.f32.mrf.mxu0
        %v4105 = vadd.f32 0.0, %v4104
        %v4106 = vpop.f32.mrf.mxu0
        %4107 = vmatprep.mubr.f32.mxu0 0.0
        %4108 = vmatmul.mubr.f32.gmra.mxu0 %v3974
        %v4109 = vpop.f32.mrf.mxu0
        %v4110 = vadd.f32 0.0, %v4109
        %v4111 = vpop.f32.mrf.mxu0
        %4112 = vmatprep.mubr.f32.mxu0 0.0
        %4113 = vmatmul.mubr.f32.gmra.mxu0 %v3977
        %v4114 = vpop.f32.mrf.mxu0
        %v4115 = vadd.f32 0.0, %v4114
        %v4116 = vpop.f32.mrf.mxu0
        %4117 = vmatprep.mubr.f32.mxu0 0.0
        %4118 = vmatmul.mubr.f32.gmra.mxu0 %v3980
        %v4119 = vpop.f32.mrf.mxu0
        %v4120 = vadd.f32 0.0, %v4119
        %v4121 = vpop.f32.mrf.mxu0
        %4122 = vmatprep.mubr.f32.mxu0 0.0
        %4123 = vmatmul.mubr.f32.gmra.mxu0 %v3983
        %v4124 = vpop.f32.mrf.mxu0
        %v4125 = vadd.f32 0.0, %v4124
        %v4126 = vpop.f32.mrf.mxu0
        %4127 = vmatprep.mubr.f32.mxu0 0.0
        %4128 = vmatmul.mubr.f32.gmra.mxu0 %v3986
        %v4129 = vpop.f32.mrf.mxu0
        %v4130 = vadd.f32 0.0, %v4129
        %v4131 = vpop.f32.mrf.mxu0
        %4132 = vdwg.mxu0
        %v4133 = vadd.f32 %v3906, %v4055
        %v4134 = vadd.f32 %v3907, %v4060
        %v4135 = vadd.f32 %v3908, %v4065
        %v4136 = vadd.f32 %v3909, %v4070
        %v4137 = vadd.f32 %v3910, %v4075
        %v4138 = vadd.f32 %v3911, %v4080
        %v4139 = vadd.f32 %v3912, %v4085
        %v4140 = vadd.f32 %v3913, %v4090
        %v4141 = vadd.f32 %v3914, %v4095
        %v4142 = vadd.f32 %v3915, %v4100
        %v4143 = vadd.f32 %v3916, %v4105
        %v4144 = vadd.f32 %v3917, %v4110
        %v4145 = vadd.f32 %v3918, %v4115
        %v4146 = vadd.f32 %v3919, %v4120
        %v4147 = vadd.f32 %v3920, %v4125
        %v4148 = vadd.f32 %v3921, %v4130
        %s4149 = scalar_lea.vmem [#allocation2], 32
        %v4150 = vld [vmem:[%s4149] sm:$0xff]
        %v4151 = vld [vmem:[%s4149 + $0x10] sm:$0xff]
        %v4152 = vld [vmem:[%s4149 + $0x20] sm:$0xff]
        %v4153 = vld [vmem:[%s4149 + $0x30] sm:$0xff]
        %v4154 = vld [vmem:[%s4149 + $0x40] sm:$0xff]
        %v4155 = vld [vmem:[%s4149 + $0x50] sm:$0xff]
        %v4156 = vld [vmem:[%s4149 + $0x60] sm:$0xff]
        %v4157 = vld [vmem:[%s4149 + $0x70] sm:$0xff]
        %v4158 = vld [vmem:[%s4149 + $0xa0] sm:$0xff]
        %v4159 = vld [vmem:[%s4149 + $0xb0] sm:$0xff]
        %v4160 = vld [vmem:[%s4149 + $0xc0] sm:$0xff]
        %v4161 = vld [vmem:[%s4149 + $0xd0] sm:$0xff]
        %v4162 = vld [vmem:[%s4149 + $0xe0] sm:$0xff]
        %v4163 = vld [vmem:[%s4149 + $0xf0] sm:$0xff]
        %v4164 = vld [vmem:[%s4149 + $0x100] sm:$0xff]
        %v4165 = vld [vmem:[%s4149 + $0x110] sm:$0xff]
        %s4166 = scalar_lea.vmem %s6, 48
        %v4167 = vld [vmem:[%s4166] sm:$0xff]
        %v4169 = vsel %vm439, %v4150, 0
        %v4172 = vsel %vm439, %v4151, 0
        %v4175 = vsel %vm439, %v4152, 0
        %v4178 = vsel %vm439, %v4153, 0
        %v4181 = vsel %vm439, %v4154, 0
        %v4184 = vsel %vm439, %v4155, 0
        %v4187 = vsel %vm439, %v4156, 0
        %v4190 = vsel %vm439, %v4157, 0
        %v4193 = vsel %vm439, %v4158, 0
        %v4196 = vsel %vm439, %v4159, 0
        %v4199 = vsel %vm439, %v4160, 0
        %v4202 = vsel %vm439, %v4161, 0
        %v4205 = vsel %vm439, %v4162, 0
        %v4208 = vsel %vm439, %v4163, 0
        %v4211 = vsel %vm439, %v4164, 0
        %v4214 = vsel %vm439, %v4165, 0
        %4216 = vmatprep.subr.mxu0 0.0
        %4217 = vmatpush1.msra.mxu0 0.0
        %4218 = vmatprep.subr.mxu0 0.0
        %4219 = vmatpush1.msra.mxu0 0.0
        %4220 = vmatprep.subr.mxu0 0.0
        %4221 = vmatpush1.msra.mxu0 0.0
        %4222 = vmatprep.subr.mxu0 0.0
        %4223 = vmatpush1.msra.mxu0 0.0
        %4224 = vmatprep.subr.mxu0 0.0
        %4225 = vmatpush1.msra.mxu0 0.0
        %4226 = vmatprep.subr.mxu0 0.0
        %4227 = vmatpush1.msra.mxu0 0.0
        %4228 = vmatprep.subr.mxu0 0.0
        %4229 = vmatpush1.msra.mxu0 0.0
        %4230 = vmatprep.subr.mxu0 0.0
        %4231 = vmatpush1.msra.mxu0 0.0
        %4232 = vmatprep.subr.mxu0 0.0
        %4233 = vmatpush1.msra.mxu0 0.0
        %4234 = vmatprep.subr.mxu0 0.0
        %4235 = vmatpush1.msra.mxu0 0.0
        %4236 = vmatprep.subr.mxu0 0.0
        %4237 = vmatpush1.msra.mxu0 0.0
        %4238 = vmatprep.subr.mxu0 0.0
        %4239 = vmatpush1.msra.mxu0 0.0
        %4240 = vmatprep.subr.mxu0 0.0
        %4241 = vmatpush1.msra.mxu0 0.0
        %4242 = vmatprep.subr.mxu0 0.0
        %4243 = vmatpush1.msra.mxu0 0.0
        %4244 = vmatprep.subr.mxu0 0.0
        %4245 = vmatpush1.msra.mxu0 0.0
        %4246 = vmatprep.subr.mxu0 0.0
        %4247 = vmatpush1.msra.mxu0 %v4167
        %4248 = vmatprep.subr.mxu0 0.0
        %4249 = vmatpush2.msra.mxu0 0.0
        %4250 = vmatprep.subr.mxu0 0.0
        %4251 = vmatpush2.msra.mxu0 0.0
        %4252 = vmatprep.subr.mxu0 0.0
        %4253 = vmatpush2.msra.mxu0 0.0
        %4254 = vmatprep.subr.mxu0 0.0
        %4255 = vmatpush2.msra.mxu0 0.0
        %4256 = vmatprep.subr.mxu0 0.0
        %4257 = vmatpush2.msra.mxu0 0.0
        %4258 = vmatprep.subr.mxu0 0.0
        %4259 = vmatpush2.msra.mxu0 0.0
        %4260 = vmatprep.subr.mxu0 0.0
        %4261 = vmatpush2.msra.mxu0 0.0
        %4262 = vmatprep.subr.mxu0 0.0
        %4263 = vmatpush2.msra.mxu0 0.0
        %4264 = vmatprep.subr.mxu0 0.0
        %4265 = vmatpush2.msra.mxu0 0.0
        %4266 = vmatprep.subr.mxu0 0.0
        %4267 = vmatpush2.msra.mxu0 0.0
        %4268 = vmatprep.subr.mxu0 0.0
        %4269 = vmatpush2.msra.mxu0 0.0
        %4270 = vmatprep.subr.mxu0 0.0
        %4271 = vmatpush2.msra.mxu0 0.0
        %4272 = vmatprep.subr.mxu0 0.0
        %4273 = vmatpush2.msra.mxu0 0.0
        %4274 = vmatprep.subr.mxu0 0.0
        %4275 = vmatpush2.msra.mxu0 0.0
        %4276 = vmatprep.subr.mxu0 0.0
        %4277 = vmatpush2.msra.mxu0 0.0
        %4278 = vmatprep.subr.mxu0 0.0
        %4279 = vmatpush2.msra.mxu0 0.0
        %4280 = vmatprep.mubr.f32.mxu0 0.0
        %4281 = vmatmul.mubr.f32.gmra.mxu0 %v4169
        %v4282 = vpop.f32.mrf.mxu0
        %v4283 = vadd.f32 0.0, %v4282
        %v4284 = vpop.f32.mrf.mxu0
        %4285 = vmatprep.mubr.f32.mxu0 0.0
        %4286 = vmatmul.mubr.f32.gmra.mxu0 %v4172
        %v4287 = vpop.f32.mrf.mxu0
        %v4288 = vadd.f32 0.0, %v4287
        %v4289 = vpop.f32.mrf.mxu0
        %4290 = vmatprep.mubr.f32.mxu0 0.0
        %4291 = vmatmul.mubr.f32.gmra.mxu0 %v4175
        %v4292 = vpop.f32.mrf.mxu0
        %v4293 = vadd.f32 0.0, %v4292
        %v4294 = vpop.f32.mrf.mxu0
        %4295 = vmatprep.mubr.f32.mxu0 0.0
        %4296 = vmatmul.mubr.f32.gmra.mxu0 %v4178
        %v4297 = vpop.f32.mrf.mxu0
        %v4298 = vadd.f32 0.0, %v4297
        %v4299 = vpop.f32.mrf.mxu0
        %4300 = vmatprep.mubr.f32.mxu0 0.0
        %4301 = vmatmul.mubr.f32.gmra.mxu0 %v4181
        %v4302 = vpop.f32.mrf.mxu0
        %v4303 = vadd.f32 0.0, %v4302
        %v4304 = vpop.f32.mrf.mxu0
        %4305 = vmatprep.mubr.f32.mxu0 0.0
        %4306 = vmatmul.mubr.f32.gmra.mxu0 %v4184
        %v4307 = vpop.f32.mrf.mxu0
        %v4308 = vadd.f32 0.0, %v4307
        %v4309 = vpop.f32.mrf.mxu0
        %4310 = vmatprep.mubr.f32.mxu0 0.0
        %4311 = vmatmul.mubr.f32.gmra.mxu0 %v4187
        %v4312 = vpop.f32.mrf.mxu0
        %v4313 = vadd.f32 0.0, %v4312
        %v4314 = vpop.f32.mrf.mxu0
        %4315 = vmatprep.mubr.f32.mxu0 0.0
        %4316 = vmatmul.mubr.f32.gmra.mxu0 %v4190
        %v4317 = vpop.f32.mrf.mxu0
        %v4318 = vadd.f32 0.0, %v4317
        %v4319 = vpop.f32.mrf.mxu0
        %4320 = vmatprep.mubr.f32.mxu0 0.0
        %4321 = vmatmul.mubr.f32.gmra.mxu0 %v4193
        %v4322 = vpop.f32.mrf.mxu0
        %v4323 = vadd.f32 0.0, %v4322
        %v4324 = vpop.f32.mrf.mxu0
        %4325 = vmatprep.mubr.f32.mxu0 0.0
        %4326 = vmatmul.mubr.f32.gmra.mxu0 %v4196
        %v4327 = vpop.f32.mrf.mxu0
        %v4328 = vadd.f32 0.0, %v4327
        %v4329 = vpop.f32.mrf.mxu0
        %4330 = vmatprep.mubr.f32.mxu0 0.0
        %4331 = vmatmul.mubr.f32.gmra.mxu0 %v4199
        %v4332 = vpop.f32.mrf.mxu0
        %v4333 = vadd.f32 0.0, %v4332
        %v4334 = vpop.f32.mrf.mxu0
        %4335 = vmatprep.mubr.f32.mxu0 0.0
        %4336 = vmatmul.mubr.f32.gmra.mxu0 %v4202
        %v4337 = vpop.f32.mrf.mxu0
        %v4338 = vadd.f32 0.0, %v4337
        %v4339 = vpop.f32.mrf.mxu0
        %4340 = vmatprep.mubr.f32.mxu0 0.0
        %4341 = vmatmul.mubr.f32.gmra.mxu0 %v4205
        %v4342 = vpop.f32.mrf.mxu0
        %v4343 = vadd.f32 0.0, %v4342
        %v4344 = vpop.f32.mrf.mxu0
        %4345 = vmatprep.mubr.f32.mxu0 0.0
        %4346 = vmatmul.mubr.f32.gmra.mxu0 %v4208
        %v4347 = vpop.f32.mrf.mxu0
        %v4348 = vadd.f32 0.0, %v4347
        %v4349 = vpop.f32.mrf.mxu0
        %4350 = vmatprep.mubr.f32.mxu0 0.0
        %4351 = vmatmul.mubr.f32.gmra.mxu0 %v4211
        %v4352 = vpop.f32.mrf.mxu0
        %v4353 = vadd.f32 0.0, %v4352
        %v4354 = vpop.f32.mrf.mxu0
        %4355 = vmatprep.mubr.f32.mxu0 0.0
        %4356 = vmatmul.mubr.f32.gmra.mxu0 %v4214
        %v4357 = vpop.f32.mrf.mxu0
        %v4358 = vadd.f32 0.0, %v4357
        %v4359 = vpop.f32.mrf.mxu0
        %4360 = vdwg.mxu0
        %v4361 = vadd.f32 %v4133, %v4283
        %v4362 = vadd.f32 %v4134, %v4288
        %v4363 = vadd.f32 %v4135, %v4293
        %v4364 = vadd.f32 %v4136, %v4298
        %v4365 = vadd.f32 %v4137, %v4303
        %v4366 = vadd.f32 %v4138, %v4308
        %v4367 = vadd.f32 %v4139, %v4313
        %v4368 = vadd.f32 %v4140, %v4318
        %v4369 = vadd.f32 %v4141, %v4323
        %v4370 = vadd.f32 %v4142, %v4328
        %v4371 = vadd.f32 %v4143, %v4333
        %v4372 = vadd.f32 %v4144, %v4338
        %v4373 = vadd.f32 %v4145, %v4343
        %v4374 = vadd.f32 %v4146, %v4348
        %v4375 = vadd.f32 %v4147, %v4353
        %v4376 = vadd.f32 %v4148, %v4358
        %v4377 = vld [vmem:[%s4149 + $0x1] sm:$0xff]
        %v4378 = vld [vmem:[%s4149 + $0x11] sm:$0xff]
        %v4379 = vld [vmem:[%s4149 + $0x21] sm:$0xff]
        %v4380 = vld [vmem:[%s4149 + $0x31] sm:$0xff]
        %v4381 = vld [vmem:[%s4149 + $0x41] sm:$0xff]
        %v4382 = vld [vmem:[%s4149 + $0x51] sm:$0xff]
        %v4383 = vld [vmem:[%s4149 + $0x61] sm:$0xff]
        %v4384 = vld [vmem:[%s4149 + $0x71] sm:$0xff]
        %v4385 = vld [vmem:[%s4149 + $0xa1] sm:$0xff]
        %v4386 = vld [vmem:[%s4149 + $0xb1] sm:$0xff]
        %v4387 = vld [vmem:[%s4149 + $0xc1] sm:$0xff]
        %v4388 = vld [vmem:[%s4149 + $0xd1] sm:$0xff]
        %v4389 = vld [vmem:[%s4149 + $0xe1] sm:$0xff]
        %v4390 = vld [vmem:[%s4149 + $0xf1] sm:$0xff]
        %v4391 = vld [vmem:[%s4149 + $0x101] sm:$0xff]
        %v4392 = vld [vmem:[%s4149 + $0x111] sm:$0xff]
        %s4393 = scalar_lea.vmem %s6, 56
        %v4394 = vld [vmem:[%s4393] sm:$0xff]
        %v4396 = vsel %vm439, %v4377, 0
        %v4399 = vsel %vm439, %v4378, 0
        %v4402 = vsel %vm439, %v4379, 0
        %v4405 = vsel %vm439, %v4380, 0
        %v4408 = vsel %vm439, %v4381, 0
        %v4411 = vsel %vm439, %v4382, 0
        %v4414 = vsel %vm439, %v4383, 0
        %v4417 = vsel %vm439, %v4384, 0
        %v4420 = vsel %vm439, %v4385, 0
        %v4423 = vsel %vm439, %v4386, 0
        %v4426 = vsel %vm439, %v4387, 0
        %v4429 = vsel %vm439, %v4388, 0
        %v4432 = vsel %vm439, %v4389, 0
        %v4435 = vsel %vm439, %v4390, 0
        %v4438 = vsel %vm439, %v4391, 0
        %v4441 = vsel %vm439, %v4392, 0
        %4443 = vmatprep.subr.mxu0 0.0
        %4444 = vmatpush1.msra.mxu0 0.0
        %4445 = vmatprep.subr.mxu0 0.0
        %4446 = vmatpush1.msra.mxu0 0.0
        %4447 = vmatprep.subr.mxu0 0.0
        %4448 = vmatpush1.msra.mxu0 0.0
        %4449 = vmatprep.subr.mxu0 0.0
        %4450 = vmatpush1.msra.mxu0 0.0
        %4451 = vmatprep.subr.mxu0 0.0
        %4452 = vmatpush1.msra.mxu0 0.0
        %4453 = vmatprep.subr.mxu0 0.0
        %4454 = vmatpush1.msra.mxu0 0.0
        %4455 = vmatprep.subr.mxu0 0.0
        %4456 = vmatpush1.msra.mxu0 0.0
        %4457 = vmatprep.subr.mxu0 0.0
        %4458 = vmatpush1.msra.mxu0 0.0
        %4459 = vmatprep.subr.mxu0 0.0
        %4460 = vmatpush1.msra.mxu0 0.0
        %4461 = vmatprep.subr.mxu0 0.0
        %4462 = vmatpush1.msra.mxu0 0.0
        %4463 = vmatprep.subr.mxu0 0.0
        %4464 = vmatpush1.msra.mxu0 0.0
        %4465 = vmatprep.subr.mxu0 0.0
        %4466 = vmatpush1.msra.mxu0 0.0
        %4467 = vmatprep.subr.mxu0 0.0
        %4468 = vmatpush1.msra.mxu0 0.0
        %4469 = vmatprep.subr.mxu0 0.0
        %4470 = vmatpush1.msra.mxu0 0.0
        %4471 = vmatprep.subr.mxu0 0.0
        %4472 = vmatpush1.msra.mxu0 0.0
        %4473 = vmatprep.subr.mxu0 0.0
        %4474 = vmatpush1.msra.mxu0 %v4394
        %4475 = vmatprep.subr.mxu0 0.0
        %4476 = vmatpush2.msra.mxu0 0.0
        %4477 = vmatprep.subr.mxu0 0.0
        %4478 = vmatpush2.msra.mxu0 0.0
        %4479 = vmatprep.subr.mxu0 0.0
        %4480 = vmatpush2.msra.mxu0 0.0
        %4481 = vmatprep.subr.mxu0 0.0
        %4482 = vmatpush2.msra.mxu0 0.0
        %4483 = vmatprep.subr.mxu0 0.0
        %4484 = vmatpush2.msra.mxu0 0.0
        %4485 = vmatprep.subr.mxu0 0.0
        %4486 = vmatpush2.msra.mxu0 0.0
        %4487 = vmatprep.subr.mxu0 0.0
        %4488 = vmatpush2.msra.mxu0 0.0
        %4489 = vmatprep.subr.mxu0 0.0
        %4490 = vmatpush2.msra.mxu0 0.0
        %4491 = vmatprep.subr.mxu0 0.0
        %4492 = vmatpush2.msra.mxu0 0.0
        %4493 = vmatprep.subr.mxu0 0.0
        %4494 = vmatpush2.msra.mxu0 0.0
        %4495 = vmatprep.subr.mxu0 0.0
        %4496 = vmatpush2.msra.mxu0 0.0
        %4497 = vmatprep.subr.mxu0 0.0
        %4498 = vmatpush2.msra.mxu0 0.0
        %4499 = vmatprep.subr.mxu0 0.0
        %4500 = vmatpush2.msra.mxu0 0.0
        %4501 = vmatprep.subr.mxu0 0.0
        %4502 = vmatpush2.msra.mxu0 0.0
        %4503 = vmatprep.subr.mxu0 0.0
        %4504 = vmatpush2.msra.mxu0 0.0
        %4505 = vmatprep.subr.mxu0 0.0
        %4506 = vmatpush2.msra.mxu0 0.0
        %4507 = vmatprep.mubr.f32.mxu0 0.0
        %4508 = vmatmul.mubr.f32.gmra.mxu0 %v4396
        %v4509 = vpop.f32.mrf.mxu0
        %v4510 = vadd.f32 0.0, %v4509
        %v4511 = vpop.f32.mrf.mxu0
        %4512 = vmatprep.mubr.f32.mxu0 0.0
        %4513 = vmatmul.mubr.f32.gmra.mxu0 %v4399
        %v4514 = vpop.f32.mrf.mxu0
        %v4515 = vadd.f32 0.0, %v4514
        %v4516 = vpop.f32.mrf.mxu0
        %4517 = vmatprep.mubr.f32.mxu0 0.0
        %4518 = vmatmul.mubr.f32.gmra.mxu0 %v4402
        %v4519 = vpop.f32.mrf.mxu0
        %v4520 = vadd.f32 0.0, %v4519
        %v4521 = vpop.f32.mrf.mxu0
        %4522 = vmatprep.mubr.f32.mxu0 0.0
        %4523 = vmatmul.mubr.f32.gmra.mxu0 %v4405
        %v4524 = vpop.f32.mrf.mxu0
        %v4525 = vadd.f32 0.0, %v4524
        %v4526 = vpop.f32.mrf.mxu0
        %4527 = vmatprep.mubr.f32.mxu0 0.0
        %4528 = vmatmul.mubr.f32.gmra.mxu0 %v4408
        %v4529 = vpop.f32.mrf.mxu0
        %v4530 = vadd.f32 0.0, %v4529
        %v4531 = vpop.f32.mrf.mxu0
        %4532 = vmatprep.mubr.f32.mxu0 0.0
        %4533 = vmatmul.mubr.f32.gmra.mxu0 %v4411
        %v4534 = vpop.f32.mrf.mxu0
        %v4535 = vadd.f32 0.0, %v4534
        %v4536 = vpop.f32.mrf.mxu0
        %4537 = vmatprep.mubr.f32.mxu0 0.0
        %4538 = vmatmul.mubr.f32.gmra.mxu0 %v4414
        %v4539 = vpop.f32.mrf.mxu0
        %v4540 = vadd.f32 0.0, %v4539
        %v4541 = vpop.f32.mrf.mxu0
        %4542 = vmatprep.mubr.f32.mxu0 0.0
        %4543 = vmatmul.mubr.f32.gmra.mxu0 %v4417
        %v4544 = vpop.f32.mrf.mxu0
        %v4545 = vadd.f32 0.0, %v4544
        %v4546 = vpop.f32.mrf.mxu0
        %4547 = vmatprep.mubr.f32.mxu0 0.0
        %4548 = vmatmul.mubr.f32.gmra.mxu0 %v4420
        %v4549 = vpop.f32.mrf.mxu0
        %v4550 = vadd.f32 0.0, %v4549
        %v4551 = vpop.f32.mrf.mxu0
        %4552 = vmatprep.mubr.f32.mxu0 0.0
        %4553 = vmatmul.mubr.f32.gmra.mxu0 %v4423
        %v4554 = vpop.f32.mrf.mxu0
        %v4555 = vadd.f32 0.0, %v4554
        %v4556 = vpop.f32.mrf.mxu0
        %4557 = vmatprep.mubr.f32.mxu0 0.0
        %4558 = vmatmul.mubr.f32.gmra.mxu0 %v4426
        %v4559 = vpop.f32.mrf.mxu0
        %v4560 = vadd.f32 0.0, %v4559
        %v4561 = vpop.f32.mrf.mxu0
        %4562 = vmatprep.mubr.f32.mxu0 0.0
        %4563 = vmatmul.mubr.f32.gmra.mxu0 %v4429
        %v4564 = vpop.f32.mrf.mxu0
        %v4565 = vadd.f32 0.0, %v4564
        %v4566 = vpop.f32.mrf.mxu0
        %4567 = vmatprep.mubr.f32.mxu0 0.0
        %4568 = vmatmul.mubr.f32.gmra.mxu0 %v4432
        %v4569 = vpop.f32.mrf.mxu0
        %v4570 = vadd.f32 0.0, %v4569
        %v4571 = vpop.f32.mrf.mxu0
        %4572 = vmatprep.mubr.f32.mxu0 0.0
        %4573 = vmatmul.mubr.f32.gmra.mxu0 %v4435
        %v4574 = vpop.f32.mrf.mxu0
        %v4575 = vadd.f32 0.0, %v4574
        %v4576 = vpop.f32.mrf.mxu0
        %4577 = vmatprep.mubr.f32.mxu0 0.0
        %4578 = vmatmul.mubr.f32.gmra.mxu0 %v4438
        %v4579 = vpop.f32.mrf.mxu0
        %v4580 = vadd.f32 0.0, %v4579
        %v4581 = vpop.f32.mrf.mxu0
        %4582 = vmatprep.mubr.f32.mxu0 0.0
        %4583 = vmatmul.mubr.f32.gmra.mxu0 %v4441
        %v4584 = vpop.f32.mrf.mxu0
        %v4585 = vadd.f32 0.0, %v4584
        %v4586 = vpop.f32.mrf.mxu0
        %4587 = vdwg.mxu0
        %v4588 = vadd.f32 %v4361, %v4510
        %v4589 = vadd.f32 %v4362, %v4515
        %v4590 = vadd.f32 %v4363, %v4520
        %v4591 = vadd.f32 %v4364, %v4525
        %v4592 = vadd.f32 %v4365, %v4530
        %v4593 = vadd.f32 %v4366, %v4535
        %v4594 = vadd.f32 %v4367, %v4540
        %v4595 = vadd.f32 %v4368, %v4545
        %v4596 = vadd.f32 %v4369, %v4550
        %v4597 = vadd.f32 %v4370, %v4555
        %v4598 = vadd.f32 %v4371, %v4560
        %v4599 = vadd.f32 %v4372, %v4565
        %v4600 = vadd.f32 %v4373, %v4570
        %v4601 = vadd.f32 %v4374, %v4575
        %v4602 = vadd.f32 %v4375, %v4580
        %v4603 = vadd.f32 %v4376, %v4585
        %v4604 = vld [vmem:[%s4149 + $0x2] sm:$0xff]
        %v4605 = vld [vmem:[%s4149 + $0x12] sm:$0xff]
        %v4606 = vld [vmem:[%s4149 + $0x22] sm:$0xff]
        %v4607 = vld [vmem:[%s4149 + $0x32] sm:$0xff]
        %v4608 = vld [vmem:[%s4149 + $0x42] sm:$0xff]
        %v4609 = vld [vmem:[%s4149 + $0x52] sm:$0xff]
        %v4610 = vld [vmem:[%s4149 + $0x62] sm:$0xff]
        %v4611 = vld [vmem:[%s4149 + $0x72] sm:$0xff]
        %v4612 = vld [vmem:[%s4149 + $0xa2] sm:$0xff]
        %v4613 = vld [vmem:[%s4149 + $0xb2] sm:$0xff]
        %v4614 = vld [vmem:[%s4149 + $0xc2] sm:$0xff]
        %v4615 = vld [vmem:[%s4149 + $0xd2] sm:$0xff]
        %v4616 = vld [vmem:[%s4149 + $0xe2] sm:$0xff]
        %v4617 = vld [vmem:[%s4149 + $0xf2] sm:$0xff]
        %v4618 = vld [vmem:[%s4149 + $0x102] sm:$0xff]
        %v4619 = vld [vmem:[%s4149 + $0x112] sm:$0xff]
        %s4620 = scalar_lea.vmem %s6, 64
        %v4621 = vld [vmem:[%s4620] sm:$0xff]
        %v4623 = vsel %vm439, %v4604, 0
        %v4626 = vsel %vm439, %v4605, 0
        %v4629 = vsel %vm439, %v4606, 0
        %v4632 = vsel %vm439, %v4607, 0
        %v4635 = vsel %vm439, %v4608, 0
        %v4638 = vsel %vm439, %v4609, 0
        %v4641 = vsel %vm439, %v4610, 0
        %v4644 = vsel %vm439, %v4611, 0
        %v4647 = vsel %vm439, %v4612, 0
        %v4650 = vsel %vm439, %v4613, 0
        %v4653 = vsel %vm439, %v4614, 0
        %v4656 = vsel %vm439, %v4615, 0
        %v4659 = vsel %vm439, %v4616, 0
        %v4662 = vsel %vm439, %v4617, 0
        %v4665 = vsel %vm439, %v4618, 0
        %v4668 = vsel %vm439, %v4619, 0
        %4670 = vmatprep.subr.mxu0 0.0
        %4671 = vmatpush1.msra.mxu0 0.0
        %4672 = vmatprep.subr.mxu0 0.0
        %4673 = vmatpush1.msra.mxu0 0.0
        %4674 = vmatprep.subr.mxu0 0.0
        %4675 = vmatpush1.msra.mxu0 0.0
        %4676 = vmatprep.subr.mxu0 0.0
        %4677 = vmatpush1.msra.mxu0 0.0
        %4678 = vmatprep.subr.mxu0 0.0
        %4679 = vmatpush1.msra.mxu0 0.0
        %4680 = vmatprep.subr.mxu0 0.0
        %4681 = vmatpush1.msra.mxu0 0.0
        %4682 = vmatprep.subr.mxu0 0.0
        %4683 = vmatpush1.msra.mxu0 0.0
        %4684 = vmatprep.subr.mxu0 0.0
        %4685 = vmatpush1.msra.mxu0 0.0
        %4686 = vmatprep.subr.mxu0 0.0
        %4687 = vmatpush1.msra.mxu0 0.0
        %4688 = vmatprep.subr.mxu0 0.0
        %4689 = vmatpush1.msra.mxu0 0.0
        %4690 = vmatprep.subr.mxu0 0.0
        %4691 = vmatpush1.msra.mxu0 0.0
        %4692 = vmatprep.subr.mxu0 0.0
        %4693 = vmatpush1.msra.mxu0 0.0
        %4694 = vmatprep.subr.mxu0 0.0
        %4695 = vmatpush1.msra.mxu0 0.0
        %4696 = vmatprep.subr.mxu0 0.0
        %4697 = vmatpush1.msra.mxu0 0.0
        %4698 = vmatprep.subr.mxu0 0.0
        %4699 = vmatpush1.msra.mxu0 0.0
        %4700 = vmatprep.subr.mxu0 0.0
        %4701 = vmatpush1.msra.mxu0 %v4621
        %4702 = vmatprep.subr.mxu0 0.0
        %4703 = vmatpush2.msra.mxu0 0.0
        %4704 = vmatprep.subr.mxu0 0.0
        %4705 = vmatpush2.msra.mxu0 0.0
        %4706 = vmatprep.subr.mxu0 0.0
        %4707 = vmatpush2.msra.mxu0 0.0
        %4708 = vmatprep.subr.mxu0 0.0
        %4709 = vmatpush2.msra.mxu0 0.0
        %4710 = vmatprep.subr.mxu0 0.0
        %4711 = vmatpush2.msra.mxu0 0.0
        %4712 = vmatprep.subr.mxu0 0.0
        %4713 = vmatpush2.msra.mxu0 0.0
        %4714 = vmatprep.subr.mxu0 0.0
        %4715 = vmatpush2.msra.mxu0 0.0
        %4716 = vmatprep.subr.mxu0 0.0
        %4717 = vmatpush2.msra.mxu0 0.0
        %4718 = vmatprep.subr.mxu0 0.0
        %4719 = vmatpush2.msra.mxu0 0.0
        %4720 = vmatprep.subr.mxu0 0.0
        %4721 = vmatpush2.msra.mxu0 0.0
        %4722 = vmatprep.subr.mxu0 0.0
        %4723 = vmatpush2.msra.mxu0 0.0
        %4724 = vmatprep.subr.mxu0 0.0
        %4725 = vmatpush2.msra.mxu0 0.0
        %4726 = vmatprep.subr.mxu0 0.0
        %4727 = vmatpush2.msra.mxu0 0.0
        %4728 = vmatprep.subr.mxu0 0.0
        %4729 = vmatpush2.msra.mxu0 0.0
        %4730 = vmatprep.subr.mxu0 0.0
        %4731 = vmatpush2.msra.mxu0 0.0
        %4732 = vmatprep.subr.mxu0 0.0
        %4733 = vmatpush2.msra.mxu0 0.0
        %4734 = vmatprep.mubr.f32.mxu0 0.0
        %4735 = vmatmul.mubr.f32.gmra.mxu0 %v4623
        %v4736 = vpop.f32.mrf.mxu0
        %v4737 = vadd.f32 0.0, %v4736
        %v4738 = vpop.f32.mrf.mxu0
        %4739 = vmatprep.mubr.f32.mxu0 0.0
        %4740 = vmatmul.mubr.f32.gmra.mxu0 %v4626
        %v4741 = vpop.f32.mrf.mxu0
        %v4742 = vadd.f32 0.0, %v4741
        %v4743 = vpop.f32.mrf.mxu0
        %4744 = vmatprep.mubr.f32.mxu0 0.0
        %4745 = vmatmul.mubr.f32.gmra.mxu0 %v4629
        %v4746 = vpop.f32.mrf.mxu0
        %v4747 = vadd.f32 0.0, %v4746
        %v4748 = vpop.f32.mrf.mxu0
        %4749 = vmatprep.mubr.f32.mxu0 0.0
        %4750 = vmatmul.mubr.f32.gmra.mxu0 %v4632
        %v4751 = vpop.f32.mrf.mxu0
        %v4752 = vadd.f32 0.0, %v4751
        %v4753 = vpop.f32.mrf.mxu0
        %4754 = vmatprep.mubr.f32.mxu0 0.0
        %4755 = vmatmul.mubr.f32.gmra.mxu0 %v4635
        %v4756 = vpop.f32.mrf.mxu0
        %v4757 = vadd.f32 0.0, %v4756
        %v4758 = vpop.f32.mrf.mxu0
        %4759 = vmatprep.mubr.f32.mxu0 0.0
        %4760 = vmatmul.mubr.f32.gmra.mxu0 %v4638
        %v4761 = vpop.f32.mrf.mxu0
        %v4762 = vadd.f32 0.0, %v4761
        %v4763 = vpop.f32.mrf.mxu0
        %4764 = vmatprep.mubr.f32.mxu0 0.0
        %4765 = vmatmul.mubr.f32.gmra.mxu0 %v4641
        %v4766 = vpop.f32.mrf.mxu0
        %v4767 = vadd.f32 0.0, %v4766
        %v4768 = vpop.f32.mrf.mxu0
        %4769 = vmatprep.mubr.f32.mxu0 0.0
        %4770 = vmatmul.mubr.f32.gmra.mxu0 %v4644
        %v4771 = vpop.f32.mrf.mxu0
        %v4772 = vadd.f32 0.0, %v4771
        %v4773 = vpop.f32.mrf.mxu0
        %4774 = vmatprep.mubr.f32.mxu0 0.0
        %4775 = vmatmul.mubr.f32.gmra.mxu0 %v4647
        %v4776 = vpop.f32.mrf.mxu0
        %v4777 = vadd.f32 0.0, %v4776
        %v4778 = vpop.f32.mrf.mxu0
        %4779 = vmatprep.mubr.f32.mxu0 0.0
        %4780 = vmatmul.mubr.f32.gmra.mxu0 %v4650
        %v4781 = vpop.f32.mrf.mxu0
        %v4782 = vadd.f32 0.0, %v4781
        %v4783 = vpop.f32.mrf.mxu0
        %4784 = vmatprep.mubr.f32.mxu0 0.0
        %4785 = vmatmul.mubr.f32.gmra.mxu0 %v4653
        %v4786 = vpop.f32.mrf.mxu0
        %v4787 = vadd.f32 0.0, %v4786
        %v4788 = vpop.f32.mrf.mxu0
        %4789 = vmatprep.mubr.f32.mxu0 0.0
        %4790 = vmatmul.mubr.f32.gmra.mxu0 %v4656
        %v4791 = vpop.f32.mrf.mxu0
        %v4792 = vadd.f32 0.0, %v4791
        %v4793 = vpop.f32.mrf.mxu0
        %4794 = vmatprep.mubr.f32.mxu0 0.0
        %4795 = vmatmul.mubr.f32.gmra.mxu0 %v4659
        %v4796 = vpop.f32.mrf.mxu0
        %v4797 = vadd.f32 0.0, %v4796
        %v4798 = vpop.f32.mrf.mxu0
        %4799 = vmatprep.mubr.f32.mxu0 0.0
        %4800 = vmatmul.mubr.f32.gmra.mxu0 %v4662
        %v4801 = vpop.f32.mrf.mxu0
        %v4802 = vadd.f32 0.0, %v4801
        %v4803 = vpop.f32.mrf.mxu0
        %4804 = vmatprep.mubr.f32.mxu0 0.0
        %4805 = vmatmul.mubr.f32.gmra.mxu0 %v4665
        %v4806 = vpop.f32.mrf.mxu0
        %v4807 = vadd.f32 0.0, %v4806
        %v4808 = vpop.f32.mrf.mxu0
        %4809 = vmatprep.mubr.f32.mxu0 0.0
        %4810 = vmatmul.mubr.f32.gmra.mxu0 %v4668
        %v4811 = vpop.f32.mrf.mxu0
        %v4812 = vadd.f32 0.0, %v4811
        %v4813 = vpop.f32.mrf.mxu0
        %4814 = vdwg.mxu0
        %v4815 = vadd.f32 %v4588, %v4737
        %v4816 = vadd.f32 %v4589, %v4742
        %v4817 = vadd.f32 %v4590, %v4747
        %v4818 = vadd.f32 %v4591, %v4752
        %v4819 = vadd.f32 %v4592, %v4757
        %v4820 = vadd.f32 %v4593, %v4762
        %v4821 = vadd.f32 %v4594, %v4767
        %v4822 = vadd.f32 %v4595, %v4772
        %v4823 = vadd.f32 %v4596, %v4777
        %v4824 = vadd.f32 %v4597, %v4782
        %v4825 = vadd.f32 %v4598, %v4787
        %v4826 = vadd.f32 %v4599, %v4792
        %v4827 = vadd.f32 %v4600, %v4797
        %v4828 = vadd.f32 %v4601, %v4802
        %v4829 = vadd.f32 %v4602, %v4807
        %v4830 = vadd.f32 %v4603, %v4812
        %v4831 = vadd.f32 %v4815, %v2742
        %v4832 = vadd.f32 %v4816, %v2747
        %v4833 = vadd.f32 %v4817, %v2752
        %v4834 = vadd.f32 %v4818, %v2757
        %v4835 = vadd.f32 %v4819, %v2762
        %v4836 = vadd.f32 %v4820, %v2767
        %v4837 = vadd.f32 %v4821, %v2772
        %v4838 = vadd.f32 %v4822, %v2777
        %v4839 = vadd.f32 %v4823, %v2782
        %v4840 = vadd.f32 %v4824, %v2787
        %v4841 = vadd.f32 %v4825, %v2792
        %v4842 = vadd.f32 %v4826, %v2797
        %v4843 = vadd.f32 %v4827, %v2802
        %v4844 = vadd.f32 %v4828, %v2807
        %v4845 = vadd.f32 %v4829, %v2812
        %v4846 = vadd.f32 %v4830, %v2817
        %v4847 = vld [vmem:[%s9 + $0x2] sm:$0x1]
        %v4848 = vld [vmem:[%s9 + $0x3] sm:$0x1]
        %v4849 = vlaneseq
        %v4850 = vshrl.u32 %v4849, 7
        %v4851 = vsub.s32 0, %v4850
        %v4852 = vrot.slane %v4847, %v4851
        %v4853 = vmul.f32 %v4831, %v4852
        %v4854 = vmul.f32 %v4832, %v4852
        %v4855 = vmul.f32 %v4833, %v4852
        %v4856 = vmul.f32 %v4834, %v4852
        %v4857 = vmul.f32 %v4835, %v4852
        %v4858 = vmul.f32 %v4836, %v4852
        %v4859 = vmul.f32 %v4837, %v4852
        %v4860 = vmul.f32 %v4838, %v4852
        %v4861 = vmul.f32 %v4839, %v4852
        %v4862 = vmul.f32 %v4840, %v4852
        %v4863 = vmul.f32 %v4841, %v4852
        %v4864 = vmul.f32 %v4842, %v4852
        %v4865 = vmul.f32 %v4843, %v4852
        %v4866 = vmul.f32 %v4844, %v4852
        %v4867 = vmul.f32 %v4845, %v4852
        %v4868 = vmul.f32 %v4846, %v4852
        %v4869 = vlaneseq
        %v4870 = vshrl.u32 %v4869, 7
        %v4871 = vsub.s32 0, %v4870
        %v4872 = vrot.slane %v4848, %v4871
        %v4873 = vadd.f32 %v4853, %v4872
        %v4874 = vadd.f32 %v4854, %v4872
        %v4875 = vadd.f32 %v4855, %v4872
        %v4876 = vadd.f32 %v4856, %v4872
        %v4877 = vadd.f32 %v4857, %v4872
        %v4878 = vadd.f32 %v4858, %v4872
        %v4879 = vadd.f32 %v4859, %v4872
        %v4880 = vadd.f32 %v4860, %v4872
        %v4881 = vadd.f32 %v4861, %v4872
        %v4882 = vadd.f32 %v4862, %v4872
        %v4883 = vadd.f32 %v4863, %v4872
        %v4884 = vadd.f32 %v4864, %v4872
        %v4885 = vadd.f32 %v4865, %v4872
        %v4886 = vadd.f32 %v4866, %v4872
        %v4887 = vadd.f32 %v4867, %v4872
        %v4888 = vadd.f32 %v4868, %v4872
        %v4889 = vmax.f32 %v4873, 0.0
        %v4890 = vmax.f32 %v4874, 0.0
        %v4891 = vmax.f32 %v4875, 0.0
        %v4892 = vmax.f32 %v4876, 0.0
        %v4893 = vmax.f32 %v4877, 0.0
        %v4894 = vmax.f32 %v4878, 0.0
        %v4895 = vmax.f32 %v4879, 0.0
        %v4896 = vmax.f32 %v4880, 0.0
        %v4897 = vmax.f32 %v4881, 0.0
        %v4898 = vmax.f32 %v4882, 0.0
        %v4899 = vmax.f32 %v4883, 0.0
        %v4900 = vmax.f32 %v4884, 0.0
        %v4901 = vmax.f32 %v4885, 0.0
        %v4902 = vmax.f32 %v4886, 0.0
        %v4903 = vmax.f32 %v4887, 0.0
        %v4904 = vmax.f32 %v4888, 0.0
        %4905 = vst.msk [vmem:[%s2590 + $0x1] sm:$0xff] %vm439, %v4889
        %4906 = vst.msk [vmem:[%s2590 + $0x11] sm:$0xff] %vm439, %v4890
        %4907 = vst.msk [vmem:[%s2590 + $0x21] sm:$0xff] %vm439, %v4891
        %4908 = vst.msk [vmem:[%s2590 + $0x31] sm:$0xff] %vm439, %v4892
        %4909 = vst.msk [vmem:[%s2590 + $0x41] sm:$0xff] %vm439, %v4893
        %4910 = vst.msk [vmem:[%s2590 + $0x51] sm:$0xff] %vm439, %v4894
        %4911 = vst.msk [vmem:[%s2590 + $0x61] sm:$0xff] %vm439, %v4895
        %4912 = vst.msk [vmem:[%s2590 + $0x71] sm:$0xff] %vm439, %v4896
        %4913 = vst.msk [vmem:[%s2590 + $0xa1] sm:$0xff] %vm439, %v4897
        %4914 = vst.msk [vmem:[%s2590 + $0xb1] sm:$0xff] %vm439, %v4898
        %4915 = vst.msk [vmem:[%s2590 + $0xc1] sm:$0xff] %vm439, %v4899
        %4916 = vst.msk [vmem:[%s2590 + $0xd1] sm:$0xff] %vm439, %v4900
        %4917 = vst.msk [vmem:[%s2590 + $0xe1] sm:$0xff] %vm439, %v4901
        %4918 = vst.msk [vmem:[%s2590 + $0xf1] sm:$0xff] %vm439, %v4902
        %4919 = vst.msk [vmem:[%s2590 + $0x101] sm:$0xff] %vm439, %v4903
        %4920 = vst.msk [vmem:[%s2590 + $0x111] sm:$0xff] %vm439, %v4904
        %v4921 = vld [vmem:[#allocation2] sm:$0xff]
        %v4922 = vld [vmem:[#allocation2 + $0x10] sm:$0xff]
        %v4923 = vld [vmem:[#allocation2 + $0x20] sm:$0xff]
        %v4924 = vld [vmem:[#allocation2 + $0x30] sm:$0xff]
        %v4925 = vld [vmem:[#allocation2 + $0x40] sm:$0xff]
        %v4926 = vld [vmem:[#allocation2 + $0x50] sm:$0xff]
        %v4927 = vld [vmem:[#allocation2 + $0x60] sm:$0xff]
        %v4928 = vld [vmem:[#allocation2 + $0x70] sm:$0xff]
        %v4929 = vld [vmem:[#allocation2 + $0xa0] sm:$0xff]
        %v4930 = vld [vmem:[#allocation2 + $0xb0] sm:$0xff]
        %v4931 = vld [vmem:[#allocation2 + $0xc0] sm:$0xff]
        %v4932 = vld [vmem:[#allocation2 + $0xd0] sm:$0xff]
        %v4933 = vld [vmem:[#allocation2 + $0xe0] sm:$0xff]
        %v4934 = vld [vmem:[#allocation2 + $0xf0] sm:$0xff]
        %v4935 = vld [vmem:[#allocation2 + $0x100] sm:$0xff]
        %v4936 = vld [vmem:[#allocation2 + $0x110] sm:$0xff]
        %v4937 = vld [vmem:[%s7] sm:$0xff]
        %v4938 = vld [vmem:[#allocation2 + $0x1] sm:$0xff]
        %v4939 = vld [vmem:[#allocation2 + $0x11] sm:$0xff]
        %v4940 = vld [vmem:[#allocation2 + $0x21] sm:$0xff]
        %v4941 = vld [vmem:[#allocation2 + $0x31] sm:$0xff]
        %v4942 = vld [vmem:[#allocation2 + $0x41] sm:$0xff]
        %v4943 = vld [vmem:[#allocation2 + $0x51] sm:$0xff]
        %v4944 = vld [vmem:[#allocation2 + $0x61] sm:$0xff]
        %v4945 = vld [vmem:[#allocation2 + $0x71] sm:$0xff]
        %v4946 = vld [vmem:[#allocation2 + $0xa1] sm:$0xff]
        %v4947 = vld [vmem:[#allocation2 + $0xb1] sm:$0xff]
        %v4948 = vld [vmem:[#allocation2 + $0xc1] sm:$0xff]
        %v4949 = vld [vmem:[#allocation2 + $0xd1] sm:$0xff]
        %v4950 = vld [vmem:[#allocation2 + $0xe1] sm:$0xff]
        %v4951 = vld [vmem:[#allocation2 + $0xf1] sm:$0xff]
        %v4952 = vld [vmem:[#allocation2 + $0x101] sm:$0xff]
        %v4953 = vld [vmem:[#allocation2 + $0x111] sm:$0xff]
        %s4954 = scalar_lea.vmem %s7, 8
        %v4955 = vld [vmem:[%s4954] sm:$0xff]
        %v4957 = vsel %vm439, %v4938, 0
        %v4960 = vsel %vm439, %v4939, 0
        %v4963 = vsel %vm439, %v4940, 0
        %v4966 = vsel %vm439, %v4941, 0
        %v4969 = vsel %vm439, %v4942, 0
        %v4972 = vsel %vm439, %v4943, 0
        %v4975 = vsel %vm439, %v4944, 0
        %v4978 = vsel %vm439, %v4945, 0
        %v4981 = vsel %vm439, %v4946, 0
        %v4984 = vsel %vm439, %v4947, 0
        %v4987 = vsel %vm439, %v4948, 0
        %v4990 = vsel %vm439, %v4949, 0
        %v4993 = vsel %vm439, %v4950, 0
        %v4996 = vsel %vm439, %v4951, 0
        %v4999 = vsel %vm439, %v4952, 0
        %v5002 = vsel %vm439, %v4953, 0
        %5004 = vmatprep.subr.mxu0 0.0
        %5005 = vmatpush1.msra.mxu0 0.0
        %5006 = vmatprep.subr.mxu0 0.0
        %5007 = vmatpush1.msra.mxu0 0.0
        %5008 = vmatprep.subr.mxu0 0.0
        %5009 = vmatpush1.msra.mxu0 0.0
        %5010 = vmatprep.subr.mxu0 0.0
        %5011 = vmatpush1.msra.mxu0 0.0
        %5012 = vmatprep.subr.mxu0 0.0
        %5013 = vmatpush1.msra.mxu0 0.0
        %5014 = vmatprep.subr.mxu0 0.0
        %5015 = vmatpush1.msra.mxu0 0.0
        %5016 = vmatprep.subr.mxu0 0.0
        %5017 = vmatpush1.msra.mxu0 0.0
        %5018 = vmatprep.subr.mxu0 0.0
        %5019 = vmatpush1.msra.mxu0 0.0
        %5020 = vmatprep.subr.mxu0 0.0
        %5021 = vmatpush1.msra.mxu0 0.0
        %5022 = vmatprep.subr.mxu0 0.0
        %5023 = vmatpush1.msra.mxu0 0.0
        %5024 = vmatprep.subr.mxu0 0.0
        %5025 = vmatpush1.msra.mxu0 0.0
        %5026 = vmatprep.subr.mxu0 0.0
        %5027 = vmatpush1.msra.mxu0 0.0
        %5028 = vmatprep.subr.mxu0 0.0
        %5029 = vmatpush1.msra.mxu0 0.0
        %5030 = vmatprep.subr.mxu0 0.0
        %5031 = vmatpush1.msra.mxu0 0.0
        %5032 = vmatprep.subr.mxu0 0.0
        %5033 = vmatpush1.msra.mxu0 0.0
        %5034 = vmatprep.subr.mxu0 0.0
        %5035 = vmatpush1.msra.mxu0 %v4955
        %5036 = vmatprep.subr.mxu0 0.0
        %5037 = vmatpush2.msra.mxu0 0.0
        %5038 = vmatprep.subr.mxu0 0.0
        %5039 = vmatpush2.msra.mxu0 0.0
        %5040 = vmatprep.subr.mxu0 0.0
        %5041 = vmatpush2.msra.mxu0 0.0
        %5042 = vmatprep.subr.mxu0 0.0
        %5043 = vmatpush2.msra.mxu0 0.0
        %5044 = vmatprep.subr.mxu0 0.0
        %5045 = vmatpush2.msra.mxu0 0.0
        %5046 = vmatprep.subr.mxu0 0.0
        %5047 = vmatpush2.msra.mxu0 0.0
        %5048 = vmatprep.subr.mxu0 0.0
        %5049 = vmatpush2.msra.mxu0 0.0
        %5050 = vmatprep.subr.mxu0 0.0
        %5051 = vmatpush2.msra.mxu0 0.0
        %5052 = vmatprep.subr.mxu0 0.0
        %5053 = vmatpush2.msra.mxu0 0.0
        %5054 = vmatprep.subr.mxu0 0.0
        %5055 = vmatpush2.msra.mxu0 0.0
        %5056 = vmatprep.subr.mxu0 0.0
        %5057 = vmatpush2.msra.mxu0 0.0
        %5058 = vmatprep.subr.mxu0 0.0
        %5059 = vmatpush2.msra.mxu0 0.0
        %5060 = vmatprep.subr.mxu0 0.0
        %5061 = vmatpush2.msra.mxu0 0.0
        %5062 = vmatprep.subr.mxu0 0.0
        %5063 = vmatpush2.msra.mxu0 0.0
        %5064 = vmatprep.subr.mxu0 0.0
        %5065 = vmatpush2.msra.mxu0 0.0
        %5066 = vmatprep.subr.mxu0 0.0
        %5067 = vmatpush2.msra.mxu0 0.0
        %5068 = vmatprep.mubr.f32.mxu0 0.0
        %5069 = vmatmul.mubr.f32.gmra.mxu0 %v4957
        %v5070 = vpop.f32.mrf.mxu0
        %v5071 = vadd.f32 0.0, %v5070
        %v5072 = vpop.f32.mrf.mxu0
        %5073 = vmatprep.mubr.f32.mxu0 0.0
        %5074 = vmatmul.mubr.f32.gmra.mxu0 %v4960
        %v5075 = vpop.f32.mrf.mxu0
        %v5076 = vadd.f32 0.0, %v5075
        %v5077 = vpop.f32.mrf.mxu0
        %5078 = vmatprep.mubr.f32.mxu0 0.0
        %5079 = vmatmul.mubr.f32.gmra.mxu0 %v4963
        %v5080 = vpop.f32.mrf.mxu0
        %v5081 = vadd.f32 0.0, %v5080
        %v5082 = vpop.f32.mrf.mxu0
        %5083 = vmatprep.mubr.f32.mxu0 0.0
        %5084 = vmatmul.mubr.f32.gmra.mxu0 %v4966
        %v5085 = vpop.f32.mrf.mxu0
        %v5086 = vadd.f32 0.0, %v5085
        %v5087 = vpop.f32.mrf.mxu0
        %5088 = vmatprep.mubr.f32.mxu0 0.0
        %5089 = vmatmul.mubr.f32.gmra.mxu0 %v4969
        %v5090 = vpop.f32.mrf.mxu0
        %v5091 = vadd.f32 0.0, %v5090
        %v5092 = vpop.f32.mrf.mxu0
        %5093 = vmatprep.mubr.f32.mxu0 0.0
        %5094 = vmatmul.mubr.f32.gmra.mxu0 %v4972
        %v5095 = vpop.f32.mrf.mxu0
        %v5096 = vadd.f32 0.0, %v5095
        %v5097 = vpop.f32.mrf.mxu0
        %5098 = vmatprep.mubr.f32.mxu0 0.0
        %5099 = vmatmul.mubr.f32.gmra.mxu0 %v4975
        %v5100 = vpop.f32.mrf.mxu0
        %v5101 = vadd.f32 0.0, %v5100
        %v5102 = vpop.f32.mrf.mxu0
        %5103 = vmatprep.mubr.f32.mxu0 0.0
        %5104 = vmatmul.mubr.f32.gmra.mxu0 %v4978
        %v5105 = vpop.f32.mrf.mxu0
        %v5106 = vadd.f32 0.0, %v5105
        %v5107 = vpop.f32.mrf.mxu0
        %5108 = vmatprep.mubr.f32.mxu0 0.0
        %5109 = vmatmul.mubr.f32.gmra.mxu0 %v4981
        %v5110 = vpop.f32.mrf.mxu0
        %v5111 = vadd.f32 0.0, %v5110
        %v5112 = vpop.f32.mrf.mxu0
        %5113 = vmatprep.mubr.f32.mxu0 0.0
        %5114 = vmatmul.mubr.f32.gmra.mxu0 %v4984
        %v5115 = vpop.f32.mrf.mxu0
        %v5116 = vadd.f32 0.0, %v5115
        %v5117 = vpop.f32.mrf.mxu0
        %5118 = vmatprep.mubr.f32.mxu0 0.0
        %5119 = vmatmul.mubr.f32.gmra.mxu0 %v4987
        %v5120 = vpop.f32.mrf.mxu0
        %v5121 = vadd.f32 0.0, %v5120
        %v5122 = vpop.f32.mrf.mxu0
        %5123 = vmatprep.mubr.f32.mxu0 0.0
        %5124 = vmatmul.mubr.f32.gmra.mxu0 %v4990
        %v5125 = vpop.f32.mrf.mxu0
        %v5126 = vadd.f32 0.0, %v5125
        %v5127 = vpop.f32.mrf.mxu0
        %5128 = vmatprep.mubr.f32.mxu0 0.0
        %5129 = vmatmul.mubr.f32.gmra.mxu0 %v4993
        %v5130 = vpop.f32.mrf.mxu0
        %v5131 = vadd.f32 0.0, %v5130
        %v5132 = vpop.f32.mrf.mxu0
        %5133 = vmatprep.mubr.f32.mxu0 0.0
        %5134 = vmatmul.mubr.f32.gmra.mxu0 %v4996
        %v5135 = vpop.f32.mrf.mxu0
        %v5136 = vadd.f32 0.0, %v5135
        %v5137 = vpop.f32.mrf.mxu0
        %5138 = vmatprep.mubr.f32.mxu0 0.0
        %5139 = vmatmul.mubr.f32.gmra.mxu0 %v4999
        %v5140 = vpop.f32.mrf.mxu0
        %v5141 = vadd.f32 0.0, %v5140
        %v5142 = vpop.f32.mrf.mxu0
        %5143 = vmatprep.mubr.f32.mxu0 0.0
        %5144 = vmatmul.mubr.f32.gmra.mxu0 %v5002
        %v5145 = vpop.f32.mrf.mxu0
        %v5146 = vadd.f32 0.0, %v5145
        %v5147 = vpop.f32.mrf.mxu0
        %5148 = vdwg.mxu0
        %v5150 = vsel %vm439, %v4921, 0
        %v5153 = vsel %vm439, %v4922, 0
        %v5156 = vsel %vm439, %v4923, 0
        %v5159 = vsel %vm439, %v4924, 0
        %v5162 = vsel %vm439, %v4925, 0
        %v5165 = vsel %vm439, %v4926, 0
        %v5168 = vsel %vm439, %v4927, 0
        %v5171 = vsel %vm439, %v4928, 0
        %v5174 = vsel %vm439, %v4929, 0
        %v5177 = vsel %vm439, %v4930, 0
        %v5180 = vsel %vm439, %v4931, 0
        %v5183 = vsel %vm439, %v4932, 0
        %v5186 = vsel %vm439, %v4933, 0
        %v5189 = vsel %vm439, %v4934, 0
        %v5192 = vsel %vm439, %v4935, 0
        %v5195 = vsel %vm439, %v4936, 0
        %5197 = vmatprep.subr.mxu0 0.0
        %5198 = vmatpush1.msra.mxu0 0.0
        %5199 = vmatprep.subr.mxu0 0.0
        %5200 = vmatpush1.msra.mxu0 0.0
        %5201 = vmatprep.subr.mxu0 0.0
        %5202 = vmatpush1.msra.mxu0 0.0
        %5203 = vmatprep.subr.mxu0 0.0
        %5204 = vmatpush1.msra.mxu0 0.0
        %5205 = vmatprep.subr.mxu0 0.0
        %5206 = vmatpush1.msra.mxu0 0.0
        %5207 = vmatprep.subr.mxu0 0.0
        %5208 = vmatpush1.msra.mxu0 0.0
        %5209 = vmatprep.subr.mxu0 0.0
        %5210 = vmatpush1.msra.mxu0 0.0
        %5211 = vmatprep.subr.mxu0 0.0
        %5212 = vmatpush1.msra.mxu0 0.0
        %5213 = vmatprep.subr.mxu0 0.0
        %5214 = vmatpush1.msra.mxu0 0.0
        %5215 = vmatprep.subr.mxu0 0.0
        %5216 = vmatpush1.msra.mxu0 0.0
        %5217 = vmatprep.subr.mxu0 0.0
        %5218 = vmatpush1.msra.mxu0 0.0
        %5219 = vmatprep.subr.mxu0 0.0
        %5220 = vmatpush1.msra.mxu0 0.0
        %5221 = vmatprep.subr.mxu0 0.0
        %5222 = vmatpush1.msra.mxu0 0.0
        %5223 = vmatprep.subr.mxu0 0.0
        %5224 = vmatpush1.msra.mxu0 0.0
        %5225 = vmatprep.subr.mxu0 0.0
        %5226 = vmatpush1.msra.mxu0 0.0
        %5227 = vmatprep.subr.mxu0 0.0
        %5228 = vmatpush1.msra.mxu0 %v4937
        %5229 = vmatprep.subr.mxu0 0.0
        %5230 = vmatpush2.msra.mxu0 0.0
        %5231 = vmatprep.subr.mxu0 0.0
        %5232 = vmatpush2.msra.mxu0 0.0
        %5233 = vmatprep.subr.mxu0 0.0
        %5234 = vmatpush2.msra.mxu0 0.0
        %5235 = vmatprep.subr.mxu0 0.0
        %5236 = vmatpush2.msra.mxu0 0.0
        %5237 = vmatprep.subr.mxu0 0.0
        %5238 = vmatpush2.msra.mxu0 0.0
        %5239 = vmatprep.subr.mxu0 0.0
        %5240 = vmatpush2.msra.mxu0 0.0
        %5241 = vmatprep.subr.mxu0 0.0
        %5242 = vmatpush2.msra.mxu0 0.0
        %5243 = vmatprep.subr.mxu0 0.0
        %5244 = vmatpush2.msra.mxu0 0.0
        %5245 = vmatprep.subr.mxu0 0.0
        %5246 = vmatpush2.msra.mxu0 0.0
        %5247 = vmatprep.subr.mxu0 0.0
        %5248 = vmatpush2.msra.mxu0 0.0
        %5249 = vmatprep.subr.mxu0 0.0
        %5250 = vmatpush2.msra.mxu0 0.0
        %5251 = vmatprep.subr.mxu0 0.0
        %5252 = vmatpush2.msra.mxu0 0.0
        %5253 = vmatprep.subr.mxu0 0.0
        %5254 = vmatpush2.msra.mxu0 0.0
        %5255 = vmatprep.subr.mxu0 0.0
        %5256 = vmatpush2.msra.mxu0 0.0
        %5257 = vmatprep.subr.mxu0 0.0
        %5258 = vmatpush2.msra.mxu0 0.0
        %5259 = vmatprep.subr.mxu0 0.0
        %5260 = vmatpush2.msra.mxu0 0.0
        %5261 = vmatprep.mubr.f32.mxu0 0.0
        %5262 = vmatmul.mubr.f32.gmra.mxu0 %v5150
        %v5263 = vpop.f32.mrf.mxu0
        %v5264 = vadd.f32 %v5071, %v5263
        %v5265 = vpop.f32.mrf.mxu0
        %5266 = vmatprep.mubr.f32.mxu0 0.0
        %5267 = vmatmul.mubr.f32.gmra.mxu0 %v5153
        %v5268 = vpop.f32.mrf.mxu0
        %v5269 = vadd.f32 %v5076, %v5268
        %v5270 = vpop.f32.mrf.mxu0
        %5271 = vmatprep.mubr.f32.mxu0 0.0
        %5272 = vmatmul.mubr.f32.gmra.mxu0 %v5156
        %v5273 = vpop.f32.mrf.mxu0
        %v5274 = vadd.f32 %v5081, %v5273
        %v5275 = vpop.f32.mrf.mxu0
        %5276 = vmatprep.mubr.f32.mxu0 0.0
        %5277 = vmatmul.mubr.f32.gmra.mxu0 %v5159
        %v5278 = vpop.f32.mrf.mxu0
        %v5279 = vadd.f32 %v5086, %v5278
        %v5280 = vpop.f32.mrf.mxu0
        %5281 = vmatprep.mubr.f32.mxu0 0.0
        %5282 = vmatmul.mubr.f32.gmra.mxu0 %v5162
        %v5283 = vpop.f32.mrf.mxu0
        %v5284 = vadd.f32 %v5091, %v5283
        %v5285 = vpop.f32.mrf.mxu0
        %5286 = vmatprep.mubr.f32.mxu0 0.0
        %5287 = vmatmul.mubr.f32.gmra.mxu0 %v5165
        %v5288 = vpop.f32.mrf.mxu0
        %v5289 = vadd.f32 %v5096, %v5288
        %v5290 = vpop.f32.mrf.mxu0
        %5291 = vmatprep.mubr.f32.mxu0 0.0
        %5292 = vmatmul.mubr.f32.gmra.mxu0 %v5168
        %v5293 = vpop.f32.mrf.mxu0
        %v5294 = vadd.f32 %v5101, %v5293
        %v5295 = vpop.f32.mrf.mxu0
        %5296 = vmatprep.mubr.f32.mxu0 0.0
        %5297 = vmatmul.mubr.f32.gmra.mxu0 %v5171
        %v5298 = vpop.f32.mrf.mxu0
        %v5299 = vadd.f32 %v5106, %v5298
        %v5300 = vpop.f32.mrf.mxu0
        %5301 = vmatprep.mubr.f32.mxu0 0.0
        %5302 = vmatmul.mubr.f32.gmra.mxu0 %v5174
        %v5303 = vpop.f32.mrf.mxu0
        %v5304 = vadd.f32 %v5111, %v5303
        %v5305 = vpop.f32.mrf.mxu0
        %5306 = vmatprep.mubr.f32.mxu0 0.0
        %5307 = vmatmul.mubr.f32.gmra.mxu0 %v5177
        %v5308 = vpop.f32.mrf.mxu0
        %v5309 = vadd.f32 %v5116, %v5308
        %v5310 = vpop.f32.mrf.mxu0
        %5311 = vmatprep.mubr.f32.mxu0 0.0
        %5312 = vmatmul.mubr.f32.gmra.mxu0 %v5180
        %v5313 = vpop.f32.mrf.mxu0
        %v5314 = vadd.f32 %v5121, %v5313
        %v5315 = vpop.f32.mrf.mxu0
        %5316 = vmatprep.mubr.f32.mxu0 0.0
        %5317 = vmatmul.mubr.f32.gmra.mxu0 %v5183
        %v5318 = vpop.f32.mrf.mxu0
        %v5319 = vadd.f32 %v5126, %v5318
        %v5320 = vpop.f32.mrf.mxu0
        %5321 = vmatprep.mubr.f32.mxu0 0.0
        %5322 = vmatmul.mubr.f32.gmra.mxu0 %v5186
        %v5323 = vpop.f32.mrf.mxu0
        %v5324 = vadd.f32 %v5131, %v5323
        %v5325 = vpop.f32.mrf.mxu0
        %5326 = vmatprep.mubr.f32.mxu0 0.0
        %5327 = vmatmul.mubr.f32.gmra.mxu0 %v5189
        %v5328 = vpop.f32.mrf.mxu0
        %v5329 = vadd.f32 %v5136, %v5328
        %v5330 = vpop.f32.mrf.mxu0
        %5331 = vmatprep.mubr.f32.mxu0 0.0
        %5332 = vmatmul.mubr.f32.gmra.mxu0 %v5192
        %v5333 = vpop.f32.mrf.mxu0
        %v5334 = vadd.f32 %v5141, %v5333
        %v5335 = vpop.f32.mrf.mxu0
        %5336 = vmatprep.mubr.f32.mxu0 0.0
        %5337 = vmatmul.mubr.f32.gmra.mxu0 %v5195
        %v5338 = vpop.f32.mrf.mxu0
        %v5339 = vadd.f32 %v5146, %v5338
        %v5340 = vpop.f32.mrf.mxu0
        %5341 = vdwg.mxu0
        %v5342 = vld [vmem:[#allocation2 + $0x2] sm:$0xff]
        %v5343 = vld [vmem:[#allocation2 + $0x12] sm:$0xff]
        %v5344 = vld [vmem:[#allocation2 + $0x22] sm:$0xff]
        %v5345 = vld [vmem:[#allocation2 + $0x32] sm:$0xff]
        %v5346 = vld [vmem:[#allocation2 + $0x42] sm:$0xff]
        %v5347 = vld [vmem:[#allocation2 + $0x52] sm:$0xff]
        %v5348 = vld [vmem:[#allocation2 + $0x62] sm:$0xff]
        %v5349 = vld [vmem:[#allocation2 + $0x72] sm:$0xff]
        %v5350 = vld [vmem:[#allocation2 + $0xa2] sm:$0xff]
        %v5351 = vld [vmem:[#allocation2 + $0xb2] sm:$0xff]
        %v5352 = vld [vmem:[#allocation2 + $0xc2] sm:$0xff]
        %v5353 = vld [vmem:[#allocation2 + $0xd2] sm:$0xff]
        %v5354 = vld [vmem:[#allocation2 + $0xe2] sm:$0xff]
        %v5355 = vld [vmem:[#allocation2 + $0xf2] sm:$0xff]
        %v5356 = vld [vmem:[#allocation2 + $0x102] sm:$0xff]
        %v5357 = vld [vmem:[#allocation2 + $0x112] sm:$0xff]
        %s5358 = scalar_lea.vmem %s7, 16
        %v5359 = vld [vmem:[%s5358] sm:$0xff]
        %v5361 = vsel %vm439, %v5342, 0
        %v5364 = vsel %vm439, %v5343, 0
        %v5367 = vsel %vm439, %v5344, 0
        %v5370 = vsel %vm439, %v5345, 0
        %v5373 = vsel %vm439, %v5346, 0
        %v5376 = vsel %vm439, %v5347, 0
        %v5379 = vsel %vm439, %v5348, 0
        %v5382 = vsel %vm439, %v5349, 0
        %v5385 = vsel %vm439, %v5350, 0
        %v5388 = vsel %vm439, %v5351, 0
        %v5391 = vsel %vm439, %v5352, 0
        %v5394 = vsel %vm439, %v5353, 0
        %v5397 = vsel %vm439, %v5354, 0
        %v5400 = vsel %vm439, %v5355, 0
        %v5403 = vsel %vm439, %v5356, 0
        %v5406 = vsel %vm439, %v5357, 0
        %5408 = vmatprep.subr.mxu0 0.0
        %5409 = vmatpush1.msra.mxu0 0.0
        %5410 = vmatprep.subr.mxu0 0.0
        %5411 = vmatpush1.msra.mxu0 0.0
        %5412 = vmatprep.subr.mxu0 0.0
        %5413 = vmatpush1.msra.mxu0 0.0
        %5414 = vmatprep.subr.mxu0 0.0
        %5415 = vmatpush1.msra.mxu0 0.0
        %5416 = vmatprep.subr.mxu0 0.0
        %5417 = vmatpush1.msra.mxu0 0.0
        %5418 = vmatprep.subr.mxu0 0.0
        %5419 = vmatpush1.msra.mxu0 0.0
        %5420 = vmatprep.subr.mxu0 0.0
        %5421 = vmatpush1.msra.mxu0 0.0
        %5422 = vmatprep.subr.mxu0 0.0
        %5423 = vmatpush1.msra.mxu0 0.0
        %5424 = vmatprep.subr.mxu0 0.0
        %5425 = vmatpush1.msra.mxu0 0.0
        %5426 = vmatprep.subr.mxu0 0.0
        %5427 = vmatpush1.msra.mxu0 0.0
        %5428 = vmatprep.subr.mxu0 0.0
        %5429 = vmatpush1.msra.mxu0 0.0
        %5430 = vmatprep.subr.mxu0 0.0
        %5431 = vmatpush1.msra.mxu0 0.0
        %5432 = vmatprep.subr.mxu0 0.0
        %5433 = vmatpush1.msra.mxu0 0.0
        %5434 = vmatprep.subr.mxu0 0.0
        %5435 = vmatpush1.msra.mxu0 0.0
        %5436 = vmatprep.subr.mxu0 0.0
        %5437 = vmatpush1.msra.mxu0 0.0
        %5438 = vmatprep.subr.mxu0 0.0
        %5439 = vmatpush1.msra.mxu0 %v5359
        %5440 = vmatprep.subr.mxu0 0.0
        %5441 = vmatpush2.msra.mxu0 0.0
        %5442 = vmatprep.subr.mxu0 0.0
        %5443 = vmatpush2.msra.mxu0 0.0
        %5444 = vmatprep.subr.mxu0 0.0
        %5445 = vmatpush2.msra.mxu0 0.0
        %5446 = vmatprep.subr.mxu0 0.0
        %5447 = vmatpush2.msra.mxu0 0.0
        %5448 = vmatprep.subr.mxu0 0.0
        %5449 = vmatpush2.msra.mxu0 0.0
        %5450 = vmatprep.subr.mxu0 0.0
        %5451 = vmatpush2.msra.mxu0 0.0
        %5452 = vmatprep.subr.mxu0 0.0
        %5453 = vmatpush2.msra.mxu0 0.0
        %5454 = vmatprep.subr.mxu0 0.0
        %5455 = vmatpush2.msra.mxu0 0.0
        %5456 = vmatprep.subr.mxu0 0.0
        %5457 = vmatpush2.msra.mxu0 0.0
        %5458 = vmatprep.subr.mxu0 0.0
        %5459 = vmatpush2.msra.mxu0 0.0
        %5460 = vmatprep.subr.mxu0 0.0
        %5461 = vmatpush2.msra.mxu0 0.0
        %5462 = vmatprep.subr.mxu0 0.0
        %5463 = vmatpush2.msra.mxu0 0.0
        %5464 = vmatprep.subr.mxu0 0.0
        %5465 = vmatpush2.msra.mxu0 0.0
        %5466 = vmatprep.subr.mxu0 0.0
        %5467 = vmatpush2.msra.mxu0 0.0
        %5468 = vmatprep.subr.mxu0 0.0
        %5469 = vmatpush2.msra.mxu0 0.0
        %5470 = vmatprep.subr.mxu0 0.0
        %5471 = vmatpush2.msra.mxu0 0.0
        %5472 = vmatprep.mubr.f32.mxu0 0.0
        %5473 = vmatmul.mubr.f32.gmra.mxu0 %v5361
        %v5474 = vpop.f32.mrf.mxu0
        %v5475 = vadd.f32 0.0, %v5474
        %v5476 = vpop.f32.mrf.mxu0
        %5477 = vmatprep.mubr.f32.mxu0 0.0
        %5478 = vmatmul.mubr.f32.gmra.mxu0 %v5364
        %v5479 = vpop.f32.mrf.mxu0
        %v5480 = vadd.f32 0.0, %v5479
        %v5481 = vpop.f32.mrf.mxu0
        %5482 = vmatprep.mubr.f32.mxu0 0.0
        %5483 = vmatmul.mubr.f32.gmra.mxu0 %v5367
        %v5484 = vpop.f32.mrf.mxu0
        %v5485 = vadd.f32 0.0, %v5484
        %v5486 = vpop.f32.mrf.mxu0
        %5487 = vmatprep.mubr.f32.mxu0 0.0
        %5488 = vmatmul.mubr.f32.gmra.mxu0 %v5370
        %v5489 = vpop.f32.mrf.mxu0
        %v5490 = vadd.f32 0.0, %v5489
        %v5491 = vpop.f32.mrf.mxu0
        %5492 = vmatprep.mubr.f32.mxu0 0.0
        %5493 = vmatmul.mubr.f32.gmra.mxu0 %v5373
        %v5494 = vpop.f32.mrf.mxu0
        %v5495 = vadd.f32 0.0, %v5494
        %v5496 = vpop.f32.mrf.mxu0
        %5497 = vmatprep.mubr.f32.mxu0 0.0
        %5498 = vmatmul.mubr.f32.gmra.mxu0 %v5376
        %v5499 = vpop.f32.mrf.mxu0
        %v5500 = vadd.f32 0.0, %v5499
        %v5501 = vpop.f32.mrf.mxu0
        %5502 = vmatprep.mubr.f32.mxu0 0.0
        %5503 = vmatmul.mubr.f32.gmra.mxu0 %v5379
        %v5504 = vpop.f32.mrf.mxu0
        %v5505 = vadd.f32 0.0, %v5504
        %v5506 = vpop.f32.mrf.mxu0
        %5507 = vmatprep.mubr.f32.mxu0 0.0
        %5508 = vmatmul.mubr.f32.gmra.mxu0 %v5382
        %v5509 = vpop.f32.mrf.mxu0
        %v5510 = vadd.f32 0.0, %v5509
        %v5511 = vpop.f32.mrf.mxu0
        %5512 = vmatprep.mubr.f32.mxu0 0.0
        %5513 = vmatmul.mubr.f32.gmra.mxu0 %v5385
        %v5514 = vpop.f32.mrf.mxu0
        %v5515 = vadd.f32 0.0, %v5514
        %v5516 = vpop.f32.mrf.mxu0
        %5517 = vmatprep.mubr.f32.mxu0 0.0
        %5518 = vmatmul.mubr.f32.gmra.mxu0 %v5388
        %v5519 = vpop.f32.mrf.mxu0
        %v5520 = vadd.f32 0.0, %v5519
        %v5521 = vpop.f32.mrf.mxu0
        %5522 = vmatprep.mubr.f32.mxu0 0.0
        %5523 = vmatmul.mubr.f32.gmra.mxu0 %v5391
        %v5524 = vpop.f32.mrf.mxu0
        %v5525 = vadd.f32 0.0, %v5524
        %v5526 = vpop.f32.mrf.mxu0
        %5527 = vmatprep.mubr.f32.mxu0 0.0
        %5528 = vmatmul.mubr.f32.gmra.mxu0 %v5394
        %v5529 = vpop.f32.mrf.mxu0
        %v5530 = vadd.f32 0.0, %v5529
        %v5531 = vpop.f32.mrf.mxu0
        %5532 = vmatprep.mubr.f32.mxu0 0.0
        %5533 = vmatmul.mubr.f32.gmra.mxu0 %v5397
        %v5534 = vpop.f32.mrf.mxu0
        %v5535 = vadd.f32 0.0, %v5534
        %v5536 = vpop.f32.mrf.mxu0
        %5537 = vmatprep.mubr.f32.mxu0 0.0
        %5538 = vmatmul.mubr.f32.gmra.mxu0 %v5400
        %v5539 = vpop.f32.mrf.mxu0
        %v5540 = vadd.f32 0.0, %v5539
        %v5541 = vpop.f32.mrf.mxu0
        %5542 = vmatprep.mubr.f32.mxu0 0.0
        %5543 = vmatmul.mubr.f32.gmra.mxu0 %v5403
        %v5544 = vpop.f32.mrf.mxu0
        %v5545 = vadd.f32 0.0, %v5544
        %v5546 = vpop.f32.mrf.mxu0
        %5547 = vmatprep.mubr.f32.mxu0 0.0
        %5548 = vmatmul.mubr.f32.gmra.mxu0 %v5406
        %v5549 = vpop.f32.mrf.mxu0
        %v5550 = vadd.f32 0.0, %v5549
        %v5551 = vpop.f32.mrf.mxu0
        %5552 = vdwg.mxu0
        %v5553 = vadd.f32 %v5264, %v5475
        %v5554 = vadd.f32 %v5269, %v5480
        %v5555 = vadd.f32 %v5274, %v5485
        %v5556 = vadd.f32 %v5279, %v5490
        %v5557 = vadd.f32 %v5284, %v5495
        %v5558 = vadd.f32 %v5289, %v5500
        %v5559 = vadd.f32 %v5294, %v5505
        %v5560 = vadd.f32 %v5299, %v5510
        %v5561 = vadd.f32 %v5304, %v5515
        %v5562 = vadd.f32 %v5309, %v5520
        %v5563 = vadd.f32 %v5314, %v5525
        %v5564 = vadd.f32 %v5319, %v5530
        %v5565 = vadd.f32 %v5324, %v5535
        %v5566 = vadd.f32 %v5329, %v5540
        %v5567 = vadd.f32 %v5334, %v5545
        %v5568 = vadd.f32 %v5339, %v5550
        %v5569 = vld [vmem:[%s2590] sm:$0xff]
        %v5570 = vld [vmem:[%s2590 + $0x10] sm:$0xff]
        %v5571 = vld [vmem:[%s2590 + $0x20] sm:$0xff]
        %v5572 = vld [vmem:[%s2590 + $0x30] sm:$0xff]
        %v5573 = vld [vmem:[%s2590 + $0x40] sm:$0xff]
        %v5574 = vld [vmem:[%s2590 + $0x50] sm:$0xff]
        %v5575 = vld [vmem:[%s2590 + $0x60] sm:$0xff]
        %v5576 = vld [vmem:[%s2590 + $0x70] sm:$0xff]
        %v5577 = vld [vmem:[%s2590 + $0xa0] sm:$0xff]
        %v5578 = vld [vmem:[%s2590 + $0xb0] sm:$0xff]
        %v5579 = vld [vmem:[%s2590 + $0xc0] sm:$0xff]
        %v5580 = vld [vmem:[%s2590 + $0xd0] sm:$0xff]
        %v5581 = vld [vmem:[%s2590 + $0xe0] sm:$0xff]
        %v5582 = vld [vmem:[%s2590 + $0xf0] sm:$0xff]
        %v5583 = vld [vmem:[%s2590 + $0x100] sm:$0xff]
        %v5584 = vld [vmem:[%s2590 + $0x110] sm:$0xff]
        %s5585 = scalar_lea.vmem %s7, 24
        %v5586 = vld [vmem:[%s5585] sm:$0xff]
        %v5588 = vsel %vm439, %v5569, 0
        %v5591 = vsel %vm439, %v5570, 0
        %v5594 = vsel %vm439, %v5571, 0
        %v5597 = vsel %vm439, %v5572, 0
        %v5600 = vsel %vm439, %v5573, 0
        %v5603 = vsel %vm439, %v5574, 0
        %v5606 = vsel %vm439, %v5575, 0
        %v5609 = vsel %vm439, %v5576, 0
        %v5612 = vsel %vm439, %v5577, 0
        %v5615 = vsel %vm439, %v5578, 0
        %v5618 = vsel %vm439, %v5579, 0
        %v5621 = vsel %vm439, %v5580, 0
        %v5624 = vsel %vm439, %v5581, 0
        %v5627 = vsel %vm439, %v5582, 0
        %v5630 = vsel %vm439, %v5583, 0
        %v5633 = vsel %vm439, %v5584, 0
        %5635 = vmatprep.subr.mxu0 0.0
        %5636 = vmatpush1.msra.mxu0 0.0
        %5637 = vmatprep.subr.mxu0 0.0
        %5638 = vmatpush1.msra.mxu0 0.0
        %5639 = vmatprep.subr.mxu0 0.0
        %5640 = vmatpush1.msra.mxu0 0.0
        %5641 = vmatprep.subr.mxu0 0.0
        %5642 = vmatpush1.msra.mxu0 0.0
        %5643 = vmatprep.subr.mxu0 0.0
        %5644 = vmatpush1.msra.mxu0 0.0
        %5645 = vmatprep.subr.mxu0 0.0
        %5646 = vmatpush1.msra.mxu0 0.0
        %5647 = vmatprep.subr.mxu0 0.0
        %5648 = vmatpush1.msra.mxu0 0.0
        %5649 = vmatprep.subr.mxu0 0.0
        %5650 = vmatpush1.msra.mxu0 0.0
        %5651 = vmatprep.subr.mxu0 0.0
        %5652 = vmatpush1.msra.mxu0 0.0
        %5653 = vmatprep.subr.mxu0 0.0
        %5654 = vmatpush1.msra.mxu0 0.0
        %5655 = vmatprep.subr.mxu0 0.0
        %5656 = vmatpush1.msra.mxu0 0.0
        %5657 = vmatprep.subr.mxu0 0.0
        %5658 = vmatpush1.msra.mxu0 0.0
        %5659 = vmatprep.subr.mxu0 0.0
        %5660 = vmatpush1.msra.mxu0 0.0
        %5661 = vmatprep.subr.mxu0 0.0
        %5662 = vmatpush1.msra.mxu0 0.0
        %5663 = vmatprep.subr.mxu0 0.0
        %5664 = vmatpush1.msra.mxu0 0.0
        %5665 = vmatprep.subr.mxu0 0.0
        %5666 = vmatpush1.msra.mxu0 %v5586
        %5667 = vmatprep.subr.mxu0 0.0
        %5668 = vmatpush2.msra.mxu0 0.0
        %5669 = vmatprep.subr.mxu0 0.0
        %5670 = vmatpush2.msra.mxu0 0.0
        %5671 = vmatprep.subr.mxu0 0.0
        %5672 = vmatpush2.msra.mxu0 0.0
        %5673 = vmatprep.subr.mxu0 0.0
        %5674 = vmatpush2.msra.mxu0 0.0
        %5675 = vmatprep.subr.mxu0 0.0
        %5676 = vmatpush2.msra.mxu0 0.0
        %5677 = vmatprep.subr.mxu0 0.0
        %5678 = vmatpush2.msra.mxu0 0.0
        %5679 = vmatprep.subr.mxu0 0.0
        %5680 = vmatpush2.msra.mxu0 0.0
        %5681 = vmatprep.subr.mxu0 0.0
        %5682 = vmatpush2.msra.mxu0 0.0
        %5683 = vmatprep.subr.mxu0 0.0
        %5684 = vmatpush2.msra.mxu0 0.0
        %5685 = vmatprep.subr.mxu0 0.0
        %5686 = vmatpush2.msra.mxu0 0.0
        %5687 = vmatprep.subr.mxu0 0.0
        %5688 = vmatpush2.msra.mxu0 0.0
        %5689 = vmatprep.subr.mxu0 0.0
        %5690 = vmatpush2.msra.mxu0 0.0
        %5691 = vmatprep.subr.mxu0 0.0
        %5692 = vmatpush2.msra.mxu0 0.0
        %5693 = vmatprep.subr.mxu0 0.0
        %5694 = vmatpush2.msra.mxu0 0.0
        %5695 = vmatprep.subr.mxu0 0.0
        %5696 = vmatpush2.msra.mxu0 0.0
        %5697 = vmatprep.subr.mxu0 0.0
        %5698 = vmatpush2.msra.mxu0 0.0
        %5699 = vmatprep.mubr.f32.mxu0 0.0
        %5700 = vmatmul.mubr.f32.gmra.mxu0 %v5588
        %v5701 = vpop.f32.mrf.mxu0
        %v5702 = vadd.f32 0.0, %v5701
        %v5703 = vpop.f32.mrf.mxu0
        %5704 = vmatprep.mubr.f32.mxu0 0.0
        %5705 = vmatmul.mubr.f32.gmra.mxu0 %v5591
        %v5706 = vpop.f32.mrf.mxu0
        %v5707 = vadd.f32 0.0, %v5706
        %v5708 = vpop.f32.mrf.mxu0
        %5709 = vmatprep.mubr.f32.mxu0 0.0
        %5710 = vmatmul.mubr.f32.gmra.mxu0 %v5594
        %v5711 = vpop.f32.mrf.mxu0
        %v5712 = vadd.f32 0.0, %v5711
        %v5713 = vpop.f32.mrf.mxu0
        %5714 = vmatprep.mubr.f32.mxu0 0.0
        %5715 = vmatmul.mubr.f32.gmra.mxu0 %v5597
        %v5716 = vpop.f32.mrf.mxu0
        %v5717 = vadd.f32 0.0, %v5716
        %v5718 = vpop.f32.mrf.mxu0
        %5719 = vmatprep.mubr.f32.mxu0 0.0
        %5720 = vmatmul.mubr.f32.gmra.mxu0 %v5600
        %v5721 = vpop.f32.mrf.mxu0
        %v5722 = vadd.f32 0.0, %v5721
        %v5723 = vpop.f32.mrf.mxu0
        %5724 = vmatprep.mubr.f32.mxu0 0.0
        %5725 = vmatmul.mubr.f32.gmra.mxu0 %v5603
        %v5726 = vpop.f32.mrf.mxu0
        %v5727 = vadd.f32 0.0, %v5726
        %v5728 = vpop.f32.mrf.mxu0
        %5729 = vmatprep.mubr.f32.mxu0 0.0
        %5730 = vmatmul.mubr.f32.gmra.mxu0 %v5606
        %v5731 = vpop.f32.mrf.mxu0
        %v5732 = vadd.f32 0.0, %v5731
        %v5733 = vpop.f32.mrf.mxu0
        %5734 = vmatprep.mubr.f32.mxu0 0.0
        %5735 = vmatmul.mubr.f32.gmra.mxu0 %v5609
        %v5736 = vpop.f32.mrf.mxu0
        %v5737 = vadd.f32 0.0, %v5736
        %v5738 = vpop.f32.mrf.mxu0
        %5739 = vmatprep.mubr.f32.mxu0 0.0
        %5740 = vmatmul.mubr.f32.gmra.mxu0 %v5612
        %v5741 = vpop.f32.mrf.mxu0
        %v5742 = vadd.f32 0.0, %v5741
        %v5743 = vpop.f32.mrf.mxu0
        %5744 = vmatprep.mubr.f32.mxu0 0.0
        %5745 = vmatmul.mubr.f32.gmra.mxu0 %v5615
        %v5746 = vpop.f32.mrf.mxu0
        %v5747 = vadd.f32 0.0, %v5746
        %v5748 = vpop.f32.mrf.mxu0
        %5749 = vmatprep.mubr.f32.mxu0 0.0
        %5750 = vmatmul.mubr.f32.gmra.mxu0 %v5618
        %v5751 = vpop.f32.mrf.mxu0
        %v5752 = vadd.f32 0.0, %v5751
        %v5753 = vpop.f32.mrf.mxu0
        %5754 = vmatprep.mubr.f32.mxu0 0.0
        %5755 = vmatmul.mubr.f32.gmra.mxu0 %v5621
        %v5756 = vpop.f32.mrf.mxu0
        %v5757 = vadd.f32 0.0, %v5756
        %v5758 = vpop.f32.mrf.mxu0
        %5759 = vmatprep.mubr.f32.mxu0 0.0
        %5760 = vmatmul.mubr.f32.gmra.mxu0 %v5624
        %v5761 = vpop.f32.mrf.mxu0
        %v5762 = vadd.f32 0.0, %v5761
        %v5763 = vpop.f32.mrf.mxu0
        %5764 = vmatprep.mubr.f32.mxu0 0.0
        %5765 = vmatmul.mubr.f32.gmra.mxu0 %v5627
        %v5766 = vpop.f32.mrf.mxu0
        %v5767 = vadd.f32 0.0, %v5766
        %v5768 = vpop.f32.mrf.mxu0
        %5769 = vmatprep.mubr.f32.mxu0 0.0
        %5770 = vmatmul.mubr.f32.gmra.mxu0 %v5630
        %v5771 = vpop.f32.mrf.mxu0
        %v5772 = vadd.f32 0.0, %v5771
        %v5773 = vpop.f32.mrf.mxu0
        %5774 = vmatprep.mubr.f32.mxu0 0.0
        %5775 = vmatmul.mubr.f32.gmra.mxu0 %v5633
        %v5776 = vpop.f32.mrf.mxu0
        %v5777 = vadd.f32 0.0, %v5776
        %v5778 = vpop.f32.mrf.mxu0
        %5779 = vdwg.mxu0
        %v5780 = vadd.f32 %v5553, %v5702
        %v5781 = vadd.f32 %v5554, %v5707
        %v5782 = vadd.f32 %v5555, %v5712
        %v5783 = vadd.f32 %v5556, %v5717
        %v5784 = vadd.f32 %v5557, %v5722
        %v5785 = vadd.f32 %v5558, %v5727
        %v5786 = vadd.f32 %v5559, %v5732
        %v5787 = vadd.f32 %v5560, %v5737
        %v5788 = vadd.f32 %v5561, %v5742
        %v5789 = vadd.f32 %v5562, %v5747
        %v5790 = vadd.f32 %v5563, %v5752
        %v5791 = vadd.f32 %v5564, %v5757
        %v5792 = vadd.f32 %v5565, %v5762
        %v5793 = vadd.f32 %v5566, %v5767
        %v5794 = vadd.f32 %v5567, %v5772
        %v5795 = vadd.f32 %v5568, %v5777
        %v5796 = vld [vmem:[%s2590 + $0x1] sm:$0xff]
        %v5797 = vld [vmem:[%s2590 + $0x11] sm:$0xff]
        %v5798 = vld [vmem:[%s2590 + $0x21] sm:$0xff]
        %v5799 = vld [vmem:[%s2590 + $0x31] sm:$0xff]
        %v5800 = vld [vmem:[%s2590 + $0x41] sm:$0xff]
        %v5801 = vld [vmem:[%s2590 + $0x51] sm:$0xff]
        %v5802 = vld [vmem:[%s2590 + $0x61] sm:$0xff]
        %v5803 = vld [vmem:[%s2590 + $0x71] sm:$0xff]
        %v5804 = vld [vmem:[%s2590 + $0xa1] sm:$0xff]
        %v5805 = vld [vmem:[%s2590 + $0xb1] sm:$0xff]
        %v5806 = vld [vmem:[%s2590 + $0xc1] sm:$0xff]
        %v5807 = vld [vmem:[%s2590 + $0xd1] sm:$0xff]
        %v5808 = vld [vmem:[%s2590 + $0xe1] sm:$0xff]
        %v5809 = vld [vmem:[%s2590 + $0xf1] sm:$0xff]
        %v5810 = vld [vmem:[%s2590 + $0x101] sm:$0xff]
        %v5811 = vld [vmem:[%s2590 + $0x111] sm:$0xff]
        %s5812 = scalar_lea.vmem %s7, 32
        %v5813 = vld [vmem:[%s5812] sm:$0xff]
        %v5815 = vsel %vm439, %v5796, 0
        %v5818 = vsel %vm439, %v5797, 0
        %v5821 = vsel %vm439, %v5798, 0
        %v5824 = vsel %vm439, %v5799, 0
        %v5827 = vsel %vm439, %v5800, 0
        %v5830 = vsel %vm439, %v5801, 0
        %v5833 = vsel %vm439, %v5802, 0
        %v5836 = vsel %vm439, %v5803, 0
        %v5839 = vsel %vm439, %v5804, 0
        %v5842 = vsel %vm439, %v5805, 0
        %v5845 = vsel %vm439, %v5806, 0
        %v5848 = vsel %vm439, %v5807, 0
        %v5851 = vsel %vm439, %v5808, 0
        %v5854 = vsel %vm439, %v5809, 0
        %v5857 = vsel %vm439, %v5810, 0
        %v5860 = vsel %vm439, %v5811, 0
        %5862 = vmatprep.subr.mxu0 0.0
        %5863 = vmatpush1.msra.mxu0 0.0
        %5864 = vmatprep.subr.mxu0 0.0
        %5865 = vmatpush1.msra.mxu0 0.0
        %5866 = vmatprep.subr.mxu0 0.0
        %5867 = vmatpush1.msra.mxu0 0.0
        %5868 = vmatprep.subr.mxu0 0.0
        %5869 = vmatpush1.msra.mxu0 0.0
        %5870 = vmatprep.subr.mxu0 0.0
        %5871 = vmatpush1.msra.mxu0 0.0
        %5872 = vmatprep.subr.mxu0 0.0
        %5873 = vmatpush1.msra.mxu0 0.0
        %5874 = vmatprep.subr.mxu0 0.0
        %5875 = vmatpush1.msra.mxu0 0.0
        %5876 = vmatprep.subr.mxu0 0.0
        %5877 = vmatpush1.msra.mxu0 0.0
        %5878 = vmatprep.subr.mxu0 0.0
        %5879 = vmatpush1.msra.mxu0 0.0
        %5880 = vmatprep.subr.mxu0 0.0
        %5881 = vmatpush1.msra.mxu0 0.0
        %5882 = vmatprep.subr.mxu0 0.0
        %5883 = vmatpush1.msra.mxu0 0.0
        %5884 = vmatprep.subr.mxu0 0.0
        %5885 = vmatpush1.msra.mxu0 0.0
        %5886 = vmatprep.subr.mxu0 0.0
        %5887 = vmatpush1.msra.mxu0 0.0
        %5888 = vmatprep.subr.mxu0 0.0
        %5889 = vmatpush1.msra.mxu0 0.0
        %5890 = vmatprep.subr.mxu0 0.0
        %5891 = vmatpush1.msra.mxu0 0.0
        %5892 = vmatprep.subr.mxu0 0.0
        %5893 = vmatpush1.msra.mxu0 %v5813
        %5894 = vmatprep.subr.mxu0 0.0
        %5895 = vmatpush2.msra.mxu0 0.0
        %5896 = vmatprep.subr.mxu0 0.0
        %5897 = vmatpush2.msra.mxu0 0.0
        %5898 = vmatprep.subr.mxu0 0.0
        %5899 = vmatpush2.msra.mxu0 0.0
        %5900 = vmatprep.subr.mxu0 0.0
        %5901 = vmatpush2.msra.mxu0 0.0
        %5902 = vmatprep.subr.mxu0 0.0
        %5903 = vmatpush2.msra.mxu0 0.0
        %5904 = vmatprep.subr.mxu0 0.0
        %5905 = vmatpush2.msra.mxu0 0.0
        %5906 = vmatprep.subr.mxu0 0.0
        %5907 = vmatpush2.msra.mxu0 0.0
        %5908 = vmatprep.subr.mxu0 0.0
        %5909 = vmatpush2.msra.mxu0 0.0
        %5910 = vmatprep.subr.mxu0 0.0
        %5911 = vmatpush2.msra.mxu0 0.0
        %5912 = vmatprep.subr.mxu0 0.0
        %5913 = vmatpush2.msra.mxu0 0.0
        %5914 = vmatprep.subr.mxu0 0.0
        %5915 = vmatpush2.msra.mxu0 0.0
        %5916 = vmatprep.subr.mxu0 0.0
        %5917 = vmatpush2.msra.mxu0 0.0
        %5918 = vmatprep.subr.mxu0 0.0
        %5919 = vmatpush2.msra.mxu0 0.0
        %5920 = vmatprep.subr.mxu0 0.0
        %5921 = vmatpush2.msra.mxu0 0.0
        %5922 = vmatprep.subr.mxu0 0.0
        %5923 = vmatpush2.msra.mxu0 0.0
        %5924 = vmatprep.subr.mxu0 0.0
        %5925 = vmatpush2.msra.mxu0 0.0
        %5926 = vmatprep.mubr.f32.mxu0 0.0
        %5927 = vmatmul.mubr.f32.gmra.mxu0 %v5815
        %v5928 = vpop.f32.mrf.mxu0
        %v5929 = vadd.f32 0.0, %v5928
        %v5930 = vpop.f32.mrf.mxu0
        %5931 = vmatprep.mubr.f32.mxu0 0.0
        %5932 = vmatmul.mubr.f32.gmra.mxu0 %v5818
        %v5933 = vpop.f32.mrf.mxu0
        %v5934 = vadd.f32 0.0, %v5933
        %v5935 = vpop.f32.mrf.mxu0
        %5936 = vmatprep.mubr.f32.mxu0 0.0
        %5937 = vmatmul.mubr.f32.gmra.mxu0 %v5821
        %v5938 = vpop.f32.mrf.mxu0
        %v5939 = vadd.f32 0.0, %v5938
        %v5940 = vpop.f32.mrf.mxu0
        %5941 = vmatprep.mubr.f32.mxu0 0.0
        %5942 = vmatmul.mubr.f32.gmra.mxu0 %v5824
        %v5943 = vpop.f32.mrf.mxu0
        %v5944 = vadd.f32 0.0, %v5943
        %v5945 = vpop.f32.mrf.mxu0
        %5946 = vmatprep.mubr.f32.mxu0 0.0
        %5947 = vmatmul.mubr.f32.gmra.mxu0 %v5827
        %v5948 = vpop.f32.mrf.mxu0
        %v5949 = vadd.f32 0.0, %v5948
        %v5950 = vpop.f32.mrf.mxu0
        %5951 = vmatprep.mubr.f32.mxu0 0.0
        %5952 = vmatmul.mubr.f32.gmra.mxu0 %v5830
        %v5953 = vpop.f32.mrf.mxu0
        %v5954 = vadd.f32 0.0, %v5953
        %v5955 = vpop.f32.mrf.mxu0
        %5956 = vmatprep.mubr.f32.mxu0 0.0
        %5957 = vmatmul.mubr.f32.gmra.mxu0 %v5833
        %v5958 = vpop.f32.mrf.mxu0
        %v5959 = vadd.f32 0.0, %v5958
        %v5960 = vpop.f32.mrf.mxu0
        %5961 = vmatprep.mubr.f32.mxu0 0.0
        %5962 = vmatmul.mubr.f32.gmra.mxu0 %v5836
        %v5963 = vpop.f32.mrf.mxu0
        %v5964 = vadd.f32 0.0, %v5963
        %v5965 = vpop.f32.mrf.mxu0
        %5966 = vmatprep.mubr.f32.mxu0 0.0
        %5967 = vmatmul.mubr.f32.gmra.mxu0 %v5839
        %v5968 = vpop.f32.mrf.mxu0
        %v5969 = vadd.f32 0.0, %v5968
        %v5970 = vpop.f32.mrf.mxu0
        %5971 = vmatprep.mubr.f32.mxu0 0.0
        %5972 = vmatmul.mubr.f32.gmra.mxu0 %v5842
        %v5973 = vpop.f32.mrf.mxu0
        %v5974 = vadd.f32 0.0, %v5973
        %v5975 = vpop.f32.mrf.mxu0
        %5976 = vmatprep.mubr.f32.mxu0 0.0
        %5977 = vmatmul.mubr.f32.gmra.mxu0 %v5845
        %v5978 = vpop.f32.mrf.mxu0
        %v5979 = vadd.f32 0.0, %v5978
        %v5980 = vpop.f32.mrf.mxu0
        %5981 = vmatprep.mubr.f32.mxu0 0.0
        %5982 = vmatmul.mubr.f32.gmra.mxu0 %v5848
        %v5983 = vpop.f32.mrf.mxu0
        %v5984 = vadd.f32 0.0, %v5983
        %v5985 = vpop.f32.mrf.mxu0
        %5986 = vmatprep.mubr.f32.mxu0 0.0
        %5987 = vmatmul.mubr.f32.gmra.mxu0 %v5851
        %v5988 = vpop.f32.mrf.mxu0
        %v5989 = vadd.f32 0.0, %v5988
        %v5990 = vpop.f32.mrf.mxu0
        %5991 = vmatprep.mubr.f32.mxu0 0.0
        %5992 = vmatmul.mubr.f32.gmra.mxu0 %v5854
        %v5993 = vpop.f32.mrf.mxu0
        %v5994 = vadd.f32 0.0, %v5993
        %v5995 = vpop.f32.mrf.mxu0
        %5996 = vmatprep.mubr.f32.mxu0 0.0
        %5997 = vmatmul.mubr.f32.gmra.mxu0 %v5857
        %v5998 = vpop.f32.mrf.mxu0
        %v5999 = vadd.f32 0.0, %v5998
        %v6000 = vpop.f32.mrf.mxu0
        %6001 = vmatprep.mubr.f32.mxu0 0.0
        %6002 = vmatmul.mubr.f32.gmra.mxu0 %v5860
        %v6003 = vpop.f32.mrf.mxu0
        %v6004 = vadd.f32 0.0, %v6003
        %v6005 = vpop.f32.mrf.mxu0
        %6006 = vdwg.mxu0
        %v6007 = vadd.f32 %v5780, %v5929
        %v6008 = vadd.f32 %v5781, %v5934
        %v6009 = vadd.f32 %v5782, %v5939
        %v6010 = vadd.f32 %v5783, %v5944
        %v6011 = vadd.f32 %v5784, %v5949
        %v6012 = vadd.f32 %v5785, %v5954
        %v6013 = vadd.f32 %v5786, %v5959
        %v6014 = vadd.f32 %v5787, %v5964
        %v6015 = vadd.f32 %v5788, %v5969
        %v6016 = vadd.f32 %v5789, %v5974
        %v6017 = vadd.f32 %v5790, %v5979
        %v6018 = vadd.f32 %v5791, %v5984
        %v6019 = vadd.f32 %v5792, %v5989
        %v6020 = vadd.f32 %v5793, %v5994
        %v6021 = vadd.f32 %v5794, %v5999
        %v6022 = vadd.f32 %v5795, %v6004
        %v6023 = vld [vmem:[%s2590 + $0x2] sm:$0xff]
        %v6024 = vld [vmem:[%s2590 + $0x12] sm:$0xff]
        %v6025 = vld [vmem:[%s2590 + $0x22] sm:$0xff]
        %v6026 = vld [vmem:[%s2590 + $0x32] sm:$0xff]
        %v6027 = vld [vmem:[%s2590 + $0x42] sm:$0xff]
        %v6028 = vld [vmem:[%s2590 + $0x52] sm:$0xff]
        %v6029 = vld [vmem:[%s2590 + $0x62] sm:$0xff]
        %v6030 = vld [vmem:[%s2590 + $0x72] sm:$0xff]
        %v6031 = vld [vmem:[%s2590 + $0xa2] sm:$0xff]
        %v6032 = vld [vmem:[%s2590 + $0xb2] sm:$0xff]
        %v6033 = vld [vmem:[%s2590 + $0xc2] sm:$0xff]
        %v6034 = vld [vmem:[%s2590 + $0xd2] sm:$0xff]
        %v6035 = vld [vmem:[%s2590 + $0xe2] sm:$0xff]
        %v6036 = vld [vmem:[%s2590 + $0xf2] sm:$0xff]
        %v6037 = vld [vmem:[%s2590 + $0x102] sm:$0xff]
        %v6038 = vld [vmem:[%s2590 + $0x112] sm:$0xff]
        %s6039 = scalar_lea.vmem %s7, 40
        %v6040 = vld [vmem:[%s6039] sm:$0xff]
        %v6042 = vsel %vm439, %v6023, 0
        %v6045 = vsel %vm439, %v6024, 0
        %v6048 = vsel %vm439, %v6025, 0
        %v6051 = vsel %vm439, %v6026, 0
        %v6054 = vsel %vm439, %v6027, 0
        %v6057 = vsel %vm439, %v6028, 0
        %v6060 = vsel %vm439, %v6029, 0
        %v6063 = vsel %vm439, %v6030, 0
        %v6066 = vsel %vm439, %v6031, 0
        %v6069 = vsel %vm439, %v6032, 0
        %v6072 = vsel %vm439, %v6033, 0
        %v6075 = vsel %vm439, %v6034, 0
        %v6078 = vsel %vm439, %v6035, 0
        %v6081 = vsel %vm439, %v6036, 0
        %v6084 = vsel %vm439, %v6037, 0
        %v6087 = vsel %vm439, %v6038, 0
        %6089 = vmatprep.subr.mxu0 0.0
        %6090 = vmatpush1.msra.mxu0 0.0
        %6091 = vmatprep.subr.mxu0 0.0
        %6092 = vmatpush1.msra.mxu0 0.0
        %6093 = vmatprep.subr.mxu0 0.0
        %6094 = vmatpush1.msra.mxu0 0.0
        %6095 = vmatprep.subr.mxu0 0.0
        %6096 = vmatpush1.msra.mxu0 0.0
        %6097 = vmatprep.subr.mxu0 0.0
        %6098 = vmatpush1.msra.mxu0 0.0
        %6099 = vmatprep.subr.mxu0 0.0
        %6100 = vmatpush1.msra.mxu0 0.0
        %6101 = vmatprep.subr.mxu0 0.0
        %6102 = vmatpush1.msra.mxu0 0.0
        %6103 = vmatprep.subr.mxu0 0.0
        %6104 = vmatpush1.msra.mxu0 0.0
        %6105 = vmatprep.subr.mxu0 0.0
        %6106 = vmatpush1.msra.mxu0 0.0
        %6107 = vmatprep.subr.mxu0 0.0
        %6108 = vmatpush1.msra.mxu0 0.0
        %6109 = vmatprep.subr.mxu0 0.0
        %6110 = vmatpush1.msra.mxu0 0.0
        %6111 = vmatprep.subr.mxu0 0.0
        %6112 = vmatpush1.msra.mxu0 0.0
        %6113 = vmatprep.subr.mxu0 0.0
        %6114 = vmatpush1.msra.mxu0 0.0
        %6115 = vmatprep.subr.mxu0 0.0
        %6116 = vmatpush1.msra.mxu0 0.0
        %6117 = vmatprep.subr.mxu0 0.0
        %6118 = vmatpush1.msra.mxu0 0.0
        %6119 = vmatprep.subr.mxu0 0.0
        %6120 = vmatpush1.msra.mxu0 %v6040
        %6121 = vmatprep.subr.mxu0 0.0
        %6122 = vmatpush2.msra.mxu0 0.0
        %6123 = vmatprep.subr.mxu0 0.0
        %6124 = vmatpush2.msra.mxu0 0.0
        %6125 = vmatprep.subr.mxu0 0.0
        %6126 = vmatpush2.msra.mxu0 0.0
        %6127 = vmatprep.subr.mxu0 0.0
        %6128 = vmatpush2.msra.mxu0 0.0
        %6129 = vmatprep.subr.mxu0 0.0
        %6130 = vmatpush2.msra.mxu0 0.0
        %6131 = vmatprep.subr.mxu0 0.0
        %6132 = vmatpush2.msra.mxu0 0.0
        %6133 = vmatprep.subr.mxu0 0.0
        %6134 = vmatpush2.msra.mxu0 0.0
        %6135 = vmatprep.subr.mxu0 0.0
        %6136 = vmatpush2.msra.mxu0 0.0
        %6137 = vmatprep.subr.mxu0 0.0
        %6138 = vmatpush2.msra.mxu0 0.0
        %6139 = vmatprep.subr.mxu0 0.0
        %6140 = vmatpush2.msra.mxu0 0.0
        %6141 = vmatprep.subr.mxu0 0.0
        %6142 = vmatpush2.msra.mxu0 0.0
        %6143 = vmatprep.subr.mxu0 0.0
        %6144 = vmatpush2.msra.mxu0 0.0
        %6145 = vmatprep.subr.mxu0 0.0
        %6146 = vmatpush2.msra.mxu0 0.0
        %6147 = vmatprep.subr.mxu0 0.0
        %6148 = vmatpush2.msra.mxu0 0.0
        %6149 = vmatprep.subr.mxu0 0.0
        %6150 = vmatpush2.msra.mxu0 0.0
        %6151 = vmatprep.subr.mxu0 0.0
        %6152 = vmatpush2.msra.mxu0 0.0
        %6153 = vmatprep.mubr.f32.mxu0 0.0
        %6154 = vmatmul.mubr.f32.gmra.mxu0 %v6042
        %v6155 = vpop.f32.mrf.mxu0
        %v6156 = vadd.f32 0.0, %v6155
        %v6157 = vpop.f32.mrf.mxu0
        %6158 = vmatprep.mubr.f32.mxu0 0.0
        %6159 = vmatmul.mubr.f32.gmra.mxu0 %v6045
        %v6160 = vpop.f32.mrf.mxu0
        %v6161 = vadd.f32 0.0, %v6160
        %v6162 = vpop.f32.mrf.mxu0
        %6163 = vmatprep.mubr.f32.mxu0 0.0
        %6164 = vmatmul.mubr.f32.gmra.mxu0 %v6048
        %v6165 = vpop.f32.mrf.mxu0
        %v6166 = vadd.f32 0.0, %v6165
        %v6167 = vpop.f32.mrf.mxu0
        %6168 = vmatprep.mubr.f32.mxu0 0.0
        %6169 = vmatmul.mubr.f32.gmra.mxu0 %v6051
        %v6170 = vpop.f32.mrf.mxu0
        %v6171 = vadd.f32 0.0, %v6170
        %v6172 = vpop.f32.mrf.mxu0
        %6173 = vmatprep.mubr.f32.mxu0 0.0
        %6174 = vmatmul.mubr.f32.gmra.mxu0 %v6054
        %v6175 = vpop.f32.mrf.mxu0
        %v6176 = vadd.f32 0.0, %v6175
        %v6177 = vpop.f32.mrf.mxu0
        %6178 = vmatprep.mubr.f32.mxu0 0.0
        %6179 = vmatmul.mubr.f32.gmra.mxu0 %v6057
        %v6180 = vpop.f32.mrf.mxu0
        %v6181 = vadd.f32 0.0, %v6180
        %v6182 = vpop.f32.mrf.mxu0
        %6183 = vmatprep.mubr.f32.mxu0 0.0
        %6184 = vmatmul.mubr.f32.gmra.mxu0 %v6060
        %v6185 = vpop.f32.mrf.mxu0
        %v6186 = vadd.f32 0.0, %v6185
        %v6187 = vpop.f32.mrf.mxu0
        %6188 = vmatprep.mubr.f32.mxu0 0.0
        %6189 = vmatmul.mubr.f32.gmra.mxu0 %v6063
        %v6190 = vpop.f32.mrf.mxu0
        %v6191 = vadd.f32 0.0, %v6190
        %v6192 = vpop.f32.mrf.mxu0
        %6193 = vmatprep.mubr.f32.mxu0 0.0
        %6194 = vmatmul.mubr.f32.gmra.mxu0 %v6066
        %v6195 = vpop.f32.mrf.mxu0
        %v6196 = vadd.f32 0.0, %v6195
        %v6197 = vpop.f32.mrf.mxu0
        %6198 = vmatprep.mubr.f32.mxu0 0.0
        %6199 = vmatmul.mubr.f32.gmra.mxu0 %v6069
        %v6200 = vpop.f32.mrf.mxu0
        %v6201 = vadd.f32 0.0, %v6200
        %v6202 = vpop.f32.mrf.mxu0
        %6203 = vmatprep.mubr.f32.mxu0 0.0
        %6204 = vmatmul.mubr.f32.gmra.mxu0 %v6072
        %v6205 = vpop.f32.mrf.mxu0
        %v6206 = vadd.f32 0.0, %v6205
        %v6207 = vpop.f32.mrf.mxu0
        %6208 = vmatprep.mubr.f32.mxu0 0.0
        %6209 = vmatmul.mubr.f32.gmra.mxu0 %v6075
        %v6210 = vpop.f32.mrf.mxu0
        %v6211 = vadd.f32 0.0, %v6210
        %v6212 = vpop.f32.mrf.mxu0
        %6213 = vmatprep.mubr.f32.mxu0 0.0
        %6214 = vmatmul.mubr.f32.gmra.mxu0 %v6078
        %v6215 = vpop.f32.mrf.mxu0
        %v6216 = vadd.f32 0.0, %v6215
        %v6217 = vpop.f32.mrf.mxu0
        %6218 = vmatprep.mubr.f32.mxu0 0.0
        %6219 = vmatmul.mubr.f32.gmra.mxu0 %v6081
        %v6220 = vpop.f32.mrf.mxu0
        %v6221 = vadd.f32 0.0, %v6220
        %v6222 = vpop.f32.mrf.mxu0
        %6223 = vmatprep.mubr.f32.mxu0 0.0
        %6224 = vmatmul.mubr.f32.gmra.mxu0 %v6084
        %v6225 = vpop.f32.mrf.mxu0
        %v6226 = vadd.f32 0.0, %v6225
        %v6227 = vpop.f32.mrf.mxu0
        %6228 = vmatprep.mubr.f32.mxu0 0.0
        %6229 = vmatmul.mubr.f32.gmra.mxu0 %v6087
        %v6230 = vpop.f32.mrf.mxu0
        %v6231 = vadd.f32 0.0, %v6230
        %v6232 = vpop.f32.mrf.mxu0
        %6233 = vdwg.mxu0
        %v6234 = vadd.f32 %v6007, %v6156
        %v6235 = vadd.f32 %v6008, %v6161
        %v6236 = vadd.f32 %v6009, %v6166
        %v6237 = vadd.f32 %v6010, %v6171
        %v6238 = vadd.f32 %v6011, %v6176
        %v6239 = vadd.f32 %v6012, %v6181
        %v6240 = vadd.f32 %v6013, %v6186
        %v6241 = vadd.f32 %v6014, %v6191
        %v6242 = vadd.f32 %v6015, %v6196
        %v6243 = vadd.f32 %v6016, %v6201
        %v6244 = vadd.f32 %v6017, %v6206
        %v6245 = vadd.f32 %v6018, %v6211
        %v6246 = vadd.f32 %v6019, %v6216
        %v6247 = vadd.f32 %v6020, %v6221
        %v6248 = vadd.f32 %v6021, %v6226
        %v6249 = vadd.f32 %v6022, %v6231
        %v6250 = vld [vmem:[%s4149] sm:$0xff]
        %v6251 = vld [vmem:[%s4149 + $0x10] sm:$0xff]
        %v6252 = vld [vmem:[%s4149 + $0x20] sm:$0xff]
        %v6253 = vld [vmem:[%s4149 + $0x30] sm:$0xff]
        %v6254 = vld [vmem:[%s4149 + $0x40] sm:$0xff]
        %v6255 = vld [vmem:[%s4149 + $0x50] sm:$0xff]
        %v6256 = vld [vmem:[%s4149 + $0x60] sm:$0xff]
        %v6257 = vld [vmem:[%s4149 + $0x70] sm:$0xff]
        %v6258 = vld [vmem:[%s4149 + $0xa0] sm:$0xff]
        %v6259 = vld [vmem:[%s4149 + $0xb0] sm:$0xff]
        %v6260 = vld [vmem:[%s4149 + $0xc0] sm:$0xff]
        %v6261 = vld [vmem:[%s4149 + $0xd0] sm:$0xff]
        %v6262 = vld [vmem:[%s4149 + $0xe0] sm:$0xff]
        %v6263 = vld [vmem:[%s4149 + $0xf0] sm:$0xff]
        %v6264 = vld [vmem:[%s4149 + $0x100] sm:$0xff]
        %v6265 = vld [vmem:[%s4149 + $0x110] sm:$0xff]
        %s6266 = scalar_lea.vmem %s7, 48
        %v6267 = vld [vmem:[%s6266] sm:$0xff]
        %v6269 = vsel %vm439, %v6250, 0
        %v6272 = vsel %vm439, %v6251, 0
        %v6275 = vsel %vm439, %v6252, 0
        %v6278 = vsel %vm439, %v6253, 0
        %v6281 = vsel %vm439, %v6254, 0
        %v6284 = vsel %vm439, %v6255, 0
        %v6287 = vsel %vm439, %v6256, 0
        %v6290 = vsel %vm439, %v6257, 0
        %v6293 = vsel %vm439, %v6258, 0
        %v6296 = vsel %vm439, %v6259, 0
        %v6299 = vsel %vm439, %v6260, 0
        %v6302 = vsel %vm439, %v6261, 0
        %v6305 = vsel %vm439, %v6262, 0
        %v6308 = vsel %vm439, %v6263, 0
        %v6311 = vsel %vm439, %v6264, 0
        %v6314 = vsel %vm439, %v6265, 0
        %6316 = vmatprep.subr.mxu0 0.0
        %6317 = vmatpush1.msra.mxu0 0.0
        %6318 = vmatprep.subr.mxu0 0.0
        %6319 = vmatpush1.msra.mxu0 0.0
        %6320 = vmatprep.subr.mxu0 0.0
        %6321 = vmatpush1.msra.mxu0 0.0
        %6322 = vmatprep.subr.mxu0 0.0
        %6323 = vmatpush1.msra.mxu0 0.0
        %6324 = vmatprep.subr.mxu0 0.0
        %6325 = vmatpush1.msra.mxu0 0.0
        %6326 = vmatprep.subr.mxu0 0.0
        %6327 = vmatpush1.msra.mxu0 0.0
        %6328 = vmatprep.subr.mxu0 0.0
        %6329 = vmatpush1.msra.mxu0 0.0
        %6330 = vmatprep.subr.mxu0 0.0
        %6331 = vmatpush1.msra.mxu0 0.0
        %6332 = vmatprep.subr.mxu0 0.0
        %6333 = vmatpush1.msra.mxu0 0.0
        %6334 = vmatprep.subr.mxu0 0.0
        %6335 = vmatpush1.msra.mxu0 0.0
        %6336 = vmatprep.subr.mxu0 0.0
        %6337 = vmatpush1.msra.mxu0 0.0
        %6338 = vmatprep.subr.mxu0 0.0
        %6339 = vmatpush1.msra.mxu0 0.0
        %6340 = vmatprep.subr.mxu0 0.0
        %6341 = vmatpush1.msra.mxu0 0.0
        %6342 = vmatprep.subr.mxu0 0.0
        %6343 = vmatpush1.msra.mxu0 0.0
        %6344 = vmatprep.subr.mxu0 0.0
        %6345 = vmatpush1.msra.mxu0 0.0
        %6346 = vmatprep.subr.mxu0 0.0
        %6347 = vmatpush1.msra.mxu0 %v6267
        %6348 = vmatprep.subr.mxu0 0.0
        %6349 = vmatpush2.msra.mxu0 0.0
        %6350 = vmatprep.subr.mxu0 0.0
        %6351 = vmatpush2.msra.mxu0 0.0
        %6352 = vmatprep.subr.mxu0 0.0
        %6353 = vmatpush2.msra.mxu0 0.0
        %6354 = vmatprep.subr.mxu0 0.0
        %6355 = vmatpush2.msra.mxu0 0.0
        %6356 = vmatprep.subr.mxu0 0.0
        %6357 = vmatpush2.msra.mxu0 0.0
        %6358 = vmatprep.subr.mxu0 0.0
        %6359 = vmatpush2.msra.mxu0 0.0
        %6360 = vmatprep.subr.mxu0 0.0
        %6361 = vmatpush2.msra.mxu0 0.0
        %6362 = vmatprep.subr.mxu0 0.0
        %6363 = vmatpush2.msra.mxu0 0.0
        %6364 = vmatprep.subr.mxu0 0.0
        %6365 = vmatpush2.msra.mxu0 0.0
        %6366 = vmatprep.subr.mxu0 0.0
        %6367 = vmatpush2.msra.mxu0 0.0
        %6368 = vmatprep.subr.mxu0 0.0
        %6369 = vmatpush2.msra.mxu0 0.0
        %6370 = vmatprep.subr.mxu0 0.0
        %6371 = vmatpush2.msra.mxu0 0.0
        %6372 = vmatprep.subr.mxu0 0.0
        %6373 = vmatpush2.msra.mxu0 0.0
        %6374 = vmatprep.subr.mxu0 0.0
        %6375 = vmatpush2.msra.mxu0 0.0
        %6376 = vmatprep.subr.mxu0 0.0
        %6377 = vmatpush2.msra.mxu0 0.0
        %6378 = vmatprep.subr.mxu0 0.0
        %6379 = vmatpush2.msra.mxu0 0.0
        %6380 = vmatprep.mubr.f32.mxu0 0.0
        %6381 = vmatmul.mubr.f32.gmra.mxu0 %v6269
        %v6382 = vpop.f32.mrf.mxu0
        %v6383 = vadd.f32 0.0, %v6382
        %v6384 = vpop.f32.mrf.mxu0
        %6385 = vmatprep.mubr.f32.mxu0 0.0
        %6386 = vmatmul.mubr.f32.gmra.mxu0 %v6272
        %v6387 = vpop.f32.mrf.mxu0
        %v6388 = vadd.f32 0.0, %v6387
        %v6389 = vpop.f32.mrf.mxu0
        %6390 = vmatprep.mubr.f32.mxu0 0.0
        %6391 = vmatmul.mubr.f32.gmra.mxu0 %v6275
        %v6392 = vpop.f32.mrf.mxu0
        %v6393 = vadd.f32 0.0, %v6392
        %v6394 = vpop.f32.mrf.mxu0
        %6395 = vmatprep.mubr.f32.mxu0 0.0
        %6396 = vmatmul.mubr.f32.gmra.mxu0 %v6278
        %v6397 = vpop.f32.mrf.mxu0
        %v6398 = vadd.f32 0.0, %v6397
        %v6399 = vpop.f32.mrf.mxu0
        %6400 = vmatprep.mubr.f32.mxu0 0.0
        %6401 = vmatmul.mubr.f32.gmra.mxu0 %v6281
        %v6402 = vpop.f32.mrf.mxu0
        %v6403 = vadd.f32 0.0, %v6402
        %v6404 = vpop.f32.mrf.mxu0
        %6405 = vmatprep.mubr.f32.mxu0 0.0
        %6406 = vmatmul.mubr.f32.gmra.mxu0 %v6284
        %v6407 = vpop.f32.mrf.mxu0
        %v6408 = vadd.f32 0.0, %v6407
        %v6409 = vpop.f32.mrf.mxu0
        %6410 = vmatprep.mubr.f32.mxu0 0.0
        %6411 = vmatmul.mubr.f32.gmra.mxu0 %v6287
        %v6412 = vpop.f32.mrf.mxu0
        %v6413 = vadd.f32 0.0, %v6412
        %v6414 = vpop.f32.mrf.mxu0
        %6415 = vmatprep.mubr.f32.mxu0 0.0
        %6416 = vmatmul.mubr.f32.gmra.mxu0 %v6290
        %v6417 = vpop.f32.mrf.mxu0
        %v6418 = vadd.f32 0.0, %v6417
        %v6419 = vpop.f32.mrf.mxu0
        %6420 = vmatprep.mubr.f32.mxu0 0.0
        %6421 = vmatmul.mubr.f32.gmra.mxu0 %v6293
        %v6422 = vpop.f32.mrf.mxu0
        %v6423 = vadd.f32 0.0, %v6422
        %v6424 = vpop.f32.mrf.mxu0
        %6425 = vmatprep.mubr.f32.mxu0 0.0
        %6426 = vmatmul.mubr.f32.gmra.mxu0 %v6296
        %v6427 = vpop.f32.mrf.mxu0
        %v6428 = vadd.f32 0.0, %v6427
        %v6429 = vpop.f32.mrf.mxu0
        %6430 = vmatprep.mubr.f32.mxu0 0.0
        %6431 = vmatmul.mubr.f32.gmra.mxu0 %v6299
        %v6432 = vpop.f32.mrf.mxu0
        %v6433 = vadd.f32 0.0, %v6432
        %v6434 = vpop.f32.mrf.mxu0
        %6435 = vmatprep.mubr.f32.mxu0 0.0
        %6436 = vmatmul.mubr.f32.gmra.mxu0 %v6302
        %v6437 = vpop.f32.mrf.mxu0
        %v6438 = vadd.f32 0.0, %v6437
        %v6439 = vpop.f32.mrf.mxu0
        %6440 = vmatprep.mubr.f32.mxu0 0.0
        %6441 = vmatmul.mubr.f32.gmra.mxu0 %v6305
        %v6442 = vpop.f32.mrf.mxu0
        %v6443 = vadd.f32 0.0, %v6442
        %v6444 = vpop.f32.mrf.mxu0
        %6445 = vmatprep.mubr.f32.mxu0 0.0
        %6446 = vmatmul.mubr.f32.gmra.mxu0 %v6308
        %v6447 = vpop.f32.mrf.mxu0
        %v6448 = vadd.f32 0.0, %v6447
        %v6449 = vpop.f32.mrf.mxu0
        %6450 = vmatprep.mubr.f32.mxu0 0.0
        %6451 = vmatmul.mubr.f32.gmra.mxu0 %v6311
        %v6452 = vpop.f32.mrf.mxu0
        %v6453 = vadd.f32 0.0, %v6452
        %v6454 = vpop.f32.mrf.mxu0
        %6455 = vmatprep.mubr.f32.mxu0 0.0
        %6456 = vmatmul.mubr.f32.gmra.mxu0 %v6314
        %v6457 = vpop.f32.mrf.mxu0
        %v6458 = vadd.f32 0.0, %v6457
        %v6459 = vpop.f32.mrf.mxu0
        %6460 = vdwg.mxu0
        %v6461 = vadd.f32 %v6234, %v6383
        %v6462 = vadd.f32 %v6235, %v6388
        %v6463 = vadd.f32 %v6236, %v6393
        %v6464 = vadd.f32 %v6237, %v6398
        %v6465 = vadd.f32 %v6238, %v6403
        %v6466 = vadd.f32 %v6239, %v6408
        %v6467 = vadd.f32 %v6240, %v6413
        %v6468 = vadd.f32 %v6241, %v6418
        %v6469 = vadd.f32 %v6242, %v6423
        %v6470 = vadd.f32 %v6243, %v6428
        %v6471 = vadd.f32 %v6244, %v6433
        %v6472 = vadd.f32 %v6245, %v6438
        %v6473 = vadd.f32 %v6246, %v6443
        %v6474 = vadd.f32 %v6247, %v6448
        %v6475 = vadd.f32 %v6248, %v6453
        %v6476 = vadd.f32 %v6249, %v6458
        %v6477 = vld [vmem:[%s4149 + $0x1] sm:$0xff]
        %v6478 = vld [vmem:[%s4149 + $0x11] sm:$0xff]
        %v6479 = vld [vmem:[%s4149 + $0x21] sm:$0xff]
        %v6480 = vld [vmem:[%s4149 + $0x31] sm:$0xff]
        %v6481 = vld [vmem:[%s4149 + $0x41] sm:$0xff]
        %v6482 = vld [vmem:[%s4149 + $0x51] sm:$0xff]
        %v6483 = vld [vmem:[%s4149 + $0x61] sm:$0xff]
        %v6484 = vld [vmem:[%s4149 + $0x71] sm:$0xff]
        %v6485 = vld [vmem:[%s4149 + $0xa1] sm:$0xff]
        %v6486 = vld [vmem:[%s4149 + $0xb1] sm:$0xff]
        %v6487 = vld [vmem:[%s4149 + $0xc1] sm:$0xff]
        %v6488 = vld [vmem:[%s4149 + $0xd1] sm:$0xff]
        %v6489 = vld [vmem:[%s4149 + $0xe1] sm:$0xff]
        %v6490 = vld [vmem:[%s4149 + $0xf1] sm:$0xff]
        %v6491 = vld [vmem:[%s4149 + $0x101] sm:$0xff]
        %v6492 = vld [vmem:[%s4149 + $0x111] sm:$0xff]
        %s6493 = scalar_lea.vmem %s7, 56
        %v6494 = vld [vmem:[%s6493] sm:$0xff]
        %v6496 = vsel %vm439, %v6477, 0
        %v6499 = vsel %vm439, %v6478, 0
        %v6502 = vsel %vm439, %v6479, 0
        %v6505 = vsel %vm439, %v6480, 0
        %v6508 = vsel %vm439, %v6481, 0
        %v6511 = vsel %vm439, %v6482, 0
        %v6514 = vsel %vm439, %v6483, 0
        %v6517 = vsel %vm439, %v6484, 0
        %v6520 = vsel %vm439, %v6485, 0
        %v6523 = vsel %vm439, %v6486, 0
        %v6526 = vsel %vm439, %v6487, 0
        %v6529 = vsel %vm439, %v6488, 0
        %v6532 = vsel %vm439, %v6489, 0
        %v6535 = vsel %vm439, %v6490, 0
        %v6538 = vsel %vm439, %v6491, 0
        %v6541 = vsel %vm439, %v6492, 0
        %6543 = vmatprep.subr.mxu0 0.0
        %6544 = vmatpush1.msra.mxu0 0.0
        %6545 = vmatprep.subr.mxu0 0.0
        %6546 = vmatpush1.msra.mxu0 0.0
        %6547 = vmatprep.subr.mxu0 0.0
        %6548 = vmatpush1.msra.mxu0 0.0
        %6549 = vmatprep.subr.mxu0 0.0
        %6550 = vmatpush1.msra.mxu0 0.0
        %6551 = vmatprep.subr.mxu0 0.0
        %6552 = vmatpush1.msra.mxu0 0.0
        %6553 = vmatprep.subr.mxu0 0.0
        %6554 = vmatpush1.msra.mxu0 0.0
        %6555 = vmatprep.subr.mxu0 0.0
        %6556 = vmatpush1.msra.mxu0 0.0
        %6557 = vmatprep.subr.mxu0 0.0
        %6558 = vmatpush1.msra.mxu0 0.0
        %6559 = vmatprep.subr.mxu0 0.0
        %6560 = vmatpush1.msra.mxu0 0.0
        %6561 = vmatprep.subr.mxu0 0.0
        %6562 = vmatpush1.msra.mxu0 0.0
        %6563 = vmatprep.subr.mxu0 0.0
        %6564 = vmatpush1.msra.mxu0 0.0
        %6565 = vmatprep.subr.mxu0 0.0
        %6566 = vmatpush1.msra.mxu0 0.0
        %6567 = vmatprep.subr.mxu0 0.0
        %6568 = vmatpush1.msra.mxu0 0.0
        %6569 = vmatprep.subr.mxu0 0.0
        %6570 = vmatpush1.msra.mxu0 0.0
        %6571 = vmatprep.subr.mxu0 0.0
        %6572 = vmatpush1.msra.mxu0 0.0
        %6573 = vmatprep.subr.mxu0 0.0
        %6574 = vmatpush1.msra.mxu0 %v6494
        %6575 = vmatprep.subr.mxu0 0.0
        %6576 = vmatpush2.msra.mxu0 0.0
        %6577 = vmatprep.subr.mxu0 0.0
        %6578 = vmatpush2.msra.mxu0 0.0
        %6579 = vmatprep.subr.mxu0 0.0
        %6580 = vmatpush2.msra.mxu0 0.0
        %6581 = vmatprep.subr.mxu0 0.0
        %6582 = vmatpush2.msra.mxu0 0.0
        %6583 = vmatprep.subr.mxu0 0.0
        %6584 = vmatpush2.msra.mxu0 0.0
        %6585 = vmatprep.subr.mxu0 0.0
        %6586 = vmatpush2.msra.mxu0 0.0
        %6587 = vmatprep.subr.mxu0 0.0
        %6588 = vmatpush2.msra.mxu0 0.0
        %6589 = vmatprep.subr.mxu0 0.0
        %6590 = vmatpush2.msra.mxu0 0.0
        %6591 = vmatprep.subr.mxu0 0.0
        %6592 = vmatpush2.msra.mxu0 0.0
        %6593 = vmatprep.subr.mxu0 0.0
        %6594 = vmatpush2.msra.mxu0 0.0
        %6595 = vmatprep.subr.mxu0 0.0
        %6596 = vmatpush2.msra.mxu0 0.0
        %6597 = vmatprep.subr.mxu0 0.0
        %6598 = vmatpush2.msra.mxu0 0.0
        %6599 = vmatprep.subr.mxu0 0.0
        %6600 = vmatpush2.msra.mxu0 0.0
        %6601 = vmatprep.subr.mxu0 0.0
        %6602 = vmatpush2.msra.mxu0 0.0
        %6603 = vmatprep.subr.mxu0 0.0
        %6604 = vmatpush2.msra.mxu0 0.0
        %6605 = vmatprep.subr.mxu0 0.0
        %6606 = vmatpush2.msra.mxu0 0.0
        %6607 = vmatprep.mubr.f32.mxu0 0.0
        %6608 = vmatmul.mubr.f32.gmra.mxu0 %v6496
        %v6609 = vpop.f32.mrf.mxu0
        %v6610 = vadd.f32 0.0, %v6609
        %v6611 = vpop.f32.mrf.mxu0
        %6612 = vmatprep.mubr.f32.mxu0 0.0
        %6613 = vmatmul.mubr.f32.gmra.mxu0 %v6499
        %v6614 = vpop.f32.mrf.mxu0
        %v6615 = vadd.f32 0.0, %v6614
        %v6616 = vpop.f32.mrf.mxu0
        %6617 = vmatprep.mubr.f32.mxu0 0.0
        %6618 = vmatmul.mubr.f32.gmra.mxu0 %v6502
        %v6619 = vpop.f32.mrf.mxu0
        %v6620 = vadd.f32 0.0, %v6619
        %v6621 = vpop.f32.mrf.mxu0
        %6622 = vmatprep.mubr.f32.mxu0 0.0
        %6623 = vmatmul.mubr.f32.gmra.mxu0 %v6505
        %v6624 = vpop.f32.mrf.mxu0
        %v6625 = vadd.f32 0.0, %v6624
        %v6626 = vpop.f32.mrf.mxu0
        %6627 = vmatprep.mubr.f32.mxu0 0.0
        %6628 = vmatmul.mubr.f32.gmra.mxu0 %v6508
        %v6629 = vpop.f32.mrf.mxu0
        %v6630 = vadd.f32 0.0, %v6629
        %v6631 = vpop.f32.mrf.mxu0
        %6632 = vmatprep.mubr.f32.mxu0 0.0
        %6633 = vmatmul.mubr.f32.gmra.mxu0 %v6511
        %v6634 = vpop.f32.mrf.mxu0
        %v6635 = vadd.f32 0.0, %v6634
        %v6636 = vpop.f32.mrf.mxu0
        %6637 = vmatprep.mubr.f32.mxu0 0.0
        %6638 = vmatmul.mubr.f32.gmra.mxu0 %v6514
        %v6639 = vpop.f32.mrf.mxu0
        %v6640 = vadd.f32 0.0, %v6639
        %v6641 = vpop.f32.mrf.mxu0
        %6642 = vmatprep.mubr.f32.mxu0 0.0
        %6643 = vmatmul.mubr.f32.gmra.mxu0 %v6517
        %v6644 = vpop.f32.mrf.mxu0
        %v6645 = vadd.f32 0.0, %v6644
        %v6646 = vpop.f32.mrf.mxu0
        %6647 = vmatprep.mubr.f32.mxu0 0.0
        %6648 = vmatmul.mubr.f32.gmra.mxu0 %v6520
        %v6649 = vpop.f32.mrf.mxu0
        %v6650 = vadd.f32 0.0, %v6649
        %v6651 = vpop.f32.mrf.mxu0
        %6652 = vmatprep.mubr.f32.mxu0 0.0
        %6653 = vmatmul.mubr.f32.gmra.mxu0 %v6523
        %v6654 = vpop.f32.mrf.mxu0
        %v6655 = vadd.f32 0.0, %v6654
        %v6656 = vpop.f32.mrf.mxu0
        %6657 = vmatprep.mubr.f32.mxu0 0.0
        %6658 = vmatmul.mubr.f32.gmra.mxu0 %v6526
        %v6659 = vpop.f32.mrf.mxu0
        %v6660 = vadd.f32 0.0, %v6659
        %v6661 = vpop.f32.mrf.mxu0
        %6662 = vmatprep.mubr.f32.mxu0 0.0
        %6663 = vmatmul.mubr.f32.gmra.mxu0 %v6529
        %v6664 = vpop.f32.mrf.mxu0
        %v6665 = vadd.f32 0.0, %v6664
        %v6666 = vpop.f32.mrf.mxu0
        %6667 = vmatprep.mubr.f32.mxu0 0.0
        %6668 = vmatmul.mubr.f32.gmra.mxu0 %v6532
        %v6669 = vpop.f32.mrf.mxu0
        %v6670 = vadd.f32 0.0, %v6669
        %v6671 = vpop.f32.mrf.mxu0
        %6672 = vmatprep.mubr.f32.mxu0 0.0
        %6673 = vmatmul.mubr.f32.gmra.mxu0 %v6535
        %v6674 = vpop.f32.mrf.mxu0
        %v6675 = vadd.f32 0.0, %v6674
        %v6676 = vpop.f32.mrf.mxu0
        %6677 = vmatprep.mubr.f32.mxu0 0.0
        %6678 = vmatmul.mubr.f32.gmra.mxu0 %v6538
        %v6679 = vpop.f32.mrf.mxu0
        %v6680 = vadd.f32 0.0, %v6679
        %v6681 = vpop.f32.mrf.mxu0
        %6682 = vmatprep.mubr.f32.mxu0 0.0
        %6683 = vmatmul.mubr.f32.gmra.mxu0 %v6541
        %v6684 = vpop.f32.mrf.mxu0
        %v6685 = vadd.f32 0.0, %v6684
        %v6686 = vpop.f32.mrf.mxu0
        %6687 = vdwg.mxu0
        %v6688 = vadd.f32 %v6461, %v6610
        %v6689 = vadd.f32 %v6462, %v6615
        %v6690 = vadd.f32 %v6463, %v6620
        %v6691 = vadd.f32 %v6464, %v6625
        %v6692 = vadd.f32 %v6465, %v6630
        %v6693 = vadd.f32 %v6466, %v6635
        %v6694 = vadd.f32 %v6467, %v6640
        %v6695 = vadd.f32 %v6468, %v6645
        %v6696 = vadd.f32 %v6469, %v6650
        %v6697 = vadd.f32 %v6470, %v6655
        %v6698 = vadd.f32 %v6471, %v6660
        %v6699 = vadd.f32 %v6472, %v6665
        %v6700 = vadd.f32 %v6473, %v6670
        %v6701 = vadd.f32 %v6474, %v6675
        %v6702 = vadd.f32 %v6475, %v6680
        %v6703 = vadd.f32 %v6476, %v6685
        %v6704 = vld [vmem:[%s4149 + $0x2] sm:$0xff]
        %v6705 = vld [vmem:[%s4149 + $0x12] sm:$0xff]
        %v6706 = vld [vmem:[%s4149 + $0x22] sm:$0xff]
        %v6707 = vld [vmem:[%s4149 + $0x32] sm:$0xff]
        %v6708 = vld [vmem:[%s4149 + $0x42] sm:$0xff]
        %v6709 = vld [vmem:[%s4149 + $0x52] sm:$0xff]
        %v6710 = vld [vmem:[%s4149 + $0x62] sm:$0xff]
        %v6711 = vld [vmem:[%s4149 + $0x72] sm:$0xff]
        %v6712 = vld [vmem:[%s4149 + $0xa2] sm:$0xff]
        %v6713 = vld [vmem:[%s4149 + $0xb2] sm:$0xff]
        %v6714 = vld [vmem:[%s4149 + $0xc2] sm:$0xff]
        %v6715 = vld [vmem:[%s4149 + $0xd2] sm:$0xff]
        %v6716 = vld [vmem:[%s4149 + $0xe2] sm:$0xff]
        %v6717 = vld [vmem:[%s4149 + $0xf2] sm:$0xff]
        %v6718 = vld [vmem:[%s4149 + $0x102] sm:$0xff]
        %v6719 = vld [vmem:[%s4149 + $0x112] sm:$0xff]
        %s6720 = scalar_lea.vmem %s7, 64
        %v6721 = vld [vmem:[%s6720] sm:$0xff]
        %v6723 = vsel %vm439, %v6704, 0
        %v6726 = vsel %vm439, %v6705, 0
        %v6729 = vsel %vm439, %v6706, 0
        %v6732 = vsel %vm439, %v6707, 0
        %v6735 = vsel %vm439, %v6708, 0
        %v6738 = vsel %vm439, %v6709, 0
        %v6741 = vsel %vm439, %v6710, 0
        %v6744 = vsel %vm439, %v6711, 0
        %v6747 = vsel %vm439, %v6712, 0
        %v6750 = vsel %vm439, %v6713, 0
        %v6753 = vsel %vm439, %v6714, 0
        %v6756 = vsel %vm439, %v6715, 0
        %v6759 = vsel %vm439, %v6716, 0
        %v6762 = vsel %vm439, %v6717, 0
        %v6765 = vsel %vm439, %v6718, 0
        %v6768 = vsel %vm439, %v6719, 0
        %6770 = vmatprep.subr.mxu0 0.0
        %6771 = vmatpush1.msra.mxu0 0.0
        %6772 = vmatprep.subr.mxu0 0.0
        %6773 = vmatpush1.msra.mxu0 0.0
        %6774 = vmatprep.subr.mxu0 0.0
        %6775 = vmatpush1.msra.mxu0 0.0
        %6776 = vmatprep.subr.mxu0 0.0
        %6777 = vmatpush1.msra.mxu0 0.0
        %6778 = vmatprep.subr.mxu0 0.0
        %6779 = vmatpush1.msra.mxu0 0.0
        %6780 = vmatprep.subr.mxu0 0.0
        %6781 = vmatpush1.msra.mxu0 0.0
        %6782 = vmatprep.subr.mxu0 0.0
        %6783 = vmatpush1.msra.mxu0 0.0
        %6784 = vmatprep.subr.mxu0 0.0
        %6785 = vmatpush1.msra.mxu0 0.0
        %6786 = vmatprep.subr.mxu0 0.0
        %6787 = vmatpush1.msra.mxu0 0.0
        %6788 = vmatprep.subr.mxu0 0.0
        %6789 = vmatpush1.msra.mxu0 0.0
        %6790 = vmatprep.subr.mxu0 0.0
        %6791 = vmatpush1.msra.mxu0 0.0
        %6792 = vmatprep.subr.mxu0 0.0
        %6793 = vmatpush1.msra.mxu0 0.0
        %6794 = vmatprep.subr.mxu0 0.0
        %6795 = vmatpush1.msra.mxu0 0.0
        %6796 = vmatprep.subr.mxu0 0.0
        %6797 = vmatpush1.msra.mxu0 0.0
        %6798 = vmatprep.subr.mxu0 0.0
        %6799 = vmatpush1.msra.mxu0 0.0
        %6800 = vmatprep.subr.mxu0 0.0
        %6801 = vmatpush1.msra.mxu0 %v6721
        %6802 = vmatprep.subr.mxu0 0.0
        %6803 = vmatpush2.msra.mxu0 0.0
        %6804 = vmatprep.subr.mxu0 0.0
        %6805 = vmatpush2.msra.mxu0 0.0
        %6806 = vmatprep.subr.mxu0 0.0
        %6807 = vmatpush2.msra.mxu0 0.0
        %6808 = vmatprep.subr.mxu0 0.0
        %6809 = vmatpush2.msra.mxu0 0.0
        %6810 = vmatprep.subr.mxu0 0.0
        %6811 = vmatpush2.msra.mxu0 0.0
        %6812 = vmatprep.subr.mxu0 0.0
        %6813 = vmatpush2.msra.mxu0 0.0
        %6814 = vmatprep.subr.mxu0 0.0
        %6815 = vmatpush2.msra.mxu0 0.0
        %6816 = vmatprep.subr.mxu0 0.0
        %6817 = vmatpush2.msra.mxu0 0.0
        %6818 = vmatprep.subr.mxu0 0.0
        %6819 = vmatpush2.msra.mxu0 0.0
        %6820 = vmatprep.subr.mxu0 0.0
        %6821 = vmatpush2.msra.mxu0 0.0
        %6822 = vmatprep.subr.mxu0 0.0
        %6823 = vmatpush2.msra.mxu0 0.0
        %6824 = vmatprep.subr.mxu0 0.0
        %6825 = vmatpush2.msra.mxu0 0.0
        %6826 = vmatprep.subr.mxu0 0.0
        %6827 = vmatpush2.msra.mxu0 0.0
        %6828 = vmatprep.subr.mxu0 0.0
        %6829 = vmatpush2.msra.mxu0 0.0
        %6830 = vmatprep.subr.mxu0 0.0
        %6831 = vmatpush2.msra.mxu0 0.0
        %6832 = vmatprep.subr.mxu0 0.0
        %6833 = vmatpush2.msra.mxu0 0.0
        %6834 = vmatprep.mubr.f32.mxu0 0.0
        %6835 = vmatmul.mubr.f32.gmra.mxu0 %v6723
        %v6836 = vpop.f32.mrf.mxu0
        %v6837 = vadd.f32 0.0, %v6836
        %v6838 = vpop.f32.mrf.mxu0
        %6839 = vmatprep.mubr.f32.mxu0 0.0
        %6840 = vmatmul.mubr.f32.gmra.mxu0 %v6726
        %v6841 = vpop.f32.mrf.mxu0
        %v6842 = vadd.f32 0.0, %v6841
        %v6843 = vpop.f32.mrf.mxu0
        %6844 = vmatprep.mubr.f32.mxu0 0.0
        %6845 = vmatmul.mubr.f32.gmra.mxu0 %v6729
        %v6846 = vpop.f32.mrf.mxu0
        %v6847 = vadd.f32 0.0, %v6846
        %v6848 = vpop.f32.mrf.mxu0
        %6849 = vmatprep.mubr.f32.mxu0 0.0
        %6850 = vmatmul.mubr.f32.gmra.mxu0 %v6732
        %v6851 = vpop.f32.mrf.mxu0
        %v6852 = vadd.f32 0.0, %v6851
        %v6853 = vpop.f32.mrf.mxu0
        %6854 = vmatprep.mubr.f32.mxu0 0.0
        %6855 = vmatmul.mubr.f32.gmra.mxu0 %v6735
        %v6856 = vpop.f32.mrf.mxu0
        %v6857 = vadd.f32 0.0, %v6856
        %v6858 = vpop.f32.mrf.mxu0
        %6859 = vmatprep.mubr.f32.mxu0 0.0
        %6860 = vmatmul.mubr.f32.gmra.mxu0 %v6738
        %v6861 = vpop.f32.mrf.mxu0
        %v6862 = vadd.f32 0.0, %v6861
        %v6863 = vpop.f32.mrf.mxu0
        %6864 = vmatprep.mubr.f32.mxu0 0.0
        %6865 = vmatmul.mubr.f32.gmra.mxu0 %v6741
        %v6866 = vpop.f32.mrf.mxu0
        %v6867 = vadd.f32 0.0, %v6866
        %v6868 = vpop.f32.mrf.mxu0
        %6869 = vmatprep.mubr.f32.mxu0 0.0
        %6870 = vmatmul.mubr.f32.gmra.mxu0 %v6744
        %v6871 = vpop.f32.mrf.mxu0
        %v6872 = vadd.f32 0.0, %v6871
        %v6873 = vpop.f32.mrf.mxu0
        %6874 = vmatprep.mubr.f32.mxu0 0.0
        %6875 = vmatmul.mubr.f32.gmra.mxu0 %v6747
        %v6876 = vpop.f32.mrf.mxu0
        %v6877 = vadd.f32 0.0, %v6876
        %v6878 = vpop.f32.mrf.mxu0
        %6879 = vmatprep.mubr.f32.mxu0 0.0
        %6880 = vmatmul.mubr.f32.gmra.mxu0 %v6750
        %v6881 = vpop.f32.mrf.mxu0
        %v6882 = vadd.f32 0.0, %v6881
        %v6883 = vpop.f32.mrf.mxu0
        %6884 = vmatprep.mubr.f32.mxu0 0.0
        %6885 = vmatmul.mubr.f32.gmra.mxu0 %v6753
        %v6886 = vpop.f32.mrf.mxu0
        %v6887 = vadd.f32 0.0, %v6886
        %v6888 = vpop.f32.mrf.mxu0
        %6889 = vmatprep.mubr.f32.mxu0 0.0
        %6890 = vmatmul.mubr.f32.gmra.mxu0 %v6756
        %v6891 = vpop.f32.mrf.mxu0
        %v6892 = vadd.f32 0.0, %v6891
        %v6893 = vpop.f32.mrf.mxu0
        %6894 = vmatprep.mubr.f32.mxu0 0.0
        %6895 = vmatmul.mubr.f32.gmra.mxu0 %v6759
        %v6896 = vpop.f32.mrf.mxu0
        %v6897 = vadd.f32 0.0, %v6896
        %v6898 = vpop.f32.mrf.mxu0
        %6899 = vmatprep.mubr.f32.mxu0 0.0
        %6900 = vmatmul.mubr.f32.gmra.mxu0 %v6762
        %v6901 = vpop.f32.mrf.mxu0
        %v6902 = vadd.f32 0.0, %v6901
        %v6903 = vpop.f32.mrf.mxu0
        %6904 = vmatprep.mubr.f32.mxu0 0.0
        %6905 = vmatmul.mubr.f32.gmra.mxu0 %v6765
        %v6906 = vpop.f32.mrf.mxu0
        %v6907 = vadd.f32 0.0, %v6906
        %v6908 = vpop.f32.mrf.mxu0
        %6909 = vmatprep.mubr.f32.mxu0 0.0
        %6910 = vmatmul.mubr.f32.gmra.mxu0 %v6768
        %v6911 = vpop.f32.mrf.mxu0
        %v6912 = vadd.f32 0.0, %v6911
        %v6913 = vpop.f32.mrf.mxu0
        %6914 = vdwg.mxu0
        %v6915 = vadd.f32 %v6688, %v6837
        %v6916 = vadd.f32 %v6689, %v6842
        %v6917 = vadd.f32 %v6690, %v6847
        %v6918 = vadd.f32 %v6691, %v6852
        %v6919 = vadd.f32 %v6692, %v6857
        %v6920 = vadd.f32 %v6693, %v6862
        %v6921 = vadd.f32 %v6694, %v6867
        %v6922 = vadd.f32 %v6695, %v6872
        %v6923 = vadd.f32 %v6696, %v6877
        %v6924 = vadd.f32 %v6697, %v6882
        %v6925 = vadd.f32 %v6698, %v6887
        %v6926 = vadd.f32 %v6699, %v6892
        %v6927 = vadd.f32 %v6700, %v6897
        %v6928 = vadd.f32 %v6701, %v6902
        %v6929 = vadd.f32 %v6702, %v6907
        %v6930 = vadd.f32 %v6703, %v6912
        %v6931 = vld [vmem:[%s9 + $0x4] sm:$0x1]
        %v6932 = vld [vmem:[%s9 + $0x5] sm:$0x1]
        %v6933 = vlaneseq
        %v6934 = vshrl.u32 %v6933, 7
        %v6935 = vsub.s32 0, %v6934
        %v6936 = vrot.slane %v6931, %v6935
        %v6937 = vmul.f32 %v6915, %v6936
        %v6938 = vmul.f32 %v6916, %v6936
        %v6939 = vmul.f32 %v6917, %v6936
        %v6940 = vmul.f32 %v6918, %v6936
        %v6941 = vmul.f32 %v6919, %v6936
        %v6942 = vmul.f32 %v6920, %v6936
        %v6943 = vmul.f32 %v6921, %v6936
        %v6944 = vmul.f32 %v6922, %v6936
        %v6945 = vmul.f32 %v6923, %v6936
        %v6946 = vmul.f32 %v6924, %v6936
        %v6947 = vmul.f32 %v6925, %v6936
        %v6948 = vmul.f32 %v6926, %v6936
        %v6949 = vmul.f32 %v6927, %v6936
        %v6950 = vmul.f32 %v6928, %v6936
        %v6951 = vmul.f32 %v6929, %v6936
        %v6952 = vmul.f32 %v6930, %v6936
        %v6953 = vlaneseq
        %v6954 = vshrl.u32 %v6953, 7
        %v6955 = vsub.s32 0, %v6954
        %v6956 = vrot.slane %v6932, %v6955
        %v6957 = vadd.f32 %v6937, %v6956
        %v6958 = vadd.f32 %v6938, %v6956
        %v6959 = vadd.f32 %v6939, %v6956
        %v6960 = vadd.f32 %v6940, %v6956
        %v6961 = vadd.f32 %v6941, %v6956
        %v6962 = vadd.f32 %v6942, %v6956
        %v6963 = vadd.f32 %v6943, %v6956
        %v6964 = vadd.f32 %v6944, %v6956
        %v6965 = vadd.f32 %v6945, %v6956
        %v6966 = vadd.f32 %v6946, %v6956
        %v6967 = vadd.f32 %v6947, %v6956
        %v6968 = vadd.f32 %v6948, %v6956
        %v6969 = vadd.f32 %v6949, %v6956
        %v6970 = vadd.f32 %v6950, %v6956
        %v6971 = vadd.f32 %v6951, %v6956
        %v6972 = vadd.f32 %v6952, %v6956
        %v6973 = vmax.f32 %v6957, 0.0
        %v6974 = vmax.f32 %v6958, 0.0
        %v6975 = vmax.f32 %v6959, 0.0
        %v6976 = vmax.f32 %v6960, 0.0
        %v6977 = vmax.f32 %v6961, 0.0
        %v6978 = vmax.f32 %v6962, 0.0
        %v6979 = vmax.f32 %v6963, 0.0
        %v6980 = vmax.f32 %v6964, 0.0
        %v6981 = vmax.f32 %v6965, 0.0
        %v6982 = vmax.f32 %v6966, 0.0
        %v6983 = vmax.f32 %v6967, 0.0
        %v6984 = vmax.f32 %v6968, 0.0
        %v6985 = vmax.f32 %v6969, 0.0
        %v6986 = vmax.f32 %v6970, 0.0
        %v6987 = vmax.f32 %v6971, 0.0
        %v6988 = vmax.f32 %v6972, 0.0
        %6989 = vst.msk [vmem:[%s2590 + $0x1] sm:$0xff] %vm439, %v6973
        %6990 = vst.msk [vmem:[%s2590 + $0x11] sm:$0xff] %vm439, %v6974
        %6991 = vst.msk [vmem:[%s2590 + $0x21] sm:$0xff] %vm439, %v6975
        %6992 = vst.msk [vmem:[%s2590 + $0x31] sm:$0xff] %vm439, %v6976
        %6993 = vst.msk [vmem:[%s2590 + $0x41] sm:$0xff] %vm439, %v6977
        %6994 = vst.msk [vmem:[%s2590 + $0x51] sm:$0xff] %vm439, %v6978
        %6995 = vst.msk [vmem:[%s2590 + $0x61] sm:$0xff] %vm439, %v6979
        %6996 = vst.msk [vmem:[%s2590 + $0x71] sm:$0xff] %vm439, %v6980
        %6997 = vst.msk [vmem:[%s2590 + $0xa1] sm:$0xff] %vm439, %v6981
        %6998 = vst.msk [vmem:[%s2590 + $0xb1] sm:$0xff] %vm439, %v6982
        %6999 = vst.msk [vmem:[%s2590 + $0xc1] sm:$0xff] %vm439, %v6983
        %7000 = vst.msk [vmem:[%s2590 + $0xd1] sm:$0xff] %vm439, %v6984
        %7001 = vst.msk [vmem:[%s2590 + $0xe1] sm:$0xff] %vm439, %v6985
        %7002 = vst.msk [vmem:[%s2590 + $0xf1] sm:$0xff] %vm439, %v6986
        %7003 = vst.msk [vmem:[%s2590 + $0x101] sm:$0xff] %vm439, %v6987
        %7004 = vst.msk [vmem:[%s2590 + $0x111] sm:$0xff] %vm439, %v6988
        %v7005 = vld [vmem:[#allocation2] sm:$0xff]
        %v7006 = vld [vmem:[#allocation2 + $0x10] sm:$0xff]
        %v7007 = vld [vmem:[#allocation2 + $0x20] sm:$0xff]
        %v7008 = vld [vmem:[#allocation2 + $0x30] sm:$0xff]
        %v7009 = vld [vmem:[#allocation2 + $0x40] sm:$0xff]
        %v7010 = vld [vmem:[#allocation2 + $0x50] sm:$0xff]
        %v7011 = vld [vmem:[#allocation2 + $0x60] sm:$0xff]
        %v7012 = vld [vmem:[#allocation2 + $0x70] sm:$0xff]
        %v7013 = vld [vmem:[#allocation2 + $0xa0] sm:$0xff]
        %v7014 = vld [vmem:[#allocation2 + $0xb0] sm:$0xff]
        %v7015 = vld [vmem:[#allocation2 + $0xc0] sm:$0xff]
        %v7016 = vld [vmem:[#allocation2 + $0xd0] sm:$0xff]
        %v7017 = vld [vmem:[#allocation2 + $0xe0] sm:$0xff]
        %v7018 = vld [vmem:[#allocation2 + $0xf0] sm:$0xff]
        %v7019 = vld [vmem:[#allocation2 + $0x100] sm:$0xff]
        %v7020 = vld [vmem:[#allocation2 + $0x110] sm:$0xff]
        %v7021 = vld [vmem:[%s8] sm:$0xff]
        %v7022 = vld [vmem:[#allocation2 + $0x1] sm:$0xff]
        %v7023 = vld [vmem:[#allocation2 + $0x11] sm:$0xff]
        %v7024 = vld [vmem:[#allocation2 + $0x21] sm:$0xff]
        %v7025 = vld [vmem:[#allocation2 + $0x31] sm:$0xff]
        %v7026 = vld [vmem:[#allocation2 + $0x41] sm:$0xff]
        %v7027 = vld [vmem:[#allocation2 + $0x51] sm:$0xff]
        %v7028 = vld [vmem:[#allocation2 + $0x61] sm:$0xff]
        %v7029 = vld [vmem:[#allocation2 + $0x71] sm:$0xff]
        %v7030 = vld [vmem:[#allocation2 + $0xa1] sm:$0xff]
        %v7031 = vld [vmem:[#allocation2 + $0xb1] sm:$0xff]
        %v7032 = vld [vmem:[#allocation2 + $0xc1] sm:$0xff]
        %v7033 = vld [vmem:[#allocation2 + $0xd1] sm:$0xff]
        %v7034 = vld [vmem:[#allocation2 + $0xe1] sm:$0xff]
        %v7035 = vld [vmem:[#allocation2 + $0xf1] sm:$0xff]
        %v7036 = vld [vmem:[#allocation2 + $0x101] sm:$0xff]
        %v7037 = vld [vmem:[#allocation2 + $0x111] sm:$0xff]
        %s7038 = scalar_lea.vmem %s8, 8
        %v7039 = vld [vmem:[%s7038] sm:$0xff]
        %v7041 = vsel %vm439, %v7022, 0
        %v7044 = vsel %vm439, %v7023, 0
        %v7047 = vsel %vm439, %v7024, 0
        %v7050 = vsel %vm439, %v7025, 0
        %v7053 = vsel %vm439, %v7026, 0
        %v7056 = vsel %vm439, %v7027, 0
        %v7059 = vsel %vm439, %v7028, 0
        %v7062 = vsel %vm439, %v7029, 0
        %v7065 = vsel %vm439, %v7030, 0
        %v7068 = vsel %vm439, %v7031, 0
        %v7071 = vsel %vm439, %v7032, 0
        %v7074 = vsel %vm439, %v7033, 0
        %v7077 = vsel %vm439, %v7034, 0
        %v7080 = vsel %vm439, %v7035, 0
        %v7083 = vsel %vm439, %v7036, 0
        %v7086 = vsel %vm439, %v7037, 0
        %7088 = vmatprep.subr.mxu0 0.0
        %7089 = vmatpush1.msra.mxu0 0.0
        %7090 = vmatprep.subr.mxu0 0.0
        %7091 = vmatpush1.msra.mxu0 0.0
        %7092 = vmatprep.subr.mxu0 0.0
        %7093 = vmatpush1.msra.mxu0 0.0
        %7094 = vmatprep.subr.mxu0 0.0
        %7095 = vmatpush1.msra.mxu0 0.0
        %7096 = vmatprep.subr.mxu0 0.0
        %7097 = vmatpush1.msra.mxu0 0.0
        %7098 = vmatprep.subr.mxu0 0.0
        %7099 = vmatpush1.msra.mxu0 0.0
        %7100 = vmatprep.subr.mxu0 0.0
        %7101 = vmatpush1.msra.mxu0 0.0
        %7102 = vmatprep.subr.mxu0 0.0
        %7103 = vmatpush1.msra.mxu0 0.0
        %7104 = vmatprep.subr.mxu0 0.0
        %7105 = vmatpush1.msra.mxu0 0.0
        %7106 = vmatprep.subr.mxu0 0.0
        %7107 = vmatpush1.msra.mxu0 0.0
        %7108 = vmatprep.subr.mxu0 0.0
        %7109 = vmatpush1.msra.mxu0 0.0
        %7110 = vmatprep.subr.mxu0 0.0
        %7111 = vmatpush1.msra.mxu0 0.0
        %7112 = vmatprep.subr.mxu0 0.0
        %7113 = vmatpush1.msra.mxu0 0.0
        %7114 = vmatprep.subr.mxu0 0.0
        %7115 = vmatpush1.msra.mxu0 0.0
        %7116 = vmatprep.subr.mxu0 0.0
        %7117 = vmatpush1.msra.mxu0 0.0
        %7118 = vmatprep.subr.mxu0 0.0
        %7119 = vmatpush1.msra.mxu0 %v7039
        %7120 = vmatprep.subr.mxu0 0.0
        %7121 = vmatpush2.msra.mxu0 0.0
        %7122 = vmatprep.subr.mxu0 0.0
        %7123 = vmatpush2.msra.mxu0 0.0
        %7124 = vmatprep.subr.mxu0 0.0
        %7125 = vmatpush2.msra.mxu0 0.0
        %7126 = vmatprep.subr.mxu0 0.0
        %7127 = vmatpush2.msra.mxu0 0.0
        %7128 = vmatprep.subr.mxu0 0.0
        %7129 = vmatpush2.msra.mxu0 0.0
        %7130 = vmatprep.subr.mxu0 0.0
        %7131 = vmatpush2.msra.mxu0 0.0
        %7132 = vmatprep.subr.mxu0 0.0
        %7133 = vmatpush2.msra.mxu0 0.0
        %7134 = vmatprep.subr.mxu0 0.0
        %7135 = vmatpush2.msra.mxu0 0.0
        %7136 = vmatprep.subr.mxu0 0.0
        %7137 = vmatpush2.msra.mxu0 0.0
        %7138 = vmatprep.subr.mxu0 0.0
        %7139 = vmatpush2.msra.mxu0 0.0
        %7140 = vmatprep.subr.mxu0 0.0
        %7141 = vmatpush2.msra.mxu0 0.0
        %7142 = vmatprep.subr.mxu0 0.0
        %7143 = vmatpush2.msra.mxu0 0.0
        %7144 = vmatprep.subr.mxu0 0.0
        %7145 = vmatpush2.msra.mxu0 0.0
        %7146 = vmatprep.subr.mxu0 0.0
        %7147 = vmatpush2.msra.mxu0 0.0
        %7148 = vmatprep.subr.mxu0 0.0
        %7149 = vmatpush2.msra.mxu0 0.0
        %7150 = vmatprep.subr.mxu0 0.0
        %7151 = vmatpush2.msra.mxu0 0.0
        %7152 = vmatprep.mubr.f32.mxu0 0.0
        %7153 = vmatmul.mubr.f32.gmra.mxu0 %v7041
        %v7154 = vpop.f32.mrf.mxu0
        %v7155 = vadd.f32 0.0, %v7154
        %v7156 = vpop.f32.mrf.mxu0
        %7157 = vmatprep.mubr.f32.mxu0 0.0
        %7158 = vmatmul.mubr.f32.gmra.mxu0 %v7044
        %v7159 = vpop.f32.mrf.mxu0
        %v7160 = vadd.f32 0.0, %v7159
        %v7161 = vpop.f32.mrf.mxu0
        %7162 = vmatprep.mubr.f32.mxu0 0.0
        %7163 = vmatmul.mubr.f32.gmra.mxu0 %v7047
        %v7164 = vpop.f32.mrf.mxu0
        %v7165 = vadd.f32 0.0, %v7164
        %v7166 = vpop.f32.mrf.mxu0
        %7167 = vmatprep.mubr.f32.mxu0 0.0
        %7168 = vmatmul.mubr.f32.gmra.mxu0 %v7050
        %v7169 = vpop.f32.mrf.mxu0
        %v7170 = vadd.f32 0.0, %v7169
        %v7171 = vpop.f32.mrf.mxu0
        %7172 = vmatprep.mubr.f32.mxu0 0.0
        %7173 = vmatmul.mubr.f32.gmra.mxu0 %v7053
        %v7174 = vpop.f32.mrf.mxu0
        %v7175 = vadd.f32 0.0, %v7174
        %v7176 = vpop.f32.mrf.mxu0
        %7177 = vmatprep.mubr.f32.mxu0 0.0
        %7178 = vmatmul.mubr.f32.gmra.mxu0 %v7056
        %v7179 = vpop.f32.mrf.mxu0
        %v7180 = vadd.f32 0.0, %v7179
        %v7181 = vpop.f32.mrf.mxu0
        %7182 = vmatprep.mubr.f32.mxu0 0.0
        %7183 = vmatmul.mubr.f32.gmra.mxu0 %v7059
        %v7184 = vpop.f32.mrf.mxu0
        %v7185 = vadd.f32 0.0, %v7184
        %v7186 = vpop.f32.mrf.mxu0
        %7187 = vmatprep.mubr.f32.mxu0 0.0
        %7188 = vmatmul.mubr.f32.gmra.mxu0 %v7062
        %v7189 = vpop.f32.mrf.mxu0
        %v7190 = vadd.f32 0.0, %v7189
        %v7191 = vpop.f32.mrf.mxu0
        %7192 = vmatprep.mubr.f32.mxu0 0.0
        %7193 = vmatmul.mubr.f32.gmra.mxu0 %v7065
        %v7194 = vpop.f32.mrf.mxu0
        %v7195 = vadd.f32 0.0, %v7194
        %v7196 = vpop.f32.mrf.mxu0
        %7197 = vmatprep.mubr.f32.mxu0 0.0
        %7198 = vmatmul.mubr.f32.gmra.mxu0 %v7068
        %v7199 = vpop.f32.mrf.mxu0
        %v7200 = vadd.f32 0.0, %v7199
        %v7201 = vpop.f32.mrf.mxu0
        %7202 = vmatprep.mubr.f32.mxu0 0.0
        %7203 = vmatmul.mubr.f32.gmra.mxu0 %v7071
        %v7204 = vpop.f32.mrf.mxu0
        %v7205 = vadd.f32 0.0, %v7204
        %v7206 = vpop.f32.mrf.mxu0
        %7207 = vmatprep.mubr.f32.mxu0 0.0
        %7208 = vmatmul.mubr.f32.gmra.mxu0 %v7074
        %v7209 = vpop.f32.mrf.mxu0
        %v7210 = vadd.f32 0.0, %v7209
        %v7211 = vpop.f32.mrf.mxu0
        %7212 = vmatprep.mubr.f32.mxu0 0.0
        %7213 = vmatmul.mubr.f32.gmra.mxu0 %v7077
        %v7214 = vpop.f32.mrf.mxu0
        %v7215 = vadd.f32 0.0, %v7214
        %v7216 = vpop.f32.mrf.mxu0
        %7217 = vmatprep.mubr.f32.mxu0 0.0
        %7218 = vmatmul.mubr.f32.gmra.mxu0 %v7080
        %v7219 = vpop.f32.mrf.mxu0
        %v7220 = vadd.f32 0.0, %v7219
        %v7221 = vpop.f32.mrf.mxu0
        %7222 = vmatprep.mubr.f32.mxu0 0.0
        %7223 = vmatmul.mubr.f32.gmra.mxu0 %v7083
        %v7224 = vpop.f32.mrf.mxu0
        %v7225 = vadd.f32 0.0, %v7224
        %v7226 = vpop.f32.mrf.mxu0
        %7227 = vmatprep.mubr.f32.mxu0 0.0
        %7228 = vmatmul.mubr.f32.gmra.mxu0 %v7086
        %v7229 = vpop.f32.mrf.mxu0
        %v7230 = vadd.f32 0.0, %v7229
        %v7231 = vpop.f32.mrf.mxu0
        %7232 = vdwg.mxu0
        %v7234 = vsel %vm439, %v7005, 0
        %v7237 = vsel %vm439, %v7006, 0
        %v7240 = vsel %vm439, %v7007, 0
        %v7243 = vsel %vm439, %v7008, 0
        %v7246 = vsel %vm439, %v7009, 0
        %v7249 = vsel %vm439, %v7010, 0
        %v7252 = vsel %vm439, %v7011, 0
        %v7255 = vsel %vm439, %v7012, 0
        %v7258 = vsel %vm439, %v7013, 0
        %v7261 = vsel %vm439, %v7014, 0
        %v7264 = vsel %vm439, %v7015, 0
        %v7267 = vsel %vm439, %v7016, 0
        %v7270 = vsel %vm439, %v7017, 0
        %v7273 = vsel %vm439, %v7018, 0
        %v7276 = vsel %vm439, %v7019, 0
        %v7279 = vsel %vm439, %v7020, 0
        %7281 = vmatprep.subr.mxu0 0.0
        %7282 = vmatpush1.msra.mxu0 0.0
        %7283 = vmatprep.subr.mxu0 0.0
        %7284 = vmatpush1.msra.mxu0 0.0
        %7285 = vmatprep.subr.mxu0 0.0
        %7286 = vmatpush1.msra.mxu0 0.0
        %7287 = vmatprep.subr.mxu0 0.0
        %7288 = vmatpush1.msra.mxu0 0.0
        %7289 = vmatprep.subr.mxu0 0.0
        %7290 = vmatpush1.msra.mxu0 0.0
        %7291 = vmatprep.subr.mxu0 0.0
        %7292 = vmatpush1.msra.mxu0 0.0
        %7293 = vmatprep.subr.mxu0 0.0
        %7294 = vmatpush1.msra.mxu0 0.0
        %7295 = vmatprep.subr.mxu0 0.0
        %7296 = vmatpush1.msra.mxu0 0.0
        %7297 = vmatprep.subr.mxu0 0.0
        %7298 = vmatpush1.msra.mxu0 0.0
        %7299 = vmatprep.subr.mxu0 0.0
        %7300 = vmatpush1.msra.mxu0 0.0
        %7301 = vmatprep.subr.mxu0 0.0
        %7302 = vmatpush1.msra.mxu0 0.0
        %7303 = vmatprep.subr.mxu0 0.0
        %7304 = vmatpush1.msra.mxu0 0.0
        %7305 = vmatprep.subr.mxu0 0.0
        %7306 = vmatpush1.msra.mxu0 0.0
        %7307 = vmatprep.subr.mxu0 0.0
        %7308 = vmatpush1.msra.mxu0 0.0
        %7309 = vmatprep.subr.mxu0 0.0
        %7310 = vmatpush1.msra.mxu0 0.0
        %7311 = vmatprep.subr.mxu0 0.0
        %7312 = vmatpush1.msra.mxu0 %v7021
        %7313 = vmatprep.subr.mxu0 0.0
        %7314 = vmatpush2.msra.mxu0 0.0
        %7315 = vmatprep.subr.mxu0 0.0
        %7316 = vmatpush2.msra.mxu0 0.0
        %7317 = vmatprep.subr.mxu0 0.0
        %7318 = vmatpush2.msra.mxu0 0.0
        %7319 = vmatprep.subr.mxu0 0.0
        %7320 = vmatpush2.msra.mxu0 0.0
        %7321 = vmatprep.subr.mxu0 0.0
        %7322 = vmatpush2.msra.mxu0 0.0
        %7323 = vmatprep.subr.mxu0 0.0
        %7324 = vmatpush2.msra.mxu0 0.0
        %7325 = vmatprep.subr.mxu0 0.0
        %7326 = vmatpush2.msra.mxu0 0.0
        %7327 = vmatprep.subr.mxu0 0.0
        %7328 = vmatpush2.msra.mxu0 0.0
        %7329 = vmatprep.subr.mxu0 0.0
        %7330 = vmatpush2.msra.mxu0 0.0
        %7331 = vmatprep.subr.mxu0 0.0
        %7332 = vmatpush2.msra.mxu0 0.0
        %7333 = vmatprep.subr.mxu0 0.0
        %7334 = vmatpush2.msra.mxu0 0.0
        %7335 = vmatprep.subr.mxu0 0.0
        %7336 = vmatpush2.msra.mxu0 0.0
        %7337 = vmatprep.subr.mxu0 0.0
        %7338 = vmatpush2.msra.mxu0 0.0
        %7339 = vmatprep.subr.mxu0 0.0
        %7340 = vmatpush2.msra.mxu0 0.0
        %7341 = vmatprep.subr.mxu0 0.0
        %7342 = vmatpush2.msra.mxu0 0.0
        %7343 = vmatprep.subr.mxu0 0.0
        %7344 = vmatpush2.msra.mxu0 0.0
        %7345 = vmatprep.mubr.f32.mxu0 0.0
        %7346 = vmatmul.mubr.f32.gmra.mxu0 %v7234
        %v7347 = vpop.f32.mrf.mxu0
        %v7348 = vadd.f32 %v7155, %v7347
        %v7349 = vpop.f32.mrf.mxu0
        %7350 = vmatprep.mubr.f32.mxu0 0.0
        %7351 = vmatmul.mubr.f32.gmra.mxu0 %v7237
        %v7352 = vpop.f32.mrf.mxu0
        %v7353 = vadd.f32 %v7160, %v7352
        %v7354 = vpop.f32.mrf.mxu0
        %7355 = vmatprep.mubr.f32.mxu0 0.0
        %7356 = vmatmul.mubr.f32.gmra.mxu0 %v7240
        %v7357 = vpop.f32.mrf.mxu0
        %v7358 = vadd.f32 %v7165, %v7357
        %v7359 = vpop.f32.mrf.mxu0
        %7360 = vmatprep.mubr.f32.mxu0 0.0
        %7361 = vmatmul.mubr.f32.gmra.mxu0 %v7243
        %v7362 = vpop.f32.mrf.mxu0
        %v7363 = vadd.f32 %v7170, %v7362
        %v7364 = vpop.f32.mrf.mxu0
        %7365 = vmatprep.mubr.f32.mxu0 0.0
        %7366 = vmatmul.mubr.f32.gmra.mxu0 %v7246
        %v7367 = vpop.f32.mrf.mxu0
        %v7368 = vadd.f32 %v7175, %v7367
        %v7369 = vpop.f32.mrf.mxu0
        %7370 = vmatprep.mubr.f32.mxu0 0.0
        %7371 = vmatmul.mubr.f32.gmra.mxu0 %v7249
        %v7372 = vpop.f32.mrf.mxu0
        %v7373 = vadd.f32 %v7180, %v7372
        %v7374 = vpop.f32.mrf.mxu0
        %7375 = vmatprep.mubr.f32.mxu0 0.0
        %7376 = vmatmul.mubr.f32.gmra.mxu0 %v7252
        %v7377 = vpop.f32.mrf.mxu0
        %v7378 = vadd.f32 %v7185, %v7377
        %v7379 = vpop.f32.mrf.mxu0
        %7380 = vmatprep.mubr.f32.mxu0 0.0
        %7381 = vmatmul.mubr.f32.gmra.mxu0 %v7255
        %v7382 = vpop.f32.mrf.mxu0
        %v7383 = vadd.f32 %v7190, %v7382
        %v7384 = vpop.f32.mrf.mxu0
        %7385 = vmatprep.mubr.f32.mxu0 0.0
        %7386 = vmatmul.mubr.f32.gmra.mxu0 %v7258
        %v7387 = vpop.f32.mrf.mxu0
        %v7388 = vadd.f32 %v7195, %v7387
        %v7389 = vpop.f32.mrf.mxu0
        %7390 = vmatprep.mubr.f32.mxu0 0.0
        %7391 = vmatmul.mubr.f32.gmra.mxu0 %v7261
        %v7392 = vpop.f32.mrf.mxu0
        %v7393 = vadd.f32 %v7200, %v7392
        %v7394 = vpop.f32.mrf.mxu0
        %7395 = vmatprep.mubr.f32.mxu0 0.0
        %7396 = vmatmul.mubr.f32.gmra.mxu0 %v7264
        %v7397 = vpop.f32.mrf.mxu0
        %v7398 = vadd.f32 %v7205, %v7397
        %v7399 = vpop.f32.mrf.mxu0
        %7400 = vmatprep.mubr.f32.mxu0 0.0
        %7401 = vmatmul.mubr.f32.gmra.mxu0 %v7267
        %v7402 = vpop.f32.mrf.mxu0
        %v7403 = vadd.f32 %v7210, %v7402
        %v7404 = vpop.f32.mrf.mxu0
        %7405 = vmatprep.mubr.f32.mxu0 0.0
        %7406 = vmatmul.mubr.f32.gmra.mxu0 %v7270
        %v7407 = vpop.f32.mrf.mxu0
        %v7408 = vadd.f32 %v7215, %v7407
        %v7409 = vpop.f32.mrf.mxu0
        %7410 = vmatprep.mubr.f32.mxu0 0.0
        %7411 = vmatmul.mubr.f32.gmra.mxu0 %v7273
        %v7412 = vpop.f32.mrf.mxu0
        %v7413 = vadd.f32 %v7220, %v7412
        %v7414 = vpop.f32.mrf.mxu0
        %7415 = vmatprep.mubr.f32.mxu0 0.0
        %7416 = vmatmul.mubr.f32.gmra.mxu0 %v7276
        %v7417 = vpop.f32.mrf.mxu0
        %v7418 = vadd.f32 %v7225, %v7417
        %v7419 = vpop.f32.mrf.mxu0
        %7420 = vmatprep.mubr.f32.mxu0 0.0
        %7421 = vmatmul.mubr.f32.gmra.mxu0 %v7279
        %v7422 = vpop.f32.mrf.mxu0
        %v7423 = vadd.f32 %v7230, %v7422
        %v7424 = vpop.f32.mrf.mxu0
        %7425 = vdwg.mxu0
        %v7426 = vld [vmem:[#allocation2 + $0x2] sm:$0xff]
        %v7427 = vld [vmem:[#allocation2 + $0x12] sm:$0xff]
        %v7428 = vld [vmem:[#allocation2 + $0x22] sm:$0xff]
        %v7429 = vld [vmem:[#allocation2 + $0x32] sm:$0xff]
        %v7430 = vld [vmem:[#allocation2 + $0x42] sm:$0xff]
        %v7431 = vld [vmem:[#allocation2 + $0x52] sm:$0xff]
        %v7432 = vld [vmem:[#allocation2 + $0x62] sm:$0xff]
        %v7433 = vld [vmem:[#allocation2 + $0x72] sm:$0xff]
        %v7434 = vld [vmem:[#allocation2 + $0xa2] sm:$0xff]
        %v7435 = vld [vmem:[#allocation2 + $0xb2] sm:$0xff]
        %v7436 = vld [vmem:[#allocation2 + $0xc2] sm:$0xff]
        %v7437 = vld [vmem:[#allocation2 + $0xd2] sm:$0xff]
        %v7438 = vld [vmem:[#allocation2 + $0xe2] sm:$0xff]
        %v7439 = vld [vmem:[#allocation2 + $0xf2] sm:$0xff]
        %v7440 = vld [vmem:[#allocation2 + $0x102] sm:$0xff]
        %v7441 = vld [vmem:[#allocation2 + $0x112] sm:$0xff]
        %s7442 = scalar_lea.vmem %s8, 16
        %v7443 = vld [vmem:[%s7442] sm:$0xff]
        %v7445 = vsel %vm439, %v7426, 0
        %v7448 = vsel %vm439, %v7427, 0
        %v7451 = vsel %vm439, %v7428, 0
        %v7454 = vsel %vm439, %v7429, 0
        %v7457 = vsel %vm439, %v7430, 0
        %v7460 = vsel %vm439, %v7431, 0
        %v7463 = vsel %vm439, %v7432, 0
        %v7466 = vsel %vm439, %v7433, 0
        %v7469 = vsel %vm439, %v7434, 0
        %v7472 = vsel %vm439, %v7435, 0
        %v7475 = vsel %vm439, %v7436, 0
        %v7478 = vsel %vm439, %v7437, 0
        %v7481 = vsel %vm439, %v7438, 0
        %v7484 = vsel %vm439, %v7439, 0
        %v7487 = vsel %vm439, %v7440, 0
        %v7490 = vsel %vm439, %v7441, 0
        %7492 = vmatprep.subr.mxu0 0.0
        %7493 = vmatpush1.msra.mxu0 0.0
        %7494 = vmatprep.subr.mxu0 0.0
        %7495 = vmatpush1.msra.mxu0 0.0
        %7496 = vmatprep.subr.mxu0 0.0
        %7497 = vmatpush1.msra.mxu0 0.0
        %7498 = vmatprep.subr.mxu0 0.0
        %7499 = vmatpush1.msra.mxu0 0.0
        %7500 = vmatprep.subr.mxu0 0.0
        %7501 = vmatpush1.msra.mxu0 0.0
        %7502 = vmatprep.subr.mxu0 0.0
        %7503 = vmatpush1.msra.mxu0 0.0
        %7504 = vmatprep.subr.mxu0 0.0
        %7505 = vmatpush1.msra.mxu0 0.0
        %7506 = vmatprep.subr.mxu0 0.0
        %7507 = vmatpush1.msra.mxu0 0.0
        %7508 = vmatprep.subr.mxu0 0.0
        %7509 = vmatpush1.msra.mxu0 0.0
        %7510 = vmatprep.subr.mxu0 0.0
        %7511 = vmatpush1.msra.mxu0 0.0
        %7512 = vmatprep.subr.mxu0 0.0
        %7513 = vmatpush1.msra.mxu0 0.0
        %7514 = vmatprep.subr.mxu0 0.0
        %7515 = vmatpush1.msra.mxu0 0.0
        %7516 = vmatprep.subr.mxu0 0.0
        %7517 = vmatpush1.msra.mxu0 0.0
        %7518 = vmatprep.subr.mxu0 0.0
        %7519 = vmatpush1.msra.mxu0 0.0
        %7520 = vmatprep.subr.mxu0 0.0
        %7521 = vmatpush1.msra.mxu0 0.0
        %7522 = vmatprep.subr.mxu0 0.0
        %7523 = vmatpush1.msra.mxu0 %v7443
        %7524 = vmatprep.subr.mxu0 0.0
        %7525 = vmatpush2.msra.mxu0 0.0
        %7526 = vmatprep.subr.mxu0 0.0
        %7527 = vmatpush2.msra.mxu0 0.0
        %7528 = vmatprep.subr.mxu0 0.0
        %7529 = vmatpush2.msra.mxu0 0.0
        %7530 = vmatprep.subr.mxu0 0.0
        %7531 = vmatpush2.msra.mxu0 0.0
        %7532 = vmatprep.subr.mxu0 0.0
        %7533 = vmatpush2.msra.mxu0 0.0
        %7534 = vmatprep.subr.mxu0 0.0
        %7535 = vmatpush2.msra.mxu0 0.0
        %7536 = vmatprep.subr.mxu0 0.0
        %7537 = vmatpush2.msra.mxu0 0.0
        %7538 = vmatprep.subr.mxu0 0.0
        %7539 = vmatpush2.msra.mxu0 0.0
        %7540 = vmatprep.subr.mxu0 0.0
        %7541 = vmatpush2.msra.mxu0 0.0
        %7542 = vmatprep.subr.mxu0 0.0
        %7543 = vmatpush2.msra.mxu0 0.0
        %7544 = vmatprep.subr.mxu0 0.0
        %7545 = vmatpush2.msra.mxu0 0.0
        %7546 = vmatprep.subr.mxu0 0.0
        %7547 = vmatpush2.msra.mxu0 0.0
        %7548 = vmatprep.subr.mxu0 0.0
        %7549 = vmatpush2.msra.mxu0 0.0
        %7550 = vmatprep.subr.mxu0 0.0
        %7551 = vmatpush2.msra.mxu0 0.0
        %7552 = vmatprep.subr.mxu0 0.0
        %7553 = vmatpush2.msra.mxu0 0.0
        %7554 = vmatprep.subr.mxu0 0.0
        %7555 = vmatpush2.msra.mxu0 0.0
        %7556 = vmatprep.mubr.f32.mxu0 0.0
        %7557 = vmatmul.mubr.f32.gmra.mxu0 %v7445
        %v7558 = vpop.f32.mrf.mxu0
        %v7559 = vadd.f32 0.0, %v7558
        %v7560 = vpop.f32.mrf.mxu0
        %7561 = vmatprep.mubr.f32.mxu0 0.0
        %7562 = vmatmul.mubr.f32.gmra.mxu0 %v7448
        %v7563 = vpop.f32.mrf.mxu0
        %v7564 = vadd.f32 0.0, %v7563
        %v7565 = vpop.f32.mrf.mxu0
        %7566 = vmatprep.mubr.f32.mxu0 0.0
        %7567 = vmatmul.mubr.f32.gmra.mxu0 %v7451
        %v7568 = vpop.f32.mrf.mxu0
        %v7569 = vadd.f32 0.0, %v7568
        %v7570 = vpop.f32.mrf.mxu0
        %7571 = vmatprep.mubr.f32.mxu0 0.0
        %7572 = vmatmul.mubr.f32.gmra.mxu0 %v7454
        %v7573 = vpop.f32.mrf.mxu0
        %v7574 = vadd.f32 0.0, %v7573
        %v7575 = vpop.f32.mrf.mxu0
        %7576 = vmatprep.mubr.f32.mxu0 0.0
        %7577 = vmatmul.mubr.f32.gmra.mxu0 %v7457
        %v7578 = vpop.f32.mrf.mxu0
        %v7579 = vadd.f32 0.0, %v7578
        %v7580 = vpop.f32.mrf.mxu0
        %7581 = vmatprep.mubr.f32.mxu0 0.0
        %7582 = vmatmul.mubr.f32.gmra.mxu0 %v7460
        %v7583 = vpop.f32.mrf.mxu0
        %v7584 = vadd.f32 0.0, %v7583
        %v7585 = vpop.f32.mrf.mxu0
        %7586 = vmatprep.mubr.f32.mxu0 0.0
        %7587 = vmatmul.mubr.f32.gmra.mxu0 %v7463
        %v7588 = vpop.f32.mrf.mxu0
        %v7589 = vadd.f32 0.0, %v7588
        %v7590 = vpop.f32.mrf.mxu0
        %7591 = vmatprep.mubr.f32.mxu0 0.0
        %7592 = vmatmul.mubr.f32.gmra.mxu0 %v7466
        %v7593 = vpop.f32.mrf.mxu0
        %v7594 = vadd.f32 0.0, %v7593
        %v7595 = vpop.f32.mrf.mxu0
        %7596 = vmatprep.mubr.f32.mxu0 0.0
        %7597 = vmatmul.mubr.f32.gmra.mxu0 %v7469
        %v7598 = vpop.f32.mrf.mxu0
        %v7599 = vadd.f32 0.0, %v7598
        %v7600 = vpop.f32.mrf.mxu0
        %7601 = vmatprep.mubr.f32.mxu0 0.0
        %7602 = vmatmul.mubr.f32.gmra.mxu0 %v7472
        %v7603 = vpop.f32.mrf.mxu0
        %v7604 = vadd.f32 0.0, %v7603
        %v7605 = vpop.f32.mrf.mxu0
        %7606 = vmatprep.mubr.f32.mxu0 0.0
        %7607 = vmatmul.mubr.f32.gmra.mxu0 %v7475
        %v7608 = vpop.f32.mrf.mxu0
        %v7609 = vadd.f32 0.0, %v7608
        %v7610 = vpop.f32.mrf.mxu0
        %7611 = vmatprep.mubr.f32.mxu0 0.0
        %7612 = vmatmul.mubr.f32.gmra.mxu0 %v7478
        %v7613 = vpop.f32.mrf.mxu0
        %v7614 = vadd.f32 0.0, %v7613
        %v7615 = vpop.f32.mrf.mxu0
        %7616 = vmatprep.mubr.f32.mxu0 0.0
        %7617 = vmatmul.mubr.f32.gmra.mxu0 %v7481
        %v7618 = vpop.f32.mrf.mxu0
        %v7619 = vadd.f32 0.0, %v7618
        %v7620 = vpop.f32.mrf.mxu0
        %7621 = vmatprep.mubr.f32.mxu0 0.0
        %7622 = vmatmul.mubr.f32.gmra.mxu0 %v7484
        %v7623 = vpop.f32.mrf.mxu0
        %v7624 = vadd.f32 0.0, %v7623
        %v7625 = vpop.f32.mrf.mxu0
        %7626 = vmatprep.mubr.f32.mxu0 0.0
        %7627 = vmatmul.mubr.f32.gmra.mxu0 %v7487
        %v7628 = vpop.f32.mrf.mxu0
        %v7629 = vadd.f32 0.0, %v7628
        %v7630 = vpop.f32.mrf.mxu0
        %7631 = vmatprep.mubr.f32.mxu0 0.0
        %7632 = vmatmul.mubr.f32.gmra.mxu0 %v7490
        %v7633 = vpop.f32.mrf.mxu0
        %v7634 = vadd.f32 0.0, %v7633
        %v7635 = vpop.f32.mrf.mxu0
        %7636 = vdwg.mxu0
        %v7637 = vadd.f32 %v7348, %v7559
        %v7638 = vadd.f32 %v7353, %v7564
        %v7639 = vadd.f32 %v7358, %v7569
        %v7640 = vadd.f32 %v7363, %v7574
        %v7641 = vadd.f32 %v7368, %v7579
        %v7642 = vadd.f32 %v7373, %v7584
        %v7643 = vadd.f32 %v7378, %v7589
        %v7644 = vadd.f32 %v7383, %v7594
        %v7645 = vadd.f32 %v7388, %v7599
        %v7646 = vadd.f32 %v7393, %v7604
        %v7647 = vadd.f32 %v7398, %v7609
        %v7648 = vadd.f32 %v7403, %v7614
        %v7649 = vadd.f32 %v7408, %v7619
        %v7650 = vadd.f32 %v7413, %v7624
        %v7651 = vadd.f32 %v7418, %v7629
        %v7652 = vadd.f32 %v7423, %v7634
        %v7653 = vld [vmem:[%s2590] sm:$0xff]
        %v7654 = vld [vmem:[%s2590 + $0x10] sm:$0xff]
        %v7655 = vld [vmem:[%s2590 + $0x20] sm:$0xff]
        %v7656 = vld [vmem:[%s2590 + $0x30] sm:$0xff]
        %v7657 = vld [vmem:[%s2590 + $0x40] sm:$0xff]
        %v7658 = vld [vmem:[%s2590 + $0x50] sm:$0xff]
        %v7659 = vld [vmem:[%s2590 + $0x60] sm:$0xff]
        %v7660 = vld [vmem:[%s2590 + $0x70] sm:$0xff]
        %v7661 = vld [vmem:[%s2590 + $0xa0] sm:$0xff]
        %v7662 = vld [vmem:[%s2590 + $0xb0] sm:$0xff]
        %v7663 = vld [vmem:[%s2590 + $0xc0] sm:$0xff]
        %v7664 = vld [vmem:[%s2590 + $0xd0] sm:$0xff]
        %v7665 = vld [vmem:[%s2590 + $0xe0] sm:$0xff]
        %v7666 = vld [vmem:[%s2590 + $0xf0] sm:$0xff]
        %v7667 = vld [vmem:[%s2590 + $0x100] sm:$0xff]
        %v7668 = vld [vmem:[%s2590 + $0x110] sm:$0xff]
        %s7669 = scalar_lea.vmem %s8, 24
        %v7670 = vld [vmem:[%s7669] sm:$0xff]
        %v7672 = vsel %vm439, %v7653, 0
        %v7675 = vsel %vm439, %v7654, 0
        %v7678 = vsel %vm439, %v7655, 0
        %v7681 = vsel %vm439, %v7656, 0
        %v7684 = vsel %vm439, %v7657, 0
        %v7687 = vsel %vm439, %v7658, 0
        %v7690 = vsel %vm439, %v7659, 0
        %v7693 = vsel %vm439, %v7660, 0
        %v7696 = vsel %vm439, %v7661, 0
        %v7699 = vsel %vm439, %v7662, 0
        %v7702 = vsel %vm439, %v7663, 0
        %v7705 = vsel %vm439, %v7664, 0
        %v7708 = vsel %vm439, %v7665, 0
        %v7711 = vsel %vm439, %v7666, 0
        %v7714 = vsel %vm439, %v7667, 0
        %v7717 = vsel %vm439, %v7668, 0
        %7719 = vmatprep.subr.mxu0 0.0
        %7720 = vmatpush1.msra.mxu0 0.0
        %7721 = vmatprep.subr.mxu0 0.0
        %7722 = vmatpush1.msra.mxu0 0.0
        %7723 = vmatprep.subr.mxu0 0.0
        %7724 = vmatpush1.msra.mxu0 0.0
        %7725 = vmatprep.subr.mxu0 0.0
        %7726 = vmatpush1.msra.mxu0 0.0
        %7727 = vmatprep.subr.mxu0 0.0
        %7728 = vmatpush1.msra.mxu0 0.0
        %7729 = vmatprep.subr.mxu0 0.0
        %7730 = vmatpush1.msra.mxu0 0.0
        %7731 = vmatprep.subr.mxu0 0.0
        %7732 = vmatpush1.msra.mxu0 0.0
        %7733 = vmatprep.subr.mxu0 0.0
        %7734 = vmatpush1.msra.mxu0 0.0
        %7735 = vmatprep.subr.mxu0 0.0
        %7736 = vmatpush1.msra.mxu0 0.0
        %7737 = vmatprep.subr.mxu0 0.0
        %7738 = vmatpush1.msra.mxu0 0.0
        %7739 = vmatprep.subr.mxu0 0.0
        %7740 = vmatpush1.msra.mxu0 0.0
        %7741 = vmatprep.subr.mxu0 0.0
        %7742 = vmatpush1.msra.mxu0 0.0
        %7743 = vmatprep.subr.mxu0 0.0
        %7744 = vmatpush1.msra.mxu0 0.0
        %7745 = vmatprep.subr.mxu0 0.0
        %7746 = vmatpush1.msra.mxu0 0.0
        %7747 = vmatprep.subr.mxu0 0.0
        %7748 = vmatpush1.msra.mxu0 0.0
        %7749 = vmatprep.subr.mxu0 0.0
        %7750 = vmatpush1.msra.mxu0 %v7670
        %7751 = vmatprep.subr.mxu0 0.0
        %7752 = vmatpush2.msra.mxu0 0.0
        %7753 = vmatprep.subr.mxu0 0.0
        %7754 = vmatpush2.msra.mxu0 0.0
        %7755 = vmatprep.subr.mxu0 0.0
        %7756 = vmatpush2.msra.mxu0 0.0
        %7757 = vmatprep.subr.mxu0 0.0
        %7758 = vmatpush2.msra.mxu0 0.0
        %7759 = vmatprep.subr.mxu0 0.0
        %7760 = vmatpush2.msra.mxu0 0.0
        %7761 = vmatprep.subr.mxu0 0.0
        %7762 = vmatpush2.msra.mxu0 0.0
        %7763 = vmatprep.subr.mxu0 0.0
        %7764 = vmatpush2.msra.mxu0 0.0
        %7765 = vmatprep.subr.mxu0 0.0
        %7766 = vmatpush2.msra.mxu0 0.0
        %7767 = vmatprep.subr.mxu0 0.0
        %7768 = vmatpush2.msra.mxu0 0.0
        %7769 = vmatprep.subr.mxu0 0.0
        %7770 = vmatpush2.msra.mxu0 0.0
        %7771 = vmatprep.subr.mxu0 0.0
        %7772 = vmatpush2.msra.mxu0 0.0
        %7773 = vmatprep.subr.mxu0 0.0
        %7774 = vmatpush2.msra.mxu0 0.0
        %7775 = vmatprep.subr.mxu0 0.0
        %7776 = vmatpush2.msra.mxu0 0.0
        %7777 = vmatprep.subr.mxu0 0.0
        %7778 = vmatpush2.msra.mxu0 0.0
        %7779 = vmatprep.subr.mxu0 0.0
        %7780 = vmatpush2.msra.mxu0 0.0
        %7781 = vmatprep.subr.mxu0 0.0
        %7782 = vmatpush2.msra.mxu0 0.0
        %7783 = vmatprep.mubr.f32.mxu0 0.0
        %7784 = vmatmul.mubr.f32.gmra.mxu0 %v7672
        %v7785 = vpop.f32.mrf.mxu0
        %v7786 = vadd.f32 0.0, %v7785
        %v7787 = vpop.f32.mrf.mxu0
        %7788 = vmatprep.mubr.f32.mxu0 0.0
        %7789 = vmatmul.mubr.f32.gmra.mxu0 %v7675
        %v7790 = vpop.f32.mrf.mxu0
        %v7791 = vadd.f32 0.0, %v7790
        %v7792 = vpop.f32.mrf.mxu0
        %7793 = vmatprep.mubr.f32.mxu0 0.0
        %7794 = vmatmul.mubr.f32.gmra.mxu0 %v7678
        %v7795 = vpop.f32.mrf.mxu0
        %v7796 = vadd.f32 0.0, %v7795
        %v7797 = vpop.f32.mrf.mxu0
        %7798 = vmatprep.mubr.f32.mxu0 0.0
        %7799 = vmatmul.mubr.f32.gmra.mxu0 %v7681
        %v7800 = vpop.f32.mrf.mxu0
        %v7801 = vadd.f32 0.0, %v7800
        %v7802 = vpop.f32.mrf.mxu0
        %7803 = vmatprep.mubr.f32.mxu0 0.0
        %7804 = vmatmul.mubr.f32.gmra.mxu0 %v7684
        %v7805 = vpop.f32.mrf.mxu0
        %v7806 = vadd.f32 0.0, %v7805
        %v7807 = vpop.f32.mrf.mxu0
        %7808 = vmatprep.mubr.f32.mxu0 0.0
        %7809 = vmatmul.mubr.f32.gmra.mxu0 %v7687
        %v7810 = vpop.f32.mrf.mxu0
        %v7811 = vadd.f32 0.0, %v7810
        %v7812 = vpop.f32.mrf.mxu0
        %7813 = vmatprep.mubr.f32.mxu0 0.0
        %7814 = vmatmul.mubr.f32.gmra.mxu0 %v7690
        %v7815 = vpop.f32.mrf.mxu0
        %v7816 = vadd.f32 0.0, %v7815
        %v7817 = vpop.f32.mrf.mxu0
        %7818 = vmatprep.mubr.f32.mxu0 0.0
        %7819 = vmatmul.mubr.f32.gmra.mxu0 %v7693
        %v7820 = vpop.f32.mrf.mxu0
        %v7821 = vadd.f32 0.0, %v7820
        %v7822 = vpop.f32.mrf.mxu0
        %7823 = vmatprep.mubr.f32.mxu0 0.0
        %7824 = vmatmul.mubr.f32.gmra.mxu0 %v7696
        %v7825 = vpop.f32.mrf.mxu0
        %v7826 = vadd.f32 0.0, %v7825
        %v7827 = vpop.f32.mrf.mxu0
        %7828 = vmatprep.mubr.f32.mxu0 0.0
        %7829 = vmatmul.mubr.f32.gmra.mxu0 %v7699
        %v7830 = vpop.f32.mrf.mxu0
        %v7831 = vadd.f32 0.0, %v7830
        %v7832 = vpop.f32.mrf.mxu0
        %7833 = vmatprep.mubr.f32.mxu0 0.0
        %7834 = vmatmul.mubr.f32.gmra.mxu0 %v7702
        %v7835 = vpop.f32.mrf.mxu0
        %v7836 = vadd.f32 0.0, %v7835
        %v7837 = vpop.f32.mrf.mxu0
        %7838 = vmatprep.mubr.f32.mxu0 0.0
        %7839 = vmatmul.mubr.f32.gmra.mxu0 %v7705
        %v7840 = vpop.f32.mrf.mxu0
        %v7841 = vadd.f32 0.0, %v7840
        %v7842 = vpop.f32.mrf.mxu0
        %7843 = vmatprep.mubr.f32.mxu0 0.0
        %7844 = vmatmul.mubr.f32.gmra.mxu0 %v7708
        %v7845 = vpop.f32.mrf.mxu0
        %v7846 = vadd.f32 0.0, %v7845
        %v7847 = vpop.f32.mrf.mxu0
        %7848 = vmatprep.mubr.f32.mxu0 0.0
        %7849 = vmatmul.mubr.f32.gmra.mxu0 %v7711
        %v7850 = vpop.f32.mrf.mxu0
        %v7851 = vadd.f32 0.0, %v7850
        %v7852 = vpop.f32.mrf.mxu0
        %7853 = vmatprep.mubr.f32.mxu0 0.0
        %7854 = vmatmul.mubr.f32.gmra.mxu0 %v7714
        %v7855 = vpop.f32.mrf.mxu0
        %v7856 = vadd.f32 0.0, %v7855
        %v7857 = vpop.f32.mrf.mxu0
        %7858 = vmatprep.mubr.f32.mxu0 0.0
        %7859 = vmatmul.mubr.f32.gmra.mxu0 %v7717
        %v7860 = vpop.f32.mrf.mxu0
        %v7861 = vadd.f32 0.0, %v7860
        %v7862 = vpop.f32.mrf.mxu0
        %7863 = vdwg.mxu0
        %v7864 = vadd.f32 %v7637, %v7786
        %v7865 = vadd.f32 %v7638, %v7791
        %v7866 = vadd.f32 %v7639, %v7796
        %v7867 = vadd.f32 %v7640, %v7801
        %v7868 = vadd.f32 %v7641, %v7806
        %v7869 = vadd.f32 %v7642, %v7811
        %v7870 = vadd.f32 %v7643, %v7816
        %v7871 = vadd.f32 %v7644, %v7821
        %v7872 = vadd.f32 %v7645, %v7826
        %v7873 = vadd.f32 %v7646, %v7831
        %v7874 = vadd.f32 %v7647, %v7836
        %v7875 = vadd.f32 %v7648, %v7841
        %v7876 = vadd.f32 %v7649, %v7846
        %v7877 = vadd.f32 %v7650, %v7851
        %v7878 = vadd.f32 %v7651, %v7856
        %v7879 = vadd.f32 %v7652, %v7861
        %v7880 = vld [vmem:[%s2590 + $0x1] sm:$0xff]
        %v7881 = vld [vmem:[%s2590 + $0x11] sm:$0xff]
        %v7882 = vld [vmem:[%s2590 + $0x21] sm:$0xff]
        %v7883 = vld [vmem:[%s2590 + $0x31] sm:$0xff]
        %v7884 = vld [vmem:[%s2590 + $0x41] sm:$0xff]
        %v7885 = vld [vmem:[%s2590 + $0x51] sm:$0xff]
        %v7886 = vld [vmem:[%s2590 + $0x61] sm:$0xff]
        %v7887 = vld [vmem:[%s2590 + $0x71] sm:$0xff]
        %v7888 = vld [vmem:[%s2590 + $0xa1] sm:$0xff]
        %v7889 = vld [vmem:[%s2590 + $0xb1] sm:$0xff]
        %v7890 = vld [vmem:[%s2590 + $0xc1] sm:$0xff]
        %v7891 = vld [vmem:[%s2590 + $0xd1] sm:$0xff]
        %v7892 = vld [vmem:[%s2590 + $0xe1] sm:$0xff]
        %v7893 = vld [vmem:[%s2590 + $0xf1] sm:$0xff]
        %v7894 = vld [vmem:[%s2590 + $0x101] sm:$0xff]
        %v7895 = vld [vmem:[%s2590 + $0x111] sm:$0xff]
        %s7896 = scalar_lea.vmem %s8, 32
        %v7897 = vld [vmem:[%s7896] sm:$0xff]
        %v7899 = vsel %vm439, %v7880, 0
        %v7902 = vsel %vm439, %v7881, 0
        %v7905 = vsel %vm439, %v7882, 0
        %v7908 = vsel %vm439, %v7883, 0
        %v7911 = vsel %vm439, %v7884, 0
        %v7914 = vsel %vm439, %v7885, 0
        %v7917 = vsel %vm439, %v7886, 0
        %v7920 = vsel %vm439, %v7887, 0
        %v7923 = vsel %vm439, %v7888, 0
        %v7926 = vsel %vm439, %v7889, 0
        %v7929 = vsel %vm439, %v7890, 0
        %v7932 = vsel %vm439, %v7891, 0
        %v7935 = vsel %vm439, %v7892, 0
        %v7938 = vsel %vm439, %v7893, 0
        %v7941 = vsel %vm439, %v7894, 0
        %v7944 = vsel %vm439, %v7895, 0
        %7946 = vmatprep.subr.mxu0 0.0
        %7947 = vmatpush1.msra.mxu0 0.0
        %7948 = vmatprep.subr.mxu0 0.0
        %7949 = vmatpush1.msra.mxu0 0.0
        %7950 = vmatprep.subr.mxu0 0.0
        %7951 = vmatpush1.msra.mxu0 0.0
        %7952 = vmatprep.subr.mxu0 0.0
        %7953 = vmatpush1.msra.mxu0 0.0
        %7954 = vmatprep.subr.mxu0 0.0
        %7955 = vmatpush1.msra.mxu0 0.0
        %7956 = vmatprep.subr.mxu0 0.0
        %7957 = vmatpush1.msra.mxu0 0.0
        %7958 = vmatprep.subr.mxu0 0.0
        %7959 = vmatpush1.msra.mxu0 0.0
        %7960 = vmatprep.subr.mxu0 0.0
        %7961 = vmatpush1.msra.mxu0 0.0
        %7962 = vmatprep.subr.mxu0 0.0
        %7963 = vmatpush1.msra.mxu0 0.0
        %7964 = vmatprep.subr.mxu0 0.0
        %7965 = vmatpush1.msra.mxu0 0.0
        %7966 = vmatprep.subr.mxu0 0.0
        %7967 = vmatpush1.msra.mxu0 0.0
        %7968 = vmatprep.subr.mxu0 0.0
        %7969 = vmatpush1.msra.mxu0 0.0
        %7970 = vmatprep.subr.mxu0 0.0
        %7971 = vmatpush1.msra.mxu0 0.0
        %7972 = vmatprep.subr.mxu0 0.0
        %7973 = vmatpush1.msra.mxu0 0.0
        %7974 = vmatprep.subr.mxu0 0.0
        %7975 = vmatpush1.msra.mxu0 0.0
        %7976 = vmatprep.subr.mxu0 0.0
        %7977 = vmatpush1.msra.mxu0 %v7897
        %7978 = vmatprep.subr.mxu0 0.0
        %7979 = vmatpush2.msra.mxu0 0.0
        %7980 = vmatprep.subr.mxu0 0.0
        %7981 = vmatpush2.msra.mxu0 0.0
        %7982 = vmatprep.subr.mxu0 0.0
        %7983 = vmatpush2.msra.mxu0 0.0
        %7984 = vmatprep.subr.mxu0 0.0
        %7985 = vmatpush2.msra.mxu0 0.0
        %7986 = vmatprep.subr.mxu0 0.0
        %7987 = vmatpush2.msra.mxu0 0.0
        %7988 = vmatprep.subr.mxu0 0.0
        %7989 = vmatpush2.msra.mxu0 0.0
        %7990 = vmatprep.subr.mxu0 0.0
        %7991 = vmatpush2.msra.mxu0 0.0
        %7992 = vmatprep.subr.mxu0 0.0
        %7993 = vmatpush2.msra.mxu0 0.0
        %7994 = vmatprep.subr.mxu0 0.0
        %7995 = vmatpush2.msra.mxu0 0.0
        %7996 = vmatprep.subr.mxu0 0.0
        %7997 = vmatpush2.msra.mxu0 0.0
        %7998 = vmatprep.subr.mxu0 0.0
        %7999 = vmatpush2.msra.mxu0 0.0
        %8000 = vmatprep.subr.mxu0 0.0
        %8001 = vmatpush2.msra.mxu0 0.0
        %8002 = vmatprep.subr.mxu0 0.0
        %8003 = vmatpush2.msra.mxu0 0.0
        %8004 = vmatprep.subr.mxu0 0.0
        %8005 = vmatpush2.msra.mxu0 0.0
        %8006 = vmatprep.subr.mxu0 0.0
        %8007 = vmatpush2.msra.mxu0 0.0
        %8008 = vmatprep.subr.mxu0 0.0
        %8009 = vmatpush2.msra.mxu0 0.0
        %8010 = vmatprep.mubr.f32.mxu0 0.0
        %8011 = vmatmul.mubr.f32.gmra.mxu0 %v7899
        %v8012 = vpop.f32.mrf.mxu0
        %v8013 = vadd.f32 0.0, %v8012
        %v8014 = vpop.f32.mrf.mxu0
        %8015 = vmatprep.mubr.f32.mxu0 0.0
        %8016 = vmatmul.mubr.f32.gmra.mxu0 %v7902
        %v8017 = vpop.f32.mrf.mxu0
        %v8018 = vadd.f32 0.0, %v8017
        %v8019 = vpop.f32.mrf.mxu0
        %8020 = vmatprep.mubr.f32.mxu0 0.0
        %8021 = vmatmul.mubr.f32.gmra.mxu0 %v7905
        %v8022 = vpop.f32.mrf.mxu0
        %v8023 = vadd.f32 0.0, %v8022
        %v8024 = vpop.f32.mrf.mxu0
        %8025 = vmatprep.mubr.f32.mxu0 0.0
        %8026 = vmatmul.mubr.f32.gmra.mxu0 %v7908
        %v8027 = vpop.f32.mrf.mxu0
        %v8028 = vadd.f32 0.0, %v8027
        %v8029 = vpop.f32.mrf.mxu0
        %8030 = vmatprep.mubr.f32.mxu0 0.0
        %8031 = vmatmul.mubr.f32.gmra.mxu0 %v7911
        %v8032 = vpop.f32.mrf.mxu0
        %v8033 = vadd.f32 0.0, %v8032
        %v8034 = vpop.f32.mrf.mxu0
        %8035 = vmatprep.mubr.f32.mxu0 0.0
        %8036 = vmatmul.mubr.f32.gmra.mxu0 %v7914
        %v8037 = vpop.f32.mrf.mxu0
        %v8038 = vadd.f32 0.0, %v8037
        %v8039 = vpop.f32.mrf.mxu0
        %8040 = vmatprep.mubr.f32.mxu0 0.0
        %8041 = vmatmul.mubr.f32.gmra.mxu0 %v7917
        %v8042 = vpop.f32.mrf.mxu0
        %v8043 = vadd.f32 0.0, %v8042
        %v8044 = vpop.f32.mrf.mxu0
        %8045 = vmatprep.mubr.f32.mxu0 0.0
        %8046 = vmatmul.mubr.f32.gmra.mxu0 %v7920
        %v8047 = vpop.f32.mrf.mxu0
        %v8048 = vadd.f32 0.0, %v8047
        %v8049 = vpop.f32.mrf.mxu0
        %8050 = vmatprep.mubr.f32.mxu0 0.0
        %8051 = vmatmul.mubr.f32.gmra.mxu0 %v7923
        %v8052 = vpop.f32.mrf.mxu0
        %v8053 = vadd.f32 0.0, %v8052
        %v8054 = vpop.f32.mrf.mxu0
        %8055 = vmatprep.mubr.f32.mxu0 0.0
        %8056 = vmatmul.mubr.f32.gmra.mxu0 %v7926
        %v8057 = vpop.f32.mrf.mxu0
        %v8058 = vadd.f32 0.0, %v8057
        %v8059 = vpop.f32.mrf.mxu0
        %8060 = vmatprep.mubr.f32.mxu0 0.0
        %8061 = vmatmul.mubr.f32.gmra.mxu0 %v7929
        %v8062 = vpop.f32.mrf.mxu0
        %v8063 = vadd.f32 0.0, %v8062
        %v8064 = vpop.f32.mrf.mxu0
        %8065 = vmatprep.mubr.f32.mxu0 0.0
        %8066 = vmatmul.mubr.f32.gmra.mxu0 %v7932
        %v8067 = vpop.f32.mrf.mxu0
        %v8068 = vadd.f32 0.0, %v8067
        %v8069 = vpop.f32.mrf.mxu0
        %8070 = vmatprep.mubr.f32.mxu0 0.0
        %8071 = vmatmul.mubr.f32.gmra.mxu0 %v7935
        %v8072 = vpop.f32.mrf.mxu0
        %v8073 = vadd.f32 0.0, %v8072
        %v8074 = vpop.f32.mrf.mxu0
        %8075 = vmatprep.mubr.f32.mxu0 0.0
        %8076 = vmatmul.mubr.f32.gmra.mxu0 %v7938
        %v8077 = vpop.f32.mrf.mxu0
        %v8078 = vadd.f32 0.0, %v8077
        %v8079 = vpop.f32.mrf.mxu0
        %8080 = vmatprep.mubr.f32.mxu0 0.0
        %8081 = vmatmul.mubr.f32.gmra.mxu0 %v7941
        %v8082 = vpop.f32.mrf.mxu0
        %v8083 = vadd.f32 0.0, %v8082
        %v8084 = vpop.f32.mrf.mxu0
        %8085 = vmatprep.mubr.f32.mxu0 0.0
        %8086 = vmatmul.mubr.f32.gmra.mxu0 %v7944
        %v8087 = vpop.f32.mrf.mxu0
        %v8088 = vadd.f32 0.0, %v8087
        %v8089 = vpop.f32.mrf.mxu0
        %8090 = vdwg.mxu0
        %v8091 = vadd.f32 %v7864, %v8013
        %v8092 = vadd.f32 %v7865, %v8018
        %v8093 = vadd.f32 %v7866, %v8023
        %v8094 = vadd.f32 %v7867, %v8028
        %v8095 = vadd.f32 %v7868, %v8033
        %v8096 = vadd.f32 %v7869, %v8038
        %v8097 = vadd.f32 %v7870, %v8043
        %v8098 = vadd.f32 %v7871, %v8048
        %v8099 = vadd.f32 %v7872, %v8053
        %v8100 = vadd.f32 %v7873, %v8058
        %v8101 = vadd.f32 %v7874, %v8063
        %v8102 = vadd.f32 %v7875, %v8068
        %v8103 = vadd.f32 %v7876, %v8073
        %v8104 = vadd.f32 %v7877, %v8078
        %v8105 = vadd.f32 %v7878, %v8083
        %v8106 = vadd.f32 %v7879, %v8088
        %v8107 = vld [vmem:[%s2590 + $0x2] sm:$0xff]
        %v8108 = vld [vmem:[%s2590 + $0x12] sm:$0xff]
        %v8109 = vld [vmem:[%s2590 + $0x22] sm:$0xff]
        %v8110 = vld [vmem:[%s2590 + $0x32] sm:$0xff]
        %v8111 = vld [vmem:[%s2590 + $0x42] sm:$0xff]
        %v8112 = vld [vmem:[%s2590 + $0x52] sm:$0xff]
        %v8113 = vld [vmem:[%s2590 + $0x62] sm:$0xff]
        %v8114 = vld [vmem:[%s2590 + $0x72] sm:$0xff]
        %v8115 = vld [vmem:[%s2590 + $0xa2] sm:$0xff]
        %v8116 = vld [vmem:[%s2590 + $0xb2] sm:$0xff]
        %v8117 = vld [vmem:[%s2590 + $0xc2] sm:$0xff]
        %v8118 = vld [vmem:[%s2590 + $0xd2] sm:$0xff]
        %v8119 = vld [vmem:[%s2590 + $0xe2] sm:$0xff]
        %v8120 = vld [vmem:[%s2590 + $0xf2] sm:$0xff]
        %v8121 = vld [vmem:[%s2590 + $0x102] sm:$0xff]
        %v8122 = vld [vmem:[%s2590 + $0x112] sm:$0xff]
        %s8123 = scalar_lea.vmem %s8, 40
        %v8124 = vld [vmem:[%s8123] sm:$0xff]
        %v8126 = vsel %vm439, %v8107, 0
        %v8129 = vsel %vm439, %v8108, 0
        %v8132 = vsel %vm439, %v8109, 0
        %v8135 = vsel %vm439, %v8110, 0
        %v8138 = vsel %vm439, %v8111, 0
        %v8141 = vsel %vm439, %v8112, 0
        %v8144 = vsel %vm439, %v8113, 0
        %v8147 = vsel %vm439, %v8114, 0
        %v8150 = vsel %vm439, %v8115, 0
        %v8153 = vsel %vm439, %v8116, 0
        %v8156 = vsel %vm439, %v8117, 0
        %v8159 = vsel %vm439, %v8118, 0
        %v8162 = vsel %vm439, %v8119, 0
        %v8165 = vsel %vm439, %v8120, 0
        %v8168 = vsel %vm439, %v8121, 0
        %v8171 = vsel %vm439, %v8122, 0
        %8173 = vmatprep.subr.mxu0 0.0
        %8174 = vmatpush1.msra.mxu0 0.0
        %8175 = vmatprep.subr.mxu0 0.0
        %8176 = vmatpush1.msra.mxu0 0.0
        %8177 = vmatprep.subr.mxu0 0.0
        %8178 = vmatpush1.msra.mxu0 0.0
        %8179 = vmatprep.subr.mxu0 0.0
        %8180 = vmatpush1.msra.mxu0 0.0
        %8181 = vmatprep.subr.mxu0 0.0
        %8182 = vmatpush1.msra.mxu0 0.0
        %8183 = vmatprep.subr.mxu0 0.0
        %8184 = vmatpush1.msra.mxu0 0.0
        %8185 = vmatprep.subr.mxu0 0.0
        %8186 = vmatpush1.msra.mxu0 0.0
        %8187 = vmatprep.subr.mxu0 0.0
        %8188 = vmatpush1.msra.mxu0 0.0
        %8189 = vmatprep.subr.mxu0 0.0
        %8190 = vmatpush1.msra.mxu0 0.0
        %8191 = vmatprep.subr.mxu0 0.0
        %8192 = vmatpush1.msra.mxu0 0.0
        %8193 = vmatprep.subr.mxu0 0.0
        %8194 = vmatpush1.msra.mxu0 0.0
        %8195 = vmatprep.subr.mxu0 0.0
        %8196 = vmatpush1.msra.mxu0 0.0
        %8197 = vmatprep.subr.mxu0 0.0
        %8198 = vmatpush1.msra.mxu0 0.0
        %8199 = vmatprep.subr.mxu0 0.0
        %8200 = vmatpush1.msra.mxu0 0.0
        %8201 = vmatprep.subr.mxu0 0.0
        %8202 = vmatpush1.msra.mxu0 0.0
        %8203 = vmatprep.subr.mxu0 0.0
        %8204 = vmatpush1.msra.mxu0 %v8124
        %8205 = vmatprep.subr.mxu0 0.0
        %8206 = vmatpush2.msra.mxu0 0.0
        %8207 = vmatprep.subr.mxu0 0.0
        %8208 = vmatpush2.msra.mxu0 0.0
        %8209 = vmatprep.subr.mxu0 0.0
        %8210 = vmatpush2.msra.mxu0 0.0
        %8211 = vmatprep.subr.mxu0 0.0
        %8212 = vmatpush2.msra.mxu0 0.0
        %8213 = vmatprep.subr.mxu0 0.0
        %8214 = vmatpush2.msra.mxu0 0.0
        %8215 = vmatprep.subr.mxu0 0.0
        %8216 = vmatpush2.msra.mxu0 0.0
        %8217 = vmatprep.subr.mxu0 0.0
        %8218 = vmatpush2.msra.mxu0 0.0
        %8219 = vmatprep.subr.mxu0 0.0
        %8220 = vmatpush2.msra.mxu0 0.0
        %8221 = vmatprep.subr.mxu0 0.0
        %8222 = vmatpush2.msra.mxu0 0.0
        %8223 = vmatprep.subr.mxu0 0.0
        %8224 = vmatpush2.msra.mxu0 0.0
        %8225 = vmatprep.subr.mxu0 0.0
        %8226 = vmatpush2.msra.mxu0 0.0
        %8227 = vmatprep.subr.mxu0 0.0
        %8228 = vmatpush2.msra.mxu0 0.0
        %8229 = vmatprep.subr.mxu0 0.0
        %8230 = vmatpush2.msra.mxu0 0.0
        %8231 = vmatprep.subr.mxu0 0.0
        %8232 = vmatpush2.msra.mxu0 0.0
        %8233 = vmatprep.subr.mxu0 0.0
        %8234 = vmatpush2.msra.mxu0 0.0
        %8235 = vmatprep.subr.mxu0 0.0
        %8236 = vmatpush2.msra.mxu0 0.0
        %8237 = vmatprep.mubr.f32.mxu0 0.0
        %8238 = vmatmul.mubr.f32.gmra.mxu0 %v8126
        %v8239 = vpop.f32.mrf.mxu0
        %v8240 = vadd.f32 0.0, %v8239
        %v8241 = vpop.f32.mrf.mxu0
        %8242 = vmatprep.mubr.f32.mxu0 0.0
        %8243 = vmatmul.mubr.f32.gmra.mxu0 %v8129
        %v8244 = vpop.f32.mrf.mxu0
        %v8245 = vadd.f32 0.0, %v8244
        %v8246 = vpop.f32.mrf.mxu0
        %8247 = vmatprep.mubr.f32.mxu0 0.0
        %8248 = vmatmul.mubr.f32.gmra.mxu0 %v8132
        %v8249 = vpop.f32.mrf.mxu0
        %v8250 = vadd.f32 0.0, %v8249
        %v8251 = vpop.f32.mrf.mxu0
        %8252 = vmatprep.mubr.f32.mxu0 0.0
        %8253 = vmatmul.mubr.f32.gmra.mxu0 %v8135
        %v8254 = vpop.f32.mrf.mxu0
        %v8255 = vadd.f32 0.0, %v8254
        %v8256 = vpop.f32.mrf.mxu0
        %8257 = vmatprep.mubr.f32.mxu0 0.0
        %8258 = vmatmul.mubr.f32.gmra.mxu0 %v8138
        %v8259 = vpop.f32.mrf.mxu0
        %v8260 = vadd.f32 0.0, %v8259
        %v8261 = vpop.f32.mrf.mxu0
        %8262 = vmatprep.mubr.f32.mxu0 0.0
        %8263 = vmatmul.mubr.f32.gmra.mxu0 %v8141
        %v8264 = vpop.f32.mrf.mxu0
        %v8265 = vadd.f32 0.0, %v8264
        %v8266 = vpop.f32.mrf.mxu0
        %8267 = vmatprep.mubr.f32.mxu0 0.0
        %8268 = vmatmul.mubr.f32.gmra.mxu0 %v8144
        %v8269 = vpop.f32.mrf.mxu0
        %v8270 = vadd.f32 0.0, %v8269
        %v8271 = vpop.f32.mrf.mxu0
        %8272 = vmatprep.mubr.f32.mxu0 0.0
        %8273 = vmatmul.mubr.f32.gmra.mxu0 %v8147
        %v8274 = vpop.f32.mrf.mxu0
        %v8275 = vadd.f32 0.0, %v8274
        %v8276 = vpop.f32.mrf.mxu0
        %8277 = vmatprep.mubr.f32.mxu0 0.0
        %8278 = vmatmul.mubr.f32.gmra.mxu0 %v8150
        %v8279 = vpop.f32.mrf.mxu0
        %v8280 = vadd.f32 0.0, %v8279
        %v8281 = vpop.f32.mrf.mxu0
        %8282 = vmatprep.mubr.f32.mxu0 0.0
        %8283 = vmatmul.mubr.f32.gmra.mxu0 %v8153
        %v8284 = vpop.f32.mrf.mxu0
        %v8285 = vadd.f32 0.0, %v8284
        %v8286 = vpop.f32.mrf.mxu0
        %8287 = vmatprep.mubr.f32.mxu0 0.0
        %8288 = vmatmul.mubr.f32.gmra.mxu0 %v8156
        %v8289 = vpop.f32.mrf.mxu0
        %v8290 = vadd.f32 0.0, %v8289
        %v8291 = vpop.f32.mrf.mxu0
        %8292 = vmatprep.mubr.f32.mxu0 0.0
        %8293 = vmatmul.mubr.f32.gmra.mxu0 %v8159
        %v8294 = vpop.f32.mrf.mxu0
        %v8295 = vadd.f32 0.0, %v8294
        %v8296 = vpop.f32.mrf.mxu0
        %8297 = vmatprep.mubr.f32.mxu0 0.0
        %8298 = vmatmul.mubr.f32.gmra.mxu0 %v8162
        %v8299 = vpop.f32.mrf.mxu0
        %v8300 = vadd.f32 0.0, %v8299
        %v8301 = vpop.f32.mrf.mxu0
        %8302 = vmatprep.mubr.f32.mxu0 0.0
        %8303 = vmatmul.mubr.f32.gmra.mxu0 %v8165
        %v8304 = vpop.f32.mrf.mxu0
        %v8305 = vadd.f32 0.0, %v8304
        %v8306 = vpop.f32.mrf.mxu0
        %8307 = vmatprep.mubr.f32.mxu0 0.0
        %8308 = vmatmul.mubr.f32.gmra.mxu0 %v8168
        %v8309 = vpop.f32.mrf.mxu0
        %v8310 = vadd.f32 0.0, %v8309
        %v8311 = vpop.f32.mrf.mxu0
        %8312 = vmatprep.mubr.f32.mxu0 0.0
        %8313 = vmatmul.mubr.f32.gmra.mxu0 %v8171
        %v8314 = vpop.f32.mrf.mxu0
        %v8315 = vadd.f32 0.0, %v8314
        %v8316 = vpop.f32.mrf.mxu0
        %8317 = vdwg.mxu0
        %v8318 = vadd.f32 %v8091, %v8240
        %v8319 = vadd.f32 %v8092, %v8245
        %v8320 = vadd.f32 %v8093, %v8250
        %v8321 = vadd.f32 %v8094, %v8255
        %v8322 = vadd.f32 %v8095, %v8260
        %v8323 = vadd.f32 %v8096, %v8265
        %v8324 = vadd.f32 %v8097, %v8270
        %v8325 = vadd.f32 %v8098, %v8275
        %v8326 = vadd.f32 %v8099, %v8280
        %v8327 = vadd.f32 %v8100, %v8285
        %v8328 = vadd.f32 %v8101, %v8290
        %v8329 = vadd.f32 %v8102, %v8295
        %v8330 = vadd.f32 %v8103, %v8300
        %v8331 = vadd.f32 %v8104, %v8305
        %v8332 = vadd.f32 %v8105, %v8310
        %v8333 = vadd.f32 %v8106, %v8315
        %v8334 = vld [vmem:[%s4149] sm:$0xff]
        %v8335 = vld [vmem:[%s4149 + $0x10] sm:$0xff]
        %v8336 = vld [vmem:[%s4149 + $0x20] sm:$0xff]
        %v8337 = vld [vmem:[%s4149 + $0x30] sm:$0xff]
        %v8338 = vld [vmem:[%s4149 + $0x40] sm:$0xff]
        %v8339 = vld [vmem:[%s4149 + $0x50] sm:$0xff]
        %v8340 = vld [vmem:[%s4149 + $0x60] sm:$0xff]
        %v8341 = vld [vmem:[%s4149 + $0x70] sm:$0xff]
        %v8342 = vld [vmem:[%s4149 + $0xa0] sm:$0xff]
        %v8343 = vld [vmem:[%s4149 + $0xb0] sm:$0xff]
        %v8344 = vld [vmem:[%s4149 + $0xc0] sm:$0xff]
        %v8345 = vld [vmem:[%s4149 + $0xd0] sm:$0xff]
        %v8346 = vld [vmem:[%s4149 + $0xe0] sm:$0xff]
        %v8347 = vld [vmem:[%s4149 + $0xf0] sm:$0xff]
        %v8348 = vld [vmem:[%s4149 + $0x100] sm:$0xff]
        %v8349 = vld [vmem:[%s4149 + $0x110] sm:$0xff]
        %s8350 = scalar_lea.vmem %s8, 48
        %v8351 = vld [vmem:[%s8350] sm:$0xff]
        %v8353 = vsel %vm439, %v8334, 0
        %v8356 = vsel %vm439, %v8335, 0
        %v8359 = vsel %vm439, %v8336, 0
        %v8362 = vsel %vm439, %v8337, 0
        %v8365 = vsel %vm439, %v8338, 0
        %v8368 = vsel %vm439, %v8339, 0
        %v8371 = vsel %vm439, %v8340, 0
        %v8374 = vsel %vm439, %v8341, 0
        %v8377 = vsel %vm439, %v8342, 0
        %v8380 = vsel %vm439, %v8343, 0
        %v8383 = vsel %vm439, %v8344, 0
        %v8386 = vsel %vm439, %v8345, 0
        %v8389 = vsel %vm439, %v8346, 0
        %v8392 = vsel %vm439, %v8347, 0
        %v8395 = vsel %vm439, %v8348, 0
        %v8398 = vsel %vm439, %v8349, 0
        %8400 = vmatprep.subr.mxu0 0.0
        %8401 = vmatpush1.msra.mxu0 0.0
        %8402 = vmatprep.subr.mxu0 0.0
        %8403 = vmatpush1.msra.mxu0 0.0
        %8404 = vmatprep.subr.mxu0 0.0
        %8405 = vmatpush1.msra.mxu0 0.0
        %8406 = vmatprep.subr.mxu0 0.0
        %8407 = vmatpush1.msra.mxu0 0.0
        %8408 = vmatprep.subr.mxu0 0.0
        %8409 = vmatpush1.msra.mxu0 0.0
        %8410 = vmatprep.subr.mxu0 0.0
        %8411 = vmatpush1.msra.mxu0 0.0
        %8412 = vmatprep.subr.mxu0 0.0
        %8413 = vmatpush1.msra.mxu0 0.0
        %8414 = vmatprep.subr.mxu0 0.0
        %8415 = vmatpush1.msra.mxu0 0.0
        %8416 = vmatprep.subr.mxu0 0.0
        %8417 = vmatpush1.msra.mxu0 0.0
        %8418 = vmatprep.subr.mxu0 0.0
        %8419 = vmatpush1.msra.mxu0 0.0
        %8420 = vmatprep.subr.mxu0 0.0
        %8421 = vmatpush1.msra.mxu0 0.0
        %8422 = vmatprep.subr.mxu0 0.0
        %8423 = vmatpush1.msra.mxu0 0.0
        %8424 = vmatprep.subr.mxu0 0.0
        %8425 = vmatpush1.msra.mxu0 0.0
        %8426 = vmatprep.subr.mxu0 0.0
        %8427 = vmatpush1.msra.mxu0 0.0
        %8428 = vmatprep.subr.mxu0 0.0
        %8429 = vmatpush1.msra.mxu0 0.0
        %8430 = vmatprep.subr.mxu0 0.0
        %8431 = vmatpush1.msra.mxu0 %v8351
        %8432 = vmatprep.subr.mxu0 0.0
        %8433 = vmatpush2.msra.mxu0 0.0
        %8434 = vmatprep.subr.mxu0 0.0
        %8435 = vmatpush2.msra.mxu0 0.0
        %8436 = vmatprep.subr.mxu0 0.0
        %8437 = vmatpush2.msra.mxu0 0.0
        %8438 = vmatprep.subr.mxu0 0.0
        %8439 = vmatpush2.msra.mxu0 0.0
        %8440 = vmatprep.subr.mxu0 0.0
        %8441 = vmatpush2.msra.mxu0 0.0
        %8442 = vmatprep.subr.mxu0 0.0
        %8443 = vmatpush2.msra.mxu0 0.0
        %8444 = vmatprep.subr.mxu0 0.0
        %8445 = vmatpush2.msra.mxu0 0.0
        %8446 = vmatprep.subr.mxu0 0.0
        %8447 = vmatpush2.msra.mxu0 0.0
        %8448 = vmatprep.subr.mxu0 0.0
        %8449 = vmatpush2.msra.mxu0 0.0
        %8450 = vmatprep.subr.mxu0 0.0
        %8451 = vmatpush2.msra.mxu0 0.0
        %8452 = vmatprep.subr.mxu0 0.0
        %8453 = vmatpush2.msra.mxu0 0.0
        %8454 = vmatprep.subr.mxu0 0.0
        %8455 = vmatpush2.msra.mxu0 0.0
        %8456 = vmatprep.subr.mxu0 0.0
        %8457 = vmatpush2.msra.mxu0 0.0
        %8458 = vmatprep.subr.mxu0 0.0
        %8459 = vmatpush2.msra.mxu0 0.0
        %8460 = vmatprep.subr.mxu0 0.0
        %8461 = vmatpush2.msra.mxu0 0.0
        %8462 = vmatprep.subr.mxu0 0.0
        %8463 = vmatpush2.msra.mxu0 0.0
        %8464 = vmatprep.mubr.f32.mxu0 0.0
        %8465 = vmatmul.mubr.f32.gmra.mxu0 %v8353
        %v8466 = vpop.f32.mrf.mxu0
        %v8467 = vadd.f32 0.0, %v8466
        %v8468 = vpop.f32.mrf.mxu0
        %8469 = vmatprep.mubr.f32.mxu0 0.0
        %8470 = vmatmul.mubr.f32.gmra.mxu0 %v8356
        %v8471 = vpop.f32.mrf.mxu0
        %v8472 = vadd.f32 0.0, %v8471
        %v8473 = vpop.f32.mrf.mxu0
        %8474 = vmatprep.mubr.f32.mxu0 0.0
        %8475 = vmatmul.mubr.f32.gmra.mxu0 %v8359
        %v8476 = vpop.f32.mrf.mxu0
        %v8477 = vadd.f32 0.0, %v8476
        %v8478 = vpop.f32.mrf.mxu0
        %8479 = vmatprep.mubr.f32.mxu0 0.0
        %8480 = vmatmul.mubr.f32.gmra.mxu0 %v8362
        %v8481 = vpop.f32.mrf.mxu0
        %v8482 = vadd.f32 0.0, %v8481
        %v8483 = vpop.f32.mrf.mxu0
        %8484 = vmatprep.mubr.f32.mxu0 0.0
        %8485 = vmatmul.mubr.f32.gmra.mxu0 %v8365
        %v8486 = vpop.f32.mrf.mxu0
        %v8487 = vadd.f32 0.0, %v8486
        %v8488 = vpop.f32.mrf.mxu0
        %8489 = vmatprep.mubr.f32.mxu0 0.0
        %8490 = vmatmul.mubr.f32.gmra.mxu0 %v8368
        %v8491 = vpop.f32.mrf.mxu0
        %v8492 = vadd.f32 0.0, %v8491
        %v8493 = vpop.f32.mrf.mxu0
        %8494 = vmatprep.mubr.f32.mxu0 0.0
        %8495 = vmatmul.mubr.f32.gmra.mxu0 %v8371
        %v8496 = vpop.f32.mrf.mxu0
        %v8497 = vadd.f32 0.0, %v8496
        %v8498 = vpop.f32.mrf.mxu0
        %8499 = vmatprep.mubr.f32.mxu0 0.0
        %8500 = vmatmul.mubr.f32.gmra.mxu0 %v8374
        %v8501 = vpop.f32.mrf.mxu0
        %v8502 = vadd.f32 0.0, %v8501
        %v8503 = vpop.f32.mrf.mxu0
        %8504 = vmatprep.mubr.f32.mxu0 0.0
        %8505 = vmatmul.mubr.f32.gmra.mxu0 %v8377
        %v8506 = vpop.f32.mrf.mxu0
        %v8507 = vadd.f32 0.0, %v8506
        %v8508 = vpop.f32.mrf.mxu0
        %8509 = vmatprep.mubr.f32.mxu0 0.0
        %8510 = vmatmul.mubr.f32.gmra.mxu0 %v8380
        %v8511 = vpop.f32.mrf.mxu0
        %v8512 = vadd.f32 0.0, %v8511
        %v8513 = vpop.f32.mrf.mxu0
        %8514 = vmatprep.mubr.f32.mxu0 0.0
        %8515 = vmatmul.mubr.f32.gmra.mxu0 %v8383
        %v8516 = vpop.f32.mrf.mxu0
        %v8517 = vadd.f32 0.0, %v8516
        %v8518 = vpop.f32.mrf.mxu0
        %8519 = vmatprep.mubr.f32.mxu0 0.0
        %8520 = vmatmul.mubr.f32.gmra.mxu0 %v8386
        %v8521 = vpop.f32.mrf.mxu0
        %v8522 = vadd.f32 0.0, %v8521
        %v8523 = vpop.f32.mrf.mxu0
        %8524 = vmatprep.mubr.f32.mxu0 0.0
        %8525 = vmatmul.mubr.f32.gmra.mxu0 %v8389
        %v8526 = vpop.f32.mrf.mxu0
        %v8527 = vadd.f32 0.0, %v8526
        %v8528 = vpop.f32.mrf.mxu0
        %8529 = vmatprep.mubr.f32.mxu0 0.0
        %8530 = vmatmul.mubr.f32.gmra.mxu0 %v8392
        %v8531 = vpop.f32.mrf.mxu0
        %v8532 = vadd.f32 0.0, %v8531
        %v8533 = vpop.f32.mrf.mxu0
        %8534 = vmatprep.mubr.f32.mxu0 0.0
        %8535 = vmatmul.mubr.f32.gmra.mxu0 %v8395
        %v8536 = vpop.f32.mrf.mxu0
        %v8537 = vadd.f32 0.0, %v8536
        %v8538 = vpop.f32.mrf.mxu0
        %8539 = vmatprep.mubr.f32.mxu0 0.0
        %8540 = vmatmul.mubr.f32.gmra.mxu0 %v8398
        %v8541 = vpop.f32.mrf.mxu0
        %v8542 = vadd.f32 0.0, %v8541
        %v8543 = vpop.f32.mrf.mxu0
        %8544 = vdwg.mxu0
        %v8545 = vadd.f32 %v8318, %v8467
        %v8546 = vadd.f32 %v8319, %v8472
        %v8547 = vadd.f32 %v8320, %v8477
        %v8548 = vadd.f32 %v8321, %v8482
        %v8549 = vadd.f32 %v8322, %v8487
        %v8550 = vadd.f32 %v8323, %v8492
        %v8551 = vadd.f32 %v8324, %v8497
        %v8552 = vadd.f32 %v8325, %v8502
        %v8553 = vadd.f32 %v8326, %v8507
        %v8554 = vadd.f32 %v8327, %v8512
        %v8555 = vadd.f32 %v8328, %v8517
        %v8556 = vadd.f32 %v8329, %v8522
        %v8557 = vadd.f32 %v8330, %v8527
        %v8558 = vadd.f32 %v8331, %v8532
        %v8559 = vadd.f32 %v8332, %v8537
        %v8560 = vadd.f32 %v8333, %v8542
        %v8561 = vld [vmem:[%s4149 + $0x1] sm:$0xff]
        %v8562 = vld [vmem:[%s4149 + $0x11] sm:$0xff]
        %v8563 = vld [vmem:[%s4149 + $0x21] sm:$0xff]
        %v8564 = vld [vmem:[%s4149 + $0x31] sm:$0xff]
        %v8565 = vld [vmem:[%s4149 + $0x41] sm:$0xff]
        %v8566 = vld [vmem:[%s4149 + $0x51] sm:$0xff]
        %v8567 = vld [vmem:[%s4149 + $0x61] sm:$0xff]
        %v8568 = vld [vmem:[%s4149 + $0x71] sm:$0xff]
        %v8569 = vld [vmem:[%s4149 + $0xa1] sm:$0xff]
        %v8570 = vld [vmem:[%s4149 + $0xb1] sm:$0xff]
        %v8571 = vld [vmem:[%s4149 + $0xc1] sm:$0xff]
        %v8572 = vld [vmem:[%s4149 + $0xd1] sm:$0xff]
        %v8573 = vld [vmem:[%s4149 + $0xe1] sm:$0xff]
        %v8574 = vld [vmem:[%s4149 + $0xf1] sm:$0xff]
        %v8575 = vld [vmem:[%s4149 + $0x101] sm:$0xff]
        %v8576 = vld [vmem:[%s4149 + $0x111] sm:$0xff]
        %s8577 = scalar_lea.vmem %s8, 56
        %v8578 = vld [vmem:[%s8577] sm:$0xff]
        %v8580 = vsel %vm439, %v8561, 0
        %v8583 = vsel %vm439, %v8562, 0
        %v8586 = vsel %vm439, %v8563, 0
        %v8589 = vsel %vm439, %v8564, 0
        %v8592 = vsel %vm439, %v8565, 0
        %v8595 = vsel %vm439, %v8566, 0
        %v8598 = vsel %vm439, %v8567, 0
        %v8601 = vsel %vm439, %v8568, 0
        %v8604 = vsel %vm439, %v8569, 0
        %v8607 = vsel %vm439, %v8570, 0
        %v8610 = vsel %vm439, %v8571, 0
        %v8613 = vsel %vm439, %v8572, 0
        %v8616 = vsel %vm439, %v8573, 0
        %v8619 = vsel %vm439, %v8574, 0
        %v8622 = vsel %vm439, %v8575, 0
        %v8625 = vsel %vm439, %v8576, 0
        %8627 = vmatprep.subr.mxu0 0.0
        %8628 = vmatpush1.msra.mxu0 0.0
        %8629 = vmatprep.subr.mxu0 0.0
        %8630 = vmatpush1.msra.mxu0 0.0
        %8631 = vmatprep.subr.mxu0 0.0
        %8632 = vmatpush1.msra.mxu0 0.0
        %8633 = vmatprep.subr.mxu0 0.0
        %8634 = vmatpush1.msra.mxu0 0.0
        %8635 = vmatprep.subr.mxu0 0.0
        %8636 = vmatpush1.msra.mxu0 0.0
        %8637 = vmatprep.subr.mxu0 0.0
        %8638 = vmatpush1.msra.mxu0 0.0
        %8639 = vmatprep.subr.mxu0 0.0
        %8640 = vmatpush1.msra.mxu0 0.0
        %8641 = vmatprep.subr.mxu0 0.0
        %8642 = vmatpush1.msra.mxu0 0.0
        %8643 = vmatprep.subr.mxu0 0.0
        %8644 = vmatpush1.msra.mxu0 0.0
        %8645 = vmatprep.subr.mxu0 0.0
        %8646 = vmatpush1.msra.mxu0 0.0
        %8647 = vmatprep.subr.mxu0 0.0
        %8648 = vmatpush1.msra.mxu0 0.0
        %8649 = vmatprep.subr.mxu0 0.0
        %8650 = vmatpush1.msra.mxu0 0.0
        %8651 = vmatprep.subr.mxu0 0.0
        %8652 = vmatpush1.msra.mxu0 0.0
        %8653 = vmatprep.subr.mxu0 0.0
        %8654 = vmatpush1.msra.mxu0 0.0
        %8655 = vmatprep.subr.mxu0 0.0
        %8656 = vmatpush1.msra.mxu0 0.0
        %8657 = vmatprep.subr.mxu0 0.0
        %8658 = vmatpush1.msra.mxu0 %v8578
        %8659 = vmatprep.subr.mxu0 0.0
        %8660 = vmatpush2.msra.mxu0 0.0
        %8661 = vmatprep.subr.mxu0 0.0
        %8662 = vmatpush2.msra.mxu0 0.0
        %8663 = vmatprep.subr.mxu0 0.0
        %8664 = vmatpush2.msra.mxu0 0.0
        %8665 = vmatprep.subr.mxu0 0.0
        %8666 = vmatpush2.msra.mxu0 0.0
        %8667 = vmatprep.subr.mxu0 0.0
        %8668 = vmatpush2.msra.mxu0 0.0
        %8669 = vmatprep.subr.mxu0 0.0
        %8670 = vmatpush2.msra.mxu0 0.0
        %8671 = vmatprep.subr.mxu0 0.0
        %8672 = vmatpush2.msra.mxu0 0.0
        %8673 = vmatprep.subr.mxu0 0.0
        %8674 = vmatpush2.msra.mxu0 0.0
        %8675 = vmatprep.subr.mxu0 0.0
        %8676 = vmatpush2.msra.mxu0 0.0
        %8677 = vmatprep.subr.mxu0 0.0
        %8678 = vmatpush2.msra.mxu0 0.0
        %8679 = vmatprep.subr.mxu0 0.0
        %8680 = vmatpush2.msra.mxu0 0.0
        %8681 = vmatprep.subr.mxu0 0.0
        %8682 = vmatpush2.msra.mxu0 0.0
        %8683 = vmatprep.subr.mxu0 0.0
        %8684 = vmatpush2.msra.mxu0 0.0
        %8685 = vmatprep.subr.mxu0 0.0
        %8686 = vmatpush2.msra.mxu0 0.0
        %8687 = vmatprep.subr.mxu0 0.0
        %8688 = vmatpush2.msra.mxu0 0.0
        %8689 = vmatprep.subr.mxu0 0.0
        %8690 = vmatpush2.msra.mxu0 0.0
        %8691 = vmatprep.mubr.f32.mxu0 0.0
        %8692 = vmatmul.mubr.f32.gmra.mxu0 %v8580
        %v8693 = vpop.f32.mrf.mxu0
        %v8694 = vadd.f32 0.0, %v8693
        %v8695 = vpop.f32.mrf.mxu0
        %8696 = vmatprep.mubr.f32.mxu0 0.0
        %8697 = vmatmul.mubr.f32.gmra.mxu0 %v8583
        %v8698 = vpop.f32.mrf.mxu0
        %v8699 = vadd.f32 0.0, %v8698
        %v8700 = vpop.f32.mrf.mxu0
        %8701 = vmatprep.mubr.f32.mxu0 0.0
        %8702 = vmatmul.mubr.f32.gmra.mxu0 %v8586
        %v8703 = vpop.f32.mrf.mxu0
        %v8704 = vadd.f32 0.0, %v8703
        %v8705 = vpop.f32.mrf.mxu0
        %8706 = vmatprep.mubr.f32.mxu0 0.0
        %8707 = vmatmul.mubr.f32.gmra.mxu0 %v8589
        %v8708 = vpop.f32.mrf.mxu0
        %v8709 = vadd.f32 0.0, %v8708
        %v8710 = vpop.f32.mrf.mxu0
        %8711 = vmatprep.mubr.f32.mxu0 0.0
        %8712 = vmatmul.mubr.f32.gmra.mxu0 %v8592
        %v8713 = vpop.f32.mrf.mxu0
        %v8714 = vadd.f32 0.0, %v8713
        %v8715 = vpop.f32.mrf.mxu0
        %8716 = vmatprep.mubr.f32.mxu0 0.0
        %8717 = vmatmul.mubr.f32.gmra.mxu0 %v8595
        %v8718 = vpop.f32.mrf.mxu0
        %v8719 = vadd.f32 0.0, %v8718
        %v8720 = vpop.f32.mrf.mxu0
        %8721 = vmatprep.mubr.f32.mxu0 0.0
        %8722 = vmatmul.mubr.f32.gmra.mxu0 %v8598
        %v8723 = vpop.f32.mrf.mxu0
        %v8724 = vadd.f32 0.0, %v8723
        %v8725 = vpop.f32.mrf.mxu0
        %8726 = vmatprep.mubr.f32.mxu0 0.0
        %8727 = vmatmul.mubr.f32.gmra.mxu0 %v8601
        %v8728 = vpop.f32.mrf.mxu0
        %v8729 = vadd.f32 0.0, %v8728
        %v8730 = vpop.f32.mrf.mxu0
        %8731 = vmatprep.mubr.f32.mxu0 0.0
        %8732 = vmatmul.mubr.f32.gmra.mxu0 %v8604
        %v8733 = vpop.f32.mrf.mxu0
        %v8734 = vadd.f32 0.0, %v8733
        %v8735 = vpop.f32.mrf.mxu0
        %8736 = vmatprep.mubr.f32.mxu0 0.0
        %8737 = vmatmul.mubr.f32.gmra.mxu0 %v8607
        %v8738 = vpop.f32.mrf.mxu0
        %v8739 = vadd.f32 0.0, %v8738
        %v8740 = vpop.f32.mrf.mxu0
        %8741 = vmatprep.mubr.f32.mxu0 0.0
        %8742 = vmatmul.mubr.f32.gmra.mxu0 %v8610
        %v8743 = vpop.f32.mrf.mxu0
        %v8744 = vadd.f32 0.0, %v8743
        %v8745 = vpop.f32.mrf.mxu0
        %8746 = vmatprep.mubr.f32.mxu0 0.0
        %8747 = vmatmul.mubr.f32.gmra.mxu0 %v8613
        %v8748 = vpop.f32.mrf.mxu0
        %v8749 = vadd.f32 0.0, %v8748
        %v8750 = vpop.f32.mrf.mxu0
        %8751 = vmatprep.mubr.f32.mxu0 0.0
        %8752 = vmatmul.mubr.f32.gmra.mxu0 %v8616
        %v8753 = vpop.f32.mrf.mxu0
        %v8754 = vadd.f32 0.0, %v8753
        %v8755 = vpop.f32.mrf.mxu0
        %8756 = vmatprep.mubr.f32.mxu0 0.0
        %8757 = vmatmul.mubr.f32.gmra.mxu0 %v8619
        %v8758 = vpop.f32.mrf.mxu0
        %v8759 = vadd.f32 0.0, %v8758
        %v8760 = vpop.f32.mrf.mxu0
        %8761 = vmatprep.mubr.f32.mxu0 0.0
        %8762 = vmatmul.mubr.f32.gmra.mxu0 %v8622
        %v8763 = vpop.f32.mrf.mxu0
        %v8764 = vadd.f32 0.0, %v8763
        %v8765 = vpop.f32.mrf.mxu0
        %8766 = vmatprep.mubr.f32.mxu0 0.0
        %8767 = vmatmul.mubr.f32.gmra.mxu0 %v8625
        %v8768 = vpop.f32.mrf.mxu0
        %v8769 = vadd.f32 0.0, %v8768
        %v8770 = vpop.f32.mrf.mxu0
        %8771 = vdwg.mxu0
        %v8772 = vadd.f32 %v8545, %v8694
        %v8773 = vadd.f32 %v8546, %v8699
        %v8774 = vadd.f32 %v8547, %v8704
        %v8775 = vadd.f32 %v8548, %v8709
        %v8776 = vadd.f32 %v8549, %v8714
        %v8777 = vadd.f32 %v8550, %v8719
        %v8778 = vadd.f32 %v8551, %v8724
        %v8779 = vadd.f32 %v8552, %v8729
        %v8780 = vadd.f32 %v8553, %v8734
        %v8781 = vadd.f32 %v8554, %v8739
        %v8782 = vadd.f32 %v8555, %v8744
        %v8783 = vadd.f32 %v8556, %v8749
        %v8784 = vadd.f32 %v8557, %v8754
        %v8785 = vadd.f32 %v8558, %v8759
        %v8786 = vadd.f32 %v8559, %v8764
        %v8787 = vadd.f32 %v8560, %v8769
        %v8788 = vld [vmem:[%s4149 + $0x2] sm:$0xff]
        %v8789 = vld [vmem:[%s4149 + $0x12] sm:$0xff]
        %v8790 = vld [vmem:[%s4149 + $0x22] sm:$0xff]
        %v8791 = vld [vmem:[%s4149 + $0x32] sm:$0xff]
        %v8792 = vld [vmem:[%s4149 + $0x42] sm:$0xff]
        %v8793 = vld [vmem:[%s4149 + $0x52] sm:$0xff]
        %v8794 = vld [vmem:[%s4149 + $0x62] sm:$0xff]
        %v8795 = vld [vmem:[%s4149 + $0x72] sm:$0xff]
        %v8796 = vld [vmem:[%s4149 + $0xa2] sm:$0xff]
        %v8797 = vld [vmem:[%s4149 + $0xb2] sm:$0xff]
        %v8798 = vld [vmem:[%s4149 + $0xc2] sm:$0xff]
        %v8799 = vld [vmem:[%s4149 + $0xd2] sm:$0xff]
        %v8800 = vld [vmem:[%s4149 + $0xe2] sm:$0xff]
        %v8801 = vld [vmem:[%s4149 + $0xf2] sm:$0xff]
        %v8802 = vld [vmem:[%s4149 + $0x102] sm:$0xff]
        %v8803 = vld [vmem:[%s4149 + $0x112] sm:$0xff]
        %s8804 = scalar_lea.vmem %s8, 64
        %v8805 = vld [vmem:[%s8804] sm:$0xff]
        %v8807 = vsel %vm439, %v8788, 0
        %v8810 = vsel %vm439, %v8789, 0
        %v8813 = vsel %vm439, %v8790, 0
        %v8816 = vsel %vm439, %v8791, 0
        %v8819 = vsel %vm439, %v8792, 0
        %v8822 = vsel %vm439, %v8793, 0
        %v8825 = vsel %vm439, %v8794, 0
        %v8828 = vsel %vm439, %v8795, 0
        %v8831 = vsel %vm439, %v8796, 0
        %v8834 = vsel %vm439, %v8797, 0
        %v8837 = vsel %vm439, %v8798, 0
        %v8840 = vsel %vm439, %v8799, 0
        %v8843 = vsel %vm439, %v8800, 0
        %v8846 = vsel %vm439, %v8801, 0
        %v8849 = vsel %vm439, %v8802, 0
        %v8852 = vsel %vm439, %v8803, 0
        %8854 = vmatprep.subr.mxu0 0.0
        %8855 = vmatpush1.msra.mxu0 0.0
        %8856 = vmatprep.subr.mxu0 0.0
        %8857 = vmatpush1.msra.mxu0 0.0
        %8858 = vmatprep.subr.mxu0 0.0
        %8859 = vmatpush1.msra.mxu0 0.0
        %8860 = vmatprep.subr.mxu0 0.0
        %8861 = vmatpush1.msra.mxu0 0.0
        %8862 = vmatprep.subr.mxu0 0.0
        %8863 = vmatpush1.msra.mxu0 0.0
        %8864 = vmatprep.subr.mxu0 0.0
        %8865 = vmatpush1.msra.mxu0 0.0
        %8866 = vmatprep.subr.mxu0 0.0
        %8867 = vmatpush1.msra.mxu0 0.0
        %8868 = vmatprep.subr.mxu0 0.0
        %8869 = vmatpush1.msra.mxu0 0.0
        %8870 = vmatprep.subr.mxu0 0.0
        %8871 = vmatpush1.msra.mxu0 0.0
        %8872 = vmatprep.subr.mxu0 0.0
        %8873 = vmatpush1.msra.mxu0 0.0
        %8874 = vmatprep.subr.mxu0 0.0
        %8875 = vmatpush1.msra.mxu0 0.0
        %8876 = vmatprep.subr.mxu0 0.0
        %8877 = vmatpush1.msra.mxu0 0.0
        %8878 = vmatprep.subr.mxu0 0.0
        %8879 = vmatpush1.msra.mxu0 0.0
        %8880 = vmatprep.subr.mxu0 0.0
        %8881 = vmatpush1.msra.mxu0 0.0
        %8882 = vmatprep.subr.mxu0 0.0
        %8883 = vmatpush1.msra.mxu0 0.0
        %8884 = vmatprep.subr.mxu0 0.0
        %8885 = vmatpush1.msra.mxu0 %v8805
        %8886 = vmatprep.subr.mxu0 0.0
        %8887 = vmatpush2.msra.mxu0 0.0
        %8888 = vmatprep.subr.mxu0 0.0
        %8889 = vmatpush2.msra.mxu0 0.0
        %8890 = vmatprep.subr.mxu0 0.0
        %8891 = vmatpush2.msra.mxu0 0.0
        %8892 = vmatprep.subr.mxu0 0.0
        %8893 = vmatpush2.msra.mxu0 0.0
        %8894 = vmatprep.subr.mxu0 0.0
        %8895 = vmatpush2.msra.mxu0 0.0
        %8896 = vmatprep.subr.mxu0 0.0
        %8897 = vmatpush2.msra.mxu0 0.0
        %8898 = vmatprep.subr.mxu0 0.0
        %8899 = vmatpush2.msra.mxu0 0.0
        %8900 = vmatprep.subr.mxu0 0.0
        %8901 = vmatpush2.msra.mxu0 0.0
        %8902 = vmatprep.subr.mxu0 0.0
        %8903 = vmatpush2.msra.mxu0 0.0
        %8904 = vmatprep.subr.mxu0 0.0
        %8905 = vmatpush2.msra.mxu0 0.0
        %8906 = vmatprep.subr.mxu0 0.0
        %8907 = vmatpush2.msra.mxu0 0.0
        %8908 = vmatprep.subr.mxu0 0.0
        %8909 = vmatpush2.msra.mxu0 0.0
        %8910 = vmatprep.subr.mxu0 0.0
        %8911 = vmatpush2.msra.mxu0 0.0
        %8912 = vmatprep.subr.mxu0 0.0
        %8913 = vmatpush2.msra.mxu0 0.0
        %8914 = vmatprep.subr.mxu0 0.0
        %8915 = vmatpush2.msra.mxu0 0.0
        %8916 = vmatprep.subr.mxu0 0.0
        %8917 = vmatpush2.msra.mxu0 0.0
        %8918 = vmatprep.mubr.f32.mxu0 0.0
        %8919 = vmatmul.mubr.f32.gmra.mxu0 %v8807
        %v8920 = vpop.f32.mrf.mxu0
        %v8921 = vadd.f32 0.0, %v8920
        %v8922 = vpop.f32.mrf.mxu0
        %8923 = vmatprep.mubr.f32.mxu0 0.0
        %8924 = vmatmul.mubr.f32.gmra.mxu0 %v8810
        %v8925 = vpop.f32.mrf.mxu0
        %v8926 = vadd.f32 0.0, %v8925
        %v8927 = vpop.f32.mrf.mxu0
        %8928 = vmatprep.mubr.f32.mxu0 0.0
        %8929 = vmatmul.mubr.f32.gmra.mxu0 %v8813
        %v8930 = vpop.f32.mrf.mxu0
        %v8931 = vadd.f32 0.0, %v8930
        %v8932 = vpop.f32.mrf.mxu0
        %8933 = vmatprep.mubr.f32.mxu0 0.0
        %8934 = vmatmul.mubr.f32.gmra.mxu0 %v8816
        %v8935 = vpop.f32.mrf.mxu0
        %v8936 = vadd.f32 0.0, %v8935
        %v8937 = vpop.f32.mrf.mxu0
        %8938 = vmatprep.mubr.f32.mxu0 0.0
        %8939 = vmatmul.mubr.f32.gmra.mxu0 %v8819
        %v8940 = vpop.f32.mrf.mxu0
        %v8941 = vadd.f32 0.0, %v8940
        %v8942 = vpop.f32.mrf.mxu0
        %8943 = vmatprep.mubr.f32.mxu0 0.0
        %8944 = vmatmul.mubr.f32.gmra.mxu0 %v8822
        %v8945 = vpop.f32.mrf.mxu0
        %v8946 = vadd.f32 0.0, %v8945
        %v8947 = vpop.f32.mrf.mxu0
        %8948 = vmatprep.mubr.f32.mxu0 0.0
        %8949 = vmatmul.mubr.f32.gmra.mxu0 %v8825
        %v8950 = vpop.f32.mrf.mxu0
        %v8951 = vadd.f32 0.0, %v8950
        %v8952 = vpop.f32.mrf.mxu0
        %8953 = vmatprep.mubr.f32.mxu0 0.0
        %8954 = vmatmul.mubr.f32.gmra.mxu0 %v8828
        %v8955 = vpop.f32.mrf.mxu0
        %v8956 = vadd.f32 0.0, %v8955
        %v8957 = vpop.f32.mrf.mxu0
        %8958 = vmatprep.mubr.f32.mxu0 0.0
        %8959 = vmatmul.mubr.f32.gmra.mxu0 %v8831
        %v8960 = vpop.f32.mrf.mxu0
        %v8961 = vadd.f32 0.0, %v8960
        %v8962 = vpop.f32.mrf.mxu0
        %8963 = vmatprep.mubr.f32.mxu0 0.0
        %8964 = vmatmul.mubr.f32.gmra.mxu0 %v8834
        %v8965 = vpop.f32.mrf.mxu0
        %v8966 = vadd.f32 0.0, %v8965
        %v8967 = vpop.f32.mrf.mxu0
        %8968 = vmatprep.mubr.f32.mxu0 0.0
        %8969 = vmatmul.mubr.f32.gmra.mxu0 %v8837
        %v8970 = vpop.f32.mrf.mxu0
        %v8971 = vadd.f32 0.0, %v8970
        %v8972 = vpop.f32.mrf.mxu0
        %8973 = vmatprep.mubr.f32.mxu0 0.0
        %8974 = vmatmul.mubr.f32.gmra.mxu0 %v8840
        %v8975 = vpop.f32.mrf.mxu0
        %v8976 = vadd.f32 0.0, %v8975
        %v8977 = vpop.f32.mrf.mxu0
        %8978 = vmatprep.mubr.f32.mxu0 0.0
        %8979 = vmatmul.mubr.f32.gmra.mxu0 %v8843
        %v8980 = vpop.f32.mrf.mxu0
        %v8981 = vadd.f32 0.0, %v8980
        %v8982 = vpop.f32.mrf.mxu0
        %8983 = vmatprep.mubr.f32.mxu0 0.0
        %8984 = vmatmul.mubr.f32.gmra.mxu0 %v8846
        %v8985 = vpop.f32.mrf.mxu0
        %v8986 = vadd.f32 0.0, %v8985
        %v8987 = vpop.f32.mrf.mxu0
        %8988 = vmatprep.mubr.f32.mxu0 0.0
        %8989 = vmatmul.mubr.f32.gmra.mxu0 %v8849
        %v8990 = vpop.f32.mrf.mxu0
        %v8991 = vadd.f32 0.0, %v8990
        %v8992 = vpop.f32.mrf.mxu0
        %8993 = vmatprep.mubr.f32.mxu0 0.0
        %8994 = vmatmul.mubr.f32.gmra.mxu0 %v8852
        %v8995 = vpop.f32.mrf.mxu0
        %v8996 = vadd.f32 0.0, %v8995
        %v8997 = vpop.f32.mrf.mxu0
        %8998 = vdwg.mxu0
        %v8999 = vadd.f32 %v8772, %v8921
        %v9000 = vadd.f32 %v8773, %v8926
        %v9001 = vadd.f32 %v8774, %v8931
        %v9002 = vadd.f32 %v8775, %v8936
        %v9003 = vadd.f32 %v8776, %v8941
        %v9004 = vadd.f32 %v8777, %v8946
        %v9005 = vadd.f32 %v8778, %v8951
        %v9006 = vadd.f32 %v8779, %v8956
        %v9007 = vadd.f32 %v8780, %v8961
        %v9008 = vadd.f32 %v8781, %v8966
        %v9009 = vadd.f32 %v8782, %v8971
        %v9010 = vadd.f32 %v8783, %v8976
        %v9011 = vadd.f32 %v8784, %v8981
        %v9012 = vadd.f32 %v8785, %v8986
        %v9013 = vadd.f32 %v8786, %v8991
        %v9014 = vadd.f32 %v8787, %v8996
        %v9015 = vadd.f32 %v8999, %v4831
        %v9016 = vadd.f32 %v9000, %v4832
        %v9017 = vadd.f32 %v9001, %v4833
        %v9018 = vadd.f32 %v9002, %v4834
        %v9019 = vadd.f32 %v9003, %v4835
        %v9020 = vadd.f32 %v9004, %v4836
        %v9021 = vadd.f32 %v9005, %v4837
        %v9022 = vadd.f32 %v9006, %v4838
        %v9023 = vadd.f32 %v9007, %v4839
        %v9024 = vadd.f32 %v9008, %v4840
        %v9025 = vadd.f32 %v9009, %v4841
        %v9026 = vadd.f32 %v9010, %v4842
        %v9027 = vadd.f32 %v9011, %v4843
        %v9028 = vadd.f32 %v9012, %v4844
        %v9029 = vadd.f32 %v9013, %v4845
        %v9030 = vadd.f32 %v9014, %v4846
        %v9031 = vld [vmem:[%s9 + $0x6] sm:$0x1]
        %v9032 = vld [vmem:[%s9 + $0x7] sm:$0x1]
        %v9033 = vlaneseq
        %v9034 = vshrl.u32 %v9033, 7
        %v9035 = vsub.s32 0, %v9034
        %v9036 = vrot.slane %v9031, %v9035
        %v9037 = vmul.f32 %v9015, %v9036
        %v9038 = vmul.f32 %v9016, %v9036
        %v9039 = vmul.f32 %v9017, %v9036
        %v9040 = vmul.f32 %v9018, %v9036
        %v9041 = vmul.f32 %v9019, %v9036
        %v9042 = vmul.f32 %v9020, %v9036
        %v9043 = vmul.f32 %v9021, %v9036
        %v9044 = vmul.f32 %v9022, %v9036
        %v9045 = vmul.f32 %v9023, %v9036
        %v9046 = vmul.f32 %v9024, %v9036
        %v9047 = vmul.f32 %v9025, %v9036
        %v9048 = vmul.f32 %v9026, %v9036
        %v9049 = vmul.f32 %v9027, %v9036
        %v9050 = vmul.f32 %v9028, %v9036
        %v9051 = vmul.f32 %v9029, %v9036
        %v9052 = vmul.f32 %v9030, %v9036
        %v9053 = vlaneseq
        %v9054 = vshrl.u32 %v9053, 7
        %v9055 = vsub.s32 0, %v9054
        %v9056 = vrot.slane %v9032, %v9055
        %v9057 = vadd.f32 %v9037, %v9056
        %v9058 = vadd.f32 %v9038, %v9056
        %v9059 = vadd.f32 %v9039, %v9056
        %v9060 = vadd.f32 %v9040, %v9056
        %v9061 = vadd.f32 %v9041, %v9056
        %v9062 = vadd.f32 %v9042, %v9056
        %v9063 = vadd.f32 %v9043, %v9056
        %v9064 = vadd.f32 %v9044, %v9056
        %v9065 = vadd.f32 %v9045, %v9056
        %v9066 = vadd.f32 %v9046, %v9056
        %v9067 = vadd.f32 %v9047, %v9056
        %v9068 = vadd.f32 %v9048, %v9056
        %v9069 = vadd.f32 %v9049, %v9056
        %v9070 = vadd.f32 %v9050, %v9056
        %v9071 = vadd.f32 %v9051, %v9056
        %v9072 = vadd.f32 %v9052, %v9056
        %v9073 = vmax.f32 %v9057, 0.0
        %v9074 = vmax.f32 %v9058, 0.0
        %v9075 = vmax.f32 %v9059, 0.0
        %v9076 = vmax.f32 %v9060, 0.0
        %v9077 = vmax.f32 %v9061, 0.0
        %v9078 = vmax.f32 %v9062, 0.0
        %v9079 = vmax.f32 %v9063, 0.0
        %v9080 = vmax.f32 %v9064, 0.0
        %v9081 = vmax.f32 %v9065, 0.0
        %v9082 = vmax.f32 %v9066, 0.0
        %v9083 = vmax.f32 %v9067, 0.0
        %v9084 = vmax.f32 %v9068, 0.0
        %v9085 = vmax.f32 %v9069, 0.0
        %v9086 = vmax.f32 %v9070, 0.0
        %v9087 = vmax.f32 %v9071, 0.0
        %v9088 = vmax.f32 %v9072, 0.0
        %9089 = vst.msk [vmem:[%s409] sm:$0xff] %vm439, %v9073
        %9090 = vst.msk [vmem:[%s409 + $0x8] sm:$0xff] %vm439, %v9074
        %9091 = vst.msk [vmem:[%s409 + $0x10] sm:$0xff] %vm439, %v9075
        %9092 = vst.msk [vmem:[%s409 + $0x18] sm:$0xff] %vm439, %v9076
        %9093 = vst.msk [vmem:[%s409 + $0x20] sm:$0xff] %vm439, %v9077
        %9094 = vst.msk [vmem:[%s409 + $0x28] sm:$0xff] %vm439, %v9078
        %9095 = vst.msk [vmem:[%s409 + $0x30] sm:$0xff] %vm439, %v9079
        %9096 = vst.msk [vmem:[%s409 + $0x38] sm:$0xff] %vm439, %v9080
        %9097 = vst.msk [vmem:[%s409 + $0x40] sm:$0xff] %vm439, %v9081
        %9098 = vst.msk [vmem:[%s409 + $0x48] sm:$0xff] %vm439, %v9082
        %9099 = vst.msk [vmem:[%s409 + $0x50] sm:$0xff] %vm439, %v9083
        %9100 = vst.msk [vmem:[%s409 + $0x58] sm:$0xff] %vm439, %v9084
        %9101 = vst.msk [vmem:[%s409 + $0x60] sm:$0xff] %vm439, %v9085
        %9102 = vst.msk [vmem:[%s409 + $0x68] sm:$0xff] %vm439, %v9086
        %9103 = vst.msk [vmem:[%s409 + $0x70] sm:$0xff] %vm439, %v9087
        %9104 = vst.msk [vmem:[%s409 + $0x78] sm:$0xff] %vm439, %v9088
        %s9105 = sand.u32 %s262, 1
        %s9106 = scalar_lea.sflag [#allocation4], %s9105
        %s9107 = sand.u32 %s262, 1
        %s9108 = smul.addr %s9107, 128
        %s9109 = scalar_lea.vmem [#allocation3], %s9108
        // Predicated region
        $region61: #{tpu_custom_call.1} parent=59 // pred_check
          %p9110 = pneg %p272
        $region62: #{tpu_custom_call.1} parent=59 // pred_check_branch
          %9112 = sbr.rel (%p9110) target = $region64
        $region63: #{tpu_custom_call.1} parent=59 // pred_region
          %s9113 = smul.u32 2, %s24
          %s9115 = ssub.s32 2048, 2048
          %9116 = vsyncadd %s9106, %s9115
          %s9117 = smul.addr %s9113, 8
          %s9118 = smul.addr %s9117, 128
          %s9119 = scalar_lea.hbm %s10, %s9118
          %s9120 = sshll.u32 %s9109, 4
          %s9121 = int_to_ptr.vmem [resolvable:$true] %s9120
          %9126 = dma.vmem_to_hbm [thread:$0]  %s9121, 2048, %s9119, %s9106, 128, 128, 8
        $region64: #{tpu_custom_call.1} parent=59 // pred_fallthru
          _
      $region60: #{tpu_custom_call.1} parent=5 // pred_fallthru
        _
      %p9127 = scmp.le.s32.totalorder 2, %s19
      // Predicated region
      $region65: #{tpu_custom_call.1} parent=5 // pred_check
        %p9128 = pneg %p9127
      $region66: #{tpu_custom_call.1} parent=5 // pred_check_branch
        %9130 = sbr.rel (%p9128) target = $region68
      $region67: #{tpu_custom_call.1} parent=5 // pred_region
        %s9131 = ssub.s32 %s19, 2
        // Predicated region
        $region69: #{tpu_custom_call.1} parent=67 // pred_check
          %p9132 = pneg %p278
        $region70: #{tpu_custom_call.1} parent=67 // pred_check_branch
          %9134 = sbr.rel (%p9132) target = $region72
        $region71: #{tpu_custom_call.1} parent=67 // pred_region
          %s9135 = sand.u32 %s263, 1
          %s9136 = scalar_lea.sflag [#allocation4], %s9135
          %s9137 = sand.u32 %s263, 1
          %s9138 = smul.addr %s9137, 128
          %s9139 = scalar_lea.vmem [#allocation3], %s9138
          %9140 = dma.done %s9136, 2048
        $region72: #{tpu_custom_call.1} parent=67 // pred_fallthru
          _
      $region68: #{tpu_custom_call.1} parent=5 // pred_fallthru
        _
    $region6: #{tpu_custom_call.1} parent=1 // loop_footer
      %s23 = sadd.s32 1, %s19
    $region7: #{tpu_custom_call.1} parent=1 // loop_footer_branch
      %18 = sbr.rel target = $region3
    $region8: #{tpu_custom_call.1} parent=1 // loop_exit
      _
    %9141 = vsyncpa [#allocation4], 1
    %s9142 = scalar_lea.sflag [#allocation4], 1
    %9143 = vsyncpa %s9142, 1

</llo_original>
